<compile_context>
chip_gen: v7x
topology: tpu7x:2x2x1
jax: 0.10.0
libtpu: 0.0.40
codegen_flags: <defaults>
</compile_context>

<pallas_src>
import math
from math import factorial

import numpy as np
import jax
import jax.numpy as jnp
from jax.experimental import pallas as pl
from jax.experimental.pallas import tpu as pltpu

# ----------------------------------------------------------------------------
# Hyper-parameters (SO3net.__init__)
# ----------------------------------------------------------------------------
LMAX = 2
F = 32                      # n_atom_basis
N_INTERACTIONS = 2
N_RBF = 16                  # radial_basis.n_rbf (GaussianRBF)
CUTOFF = 5.0                # cutoff_fn.cutoff (CosineCutoff)
MAX_Z = 100
L = LMAX + 1
M = (LMAX + 1) ** 2         # real spherical-harmonic components (9)
MF = M * F                  # real flat feature width (288)
MF_PAD = 384                # lane-dense padded feature width (3 * 128)
SLAB_W = 32                 # pair slab lanes: [Y*cutoff (9) | radial (16) | 0]
PAIR_TILE = 1024            # pairs per grid step (sweep 512-2048)
ATOM_TILE = 256             # atoms per finalize grid step


def _ceil_to(v, m):
    return ((v + m - 1) // m) * m


# ----------------------------------------------------------------------------
# Clebsch-Gordan coefficients for real spherical harmonics (host-side numpy,
# mirrors schnetpack.nn.so3.generate_clebsch_gordan_rsh)
# ----------------------------------------------------------------------------
def _sh_indices(lmax):
    lidx, midx = [], []
    for l in range(lmax + 1):
        for m in range(-l, l + 1):
            lidx.append(l)
            midx.append(m)
    return lidx, midx


def _cg_coeff(j1, j2, j3, m1, m2, m3):
    if m1 + m2 != m3:
        return 0.0
    if j3 < abs(j1 - j2) or j3 > j1 + j2:
        return 0.0
    if abs(m1) > j1 or abs(m2) > j2 or abs(m3) > j3:
        return 0.0
    pre = ((2 * j3 + 1) * factorial(j3 + j1 - j2) * factorial(j3 - j1 + j2)
           * factorial(j1 + j2 - j3) / factorial(j1 + j2 + j3 + 1))
    pre *= (factorial(j3 + m3) * factorial(j3 - m3) * factorial(j1 - m1)
            * factorial(j1 + m1) * factorial(j2 - m2) * factorial(j2 + m2))
    pre = math.sqrt(pre)
    s = 0.0
    kmin = max(0, j2 - j3 - m1, j1 - j3 + m2)
    kmax = min(j1 + j2 - j3, j1 - m1, j2 + m2)
    for k in range(kmin, kmax + 1):
        s += ((-1.0) ** k / (factorial(k) * factorial(j1 + j2 - j3 - k)
                             * factorial(j1 - m1 - k) * factorial(j2 + m2 - k)
                             * factorial(j3 - j2 + m1 + k)
                             * factorial(j3 - j1 - m2 + k)))
    return pre * s


def _sh_to_rsh(lmax):
    lidx, midx = _sh_indices(lmax)
    n = len(lidx)
    U = np.zeros((n, n), dtype=np.complex128)
    for a in range(n):
        for b in range(n):
            l1, m1 = lidx[a], midx[a]
            l2, m2 = lidx[b], midx[b]
            if l1 != l2:
                continue
            v = 0.0 + 0.0j
            if m1 == 0 and m2 == 0:
                v += 1.0
            if m1 == m2 and m1 > 0:
                v += (-1.0) ** abs(m1) / math.sqrt(2.0)
            if m1 == -m2 and m2 < 0:
                v += 1.0 / math.sqrt(2.0)
            if m1 == -m2 and m1 < 0:
                v += -1.0j * (-1.0) ** abs(m1) / math.sqrt(2.0)
            if m1 == m2 and m1 < 0:
                v += 1.0j / math.sqrt(2.0)
            U[a, b] = v
    return U


def _build_real_cg(lmax):
    lidx, midx = _sh_indices(lmax)
    n = len(lidx)
    cg = np.zeros((n, n, n), dtype=np.complex128)
    for a in range(n):
        for b in range(n):
            for c in range(n):
                cg[a, b, c] = _cg_coeff(lidx[a], lidx[b], lidx[c],
                                        midx[a], midx[b], midx[c])
    U = _sh_to_rsh(lmax)
    cg_rsh = np.einsum("ijk,mi,nj,ok->mno", cg, U, U, U.conj())
    parity = (-1.0) ** np.array(lidx)
    pmask = (parity[:, None, None] * parity[None, :, None]) == parity[None, None, :]
    cg_real = np.real(cg_rsh * pmask)
    return cg_real, [int(l) for l in lidx]


CG_DENSE, LIDX = _build_real_cg(LMAX)          # dense (M, M, M) real CG
_EPS = 1e-12

# SO3 convolution terms: unique (i2, mo) pairs with a nonzero coefficient
# column over i1.  Each column is repeated F times on the host so the in-kernel
# Y-side contraction (one small MXU matmul) comes out lane-dense and block-
# aligned with the xj feature blocks -> no single-lane broadcasts in the loop.
_cols = []
CONV_TERMS = [[] for _ in range(M)]            # per output mo: (term, i2)
for _mo in range(M):
    for _i2 in range(M):
        _colvec = CG_DENSE[:, _i2, _mo]
        if np.any(np.abs(_colvec) > _EPS):
            CONV_TERMS[_mo].append((len(_cols), _i2))
            _cols.append(_colvec)
N_TERMS = len(_cols)
N_TERMS_PAD = _ceil_to(N_TERMS, 4)             # keep N_TERMS*F a 128 multiple
CG_EXP_NP = np.zeros((SLAB_W, N_TERMS_PAD * F), np.float32)
for _t, _col in enumerate(_cols):
    CG_EXP_NP[0:M, _t * F:(_t + 1) * F] = np.repeat(
        _col[:, None].astype(np.float32), F, axis=1)

# SO3 tensor product: per output mo a list of (i1, i2, val)
TP_TERMS = [[] for _ in range(M)]
for _i1 in range(M):
    for _i2 in range(M):
        for _io in range(M):
            _v = CG_DENSE[_i1, _i2, _io]
            if abs(_v) > _EPS:
                TP_TERMS[_io].append((_i1, _i2, float(_v)))

# lidx expansion matrix (L*F -> M*F): duplicates each l-block to its m slots
_E_L2M_NP = np.zeros((L * F, MF), np.float32)
for _m in range(M):
    for _f in range(F):
        _E_L2M_NP[LIDX[_m] * F + _f, _m * F + _f] = 1.0


# ----------------------------------------------------------------------------
# Plain-JAX glue: spherical harmonics, RBF, cutoff
# ----------------------------------------------------------------------------
def real_sph_harm(dirs, lmax):
    # closed-form orthonormal real spherical harmonics (lmax <= 2),
    # ordering (l=0,m=0), (l=1,m=-1,0,1), (l=2,m=-2..2)
    x, y, z = dirs[:, 0], dirs[:, 1], dirs[:, 2]
    out = [jnp.full_like(x, 0.28209479177387814)]
    if lmax >= 1:
        c1 = 0.4886025119029199
        out += [c1 * y, c1 * z, c1 * x]
    if lmax >= 2:
        c2a = 1.0925484305920792
        c2b = 0.31539156525252005
        c2c = 0.5462742152960396
        out += [c2a * x * y, c2a * y * z, c2b * (3.0 * z * z - 1.0),
                c2a * x * z, c2c * (x * x - y * y)]
    return jnp.stack(out, axis=1)


def gaussian_rbf(d, offsets, widths):
    coeff = -0.5 / widths ** 2
    diff = d[:, None] - offsets[None, :]
    return jnp.exp(coeff[None, :] * diff ** 2)


def cosine_cutoff(d, cutoff):
    return 0.5 * (jnp.cos(d * jnp.pi / cutoff) + 1.0) * (d < cutoff).astype(jnp.float32)


# ----------------------------------------------------------------------------
# Per-generation VMEM limit (v7x only has 64 MiB physical per TensorCore)
# ----------------------------------------------------------------------------
_VMEM_LIMIT_CACHE = [None]


def _vmem_limit_bytes():
    if _VMEM_LIMIT_CACHE[0] is None:
        try:
            kind = jax.devices()[0].device_kind.lower()
        except Exception:
            kind = ""
        if ("v5" in kind) or ("v6" in kind):
            _VMEM_LIMIT_CACHE[0] = 100 * 1024 * 1024   # 128 MiB physical
        else:
            _VMEM_LIMIT_CACHE[0] = 48 * 1024 * 1024    # v7x / unknown: headroom
    return _VMEM_LIMIT_CACHE[0]


# ----------------------------------------------------------------------------
# Kernel 1: SO3 convolution over pair tiles
#   grid = (cores "parallel", pair tiles "arbitrary"); per-core partial dx
#   accumulators live resident in the output block (constant index over tiles).
# ----------------------------------------------------------------------------
def _so3_conv_kernel(slab_ref, xj_ref, idxi_ref, cg_ref, wf_ref, bf_ref, dx_ref):
    step = pl.program_id(1)
    TP = slab_ref.shape[0]
    NA = dx_ref.shape[0]

    @pl.when(step == 0)
    def _init():
        dx_ref[...] = jnp.zeros_like(dx_ref)

    slab = slab_ref[...]                                         # (TP, 32)
    # radial filter network (cutoff already folded into the Y lanes in glue)
    wflat = (jnp.dot(slab, wf_ref[...], preferred_element_type=jnp.float32)
             + bf_ref[...])                                      # (TP, MF_PAD)
    # lane-dense Y-side CG contraction: one small MXU matmul
    yce = jnp.dot(slab, cg_ref[...], preferred_element_type=jnp.float32)

    xj = xj_ref[...]                                             # (TP, MF_PAD)
    blocks = []
    for mo in range(M):
        terms = CONV_TERMS[mo]
        if not terms:
            blocks.append(jnp.zeros((TP, F), jnp.float32))
            continue
        t, i2 = terms[0]
        b = yce[:, t * F:(t + 1) * F] * xj[:, i2 * F:(i2 + 1) * F]
        for t, i2 in terms[1:]:
            b = b + yce[:, t * F:(t + 1) * F] * xj[:, i2 * F:(i2 + 1) * F]
        blocks.append(b)
    blocks.append(jnp.zeros((TP, MF_PAD - MF), jnp.float32))
    v = jnp.concatenate(blocks, axis=1) * wflat                  # (TP, MF_PAD)

    # scatter-add dx[idx_i] += v as one bf16 MXU matmul (f32 accumulation).
    # TODO(synk): for very large NA, restrict the scatter to a sorted atom
    # window via scalar-prefetched offsets instead of the full (NA, TP) one-hot.
    onehot_iT = (jax.lax.broadcasted_iota(jnp.int32, (NA, TP), 0)
                 == idxi_ref[...]).astype(jnp.bfloat16)          # (NA, TP)
    dx_ref[...] += jnp.dot(onehot_iT, v.astype(jnp.bfloat16),
                           preferred_element_type=jnp.float32)


# ----------------------------------------------------------------------------
# Kernel 2: per-atom update (mixing1, SO3 tensor product, mixing2, gate,
#            mixing3, residual), gridded over atom tiles ("parallel").
# ----------------------------------------------------------------------------
def _so3_update_kernel(x_ref, dxc_ref, w1_ref, w2_ref, wg_ref, bg_ref, w3_ref,
                       out_ref):
    TA = x_ref.shape[0]
    dxc = dxc_ref[...]                                           # (TA, MF_PAD)
    # mixing1 (block-diagonal weight -> one wide matmul)
    ddx = jnp.dot(dxc, w1_ref[...], preferred_element_type=jnp.float32)
    # dx = dx + SO3TensorProduct(dx, ddx)
    dxc_b = [dxc[:, m * F:(m + 1) * F] for m in range(M)]
    ddx_b = [ddx[:, m * F:(m + 1) * F] for m in range(M)]
    tp_blocks = []
    for mo in range(M):
        b = dxc_b[mo]
        for (i1, i2, val) in TP_TERMS[mo]:
            b = b + val * dxc_b[i1] * ddx_b[i2]
        tp_blocks.append(b)
    tp_blocks.append(jnp.zeros((TA, MF_PAD - MF), jnp.float32))
    dx = jnp.concatenate(tp_blocks, axis=1)
    # mixing2
    dx = jnp.dot(dx, w2_ref[...], preferred_element_type=jnp.float32)
    # SO3ParametricGatedNonlinearity (gate weights pre-expanded by lidx)
    h = (jnp.dot(dx[:, 0:F], wg_ref[...], preferred_element_type=jnp.float32)
         + bg_ref[...])
    dx = dx * (1.0 / (1.0 + jnp.exp(-h)))
    # mixing3 + residual
    dx = jnp.dot(dx, w3_ref[...], preferred_element_type=jnp.float32)
    out_ref[...] = x_ref[...] + dx


# ----------------------------------------------------------------------------
# pallas_call wrappers
# ----------------------------------------------------------------------------
def _pair_tiling(P):
    """-> (tile_p, n_cores, tiles_per_core, P_pad)."""
    if P <= PAIR_TILE:
        tp = _ceil_to(max(P, 8), 8)
        return tp, 1, 1, tp
    ntiles = -(-P // PAIR_TILE)
    ncores = 2 if ntiles >= 2 else 1
    ntiles = _ceil_to(ntiles, ncores)
    return PAIR_TILE, ncores, ntiles // ncores, ntiles * PAIR_TILE


def so3_convolution(slab, xj, idxi_row, w, na_pad, tile_p, ncores, tpc):
    P_pad = slab.shape[0]
    ntf = CG_EXP_NP.shape[1]

    def pair2d(c, s):
        return (c * tpc + s, 0)

    def pair_row(c, s):
        return (0, c * tpc + s)

    def full(c, s):
        return (0, 0)

    grid_spec = pltpu.PrefetchScalarGridSpec(
        num_scalar_prefetch=0,
        grid=(ncores, tpc),
        in_specs=[
            pl.BlockSpec((tile_p, SLAB_W), pair2d),    # pair slab [Y*cut|rbf]
            pl.BlockSpec((tile_p, MF_PAD), pair2d),    # xj = x[idx_j]
            pl.BlockSpec((1, tile_p), pair_row),       # idx_i
            pl.BlockSpec((SLAB_W, ntf), full),         # CG columns, F-expanded
            pl.BlockSpec((SLAB_W, MF_PAD), full),      # filter weight
            pl.BlockSpec((1, MF_PAD), full),           # filter bias
        ],
        out_specs=pl.BlockSpec((na_pad, MF_PAD), lambda c, s: (c, 0)),
    )

    flops = int(2 * P_pad * SLAB_W * (MF_PAD + ntf) + 4 * P_pad * N_TERMS * F
                + 2 * P_pad * MF_PAD + 2 * P_pad * na_pad * MF_PAD)
    bytes_acc = int(4 * (P_pad * (SLAB_W + MF_PAD + 1)
                         + ncores * na_pad * MF_PAD
                         + SLAB_W * (ntf + MF_PAD) + MF_PAD))

    return pl.pallas_call(
        _so3_conv_kernel,
        out_shape=jax.ShapeDtypeStruct((ncores * na_pad, MF_PAD), jnp.float32),
        grid_spec=grid_spec,
        compiler_params=pltpu.CompilerParams(
            dimension_semantics=("parallel", "arbitrary"),
            vmem_limit_bytes=_vmem_limit_bytes()),
        cost_estimate=pl.CostEstimate(flops=flops, transcendentals=0,
                                      bytes_accessed=bytes_acc),
    )(slab, xj, idxi_row, jnp.asarray(CG_EXP_NP), w["Wf"], w["bf"])


def so3_update(x_flat, dxc, w, tile_a):
    na_pad = x_flat.shape[0]

    def amap(a):
        return (a, 0)

    def full(a):
        return (0, 0)

    grid_spec = pltpu.PrefetchScalarGridSpec(
        num_scalar_prefetch=0,
        grid=(na_pad // tile_a,),
        in_specs=[
            pl.BlockSpec((tile_a, MF_PAD), amap),      # x
            pl.BlockSpec((tile_a, MF_PAD), amap),      # dx from convolution
            pl.BlockSpec((MF_PAD, MF_PAD), full),      # mixing1 (block-diag)
            pl.BlockSpec((MF_PAD, MF_PAD), full),      # mixing2 (block-diag)
            pl.BlockSpec((F, MF_PAD), full),           # gate weight (lidx exp)
            pl.BlockSpec((1, MF_PAD), full),           # gate bias (lidx exp)
            pl.BlockSpec((MF_PAD, MF_PAD), full),      # mixing3 (block-diag)
        ],
        out_specs=pl.BlockSpec((tile_a, MF_PAD), amap),
    )
    return pl.pallas_call(
        _so3_update_kernel,
        out_shape=jax.ShapeDtypeStruct((na_pad, MF_PAD), jnp.float32),
        grid_spec=grid_spec,
        compiler_params=pltpu.CompilerParams(
            dimension_semantics=("parallel",),
            vmem_limit_bytes=_vmem_limit_bytes()),
    )(x_flat, dxc, w["W1"], w["W2"], w["Wg"], w["bg"], w["W3"])


# ----------------------------------------------------------------------------
# Parameter expansion into the lane-dense 384-wide layout
# ----------------------------------------------------------------------------
def _expand_params(p):
    E = jnp.asarray(_E_L2M_NP)
    eye = jnp.eye(M, dtype=jnp.float32)

    def pad_cols(a):
        return jnp.zeros((a.shape[0], MF_PAD), jnp.float32).at[:, :MF].set(a)

    def pad_sq(a):
        return jnp.zeros((MF_PAD, MF_PAD), jnp.float32).at[:MF, :MF].set(a)

    # filter weight rows are placed at the radial lanes (M .. M+N_RBF) of the
    # pair slab so the kernel can matmul the slab directly (no slicing).
    wf = jnp.zeros((SLAB_W, MF_PAD), jnp.float32)
    wf = wf.at[M:M + N_RBF, :MF].set(jnp.dot(p["Wf_t"], E))
    return dict(
        Wf=wf,
        bf=pad_cols(jnp.dot(p["bf"], E)),
        Wg=pad_cols(jnp.dot(p["Wg_t"], E)),
        bg=pad_cols(jnp.dot(p["bg"], E)),
        W1=pad_sq(jnp.kron(eye, p["W1_t"])),
        W2=pad_sq(jnp.kron(eye, p["W2_t"])),
        W3=pad_sq(jnp.kron(eye, p["W3_t"])),
    )


# ----------------------------------------------------------------------------
# Full SO3net forward
# ----------------------------------------------------------------------------
def so3net_forward(params, Z, r_ij, idx_i, idx_j):
    n_atoms = Z.shape[0]
    P = idx_i.shape[0]

    d_ij = jnp.linalg.norm(r_ij, axis=1, keepdims=True)          # (P, 1)
    dir_ij = r_ij / d_ij
    Yij = real_sph_harm(dir_ij, LMAX)                            # (P, M)
    radial_ij = gaussian_rbf(d_ij[:, 0], params["rbf_offsets"],
                             params["rbf_widths"])               # (P, n_rbf)
    cutoff_ij = cosine_cutoff(d_ij, CUTOFF)                      # (P, 1)

    # one lane-dense pair slab: [Y * cutoff | radial | zeros].  Folding the
    # cutoff into Y is exact (each conv term is linear in Y) and makes padded
    # pairs contribute exactly zero regardless of idx_j or the filter bias.
    slab = jnp.zeros((P, SLAB_W), jnp.float32)
    slab = slab.at[:, 0:M].set(Yij * cutoff_ij)
    slab = slab.at[:, M:M + N_RBF].set(radial_ij)

    tile_p, ncores, tpc, P_pad = _pair_tiling(P)
    pad = P_pad - P
    slab = jnp.pad(slab, ((0, pad), (0, 0)))
    idxi_row = jnp.pad(idx_i.astype(jnp.int32), (0, pad)).reshape(1, P_pad)
    idxj_pad = jnp.pad(idx_j.astype(jnp.int32), (0, pad))

    # atoms padded to a tileable sublane multiple; lane-dense (NA, 384) layout
    if n_atoms <= ATOM_TILE:
        na_pad = _ceil_to(max(n_atoms, 8), 8)
        tile_a = na_pad
    else:
        na_pad = _ceil_to(n_atoms, ATOM_TILE)
        tile_a = ATOM_TILE
    x0 = params["embedding"][Z]                                  # (n_atoms, F)
    x_flat = jnp.zeros((na_pad, MF_PAD), jnp.float32).at[:n_atoms, 0:F].set(x0)

    for i in range(N_INTERACTIONS):
        w = _expand_params(params["interactions"][i])
        xj = x_flat[idxj_pad]                                    # (P_pad, MF_PAD)
        dx = so3_convolution(slab, xj, idxi_row, w, na_pad, tile_p, ncores, tpc)
        if ncores > 1:
            dx = dx.reshape(ncores, na_pad, MF_PAD).sum(axis=0)
        x_flat = so3_update(x_flat, dx, w, tile_a)

    x_amf = x_flat[:n_atoms, :MF].reshape(n_atoms, M, F)
    return {
        "scalar_representation": x_amf[:, 0],
        "multipole_representation": x_amf,
        # return_vector_representation=True: roll (y,z,x) -> (x,y,z)
        # TODO(synk): assert the l=1 component ordering against schnetpack's
        # RealSphericalHarmonics once before relying on the vector output.
        "vector_representation": jnp.roll(x_amf[:, 1:4], 1, axis=1),
    }


# ----------------------------------------------------------------------------
# Deterministic parameter initialization (synthetic, no checkpoint)
# ----------------------------------------------------------------------------
def init_params(key):
    keys = jax.random.split(key, 1 + N_INTERACTIONS * 7)
    emb = 0.3 * jax.random.normal(keys[0], (MAX_Z, F), jnp.float32)
    emb = emb.at[0].set(0.0)                      # padding_idx=0

    offsets = jnp.linspace(0.0, CUTOFF, N_RBF)    # GaussianRBF offsets
    widths = jnp.abs(offsets[1] - offsets[0]) * jnp.ones_like(offsets)

    inters = []
    k = 1
    for _ in range(N_INTERACTIONS):
        # weights stored pre-transposed so kernels compute y = x @ W
        Wf_t = 0.2 * jax.random.normal(keys[k + 0], (N_RBF, L * F), jnp.float32)
        bf = 0.05 * jax.random.normal(keys[k + 1], (1, L * F), jnp.float32)
        W1_t = 0.2 * jax.random.normal(keys[k + 2], (F, F), jnp.float32)
        W2_t = 0.2 * jax.random.normal(keys[k + 3], (F, F), jnp.float32)
        W3_t = 0.2 * jax.random.normal(keys[k + 4], (F, F), jnp.float32)
        Wg_t = 0.2 * jax.random.normal(keys[k + 5], (F, L * F), jnp.float32)
        bg = 0.05 * jax.random.normal(keys[k + 6], (1, L * F), jnp.float32)
        inters.append(dict(Wf_t=Wf_t, bf=bf, W1_t=W1_t, W2_t=W2_t,
                           W3_t=W3_t, Wg_t=Wg_t, bg=bg))
        k += 7

    return dict(embedding=emb, rbf_offsets=offsets, rbf_widths=widths,
                interactions=inters)


# ----------------------------------------------------------------------------
# Example run
# ----------------------------------------------------------------------------
if __name__ == "__main__":
    key = jax.random.PRNGKey(0)
    kpar, kpos, kz = jax.random.split(key, 3)

    params = init_params(kpar)

    n_atoms = 8
    pos = jax.random.uniform(kpos, (n_atoms, 3), jnp.float32,
                             minval=-1.5, maxval=1.5)
    Z = jax.random.randint(kz, (n_atoms,), 1, 10)

    idx_i_l, idx_j_l = [], []
    for i in range(n_atoms):
        for j in range(n_atoms):
            if i != j:
                idx_i_l.append(i)
                idx_j_l.append(j)
    idx_i = jnp.array(idx_i_l, dtype=jnp.int32)
    idx_j = jnp.array(idx_j_l, dtype=jnp.int32)
    r_ij = pos[idx_j] - pos[idx_i]                               # (P, 3)

    fwd = jax.jit(so3net_forward)
    out = fwd(params, Z, r_ij, idx_i, idx_j)
    jax.block_until_ready(out["multipole_representation"])

    assert out["scalar_representation"].shape == (n_atoms, F)
    assert out["multipole_representation"].shape == (n_atoms, M, F)
    assert out["vector_representation"].shape == (n_atoms, 3, F)
    assert bool(jnp.all(jnp.isfinite(out["multipole_representation"])))
    print("KERNEL_OK")
</pallas_src>

<mosaic_0001>
module attributes {stable_mosaic.version = 11 : i64} {
  func.func @_so3_conv_kernel(%arg0: i32, %arg1: i32, %arg2: memref<56x32xf32, #tpu.memory_space<vmem>>, %arg3: memref<56x384xf32, #tpu.memory_space<vmem>>, %arg4: memref<1x56xi32, #tpu.memory_space<vmem>>, %arg5: memref<32x2304xf32, #tpu.memory_space<vmem>>, %arg6: memref<32x384xf32, #tpu.memory_space<vmem>>, %arg7: memref<1x384xf32, #tpu.memory_space<vmem>>, %arg8: memref<8x384xf32, #tpu.memory_space<vmem>>) attributes {dimension_semantics = [#tpu.dimension_semantics<parallel>, #tpu.dimension_semantics<arbitrary>], iteration_bounds = array<i64: 1, 1>, scalar_prefetch = 0 : i64, scratch_operands = 0 : i64, tpu.core_type = #tpu.core_type<tc>, window_params = [{transform_indices = @transform_0, window_bounds = array<i64: 56, 32>}, {transform_indices = @transform_1, window_bounds = array<i64: 56, 384>}, {transform_indices = @transform_2, window_bounds = array<i64: 1, 56>}, {pipeline_mode = #tpu.pipeline_mode<synchronous>, transform_indices = @transform_3, window_bounds = array<i64: 32, 2304>}, {pipeline_mode = #tpu.pipeline_mode<synchronous>, transform_indices = @transform_4, window_bounds = array<i64: 32, 384>}, {pipeline_mode = #tpu.pipeline_mode<synchronous>, transform_indices = @transform_5, window_bounds = array<i64: 1, 384>}, {transform_indices = @transform_6, window_bounds = array<i64: 8, 384>}]} {
    %c0_i32 = arith.constant 0 : i32
    %0 = arith.cmpi eq, %arg1, %c0_i32 : i32
    %1 = arith.extui %0 : i1 to i32
    %c0_i32_0 = arith.constant 0 : i32
    %2 = arith.cmpi ne, %1, %c0_i32_0 : i32
    scf.if %2 {
      %cst_19 = arith.constant 0.000000e+00 : f32
      %302 = vector.broadcast %cst_19 : f32 to vector<8x384xf32>
      %c0_20 = arith.constant 0 : index
      %c0_21 = arith.constant 0 : index
      %303 = vector.load %arg8[%c0_20, %c0_21] : memref<8x384xf32, #tpu.memory_space<vmem>>, vector<8x384xf32>
      tpu.vector_store %arg8[%c0_20, %c0_21], %302 {strides = array<i32>} : memref<8x384xf32, #tpu.memory_space<vmem>>, vector<8x384xf32>,
    } else {
    }
    %c0 = arith.constant 0 : index
    %c0_1 = arith.constant 0 : index
    %3 = vector.load %arg2[%c0, %c0_1] : memref<56x32xf32, #tpu.memory_space<vmem>>, vector<56x32xf32>
    %c0_2 = arith.constant 0 : index
    %c0_3 = arith.constant 0 : index
    %4 = vector.load %arg6[%c0_2, %c0_3] : memref<32x384xf32, #tpu.memory_space<vmem>>, vector<32x384xf32>
    %cst = arith.constant dense<0.000000e+00> : vector<56x384xf32>
    %5 = tpu.matmul %3, %4, %cst {dimension_numbers = #tpu.dot_dimension_numbers<[1], [0], [0], [1], [0, 0, 1, 1], [], []>} : vector<56x32xf32>, vector<32x384xf32>, vector<56x384xf32> -> vector<56x384xf32>
    %c0_4 = arith.constant 0 : index
    %c0_5 = arith.constant 0 : index
    %6 = vector.load %arg7[%c0_4, %c0_5] : memref<1x384xf32, #tpu.memory_space<vmem>>, vector<1x384xf32>
    %7 = vector.broadcast %6 : vector<1x384xf32> to vector<56x384xf32>
    %8 = arith.addf %5, %7 : vector<56x384xf32>
    %c0_6 = arith.constant 0 : index
    %c0_7 = arith.constant 0 : index
    %9 = vector.load %arg5[%c0_6, %c0_7] : memref<32x2304xf32, #tpu.memory_space<vmem>>, vector<32x2304xf32>
    %cst_8 = arith.constant dense<0.000000e+00> : vector<56x2304xf32>
    %10 = tpu.matmul %3, %9, %cst_8 {dimension_numbers = #tpu.dot_dimension_numbers<[1], [0], [0], [1], [0, 0, 1, 1], [], []>} : vector<56x32xf32>, vector<32x2304xf32>, vector<56x2304xf32> -> vector<56x2304xf32>
    %c0_9 = arith.constant 0 : index
    %c0_10 = arith.constant 0 : index
    %11 = vector.load %arg3[%c0_9, %c0_10] : memref<56x384xf32, #tpu.memory_space<vmem>>, vector<56x384xf32>
    %12 = vector.extract_strided_slice %10 {offsets = [0, 0], sizes = [56, 32], strides = [1, 1]} : vector<56x2304xf32> to vector<56x32xf32>
    %13 = vector.extract_strided_slice %11 {offsets = [0, 0], sizes = [56, 32], strides = [1, 1]} : vector<56x384xf32> to vector<56x32xf32>
    %14 = arith.mulf %12, %13 : vector<56x32xf32>
    %15 = vector.extract_strided_slice %10 {offsets = [0, 32], sizes = [56, 32], strides = [1, 1]} : vector<56x2304xf32> to vector<56x32xf32>
    %16 = vector.extract_strided_slice %11 {offsets = [0, 32], sizes = [56, 32], strides = [1, 1]} : vector<56x384xf32> to vector<56x32xf32>
    %17 = arith.mulf %15, %16 : vector<56x32xf32>
    %18 = arith.addf %14, %17 : vector<56x32xf32>
    %19 = vector.extract_strided_slice %10 {offsets = [0, 64], sizes = [56, 32], strides = [1, 1]} : vector<56x2304xf32> to vector<56x32xf32>
    %20 = vector.extract_strided_slice %11 {offsets = [0, 64], sizes = [56, 32], strides = [1, 1]} : vector<56x384xf32> to vector<56x32xf32>
    %21 = arith.mulf %19, %20 : vector<56x32xf32>
    %22 = arith.addf %18, %21 : vector<56x32xf32>
    %23 = vector.extract_strided_slice %10 {offsets = [0, 96], sizes = [56, 32], strides = [1, 1]} : vector<56x2304xf32> to vector<56x32xf32>
    %24 = vector.extract_strided_slice %11 {offsets = [0, 96], sizes = [56, 32], strides = [1, 1]} : vector<56x384xf32> to vector<56x32xf32>
    %25 = arith.mulf %23, %24 : vector<56x32xf32>
    %26 = arith.addf %22, %25 : vector<56x32xf32>
    %27 = vector.extract_strided_slice %10 {offsets = [0, 128], sizes = [56, 32], strides = [1, 1]} : vector<56x2304xf32> to vector<56x32xf32>
    %28 = vector.extract_strided_slice %11 {offsets = [0, 128], sizes = [56, 32], strides = [1, 1]} : vector<56x384xf32> to vector<56x32xf32>
    %29 = arith.mulf %27, %28 : vector<56x32xf32>
    %30 = arith.addf %26, %29 : vector<56x32xf32>
    %31 = vector.extract_strided_slice %10 {offsets = [0, 160], sizes = [56, 32], strides = [1, 1]} : vector<56x2304xf32> to vector<56x32xf32>
    %32 = vector.extract_strided_slice %11 {offsets = [0, 160], sizes = [56, 32], strides = [1, 1]} : vector<56x384xf32> to vector<56x32xf32>
    %33 = arith.mulf %31, %32 : vector<56x32xf32>
    %34 = arith.addf %30, %33 : vector<56x32xf32>
    %35 = vector.extract_strided_slice %10 {offsets = [0, 192], sizes = [56, 32], strides = [1, 1]} : vector<56x2304xf32> to vector<56x32xf32>
    %36 = vector.extract_strided_slice %11 {offsets = [0, 192], sizes = [56, 32], strides = [1, 1]} : vector<56x384xf32> to vector<56x32xf32>
    %37 = arith.mulf %35, %36 : vector<56x32xf32>
    %38 = arith.addf %34, %37 : vector<56x32xf32>
    %39 = vector.extract_strided_slice %10 {offsets = [0, 224], sizes = [56, 32], strides = [1, 1]} : vector<56x2304xf32> to vector<56x32xf32>
    %40 = vector.extract_strided_slice %11 {offsets = [0, 224], sizes = [56, 32], strides = [1, 1]} : vector<56x384xf32> to vector<56x32xf32>
    %41 = arith.mulf %39, %40 : vector<56x32xf32>
    %42 = arith.addf %38, %41 : vector<56x32xf32>
    %43 = vector.extract_strided_slice %10 {offsets = [0, 256], sizes = [56, 32], strides = [1, 1]} : vector<56x2304xf32> to vector<56x32xf32>
    %44 = vector.extract_strided_slice %11 {offsets = [0, 256], sizes = [56, 32], strides = [1, 1]} : vector<56x384xf32> to vector<56x32xf32>
    %45 = arith.mulf %43, %44 : vector<56x32xf32>
    %46 = arith.addf %42, %45 : vector<56x32xf32>
    %47 = vector.extract_strided_slice %10 {offsets = [0, 288], sizes = [56, 32], strides = [1, 1]} : vector<56x2304xf32> to vector<56x32xf32>
    %48 = vector.extract_strided_slice %11 {offsets = [0, 0], sizes = [56, 32], strides = [1, 1]} : vector<56x384xf32> to vector<56x32xf32>
    %49 = arith.mulf %47, %48 : vector<56x32xf32>
    %50 = vector.extract_strided_slice %10 {offsets = [0, 320], sizes = [56, 32], strides = [1, 1]} : vector<56x2304xf32> to vector<56x32xf32>
    %51 = vector.extract_strided_slice %11 {offsets = [0, 32], sizes = [56, 32], strides = [1, 1]} : vector<56x384xf32> to vector<56x32xf32>
    %52 = arith.mulf %50, %51 : vector<56x32xf32>
    %53 = arith.addf %49, %52 : vector<56x32xf32>
    %54 = vector.extract_strided_slice %10 {offsets = [0, 352], sizes = [56, 32], strides = [1, 1]} : vector<56x2304xf32> to vector<56x32xf32>
    %55 = vector.extract_strided_slice %11 {offsets = [0, 64], sizes = [56, 32], strides = [1, 1]} : vector<56x384xf32> to vector<56x32xf32>
    %56 = arith.mulf %54, %55 : vector<56x32xf32>
    %57 = arith.addf %53, %56 : vector<56x32xf32>
    %58 = vector.extract_strided_slice %10 {offsets = [0, 384], sizes = [56, 32], strides = [1, 1]} : vector<56x2304xf32> to vector<56x32xf32>
    %59 = vector.extract_strided_slice %11 {offsets = [0, 96], sizes = [56, 32], strides = [1, 1]} : vector<56x384xf32> to vector<56x32xf32>
    %60 = arith.mulf %58, %59 : vector<56x32xf32>
    %61 = arith.addf %57, %60 : vector<56x32xf32>
    %62 = vector.extract_strided_slice %10 {offsets = [0, 416], sizes = [56, 32], strides = [1, 1]} : vector<56x2304xf32> to vector<56x32xf32>
    %63 = vector.extract_strided_slice %11 {offsets = [0, 128], sizes = [56, 32], strides = [1, 1]} : vector<56x384xf32> to vector<56x32xf32>
    %64 = arith.mulf %62, %63 : vector<56x32xf32>
    %65 = arith.addf %61, %64 : vector<56x32xf32>
    %66 = vector.extract_strided_slice %10 {offsets = [0, 448], sizes = [56, 32], strides = [1, 1]} : vector<56x2304xf32> to vector<56x32xf32>
    %67 = vector.extract_strided_slice %11 {offsets = [0, 160], sizes = [56, 32], strides = [1, 1]} : vector<56x384xf32> to vector<56x32xf32>
    %68 = arith.mulf %66, %67 : vector<56x32xf32>
    %69 = arith.addf %65, %68 : vector<56x32xf32>
    %70 = vector.extract_strided_slice %10 {offsets = [0, 480], sizes = [56, 32], strides = [1, 1]} : vector<56x2304xf32> to vector<56x32xf32>
    %71 = vector.extract_strided_slice %11 {offsets = [0, 192], sizes = [56, 32], strides = [1, 1]} : vector<56x384xf32> to vector<56x32xf32>
    %72 = arith.mulf %70, %71 : vector<56x32xf32>
    %73 = arith.addf %69, %72 : vector<56x32xf32>
    %74 = vector.extract_strided_slice %10 {offsets = [0, 512], sizes = [56, 32], strides = [1, 1]} : vector<56x2304xf32> to vector<56x32xf32>
    %75 = vector.extract_strided_slice %11 {offsets = [0, 256], sizes = [56, 32], strides = [1, 1]} : vector<56x384xf32> to vector<56x32xf32>
    %76 = arith.mulf %74, %75 : vector<56x32xf32>
    %77 = arith.addf %73, %76 : vector<56x32xf32>
    %78 = vector.extract_strided_slice %10 {offsets = [0, 544], sizes = [56, 32], strides = [1, 1]} : vector<56x2304xf32> to vector<56x32xf32>
    %79 = vector.extract_strided_slice %11 {offsets = [0, 0], sizes = [56, 32], strides = [1, 1]} : vector<56x384xf32> to vector<56x32xf32>
    %80 = arith.mulf %78, %79 : vector<56x32xf32>
    %81 = vector.extract_strided_slice %10 {offsets = [0, 576], sizes = [56, 32], strides = [1, 1]} : vector<56x2304xf32> to vector<56x32xf32>
    %82 = vector.extract_strided_slice %11 {offsets = [0, 32], sizes = [56, 32], strides = [1, 1]} : vector<56x384xf32> to vector<56x32xf32>
    %83 = arith.mulf %81, %82 : vector<56x32xf32>
    %84 = arith.addf %80, %83 : vector<56x32xf32>
    %85 = vector.extract_strided_slice %10 {offsets = [0, 608], sizes = [56, 32], strides = [1, 1]} : vector<56x2304xf32> to vector<56x32xf32>
    %86 = vector.extract_strided_slice %11 {offsets = [0, 64], sizes = [56, 32], strides = [1, 1]} : vector<56x384xf32> to vector<56x32xf32>
    %87 = arith.mulf %85, %86 : vector<56x32xf32>
    %88 = arith.addf %84, %87 : vector<56x32xf32>
    %89 = vector.extract_strided_slice %10 {offsets = [0, 640], sizes = [56, 32], strides = [1, 1]} : vector<56x2304xf32> to vector<56x32xf32>
    %90 = vector.extract_strided_slice %11 {offsets = [0, 96], sizes = [56, 32], strides = [1, 1]} : vector<56x384xf32> to vector<56x32xf32>
    %91 = arith.mulf %89, %90 : vector<56x32xf32>
    %92 = arith.addf %88, %91 : vector<56x32xf32>
    %93 = vector.extract_strided_slice %10 {offsets = [0, 672], sizes = [56, 32], strides = [1, 1]} : vector<56x2304xf32> to vector<56x32xf32>
    %94 = vector.extract_strided_slice %11 {offsets = [0, 160], sizes = [56, 32], strides = [1, 1]} : vector<56x384xf32> to vector<56x32xf32>
    %95 = arith.mulf %93, %94 : vector<56x32xf32>
    %96 = arith.addf %92, %95 : vector<56x32xf32>
    %97 = vector.extract_strided_slice %10 {offsets = [0, 704], sizes = [56, 32], strides = [1, 1]} : vector<56x2304xf32> to vector<56x32xf32>
    %98 = vector.extract_strided_slice %11 {offsets = [0, 192], sizes = [56, 32], strides = [1, 1]} : vector<56x384xf32> to vector<56x32xf32>
    %99 = arith.mulf %97, %98 : vector<56x32xf32>
    %100 = arith.addf %96, %99 : vector<56x32xf32>
    %101 = vector.extract_strided_slice %10 {offsets = [0, 736], sizes = [56, 32], strides = [1, 1]} : vector<56x2304xf32> to vector<56x32xf32>
    %102 = vector.extract_strided_slice %11 {offsets = [0, 224], sizes = [56, 32], strides = [1, 1]} : vector<56x384xf32> to vector<56x32xf32>
    %103 = arith.mulf %101, %102 : vector<56x32xf32>
    %104 = arith.addf %100, %103 : vector<56x32xf32>
    %105 = vector.extract_strided_slice %10 {offsets = [0, 768], sizes = [56, 32], strides = [1, 1]} : vector<56x2304xf32> to vector<56x32xf32>
    %106 = vector.extract_strided_slice %11 {offsets = [0, 0], sizes = [56, 32], strides = [1, 1]} : vector<56x384xf32> to vector<56x32xf32>
    %107 = arith.mulf %105, %106 : vector<56x32xf32>
    %108 = vector.extract_strided_slice %10 {offsets = [0, 800], sizes = [56, 32], strides = [1, 1]} : vector<56x2304xf32> to vector<56x32xf32>
    %109 = vector.extract_strided_slice %11 {offsets = [0, 32], sizes = [56, 32], strides = [1, 1]} : vector<56x384xf32> to vector<56x32xf32>
    %110 = arith.mulf %108, %109 : vector<56x32xf32>
    %111 = arith.addf %107, %110 : vector<56x32xf32>
    %112 = vector.extract_strided_slice %10 {offsets = [0, 832], sizes = [56, 32], strides = [1, 1]} : vector<56x2304xf32> to vector<56x32xf32>
    %113 = vector.extract_strided_slice %11 {offsets = [0, 64], sizes = [56, 32], strides = [1, 1]} : vector<56x384xf32> to vector<56x32xf32>
    %114 = arith.mulf %112, %113 : vector<56x32xf32>
    %115 = arith.addf %111, %114 : vector<56x32xf32>
    %116 = vector.extract_strided_slice %10 {offsets = [0, 864], sizes = [56, 32], strides = [1, 1]} : vector<56x2304xf32> to vector<56x32xf32>
    %117 = vector.extract_strided_slice %11 {offsets = [0, 96], sizes = [56, 32], strides = [1, 1]} : vector<56x384xf32> to vector<56x32xf32>
    %118 = arith.mulf %116, %117 : vector<56x32xf32>
    %119 = arith.addf %115, %118 : vector<56x32xf32>
    %120 = vector.extract_strided_slice %10 {offsets = [0, 896], sizes = [56, 32], strides = [1, 1]} : vector<56x2304xf32> to vector<56x32xf32>
    %121 = vector.extract_strided_slice %11 {offsets = [0, 128], sizes = [56, 32], strides = [1, 1]} : vector<56x384xf32> to vector<56x32xf32>
    %122 = arith.mulf %120, %121 : vector<56x32xf32>
    %123 = arith.addf %119, %122 : vector<56x32xf32>
    %124 = vector.extract_strided_slice %10 {offsets = [0, 928], sizes = [56, 32], strides = [1, 1]} : vector<56x2304xf32> to vector<56x32xf32>
    %125 = vector.extract_strided_slice %11 {offsets = [0, 192], sizes = [56, 32], strides = [1, 1]} : vector<56x384xf32> to vector<56x32xf32>
    %126 = arith.mulf %124, %125 : vector<56x32xf32>
    %127 = arith.addf %123, %126 : vector<56x32xf32>
    %128 = vector.extract_strided_slice %10 {offsets = [0, 960], sizes = [56, 32], strides = [1, 1]} : vector<56x2304xf32> to vector<56x32xf32>
    %129 = vector.extract_strided_slice %11 {offsets = [0, 224], sizes = [56, 32], strides = [1, 1]} : vector<56x384xf32> to vector<56x32xf32>
    %130 = arith.mulf %128, %129 : vector<56x32xf32>
    %131 = arith.addf %127, %130 : vector<56x32xf32>
    %132 = vector.extract_strided_slice %10 {offsets = [0, 992], sizes = [56, 32], strides = [1, 1]} : vector<56x2304xf32> to vector<56x32xf32>
    %133 = vector.extract_strided_slice %11 {offsets = [0, 256], sizes = [56, 32], strides = [1, 1]} : vector<56x384xf32> to vector<56x32xf32>
    %134 = arith.mulf %132, %133 : vector<56x32xf32>
    %135 = arith.addf %131, %134 : vector<56x32xf32>
    %136 = vector.extract_strided_slice %10 {offsets = [0, 1024], sizes = [56, 32], strides = [1, 1]} : vector<56x2304xf32> to vector<56x32xf32>
    %137 = vector.extract_strided_slice %11 {offsets = [0, 0], sizes = [56, 32], strides = [1, 1]} : vector<56x384xf32> to vector<56x32xf32>
    %138 = arith.mulf %136, %137 : vector<56x32xf32>
    %139 = vector.extract_strided_slice %10 {offsets = [0, 1056], sizes = [56, 32], strides = [1, 1]} : vector<56x2304xf32> to vector<56x32xf32>
    %140 = vector.extract_strided_slice %11 {offsets = [0, 32], sizes = [56, 32], strides = [1, 1]} : vector<56x384xf32> to vector<56x32xf32>
    %141 = arith.mulf %139, %140 : vector<56x32xf32>
    %142 = arith.addf %138, %141 : vector<56x32xf32>
    %143 = vector.extract_strided_slice %10 {offsets = [0, 1088], sizes = [56, 32], strides = [1, 1]} : vector<56x2304xf32> to vector<56x32xf32>
    %144 = vector.extract_strided_slice %11 {offsets = [0, 96], sizes = [56, 32], strides = [1, 1]} : vector<56x384xf32> to vector<56x32xf32>
    %145 = arith.mulf %143, %144 : vector<56x32xf32>
    %146 = arith.addf %142, %145 : vector<56x32xf32>
    %147 = vector.extract_strided_slice %10 {offsets = [0, 1120], sizes = [56, 32], strides = [1, 1]} : vector<56x2304xf32> to vector<56x32xf32>
    %148 = vector.extract_strided_slice %11 {offsets = [0, 128], sizes = [56, 32], strides = [1, 1]} : vector<56x384xf32> to vector<56x32xf32>
    %149 = arith.mulf %147, %148 : vector<56x32xf32>
    %150 = arith.addf %146, %149 : vector<56x32xf32>
    %151 = vector.extract_strided_slice %10 {offsets = [0, 1152], sizes = [56, 32], strides = [1, 1]} : vector<56x2304xf32> to vector<56x32xf32>
    %152 = vector.extract_strided_slice %11 {offsets = [0, 160], sizes = [56, 32], strides = [1, 1]} : vector<56x384xf32> to vector<56x32xf32>
    %153 = arith.mulf %151, %152 : vector<56x32xf32>
    %154 = arith.addf %150, %153 : vector<56x32xf32>
    %155 = vector.extract_strided_slice %10 {offsets = [0, 1184], sizes = [56, 32], strides = [1, 1]} : vector<56x2304xf32> to vector<56x32xf32>
    %156 = vector.extract_strided_slice %11 {offsets = [0, 192], sizes = [56, 32], strides = [1, 1]} : vector<56x384xf32> to vector<56x32xf32>
    %157 = arith.mulf %155, %156 : vector<56x32xf32>
    %158 = arith.addf %154, %157 : vector<56x32xf32>
    %159 = vector.extract_strided_slice %10 {offsets = [0, 1216], sizes = [56, 32], strides = [1, 1]} : vector<56x2304xf32> to vector<56x32xf32>
    %160 = vector.extract_strided_slice %11 {offsets = [0, 224], sizes = [56, 32], strides = [1, 1]} : vector<56x384xf32> to vector<56x32xf32>
    %161 = arith.mulf %159, %160 : vector<56x32xf32>
    %162 = arith.addf %158, %161 : vector<56x32xf32>
    %163 = vector.extract_strided_slice %10 {offsets = [0, 1248], sizes = [56, 32], strides = [1, 1]} : vector<56x2304xf32> to vector<56x32xf32>
    %164 = vector.extract_strided_slice %11 {offsets = [0, 0], sizes = [56, 32], strides = [1, 1]} : vector<56x384xf32> to vector<56x32xf32>
    %165 = arith.mulf %163, %164 : vector<56x32xf32>
    %166 = vector.extract_strided_slice %10 {offsets = [0, 1280], sizes = [56, 32], strides = [1, 1]} : vector<56x2304xf32> to vector<56x32xf32>
    %167 = vector.extract_strided_slice %11 {offsets = [0, 32], sizes = [56, 32], strides = [1, 1]} : vector<56x384xf32> to vector<56x32xf32>
    %168 = arith.mulf %166, %167 : vector<56x32xf32>
    %169 = arith.addf %165, %168 : vector<56x32xf32>
    %170 = vector.extract_strided_slice %10 {offsets = [0, 1312], sizes = [56, 32], strides = [1, 1]} : vector<56x2304xf32> to vector<56x32xf32>
    %171 = vector.extract_strided_slice %11 {offsets = [0, 64], sizes = [56, 32], strides = [1, 1]} : vector<56x384xf32> to vector<56x32xf32>
    %172 = arith.mulf %170, %171 : vector<56x32xf32>
    %173 = arith.addf %169, %172 : vector<56x32xf32>
    %174 = vector.extract_strided_slice %10 {offsets = [0, 1344], sizes = [56, 32], strides = [1, 1]} : vector<56x2304xf32> to vector<56x32xf32>
    %175 = vector.extract_strided_slice %11 {offsets = [0, 128], sizes = [56, 32], strides = [1, 1]} : vector<56x384xf32> to vector<56x32xf32>
    %176 = arith.mulf %174, %175 : vector<56x32xf32>
    %177 = arith.addf %173, %176 : vector<56x32xf32>
    %178 = vector.extract_strided_slice %10 {offsets = [0, 1376], sizes = [56, 32], strides = [1, 1]} : vector<56x2304xf32> to vector<56x32xf32>
    %179 = vector.extract_strided_slice %11 {offsets = [0, 160], sizes = [56, 32], strides = [1, 1]} : vector<56x384xf32> to vector<56x32xf32>
    %180 = arith.mulf %178, %179 : vector<56x32xf32>
    %181 = arith.addf %177, %180 : vector<56x32xf32>
    %182 = vector.extract_strided_slice %10 {offsets = [0, 1408], sizes = [56, 32], strides = [1, 1]} : vector<56x2304xf32> to vector<56x32xf32>
    %183 = vector.extract_strided_slice %11 {offsets = [0, 192], sizes = [56, 32], strides = [1, 1]} : vector<56x384xf32> to vector<56x32xf32>
    %184 = arith.mulf %182, %183 : vector<56x32xf32>
    %185 = arith.addf %181, %184 : vector<56x32xf32>
    %186 = vector.extract_strided_slice %10 {offsets = [0, 1440], sizes = [56, 32], strides = [1, 1]} : vector<56x2304xf32> to vector<56x32xf32>
    %187 = vector.extract_strided_slice %11 {offsets = [0, 224], sizes = [56, 32], strides = [1, 1]} : vector<56x384xf32> to vector<56x32xf32>
    %188 = arith.mulf %186, %187 : vector<56x32xf32>
    %189 = arith.addf %185, %188 : vector<56x32xf32>
    %190 = vector.extract_strided_slice %10 {offsets = [0, 1472], sizes = [56, 32], strides = [1, 1]} : vector<56x2304xf32> to vector<56x32xf32>
    %191 = vector.extract_strided_slice %11 {offsets = [0, 256], sizes = [56, 32], strides = [1, 1]} : vector<56x384xf32> to vector<56x32xf32>
    %192 = arith.mulf %190, %191 : vector<56x32xf32>
    %193 = arith.addf %189, %192 : vector<56x32xf32>
    %194 = vector.extract_strided_slice %10 {offsets = [0, 1504], sizes = [56, 32], strides = [1, 1]} : vector<56x2304xf32> to vector<56x32xf32>
    %195 = vector.extract_strided_slice %11 {offsets = [0, 0], sizes = [56, 32], strides = [1, 1]} : vector<56x384xf32> to vector<56x32xf32>
    %196 = arith.mulf %194, %195 : vector<56x32xf32>
    %197 = vector.extract_strided_slice %10 {offsets = [0, 1536], sizes = [56, 32], strides = [1, 1]} : vector<56x2304xf32> to vector<56x32xf32>
    %198 = vector.extract_strided_slice %11 {offsets = [0, 32], sizes = [56, 32], strides = [1, 1]} : vector<56x384xf32> to vector<56x32xf32>
    %199 = arith.mulf %197, %198 : vector<56x32xf32>
    %200 = arith.addf %196, %199 : vector<56x32xf32>
    %201 = vector.extract_strided_slice %10 {offsets = [0, 1568], sizes = [56, 32], strides = [1, 1]} : vector<56x2304xf32> to vector<56x32xf32>
    %202 = vector.extract_strided_slice %11 {offsets = [0, 64], sizes = [56, 32], strides = [1, 1]} : vector<56x384xf32> to vector<56x32xf32>
    %203 = arith.mulf %201, %202 : vector<56x32xf32>
    %204 = arith.addf %200, %203 : vector<56x32xf32>
    %205 = vector.extract_strided_slice %10 {offsets = [0, 1600], sizes = [56, 32], strides = [1, 1]} : vector<56x2304xf32> to vector<56x32xf32>
    %206 = vector.extract_strided_slice %11 {offsets = [0, 96], sizes = [56, 32], strides = [1, 1]} : vector<56x384xf32> to vector<56x32xf32>
    %207 = arith.mulf %205, %206 : vector<56x32xf32>
    %208 = arith.addf %204, %207 : vector<56x32xf32>
    %209 = vector.extract_strided_slice %10 {offsets = [0, 1632], sizes = [56, 32], strides = [1, 1]} : vector<56x2304xf32> to vector<56x32xf32>
    %210 = vector.extract_strided_slice %11 {offsets = [0, 128], sizes = [56, 32], strides = [1, 1]} : vector<56x384xf32> to vector<56x32xf32>
    %211 = arith.mulf %209, %210 : vector<56x32xf32>
    %212 = arith.addf %208, %211 : vector<56x32xf32>
    %213 = vector.extract_strided_slice %10 {offsets = [0, 1664], sizes = [56, 32], strides = [1, 1]} : vector<56x2304xf32> to vector<56x32xf32>
    %214 = vector.extract_strided_slice %11 {offsets = [0, 160], sizes = [56, 32], strides = [1, 1]} : vector<56x384xf32> to vector<56x32xf32>
    %215 = arith.mulf %213, %214 : vector<56x32xf32>
    %216 = arith.addf %212, %215 : vector<56x32xf32>
    %217 = vector.extract_strided_slice %10 {offsets = [0, 1696], sizes = [56, 32], strides = [1, 1]} : vector<56x2304xf32> to vector<56x32xf32>
    %218 = vector.extract_strided_slice %11 {offsets = [0, 192], sizes = [56, 32], strides = [1, 1]} : vector<56x384xf32> to vector<56x32xf32>
    %219 = arith.mulf %217, %218 : vector<56x32xf32>
    %220 = arith.addf %216, %219 : vector<56x32xf32>
    %221 = vector.extract_strided_slice %10 {offsets = [0, 1728], sizes = [56, 32], strides = [1, 1]} : vector<56x2304xf32> to vector<56x32xf32>
    %222 = vector.extract_strided_slice %11 {offsets = [0, 224], sizes = [56, 32], strides = [1, 1]} : vector<56x384xf32> to vector<56x32xf32>
    %223 = arith.mulf %221, %222 : vector<56x32xf32>
    %224 = arith.addf %220, %223 : vector<56x32xf32>
    %225 = vector.extract_strided_slice %10 {offsets = [0, 1760], sizes = [56, 32], strides = [1, 1]} : vector<56x2304xf32> to vector<56x32xf32>
    %226 = vector.extract_strided_slice %11 {offsets = [0, 256], sizes = [56, 32], strides = [1, 1]} : vector<56x384xf32> to vector<56x32xf32>
    %227 = arith.mulf %225, %226 : vector<56x32xf32>
    %228 = arith.addf %224, %227 : vector<56x32xf32>
    %229 = vector.extract_strided_slice %10 {offsets = [0, 1792], sizes = [56, 32], strides = [1, 1]} : vector<56x2304xf32> to vector<56x32xf32>
    %230 = vector.extract_strided_slice %11 {offsets = [0, 0], sizes = [56, 32], strides = [1, 1]} : vector<56x384xf32> to vector<56x32xf32>
    %231 = arith.mulf %229, %230 : vector<56x32xf32>
    %232 = vector.extract_strided_slice %10 {offsets = [0, 1824], sizes = [56, 32], strides = [1, 1]} : vector<56x2304xf32> to vector<56x32xf32>
    %233 = vector.extract_strided_slice %11 {offsets = [0, 64], sizes = [56, 32], strides = [1, 1]} : vector<56x384xf32> to vector<56x32xf32>
    %234 = arith.mulf %232, %233 : vector<56x32xf32>
    %235 = arith.addf %231, %234 : vector<56x32xf32>
    %236 = vector.extract_strided_slice %10 {offsets = [0, 1856], sizes = [56, 32], strides = [1, 1]} : vector<56x2304xf32> to vector<56x32xf32>
    %237 = vector.extract_strided_slice %11 {offsets = [0, 96], sizes = [56, 32], strides = [1, 1]} : vector<56x384xf32> to vector<56x32xf32>
    %238 = arith.mulf %236, %237 : vector<56x32xf32>
    %239 = arith.addf %235, %238 : vector<56x32xf32>
    %240 = vector.extract_strided_slice %10 {offsets = [0, 1888], sizes = [56, 32], strides = [1, 1]} : vector<56x2304xf32> to vector<56x32xf32>
    %241 = vector.extract_strided_slice %11 {offsets = [0, 128], sizes = [56, 32], strides = [1, 1]} : vector<56x384xf32> to vector<56x32xf32>
    %242 = arith.mulf %240, %241 : vector<56x32xf32>
    %243 = arith.addf %239, %242 : vector<56x32xf32>
    %244 = vector.extract_strided_slice %10 {offsets = [0, 1920], sizes = [56, 32], strides = [1, 1]} : vector<56x2304xf32> to vector<56x32xf32>
    %245 = vector.extract_strided_slice %11 {offsets = [0, 160], sizes = [56, 32], strides = [1, 1]} : vector<56x384xf32> to vector<56x32xf32>
    %246 = arith.mulf %244, %245 : vector<56x32xf32>
    %247 = arith.addf %243, %246 : vector<56x32xf32>
    %248 = vector.extract_strided_slice %10 {offsets = [0, 1952], sizes = [56, 32], strides = [1, 1]} : vector<56x2304xf32> to vector<56x32xf32>
    %249 = vector.extract_strided_slice %11 {offsets = [0, 192], sizes = [56, 32], strides = [1, 1]} : vector<56x384xf32> to vector<56x32xf32>
    %250 = arith.mulf %248, %249 : vector<56x32xf32>
    %251 = arith.addf %247, %250 : vector<56x32xf32>
    %252 = vector.extract_strided_slice %10 {offsets = [0, 1984], sizes = [56, 32], strides = [1, 1]} : vector<56x2304xf32> to vector<56x32xf32>
    %253 = vector.extract_strided_slice %11 {offsets = [0, 224], sizes = [56, 32], strides = [1, 1]} : vector<56x384xf32> to vector<56x32xf32>
    %254 = arith.mulf %252, %253 : vector<56x32xf32>
    %255 = arith.addf %251, %254 : vector<56x32xf32>
    %256 = vector.extract_strided_slice %10 {offsets = [0, 2016], sizes = [56, 32], strides = [1, 1]} : vector<56x2304xf32> to vector<56x32xf32>
    %257 = vector.extract_strided_slice %11 {offsets = [0, 256], sizes = [56, 32], strides = [1, 1]} : vector<56x384xf32> to vector<56x32xf32>
    %258 = arith.mulf %256, %257 : vector<56x32xf32>
    %259 = arith.addf %255, %258 : vector<56x32xf32>
    %260 = vector.extract_strided_slice %10 {offsets = [0, 2048], sizes = [56, 32], strides = [1, 1]} : vector<56x2304xf32> to vector<56x32xf32>
    %261 = vector.extract_strided_slice %11 {offsets = [0, 0], sizes = [56, 32], strides = [1, 1]} : vector<56x384xf32> to vector<56x32xf32>
    %262 = arith.mulf %260, %261 : vector<56x32xf32>
    %263 = vector.extract_strided_slice %10 {offsets = [0, 2080], sizes = [56, 32], strides = [1, 1]} : vector<56x2304xf32> to vector<56x32xf32>
    %264 = vector.extract_strided_slice %11 {offsets = [0, 32], sizes = [56, 32], strides = [1, 1]} : vector<56x384xf32> to vector<56x32xf32>
    %265 = arith.mulf %263, %264 : vector<56x32xf32>
    %266 = arith.addf %262, %265 : vector<56x32xf32>
    %267 = vector.extract_strided_slice %10 {offsets = [0, 2112], sizes = [56, 32], strides = [1, 1]} : vector<56x2304xf32> to vector<56x32xf32>
    %268 = vector.extract_strided_slice %11 {offsets = [0, 96], sizes = [56, 32], strides = [1, 1]} : vector<56x384xf32> to vector<56x32xf32>
    %269 = arith.mulf %267, %268 : vector<56x32xf32>
    %270 = arith.addf %266, %269 : vector<56x32xf32>
    %271 = vector.extract_strided_slice %10 {offsets = [0, 2144], sizes = [56, 32], strides = [1, 1]} : vector<56x2304xf32> to vector<56x32xf32>
    %272 = vector.extract_strided_slice %11 {offsets = [0, 160], sizes = [56, 32], strides = [1, 1]} : vector<56x384xf32> to vector<56x32xf32>
    %273 = arith.mulf %271, %272 : vector<56x32xf32>
    %274 = arith.addf %270, %273 : vector<56x32xf32>
    %275 = vector.extract_strided_slice %10 {offsets = [0, 2176], sizes = [56, 32], strides = [1, 1]} : vector<56x2304xf32> to vector<56x32xf32>
    %276 = vector.extract_strided_slice %11 {offsets = [0, 192], sizes = [56, 32], strides = [1, 1]} : vector<56x384xf32> to vector<56x32xf32>
    %277 = arith.mulf %275, %276 : vector<56x32xf32>
    %278 = arith.addf %274, %277 : vector<56x32xf32>
    %279 = vector.extract_strided_slice %10 {offsets = [0, 2208], sizes = [56, 32], strides = [1, 1]} : vector<56x2304xf32> to vector<56x32xf32>
    %280 = vector.extract_strided_slice %11 {offsets = [0, 224], sizes = [56, 32], strides = [1, 1]} : vector<56x384xf32> to vector<56x32xf32>
    %281 = arith.mulf %279, %280 : vector<56x32xf32>
    %282 = arith.addf %278, %281 : vector<56x32xf32>
    %283 = vector.extract_strided_slice %10 {offsets = [0, 2240], sizes = [56, 32], strides = [1, 1]} : vector<56x2304xf32> to vector<56x32xf32>
    %284 = vector.extract_strided_slice %11 {offsets = [0, 256], sizes = [56, 32], strides = [1, 1]} : vector<56x384xf32> to vector<56x32xf32>
    %285 = arith.mulf %283, %284 : vector<56x32xf32>
    %286 = arith.addf %282, %285 : vector<56x32xf32>
    %cst_11 = arith.constant 0.000000e+00 : f32
    %287 = vector.broadcast %cst_11 : f32 to vector<56x96xf32>
    %288 = tpu.concatenate %46, %77, %104, %135, %162, %193, %228, %259, %286, %287 in 1 : vector<56x32xf32>, vector<56x32xf32>, vector<56x32xf32>, vector<56x32xf32>, vector<56x32xf32>, vector<56x32xf32>, vector<56x32xf32>, vector<56x32xf32>, vector<56x32xf32>, vector<56x96xf32> -> vector<56x384xf32>
    %289 = arith.mulf %288, %8 : vector<56x384xf32>
    %290 = tpu.iota {dimensions = array<i32: 0>} : vector<8x56xi32>
    %c0_12 = arith.constant 0 : index
    %c0_13 = arith.constant 0 : index
    %291 = vector.load %arg4[%c0_12, %c0_13] : memref<1x56xi32, #tpu.memory_space<vmem>>, vector<1x56xi32>
    %292 = vector.broadcast %291 : vector<1x56xi32> to vector<8x56xi32>
    %293 = arith.cmpi eq, %290, %292 : vector<8x56xi32>
    %294 = arith.extui %293 : vector<8x56xi1> to vector<8x56xi32>
    %295 = arith.sitofp %294 : vector<8x56xi32> to vector<8x56xf32>
    %296 = arith.truncf %295 : vector<8x56xf32> to vector<8x56xbf16>
    %c0_14 = arith.constant 0 : index
    %c0_15 = arith.constant 0 : index
    %297 = vector.load %arg8[%c0_14, %c0_15] : memref<8x384xf32, #tpu.memory_space<vmem>>, vector<8x384xf32>
    %298 = arith.truncf %289 : vector<56x384xf32> to vector<56x384xbf16>
    %cst_16 = arith.constant dense<0.000000e+00> : vector<8x384xf32>
    %299 = tpu.matmul %296, %298, %cst_16 {dimension_numbers = #tpu.dot_dimension_numbers<[1], [0], [0], [1], [0, 0, 1, 1], [], []>} : vector<8x56xbf16>, vector<56x384xbf16>, vector<8x384xf32> -> vector<8x384xf32>
    %300 = arith.addf %297, %299 : vector<8x384xf32>
    %c0_17 = arith.constant 0 : index
    %c0_18 = arith.constant 0 : index
    %301 = vector.load %arg8[%c0_17, %c0_18] : memref<8x384xf32, #tpu.memory_space<vmem>>, vector<8x384xf32>
    tpu.vector_store %arg8[%c0_17, %c0_18], %300 {strides = array<i32>} : memref<8x384xf32, #tpu.memory_space<vmem>>, vector<8x384xf32>,
    return
  }
  func.func @transform_0(%arg0: i32, %arg1: i32) -> (i32, i32) {
    %c1_i32 = arith.constant 1 : i32
    %0 = arith.muli %arg0, %c1_i32 : i32
    %1 = arith.addi %0, %arg1 : i32
    %c0_i32 = arith.constant 0 : i32
    %c0_i32_0 = arith.constant 0 : i32
    return %1, %c0_i32 : i32, i32
  }
  func.func @transform_1(%arg0: i32, %arg1: i32) -> (i32, i32) {
    %c1_i32 = arith.constant 1 : i32
    %0 = arith.muli %arg0, %c1_i32 : i32
    %1 = arith.addi %0, %arg1 : i32
    %c0_i32 = arith.constant 0 : i32
    %c0_i32_0 = arith.constant 0 : i32
    return %1, %c0_i32 : i32, i32
  }
  func.func @transform_2(%arg0: i32, %arg1: i32) -> (i32, i32) {
    %c1_i32 = arith.constant 1 : i32
    %0 = arith.muli %arg0, %c1_i32 : i32
    %1 = arith.addi %0, %arg1 : i32
    %c0_i32 = arith.constant 0 : i32
    %c0_i32_0 = arith.constant 0 : i32
    return %c0_i32, %1 : i32, i32
  }
  func.func @transform_3(%arg0: i32, %arg1: i32) -> (i32, i32) {
    %c0_i32 = arith.constant 0 : i32
    %c0_i32_0 = arith.constant 0 : i32
    %c0_i32_1 = arith.constant 0 : i32
    return %c0_i32, %c0_i32_0 : i32, i32
  }
  func.func @transform_4(%arg0: i32, %arg1: i32) -> (i32, i32) {
    %c0_i32 = arith.constant 0 : i32
    %c0_i32_0 = arith.constant 0 : i32
    %c0_i32_1 = arith.constant 0 : i32
    return %c0_i32, %c0_i32_0 : i32, i32
  }
  func.func @transform_5(%arg0: i32, %arg1: i32) -> (i32, i32) {
    %c0_i32 = arith.constant 0 : i32
    %c0_i32_0 = arith.constant 0 : i32
    %c0_i32_1 = arith.constant 0 : i32
    return %c0_i32, %c0_i32_0 : i32, i32
  }
  func.func @transform_6(%arg0: i32, %arg1: i32) -> (i32, i32) {
    %c0_i32 = arith.constant 0 : i32
    %c0_i32_0 = arith.constant 0 : i32
    return %arg0, %c0_i32 : i32, i32
  }
}

module attributes {stable_mosaic.version = 11 : i64} {
  func.func @_so3_update_kernel(%arg0: i32, %arg1: memref<8x384xf32, #tpu.memory_space<vmem>>, %arg2: memref<8x384xf32, #tpu.memory_space<vmem>>, %arg3: memref<384x384xf32, #tpu.memory_space<vmem>>, %arg4: memref<384x384xf32, #tpu.memory_space<vmem>>, %arg5: memref<32x384xf32, #tpu.memory_space<vmem>>, %arg6: memref<1x384xf32, #tpu.memory_space<vmem>>, %arg7: memref<384x384xf32, #tpu.memory_space<vmem>>, %arg8: memref<8x384xf32, #tpu.memory_space<vmem>>) attributes {dimension_semantics = [#tpu.dimension_semantics<parallel>], iteration_bounds = array<i64: 1>, scalar_prefetch = 0 : i64, scratch_operands = 0 : i64, tpu.core_type = #tpu.core_type<tc>, window_params = [{transform_indices = @transform_0, window_bounds = array<i64: 8, 384>}, {transform_indices = @transform_1, window_bounds = array<i64: 8, 384>}, {pipeline_mode = #tpu.pipeline_mode<synchronous>, transform_indices = @transform_2, window_bounds = array<i64: 384, 384>}, {pipeline_mode = #tpu.pipeline_mode<synchronous>, transform_indices = @transform_3, window_bounds = array<i64: 384, 384>}, {pipeline_mode = #tpu.pipeline_mode<synchronous>, transform_indices = @transform_4, window_bounds = array<i64: 32, 384>}, {pipeline_mode = #tpu.pipeline_mode<synchronous>, transform_indices = @transform_5, window_bounds = array<i64: 1, 384>}, {pipeline_mode = #tpu.pipeline_mode<synchronous>, transform_indices = @transform_6, window_bounds = array<i64: 384, 384>}, {transform_indices = @transform_7, window_bounds = array<i64: 8, 384>}]} {
    %c0 = arith.constant 0 : index
    %c0_0 = arith.constant 0 : index
    %0 = vector.load %arg2[%c0, %c0_0] : memref<8x384xf32, #tpu.memory_space<vmem>>, vector<8x384xf32>
    %c0_1 = arith.constant 0 : index
    %c0_2 = arith.constant 0 : index
    %1 = vector.load %arg3[%c0_1, %c0_2] : memref<384x384xf32, #tpu.memory_space<vmem>>, vector<384x384xf32>
    %cst = arith.constant dense<0.000000e+00> : vector<8x384xf32>
    %2 = tpu.matmul %0, %1, %cst {dimension_numbers = #tpu.dot_dimension_numbers<[1], [0], [0], [1], [0, 0, 1, 1], [], []>} : vector<8x384xf32>, vector<384x384xf32>, vector<8x384xf32> -> vector<8x384xf32>
    %3 = vector.extract_strided_slice %0 {offsets = [0, 0], sizes = [8, 32], strides = [1, 1]} : vector<8x384xf32> to vector<8x32xf32>
    %4 = vector.extract_strided_slice %0 {offsets = [0, 32], sizes = [8, 32], strides = [1, 1]} : vector<8x384xf32> to vector<8x32xf32>
    %5 = vector.extract_strided_slice %0 {offsets = [0, 64], sizes = [8, 32], strides = [1, 1]} : vector<8x384xf32> to vector<8x32xf32>
    %6 = vector.extract_strided_slice %0 {offsets = [0, 96], sizes = [8, 32], strides = [1, 1]} : vector<8x384xf32> to vector<8x32xf32>
    %7 = vector.extract_strided_slice %0 {offsets = [0, 128], sizes = [8, 32], strides = [1, 1]} : vector<8x384xf32> to vector<8x32xf32>
    %8 = vector.extract_strided_slice %0 {offsets = [0, 160], sizes = [8, 32], strides = [1, 1]} : vector<8x384xf32> to vector<8x32xf32>
    %9 = vector.extract_strided_slice %0 {offsets = [0, 192], sizes = [8, 32], strides = [1, 1]} : vector<8x384xf32> to vector<8x32xf32>
    %10 = vector.extract_strided_slice %0 {offsets = [0, 224], sizes = [8, 32], strides = [1, 1]} : vector<8x384xf32> to vector<8x32xf32>
    %11 = vector.extract_strided_slice %0 {offsets = [0, 256], sizes = [8, 32], strides = [1, 1]} : vector<8x384xf32> to vector<8x32xf32>
    %12 = vector.extract_strided_slice %2 {offsets = [0, 0], sizes = [8, 32], strides = [1, 1]} : vector<8x384xf32> to vector<8x32xf32>
    %13 = vector.extract_strided_slice %2 {offsets = [0, 32], sizes = [8, 32], strides = [1, 1]} : vector<8x384xf32> to vector<8x32xf32>
    %14 = vector.extract_strided_slice %2 {offsets = [0, 64], sizes = [8, 32], strides = [1, 1]} : vector<8x384xf32> to vector<8x32xf32>
    %15 = vector.extract_strided_slice %2 {offsets = [0, 96], sizes = [8, 32], strides = [1, 1]} : vector<8x384xf32> to vector<8x32xf32>
    %16 = vector.extract_strided_slice %2 {offsets = [0, 128], sizes = [8, 32], strides = [1, 1]} : vector<8x384xf32> to vector<8x32xf32>
    %17 = vector.extract_strided_slice %2 {offsets = [0, 160], sizes = [8, 32], strides = [1, 1]} : vector<8x384xf32> to vector<8x32xf32>
    %18 = vector.extract_strided_slice %2 {offsets = [0, 192], sizes = [8, 32], strides = [1, 1]} : vector<8x384xf32> to vector<8x32xf32>
    %19 = vector.extract_strided_slice %2 {offsets = [0, 224], sizes = [8, 32], strides = [1, 1]} : vector<8x384xf32> to vector<8x32xf32>
    %20 = vector.extract_strided_slice %2 {offsets = [0, 256], sizes = [8, 32], strides = [1, 1]} : vector<8x384xf32> to vector<8x32xf32>
    %cst_3 = arith.constant 1.000000e+00 : f32
    %21 = vector.broadcast %cst_3 : f32 to vector<8x32xf32>
    %22 = arith.mulf %21, %3 : vector<8x32xf32>
    %23 = arith.mulf %22, %12 : vector<8x32xf32>
    %24 = arith.addf %3, %23 : vector<8x32xf32>
    %cst_4 = arith.constant -0.577350259 : f32
    %25 = vector.broadcast %cst_4 : f32 to vector<8x32xf32>
    %26 = arith.mulf %25, %4 : vector<8x32xf32>
    %27 = arith.mulf %26, %13 : vector<8x32xf32>
    %28 = arith.addf %24, %27 : vector<8x32xf32>
    %cst_5 = arith.constant -0.577350259 : f32
    %29 = vector.broadcast %cst_5 : f32 to vector<8x32xf32>
    %30 = arith.mulf %29, %5 : vector<8x32xf32>
    %31 = arith.mulf %30, %14 : vector<8x32xf32>
    %32 = arith.addf %28, %31 : vector<8x32xf32>
    %cst_6 = arith.constant -0.577350259 : f32
    %33 = vector.broadcast %cst_6 : f32 to vector<8x32xf32>
    %34 = arith.mulf %33, %6 : vector<8x32xf32>
    %35 = arith.mulf %34, %15 : vector<8x32xf32>
    %36 = arith.addf %32, %35 : vector<8x32xf32>
    %cst_7 = arith.constant 0.44721359 : f32
    %37 = vector.broadcast %cst_7 : f32 to vector<8x32xf32>
    %38 = arith.mulf %37, %7 : vector<8x32xf32>
    %39 = arith.mulf %38, %16 : vector<8x32xf32>
    %40 = arith.addf %36, %39 : vector<8x32xf32>
    %cst_8 = arith.constant 0.44721359 : f32
    %41 = vector.broadcast %cst_8 : f32 to vector<8x32xf32>
    %42 = arith.mulf %41, %8 : vector<8x32xf32>
    %43 = arith.mulf %42, %17 : vector<8x32xf32>
    %44 = arith.addf %40, %43 : vector<8x32xf32>
    %cst_9 = arith.constant 0.44721359 : f32
    %45 = vector.broadcast %cst_9 : f32 to vector<8x32xf32>
    %46 = arith.mulf %45, %9 : vector<8x32xf32>
    %47 = arith.mulf %46, %18 : vector<8x32xf32>
    %48 = arith.addf %44, %47 : vector<8x32xf32>
    %cst_10 = arith.constant 0.44721359 : f32
    %49 = vector.broadcast %cst_10 : f32 to vector<8x32xf32>
    %50 = arith.mulf %49, %10 : vector<8x32xf32>
    %51 = arith.mulf %50, %19 : vector<8x32xf32>
    %52 = arith.addf %48, %51 : vector<8x32xf32>
    %cst_11 = arith.constant 0.44721359 : f32
    %53 = vector.broadcast %cst_11 : f32 to vector<8x32xf32>
    %54 = arith.mulf %53, %11 : vector<8x32xf32>
    %55 = arith.mulf %54, %20 : vector<8x32xf32>
    %56 = arith.addf %52, %55 : vector<8x32xf32>
    %cst_12 = arith.constant 1.000000e+00 : f32
    %57 = vector.broadcast %cst_12 : f32 to vector<8x32xf32>
    %58 = arith.mulf %57, %3 : vector<8x32xf32>
    %59 = arith.mulf %58, %13 : vector<8x32xf32>
    %60 = arith.addf %4, %59 : vector<8x32xf32>
    %cst_13 = arith.constant 1.000000e+00 : f32
    %61 = vector.broadcast %cst_13 : f32 to vector<8x32xf32>
    %62 = arith.mulf %61, %4 : vector<8x32xf32>
    %63 = arith.mulf %62, %12 : vector<8x32xf32>
    %64 = arith.addf %60, %63 : vector<8x32xf32>
    %cst_14 = arith.constant 0.316227764 : f32
    %65 = vector.broadcast %cst_14 : f32 to vector<8x32xf32>
    %66 = arith.mulf %65, %4 : vector<8x32xf32>
    %67 = arith.mulf %66, %18 : vector<8x32xf32>
    %68 = arith.addf %64, %67 : vector<8x32xf32>
    %cst_15 = arith.constant 0.547722578 : f32
    %69 = vector.broadcast %cst_15 : f32 to vector<8x32xf32>
    %70 = arith.mulf %69, %4 : vector<8x32xf32>
    %71 = arith.mulf %70, %20 : vector<8x32xf32>
    %72 = arith.addf %68, %71 : vector<8x32xf32>
    %cst_16 = arith.constant -0.547722578 : f32
    %73 = vector.broadcast %cst_16 : f32 to vector<8x32xf32>
    %74 = arith.mulf %73, %5 : vector<8x32xf32>
    %75 = arith.mulf %74, %17 : vector<8x32xf32>
    %76 = arith.addf %72, %75 : vector<8x32xf32>
    %cst_17 = arith.constant -0.547722578 : f32
    %77 = vector.broadcast %cst_17 : f32 to vector<8x32xf32>
    %78 = arith.mulf %77, %6 : vector<8x32xf32>
    %79 = arith.mulf %78, %16 : vector<8x32xf32>
    %80 = arith.addf %76, %79 : vector<8x32xf32>
    %cst_18 = arith.constant -0.547722578 : f32
    %81 = vector.broadcast %cst_18 : f32 to vector<8x32xf32>
    %82 = arith.mulf %81, %7 : vector<8x32xf32>
    %83 = arith.mulf %82, %15 : vector<8x32xf32>
    %84 = arith.addf %80, %83 : vector<8x32xf32>
    %cst_19 = arith.constant -0.547722578 : f32
    %85 = vector.broadcast %cst_19 : f32 to vector<8x32xf32>
    %86 = arith.mulf %85, %8 : vector<8x32xf32>
    %87 = arith.mulf %86, %14 : vector<8x32xf32>
    %88 = arith.addf %84, %87 : vector<8x32xf32>
    %cst_20 = arith.constant 0.316227764 : f32
    %89 = vector.broadcast %cst_20 : f32 to vector<8x32xf32>
    %90 = arith.mulf %89, %9 : vector<8x32xf32>
    %91 = arith.mulf %90, %13 : vector<8x32xf32>
    %92 = arith.addf %88, %91 : vector<8x32xf32>
    %cst_21 = arith.constant 0.547722578 : f32
    %93 = vector.broadcast %cst_21 : f32 to vector<8x32xf32>
    %94 = arith.mulf %93, %11 : vector<8x32xf32>
    %95 = arith.mulf %94, %13 : vector<8x32xf32>
    %96 = arith.addf %92, %95 : vector<8x32xf32>
    %cst_22 = arith.constant 1.000000e+00 : f32
    %97 = vector.broadcast %cst_22 : f32 to vector<8x32xf32>
    %98 = arith.mulf %97, %3 : vector<8x32xf32>
    %99 = arith.mulf %98, %14 : vector<8x32xf32>
    %100 = arith.addf %5, %99 : vector<8x32xf32>
    %cst_23 = arith.constant -0.547722578 : f32
    %101 = vector.broadcast %cst_23 : f32 to vector<8x32xf32>
    %102 = arith.mulf %101, %4 : vector<8x32xf32>
    %103 = arith.mulf %102, %17 : vector<8x32xf32>
    %104 = arith.addf %100, %103 : vector<8x32xf32>
    %cst_24 = arith.constant 1.000000e+00 : f32
    %105 = vector.broadcast %cst_24 : f32 to vector<8x32xf32>
    %106 = arith.mulf %105, %5 : vector<8x32xf32>
    %107 = arith.mulf %106, %12 : vector<8x32xf32>
    %108 = arith.addf %104, %107 : vector<8x32xf32>
    %cst_25 = arith.constant -0.632455527 : f32
    %109 = vector.broadcast %cst_25 : f32 to vector<8x32xf32>
    %110 = arith.mulf %109, %5 : vector<8x32xf32>
    %111 = arith.mulf %110, %18 : vector<8x32xf32>
    %112 = arith.addf %108, %111 : vector<8x32xf32>
    %cst_26 = arith.constant -0.547722578 : f32
    %113 = vector.broadcast %cst_26 : f32 to vector<8x32xf32>
    %114 = arith.mulf %113, %6 : vector<8x32xf32>
    %115 = arith.mulf %114, %19 : vector<8x32xf32>
    %116 = arith.addf %112, %115 : vector<8x32xf32>
    %cst_27 = arith.constant -0.547722578 : f32
    %117 = vector.broadcast %cst_27 : f32 to vector<8x32xf32>
    %118 = arith.mulf %117, %8 : vector<8x32xf32>
    %119 = arith.mulf %118, %13 : vector<8x32xf32>
    %120 = arith.addf %116, %119 : vector<8x32xf32>
    %cst_28 = arith.constant -0.632455527 : f32
    %121 = vector.broadcast %cst_28 : f32 to vector<8x32xf32>
    %122 = arith.mulf %121, %9 : vector<8x32xf32>
    %123 = arith.mulf %122, %14 : vector<8x32xf32>
    %124 = arith.addf %120, %123 : vector<8x32xf32>
    %cst_29 = arith.constant -0.547722578 : f32
    %125 = vector.broadcast %cst_29 : f32 to vector<8x32xf32>
    %126 = arith.mulf %125, %10 : vector<8x32xf32>
    %127 = arith.mulf %126, %15 : vector<8x32xf32>
    %128 = arith.addf %124, %127 : vector<8x32xf32>
    %cst_30 = arith.constant 1.000000e+00 : f32
    %129 = vector.broadcast %cst_30 : f32 to vector<8x32xf32>
    %130 = arith.mulf %129, %3 : vector<8x32xf32>
    %131 = arith.mulf %130, %15 : vector<8x32xf32>
    %132 = arith.addf %6, %131 : vector<8x32xf32>
    %cst_31 = arith.constant -0.547722578 : f32
    %133 = vector.broadcast %cst_31 : f32 to vector<8x32xf32>
    %134 = arith.mulf %133, %4 : vector<8x32xf32>
    %135 = arith.mulf %134, %16 : vector<8x32xf32>
    %136 = arith.addf %132, %135 : vector<8x32xf32>
    %cst_32 = arith.constant -0.547722578 : f32
    %137 = vector.broadcast %cst_32 : f32 to vector<8x32xf32>
    %138 = arith.mulf %137, %5 : vector<8x32xf32>
    %139 = arith.mulf %138, %19 : vector<8x32xf32>
    %140 = arith.addf %136, %139 : vector<8x32xf32>
    %cst_33 = arith.constant 1.000000e+00 : f32
    %141 = vector.broadcast %cst_33 : f32 to vector<8x32xf32>
    %142 = arith.mulf %141, %6 : vector<8x32xf32>
    %143 = arith.mulf %142, %12 : vector<8x32xf32>
    %144 = arith.addf %140, %143 : vector<8x32xf32>
    %cst_34 = arith.constant 0.316227764 : f32
    %145 = vector.broadcast %cst_34 : f32 to vector<8x32xf32>
    %146 = arith.mulf %145, %6 : vector<8x32xf32>
    %147 = arith.mulf %146, %18 : vector<8x32xf32>
    %148 = arith.addf %144, %147 : vector<8x32xf32>
    %cst_35 = arith.constant -0.547722578 : f32
    %149 = vector.broadcast %cst_35 : f32 to vector<8x32xf32>
    %150 = arith.mulf %149, %6 : vector<8x32xf32>
    %151 = arith.mulf %150, %20 : vector<8x32xf32>
    %152 = arith.addf %148, %151 : vector<8x32xf32>
    %cst_36 = arith.constant -0.547722578 : f32
    %153 = vector.broadcast %cst_36 : f32 to vector<8x32xf32>
    %154 = arith.mulf %153, %7 : vector<8x32xf32>
    %155 = arith.mulf %154, %13 : vector<8x32xf32>
    %156 = arith.addf %152, %155 : vector<8x32xf32>
    %cst_37 = arith.constant 0.316227764 : f32
    %157 = vector.broadcast %cst_37 : f32 to vector<8x32xf32>
    %158 = arith.mulf %157, %9 : vector<8x32xf32>
    %159 = arith.mulf %158, %15 : vector<8x32xf32>
    %160 = arith.addf %156, %159 : vector<8x32xf32>
    %cst_38 = arith.constant -0.547722578 : f32
    %161 = vector.broadcast %cst_38 : f32 to vector<8x32xf32>
    %162 = arith.mulf %161, %10 : vector<8x32xf32>
    %163 = arith.mulf %162, %14 : vector<8x32xf32>
    %164 = arith.addf %160, %163 : vector<8x32xf32>
    %cst_39 = arith.constant -0.547722578 : f32
    %165 = vector.broadcast %cst_39 : f32 to vector<8x32xf32>
    %166 = arith.mulf %165, %11 : vector<8x32xf32>
    %167 = arith.mulf %166, %15 : vector<8x32xf32>
    %168 = arith.addf %164, %167 : vector<8x32xf32>
    %cst_40 = arith.constant 1.000000e+00 : f32
    %169 = vector.broadcast %cst_40 : f32 to vector<8x32xf32>
    %170 = arith.mulf %169, %3 : vector<8x32xf32>
    %171 = arith.mulf %170, %16 : vector<8x32xf32>
    %172 = arith.addf %7, %171 : vector<8x32xf32>
    %cst_41 = arith.constant 0.707106769 : f32
    %173 = vector.broadcast %cst_41 : f32 to vector<8x32xf32>
    %174 = arith.mulf %173, %4 : vector<8x32xf32>
    %175 = arith.mulf %174, %15 : vector<8x32xf32>
    %176 = arith.addf %172, %175 : vector<8x32xf32>
    %cst_42 = arith.constant 0.707106769 : f32
    %177 = vector.broadcast %cst_42 : f32 to vector<8x32xf32>
    %178 = arith.mulf %177, %6 : vector<8x32xf32>
    %179 = arith.mulf %178, %13 : vector<8x32xf32>
    %180 = arith.addf %176, %179 : vector<8x32xf32>
    %cst_43 = arith.constant 1.000000e+00 : f32
    %181 = vector.broadcast %cst_43 : f32 to vector<8x32xf32>
    %182 = arith.mulf %181, %7 : vector<8x32xf32>
    %183 = arith.mulf %182, %12 : vector<8x32xf32>
    %184 = arith.addf %180, %183 : vector<8x32xf32>
    %cst_44 = arith.constant 0.534522474 : f32
    %185 = vector.broadcast %cst_44 : f32 to vector<8x32xf32>
    %186 = arith.mulf %185, %7 : vector<8x32xf32>
    %187 = arith.mulf %186, %18 : vector<8x32xf32>
    %188 = arith.addf %184, %187 : vector<8x32xf32>
    %cst_45 = arith.constant -0.462910056 : f32
    %189 = vector.broadcast %cst_45 : f32 to vector<8x32xf32>
    %190 = arith.mulf %189, %8 : vector<8x32xf32>
    %191 = arith.mulf %190, %19 : vector<8x32xf32>
    %192 = arith.addf %188, %191 : vector<8x32xf32>
    %cst_46 = arith.constant 0.534522474 : f32
    %193 = vector.broadcast %cst_46 : f32 to vector<8x32xf32>
    %194 = arith.mulf %193, %9 : vector<8x32xf32>
    %195 = arith.mulf %194, %16 : vector<8x32xf32>
    %196 = arith.addf %192, %195 : vector<8x32xf32>
    %cst_47 = arith.constant -0.462910056 : f32
    %197 = vector.broadcast %cst_47 : f32 to vector<8x32xf32>
    %198 = arith.mulf %197, %10 : vector<8x32xf32>
    %199 = arith.mulf %198, %17 : vector<8x32xf32>
    %200 = arith.addf %196, %199 : vector<8x32xf32>
    %cst_48 = arith.constant 1.000000e+00 : f32
    %201 = vector.broadcast %cst_48 : f32 to vector<8x32xf32>
    %202 = arith.mulf %201, %3 : vector<8x32xf32>
    %203 = arith.mulf %202, %17 : vector<8x32xf32>
    %204 = arith.addf %8, %203 : vector<8x32xf32>
    %cst_49 = arith.constant 0.707106769 : f32
    %205 = vector.broadcast %cst_49 : f32 to vector<8x32xf32>
    %206 = arith.mulf %205, %4 : vector<8x32xf32>
    %207 = arith.mulf %206, %14 : vector<8x32xf32>
    %208 = arith.addf %204, %207 : vector<8x32xf32>
    %cst_50 = arith.constant 0.707106769 : f32
    %209 = vector.broadcast %cst_50 : f32 to vector<8x32xf32>
    %210 = arith.mulf %209, %5 : vector<8x32xf32>
    %211 = arith.mulf %210, %13 : vector<8x32xf32>
    %212 = arith.addf %208, %211 : vector<8x32xf32>
    %cst_51 = arith.constant -0.462910056 : f32
    %213 = vector.broadcast %cst_51 : f32 to vector<8x32xf32>
    %214 = arith.mulf %213, %7 : vector<8x32xf32>
    %215 = arith.mulf %214, %19 : vector<8x32xf32>
    %216 = arith.addf %212, %215 : vector<8x32xf32>
    %cst_52 = arith.constant 1.000000e+00 : f32
    %217 = vector.broadcast %cst_52 : f32 to vector<8x32xf32>
    %218 = arith.mulf %217, %8 : vector<8x32xf32>
    %219 = arith.mulf %218, %12 : vector<8x32xf32>
    %220 = arith.addf %216, %219 : vector<8x32xf32>
    %cst_53 = arith.constant -0.267261237 : f32
    %221 = vector.broadcast %cst_53 : f32 to vector<8x32xf32>
    %222 = arith.mulf %221, %8 : vector<8x32xf32>
    %223 = arith.mulf %222, %18 : vector<8x32xf32>
    %224 = arith.addf %220, %223 : vector<8x32xf32>
    %cst_54 = arith.constant 0.462910056 : f32
    %225 = vector.broadcast %cst_54 : f32 to vector<8x32xf32>
    %226 = arith.mulf %225, %8 : vector<8x32xf32>
    %227 = arith.mulf %226, %20 : vector<8x32xf32>
    %228 = arith.addf %224, %227 : vector<8x32xf32>
    %cst_55 = arith.constant -0.267261237 : f32
    %229 = vector.broadcast %cst_55 : f32 to vector<8x32xf32>
    %230 = arith.mulf %229, %9 : vector<8x32xf32>
    %231 = arith.mulf %230, %17 : vector<8x32xf32>
    %232 = arith.addf %228, %231 : vector<8x32xf32>
    %cst_56 = arith.constant -0.462910056 : f32
    %233 = vector.broadcast %cst_56 : f32 to vector<8x32xf32>
    %234 = arith.mulf %233, %10 : vector<8x32xf32>
    %235 = arith.mulf %234, %16 : vector<8x32xf32>
    %236 = arith.addf %232, %235 : vector<8x32xf32>
    %cst_57 = arith.constant 0.462910056 : f32
    %237 = vector.broadcast %cst_57 : f32 to vector<8x32xf32>
    %238 = arith.mulf %237, %11 : vector<8x32xf32>
    %239 = arith.mulf %238, %17 : vector<8x32xf32>
    %240 = arith.addf %236, %239 : vector<8x32xf32>
    %cst_58 = arith.constant 1.000000e+00 : f32
    %241 = vector.broadcast %cst_58 : f32 to vector<8x32xf32>
    %242 = arith.mulf %241, %3 : vector<8x32xf32>
    %243 = arith.mulf %242, %18 : vector<8x32xf32>
    %244 = arith.addf %9, %243 : vector<8x32xf32>
    %cst_59 = arith.constant -0.408248305 : f32
    %245 = vector.broadcast %cst_59 : f32 to vector<8x32xf32>
    %246 = arith.mulf %245, %4 : vector<8x32xf32>
    %247 = arith.mulf %246, %13 : vector<8x32xf32>
    %248 = arith.addf %244, %247 : vector<8x32xf32>
    %cst_60 = arith.constant 0.816496611 : f32
    %249 = vector.broadcast %cst_60 : f32 to vector<8x32xf32>
    %250 = arith.mulf %249, %5 : vector<8x32xf32>
    %251 = arith.mulf %250, %14 : vector<8x32xf32>
    %252 = arith.addf %248, %251 : vector<8x32xf32>
    %cst_61 = arith.constant -0.408248305 : f32
    %253 = vector.broadcast %cst_61 : f32 to vector<8x32xf32>
    %254 = arith.mulf %253, %6 : vector<8x32xf32>
    %255 = arith.mulf %254, %15 : vector<8x32xf32>
    %256 = arith.addf %252, %255 : vector<8x32xf32>
    %cst_62 = arith.constant 0.534522474 : f32
    %257 = vector.broadcast %cst_62 : f32 to vector<8x32xf32>
    %258 = arith.mulf %257, %7 : vector<8x32xf32>
    %259 = arith.mulf %258, %16 : vector<8x32xf32>
    %260 = arith.addf %256, %259 : vector<8x32xf32>
    %cst_63 = arith.constant -0.267261237 : f32
    %261 = vector.broadcast %cst_63 : f32 to vector<8x32xf32>
    %262 = arith.mulf %261, %8 : vector<8x32xf32>
    %263 = arith.mulf %262, %17 : vector<8x32xf32>
    %264 = arith.addf %260, %263 : vector<8x32xf32>
    %cst_64 = arith.constant 1.000000e+00 : f32
    %265 = vector.broadcast %cst_64 : f32 to vector<8x32xf32>
    %266 = arith.mulf %265, %9 : vector<8x32xf32>
    %267 = arith.mulf %266, %12 : vector<8x32xf32>
    %268 = arith.addf %264, %267 : vector<8x32xf32>
    %cst_65 = arith.constant -0.534522474 : f32
    %269 = vector.broadcast %cst_65 : f32 to vector<8x32xf32>
    %270 = arith.mulf %269, %9 : vector<8x32xf32>
    %271 = arith.mulf %270, %18 : vector<8x32xf32>
    %272 = arith.addf %268, %271 : vector<8x32xf32>
    %cst_66 = arith.constant -0.267261237 : f32
    %273 = vector.broadcast %cst_66 : f32 to vector<8x32xf32>
    %274 = arith.mulf %273, %10 : vector<8x32xf32>
    %275 = arith.mulf %274, %19 : vector<8x32xf32>
    %276 = arith.addf %272, %275 : vector<8x32xf32>
    %cst_67 = arith.constant 0.534522474 : f32
    %277 = vector.broadcast %cst_67 : f32 to vector<8x32xf32>
    %278 = arith.mulf %277, %11 : vector<8x32xf32>
    %279 = arith.mulf %278, %20 : vector<8x32xf32>
    %280 = arith.addf %276, %279 : vector<8x32xf32>
    %cst_68 = arith.constant 1.000000e+00 : f32
    %281 = vector.broadcast %cst_68 : f32 to vector<8x32xf32>
    %282 = arith.mulf %281, %3 : vector<8x32xf32>
    %283 = arith.mulf %282, %19 : vector<8x32xf32>
    %284 = arith.addf %10, %283 : vector<8x32xf32>
    %cst_69 = arith.constant 0.707106769 : f32
    %285 = vector.broadcast %cst_69 : f32 to vector<8x32xf32>
    %286 = arith.mulf %285, %5 : vector<8x32xf32>
    %287 = arith.mulf %286, %15 : vector<8x32xf32>
    %288 = arith.addf %284, %287 : vector<8x32xf32>
    %cst_70 = arith.constant 0.707106769 : f32
    %289 = vector.broadcast %cst_70 : f32 to vector<8x32xf32>
    %290 = arith.mulf %289, %6 : vector<8x32xf32>
    %291 = arith.mulf %290, %14 : vector<8x32xf32>
    %292 = arith.addf %288, %291 : vector<8x32xf32>
    %cst_71 = arith.constant -0.462910056 : f32
    %293 = vector.broadcast %cst_71 : f32 to vector<8x32xf32>
    %294 = arith.mulf %293, %7 : vector<8x32xf32>
    %295 = arith.mulf %294, %17 : vector<8x32xf32>
    %296 = arith.addf %292, %295 : vector<8x32xf32>
    %cst_72 = arith.constant -0.462910056 : f32
    %297 = vector.broadcast %cst_72 : f32 to vector<8x32xf32>
    %298 = arith.mulf %297, %8 : vector<8x32xf32>
    %299 = arith.mulf %298, %16 : vector<8x32xf32>
    %300 = arith.addf %296, %299 : vector<8x32xf32>
    %cst_73 = arith.constant -0.267261237 : f32
    %301 = vector.broadcast %cst_73 : f32 to vector<8x32xf32>
    %302 = arith.mulf %301, %9 : vector<8x32xf32>
    %303 = arith.mulf %302, %19 : vector<8x32xf32>
    %304 = arith.addf %300, %303 : vector<8x32xf32>
    %cst_74 = arith.constant 1.000000e+00 : f32
    %305 = vector.broadcast %cst_74 : f32 to vector<8x32xf32>
    %306 = arith.mulf %305, %10 : vector<8x32xf32>
    %307 = arith.mulf %306, %12 : vector<8x32xf32>
    %308 = arith.addf %304, %307 : vector<8x32xf32>
    %cst_75 = arith.constant -0.267261237 : f32
    %309 = vector.broadcast %cst_75 : f32 to vector<8x32xf32>
    %310 = arith.mulf %309, %10 : vector<8x32xf32>
    %311 = arith.mulf %310, %18 : vector<8x32xf32>
    %312 = arith.addf %308, %311 : vector<8x32xf32>
    %cst_76 = arith.constant -0.462910056 : f32
    %313 = vector.broadcast %cst_76 : f32 to vector<8x32xf32>
    %314 = arith.mulf %313, %10 : vector<8x32xf32>
    %315 = arith.mulf %314, %20 : vector<8x32xf32>
    %316 = arith.addf %312, %315 : vector<8x32xf32>
    %cst_77 = arith.constant -0.462910056 : f32
    %317 = vector.broadcast %cst_77 : f32 to vector<8x32xf32>
    %318 = arith.mulf %317, %11 : vector<8x32xf32>
    %319 = arith.mulf %318, %19 : vector<8x32xf32>
    %320 = arith.addf %316, %319 : vector<8x32xf32>
    %cst_78 = arith.constant 1.000000e+00 : f32
    %321 = vector.broadcast %cst_78 : f32 to vector<8x32xf32>
    %322 = arith.mulf %321, %3 : vector<8x32xf32>
    %323 = arith.mulf %322, %20 : vector<8x32xf32>
    %324 = arith.addf %11, %323 : vector<8x32xf32>
    %cst_79 = arith.constant -0.707106769 : f32
    %325 = vector.broadcast %cst_79 : f32 to vector<8x32xf32>
    %326 = arith.mulf %325, %4 : vector<8x32xf32>
    %327 = arith.mulf %326, %13 : vector<8x32xf32>
    %328 = arith.addf %324, %327 : vector<8x32xf32>
    %cst_80 = arith.constant 0.707106769 : f32
    %329 = vector.broadcast %cst_80 : f32 to vector<8x32xf32>
    %330 = arith.mulf %329, %6 : vector<8x32xf32>
    %331 = arith.mulf %330, %15 : vector<8x32xf32>
    %332 = arith.addf %328, %331 : vector<8x32xf32>
    %cst_81 = arith.constant 0.462910056 : f32
    %333 = vector.broadcast %cst_81 : f32 to vector<8x32xf32>
    %334 = arith.mulf %333, %8 : vector<8x32xf32>
    %335 = arith.mulf %334, %17 : vector<8x32xf32>
    %336 = arith.addf %332, %335 : vector<8x32xf32>
    %cst_82 = arith.constant 0.534522474 : f32
    %337 = vector.broadcast %cst_82 : f32 to vector<8x32xf32>
    %338 = arith.mulf %337, %9 : vector<8x32xf32>
    %339 = arith.mulf %338, %20 : vector<8x32xf32>
    %340 = arith.addf %336, %339 : vector<8x32xf32>
    %cst_83 = arith.constant -0.462910056 : f32
    %341 = vector.broadcast %cst_83 : f32 to vector<8x32xf32>
    %342 = arith.mulf %341, %10 : vector<8x32xf32>
    %343 = arith.mulf %342, %19 : vector<8x32xf32>
    %344 = arith.addf %340, %343 : vector<8x32xf32>
    %cst_84 = arith.constant 1.000000e+00 : f32
    %345 = vector.broadcast %cst_84 : f32 to vector<8x32xf32>
    %346 = arith.mulf %345, %11 : vector<8x32xf32>
    %347 = arith.mulf %346, %12 : vector<8x32xf32>
    %348 = arith.addf %344, %347 : vector<8x32xf32>
    %cst_85 = arith.constant 0.534522474 : f32
    %349 = vector.broadcast %cst_85 : f32 to vector<8x32xf32>
    %350 = arith.mulf %349, %11 : vector<8x32xf32>
    %351 = arith.mulf %350, %18 : vector<8x32xf32>
    %352 = arith.addf %348, %351 : vector<8x32xf32>
    %cst_86 = arith.constant 0.000000e+00 : f32
    %353 = vector.broadcast %cst_86 : f32 to vector<8x96xf32>
    %354 = tpu.concatenate %56, %96, %128, %168, %200, %240, %280, %320, %352, %353 in 1 : vector<8x32xf32>, vector<8x32xf32>, vector<8x32xf32>, vector<8x32xf32>, vector<8x32xf32>, vector<8x32xf32>, vector<8x32xf32>, vector<8x32xf32>, vector<8x32xf32>, vector<8x96xf32> -> vector<8x384xf32>
    %c0_87 = arith.constant 0 : index
    %c0_88 = arith.constant 0 : index
    %355 = vector.load %arg4[%c0_87, %c0_88] : memref<384x384xf32, #tpu.memory_space<vmem>>, vector<384x384xf32>
    %cst_89 = arith.constant dense<0.000000e+00> : vector<8x384xf32>
    %356 = tpu.matmul %354, %355, %cst_89 {dimension_numbers = #tpu.dot_dimension_numbers<[1], [0], [0], [1], [0, 0, 1, 1], [], []>} : vector<8x384xf32>, vector<384x384xf32>, vector<8x384xf32> -> vector<8x384xf32>
    %357 = vector.extract_strided_slice %356 {offsets = [0, 0], sizes = [8, 32], strides = [1, 1]} : vector<8x384xf32> to vector<8x32xf32>
    %c0_90 = arith.constant 0 : index
    %c0_91 = arith.constant 0 : index
    %358 = vector.load %arg5[%c0_90, %c0_91] : memref<32x384xf32, #tpu.memory_space<vmem>>, vector<32x384xf32>
    %cst_92 = arith.constant dense<0.000000e+00> : vector<8x384xf32>
    %359 = tpu.matmul %357, %358, %cst_92 {dimension_numbers = #tpu.dot_dimension_numbers<[1], [0], [0], [1], [0, 0, 1, 1], [], []>} : vector<8x32xf32>, vector<32x384xf32>, vector<8x384xf32> -> vector<8x384xf32>
    %c0_93 = arith.constant 0 : index
    %c0_94 = arith.constant 0 : index
    %360 = vector.load %arg6[%c0_93, %c0_94] : memref<1x384xf32, #tpu.memory_space<vmem>>, vector<1x384xf32>
    %361 = vector.broadcast %360 : vector<1x384xf32> to vector<8x384xf32>
    %362 = arith.addf %359, %361 : vector<8x384xf32>
    %cst_95 = arith.constant 0.000000e+00 : f32
    %363 = vector.broadcast %cst_95 : f32 to vector<8x384xf32>
    %364 = arith.subf %363, %362 : vector<8x384xf32>
    %365 = math.exp %364 : vector<8x384xf32>
    %cst_96 = arith.constant 1.000000e+00 : f32
    %366 = vector.broadcast %cst_96 : f32 to vector<8x384xf32>
    %367 = arith.addf %366, %365 : vector<8x384xf32>
    %cst_97 = arith.constant 1.000000e+00 : f32
    %368 = vector.broadcast %cst_97 : f32 to vector<8x384xf32>
    %369 = arith.divf %368, %367 : vector<8x384xf32>
    %370 = arith.mulf %356, %369 : vector<8x384xf32>
    %c0_98 = arith.constant 0 : index
    %c0_99 = arith.constant 0 : index
    %371 = vector.load %arg7[%c0_98, %c0_99] : memref<384x384xf32, #tpu.memory_space<vmem>>, vector<384x384xf32>
    %cst_100 = arith.constant dense<0.000000e+00> : vector<8x384xf32>
    %372 = tpu.matmul %370, %371, %cst_100 {dimension_numbers = #tpu.dot_dimension_numbers<[1], [0], [0], [1], [0, 0, 1, 1], [], []>} : vector<8x384xf32>, vector<384x384xf32>, vector<8x384xf32> -> vector<8x384xf32>
    %c0_101 = arith.constant 0 : index
    %c0_102 = arith.constant 0 : index
    %373 = vector.load %arg1[%c0_101, %c0_102] : memref<8x384xf32, #tpu.memory_space<vmem>>, vector<8x384xf32>
    %374 = arith.addf %373, %372 : vector<8x384xf32>
    %c0_103 = arith.constant 0 : index
    %c0_104 = arith.constant 0 : index
    %375 = vector.load %arg8[%c0_103, %c0_104] : memref<8x384xf32, #tpu.memory_space<vmem>>, vector<8x384xf32>
    tpu.vector_store %arg8[%c0_103, %c0_104], %374 {strides = array<i32>} : memref<8x384xf32, #tpu.memory_space<vmem>>, vector<8x384xf32>,
    return
  }
  func.func @transform_0(%arg0: i32) -> (i32, i32) {
    %c0_i32 = arith.constant 0 : i32
    %c0_i32_0 = arith.constant 0 : i32
    return %arg0, %c0_i32 : i32, i32
  }
  func.func @transform_1(%arg0: i32) -> (i32, i32) {
    %c0_i32 = arith.constant 0 : i32
    %c0_i32_0 = arith.constant 0 : i32
    return %arg0, %c0_i32 : i32, i32
  }
  func.func @transform_2(%arg0: i32) -> (i32, i32) {
    %c0_i32 = arith.constant 0 : i32
    %c0_i32_0 = arith.constant 0 : i32
    %c0_i32_1 = arith.constant 0 : i32
    return %c0_i32, %c0_i32_0 : i32, i32
  }
  func.func @transform_3(%arg0: i32) -> (i32, i32) {
    %c0_i32 = arith.constant 0 : i32
    %c0_i32_0 = arith.constant 0 : i32
    %c0_i32_1 = arith.constant 0 : i32
    return %c0_i32, %c0_i32_0 : i32, i32
  }
  func.func @transform_4(%arg0: i32) -> (i32, i32) {
    %c0_i32 = arith.constant 0 : i32
    %c0_i32_0 = arith.constant 0 : i32
    %c0_i32_1 = arith.constant 0 : i32
    return %c0_i32, %c0_i32_0 : i32, i32
  }
  func.func @transform_5(%arg0: i32) -> (i32, i32) {
    %c0_i32 = arith.constant 0 : i32
    %c0_i32_0 = arith.constant 0 : i32
    %c0_i32_1 = arith.constant 0 : i32
    return %c0_i32, %c0_i32_0 : i32, i32
  }
  func.func @transform_6(%arg0: i32) -> (i32, i32) {
    %c0_i32 = arith.constant 0 : i32
    %c0_i32_0 = arith.constant 0 : i32
    %c0_i32_1 = arith.constant 0 : i32
    return %c0_i32, %c0_i32_0 : i32, i32
  }
  func.func @transform_7(%arg0: i32) -> (i32, i32) {
    %c0_i32 = arith.constant 0 : i32
    %c0_i32_0 = arith.constant 0 : i32
    return %arg0, %c0_i32 : i32, i32
  }
}

module attributes {stable_mosaic.version = 11 : i64} {
  func.func @_so3_conv_kernel(%arg0: i32, %arg1: i32, %arg2: memref<56x32xf32, #tpu.memory_space<vmem>>, %arg3: memref<56x384xf32, #tpu.memory_space<vmem>>, %arg4: memref<1x56xi32, #tpu.memory_space<vmem>>, %arg5: memref<32x2304xf32, #tpu.memory_space<vmem>>, %arg6: memref<32x384xf32, #tpu.memory_space<vmem>>, %arg7: memref<1x384xf32, #tpu.memory_space<vmem>>, %arg8: memref<8x384xf32, #tpu.memory_space<vmem>>) attributes {dimension_semantics = [#tpu.dimension_semantics<parallel>, #tpu.dimension_semantics<arbitrary>], iteration_bounds = array<i64: 1, 1>, scalar_prefetch = 0 : i64, scratch_operands = 0 : i64, tpu.core_type = #tpu.core_type<tc>, window_params = [{transform_indices = @transform_0, window_bounds = array<i64: 56, 32>}, {transform_indices = @transform_1, window_bounds = array<i64: 56, 384>}, {transform_indices = @transform_2, window_bounds = array<i64: 1, 56>}, {pipeline_mode = #tpu.pipeline_mode<synchronous>, transform_indices = @transform_3, window_bounds = array<i64: 32, 2304>}, {pipeline_mode = #tpu.pipeline_mode<synchronous>, transform_indices = @transform_4, window_bounds = array<i64: 32, 384>}, {pipeline_mode = #tpu.pipeline_mode<synchronous>, transform_indices = @transform_5, window_bounds = array<i64: 1, 384>}, {transform_indices = @transform_6, window_bounds = array<i64: 8, 384>}]} {
    %c0_i32 = arith.constant 0 : i32
    %0 = arith.cmpi eq, %arg1, %c0_i32 : i32
    %1 = arith.extui %0 : i1 to i32
    %c0_i32_0 = arith.constant 0 : i32
    %2 = arith.cmpi ne, %1, %c0_i32_0 : i32
    scf.if %2 {
      %cst_19 = arith.constant 0.000000e+00 : f32
      %302 = vector.broadcast %cst_19 : f32 to vector<8x384xf32>
      %c0_20 = arith.constant 0 : index
      %c0_21 = arith.constant 0 : index
      %303 = vector.load %arg8[%c0_20, %c0_21] : memref<8x384xf32, #tpu.memory_space<vmem>>, vector<8x384xf32>
      tpu.vector_store %arg8[%c0_20, %c0_21], %302 {strides = array<i32>} : memref<8x384xf32, #tpu.memory_space<vmem>>, vector<8x384xf32>,
    } else {
    }
    %c0 = arith.constant 0 : index
    %c0_1 = arith.constant 0 : index
    %3 = vector.load %arg2[%c0, %c0_1] : memref<56x32xf32, #tpu.memory_space<vmem>>, vector<56x32xf32>
    %c0_2 = arith.constant 0 : index
    %c0_3 = arith.constant 0 : index
    %4 = vector.load %arg6[%c0_2, %c0_3] : memref<32x384xf32, #tpu.memory_space<vmem>>, vector<32x384xf32>
    %cst = arith.constant dense<0.000000e+00> : vector<56x384xf32>
    %5 = tpu.matmul %3, %4, %cst {dimension_numbers = #tpu.dot_dimension_numbers<[1], [0], [0], [1], [0, 0, 1, 1], [], []>} : vector<56x32xf32>, vector<32x384xf32>, vector<56x384xf32> -> vector<56x384xf32>
    %c0_4 = arith.constant 0 : index
    %c0_5 = arith.constant 0 : index
    %6 = vector.load %arg7[%c0_4, %c0_5] : memref<1x384xf32, #tpu.memory_space<vmem>>, vector<1x384xf32>
    %7 = vector.broadcast %6 : vector<1x384xf32> to vector<56x384xf32>
    %8 = arith.addf %5, %7 : vector<56x384xf32>
    %c0_6 = arith.constant 0 : index
    %c0_7 = arith.constant 0 : index
    %9 = vector.load %arg5[%c0_6, %c0_7] : memref<32x2304xf32, #tpu.memory_space<vmem>>, vector<32x2304xf32>
    %cst_8 = arith.constant dense<0.000000e+00> : vector<56x2304xf32>
    %10 = tpu.matmul %3, %9, %cst_8 {dimension_numbers = #tpu.dot_dimension_numbers<[1], [0], [0], [1], [0, 0, 1, 1], [], []>} : vector<56x32xf32>, vector<32x2304xf32>, vector<56x2304xf32> -> vector<56x2304xf32>
    %c0_9 = arith.constant 0 : index
    %c0_10 = arith.constant 0 : index
    %11 = vector.load %arg3[%c0_9, %c0_10] : memref<56x384xf32, #tpu.memory_space<vmem>>, vector<56x384xf32>
    %12 = vector.extract_strided_slice %10 {offsets = [0, 0], sizes = [56, 32], strides = [1, 1]} : vector<56x2304xf32> to vector<56x32xf32>
    %13 = vector.extract_strided_slice %11 {offsets = [0, 0], sizes = [56, 32], strides = [1, 1]} : vector<56x384xf32> to vector<56x32xf32>
    %14 = arith.mulf %12, %13 : vector<56x32xf32>
    %15 = vector.extract_strided_slice %10 {offsets = [0, 32], sizes = [56, 32], strides = [1, 1]} : vector<56x2304xf32> to vector<56x32xf32>
    %16 = vector.extract_strided_slice %11 {offsets = [0, 32], sizes = [56, 32], strides = [1, 1]} : vector<56x384xf32> to vector<56x32xf32>
    %17 = arith.mulf %15, %16 : vector<56x32xf32>
    %18 = arith.addf %14, %17 : vector<56x32xf32>
    %19 = vector.extract_strided_slice %10 {offsets = [0, 64], sizes = [56, 32], strides = [1, 1]} : vector<56x2304xf32> to vector<56x32xf32>
    %20 = vector.extract_strided_slice %11 {offsets = [0, 64], sizes = [56, 32], strides = [1, 1]} : vector<56x384xf32> to vector<56x32xf32>
    %21 = arith.mulf %19, %20 : vector<56x32xf32>
    %22 = arith.addf %18, %21 : vector<56x32xf32>
    %23 = vector.extract_strided_slice %10 {offsets = [0, 96], sizes = [56, 32], strides = [1, 1]} : vector<56x2304xf32> to vector<56x32xf32>
    %24 = vector.extract_strided_slice %11 {offsets = [0, 96], sizes = [56, 32], strides = [1, 1]} : vector<56x384xf32> to vector<56x32xf32>
    %25 = arith.mulf %23, %24 : vector<56x32xf32>
    %26 = arith.addf %22, %25 : vector<56x32xf32>
    %27 = vector.extract_strided_slice %10 {offsets = [0, 128], sizes = [56, 32], strides = [1, 1]} : vector<56x2304xf32> to vector<56x32xf32>
    %28 = vector.extract_strided_slice %11 {offsets = [0, 128], sizes = [56, 32], strides = [1, 1]} : vector<56x384xf32> to vector<56x32xf32>
    %29 = arith.mulf %27, %28 : vector<56x32xf32>
    %30 = arith.addf %26, %29 : vector<56x32xf32>
    %31 = vector.extract_strided_slice %10 {offsets = [0, 160], sizes = [56, 32], strides = [1, 1]} : vector<56x2304xf32> to vector<56x32xf32>
    %32 = vector.extract_strided_slice %11 {offsets = [0, 160], sizes = [56, 32], strides = [1, 1]} : vector<56x384xf32> to vector<56x32xf32>
    %33 = arith.mulf %31, %32 : vector<56x32xf32>
    %34 = arith.addf %30, %33 : vector<56x32xf32>
    %35 = vector.extract_strided_slice %10 {offsets = [0, 192], sizes = [56, 32], strides = [1, 1]} : vector<56x2304xf32> to vector<56x32xf32>
    %36 = vector.extract_strided_slice %11 {offsets = [0, 192], sizes = [56, 32], strides = [1, 1]} : vector<56x384xf32> to vector<56x32xf32>
    %37 = arith.mulf %35, %36 : vector<56x32xf32>
    %38 = arith.addf %34, %37 : vector<56x32xf32>
    %39 = vector.extract_strided_slice %10 {offsets = [0, 224], sizes = [56, 32], strides = [1, 1]} : vector<56x2304xf32> to vector<56x32xf32>
    %40 = vector.extract_strided_slice %11 {offsets = [0, 224], sizes = [56, 32], strides = [1, 1]} : vector<56x384xf32> to vector<56x32xf32>
    %41 = arith.mulf %39, %40 : vector<56x32xf32>
    %42 = arith.addf %38, %41 : vector<56x32xf32>
    %43 = vector.extract_strided_slice %10 {offsets = [0, 256], sizes = [56, 32], strides = [1, 1]} : vector<56x2304xf32> to vector<56x32xf32>
    %44 = vector.extract_strided_slice %11 {offsets = [0, 256], sizes = [56, 32], strides = [1, 1]} : vector<56x384xf32> to vector<56x32xf32>
    %45 = arith.mulf %43, %44 : vector<56x32xf32>
    %46 = arith.addf %42, %45 : vector<56x32xf32>
    %47 = vector.extract_strided_slice %10 {offsets = [0, 288], sizes = [56, 32], strides = [1, 1]} : vector<56x2304xf32> to vector<56x32xf32>
    %48 = vector.extract_strided_slice %11 {offsets = [0, 0], sizes = [56, 32], strides = [1, 1]} : vector<56x384xf32> to vector<56x32xf32>
    %49 = arith.mulf %47, %48 : vector<56x32xf32>
    %50 = vector.extract_strided_slice %10 {offsets = [0, 320], sizes = [56, 32], strides = [1, 1]} : vector<56x2304xf32> to vector<56x32xf32>
    %51 = vector.extract_strided_slice %11 {offsets = [0, 32], sizes = [56, 32], strides = [1, 1]} : vector<56x384xf32> to vector<56x32xf32>
    %52 = arith.mulf %50, %51 : vector<56x32xf32>
    %53 = arith.addf %49, %52 : vector<56x32xf32>
    %54 = vector.extract_strided_slice %10 {offsets = [0, 352], sizes = [56, 32], strides = [1, 1]} : vector<56x2304xf32> to vector<56x32xf32>
    %55 = vector.extract_strided_slice %11 {offsets = [0, 64], sizes = [56, 32], strides = [1, 1]} : vector<56x384xf32> to vector<56x32xf32>
    %56 = arith.mulf %54, %55 : vector<56x32xf32>
    %57 = arith.addf %53, %56 : vector<56x32xf32>
    %58 = vector.extract_strided_slice %10 {offsets = [0, 384], sizes = [56, 32], strides = [1, 1]} : vector<56x2304xf32> to vector<56x32xf32>
    %59 = vector.extract_strided_slice %11 {offsets = [0, 96], sizes = [56, 32], strides = [1, 1]} : vector<56x384xf32> to vector<56x32xf32>
    %60 = arith.mulf %58, %59 : vector<56x32xf32>
    %61 = arith.addf %57, %60 : vector<56x32xf32>
    %62 = vector.extract_strided_slice %10 {offsets = [0, 416], sizes = [56, 32], strides = [1, 1]} : vector<56x2304xf32> to vector<56x32xf32>
    %63 = vector.extract_strided_slice %11 {offsets = [0, 128], sizes = [56, 32], strides = [1, 1]} : vector<56x384xf32> to vector<56x32xf32>
    %64 = arith.mulf %62, %63 : vector<56x32xf32>
    %65 = arith.addf %61, %64 : vector<56x32xf32>
    %66 = vector.extract_strided_slice %10 {offsets = [0, 448], sizes = [56, 32], strides = [1, 1]} : vector<56x2304xf32> to vector<56x32xf32>
    %67 = vector.extract_strided_slice %11 {offsets = [0, 160], sizes = [56, 32], strides = [1, 1]} : vector<56x384xf32> to vector<56x32xf32>
    %68 = arith.mulf %66, %67 : vector<56x32xf32>
    %69 = arith.addf %65, %68 : vector<56x32xf32>
    %70 = vector.extract_strided_slice %10 {offsets = [0, 480], sizes = [56, 32], strides = [1, 1]} : vector<56x2304xf32> to vector<56x32xf32>
    %71 = vector.extract_strided_slice %11 {offsets = [0, 192], sizes = [56, 32], strides = [1, 1]} : vector<56x384xf32> to vector<56x32xf32>
    %72 = arith.mulf %70, %71 : vector<56x32xf32>
    %73 = arith.addf %69, %72 : vector<56x32xf32>
    %74 = vector.extract_strided_slice %10 {offsets = [0, 512], sizes = [56, 32], strides = [1, 1]} : vector<56x2304xf32> to vector<56x32xf32>
    %75 = vector.extract_strided_slice %11 {offsets = [0, 256], sizes = [56, 32], strides = [1, 1]} : vector<56x384xf32> to vector<56x32xf32>
    %76 = arith.mulf %74, %75 : vector<56x32xf32>
    %77 = arith.addf %73, %76 : vector<56x32xf32>
    %78 = vector.extract_strided_slice %10 {offsets = [0, 544], sizes = [56, 32], strides = [1, 1]} : vector<56x2304xf32> to vector<56x32xf32>
    %79 = vector.extract_strided_slice %11 {offsets = [0, 0], sizes = [56, 32], strides = [1, 1]} : vector<56x384xf32> to vector<56x32xf32>
    %80 = arith.mulf %78, %79 : vector<56x32xf32>
    %81 = vector.extract_strided_slice %10 {offsets = [0, 576], sizes = [56, 32], strides = [1, 1]} : vector<56x2304xf32> to vector<56x32xf32>
    %82 = vector.extract_strided_slice %11 {offsets = [0, 32], sizes = [56, 32], strides = [1, 1]} : vector<56x384xf32> to vector<56x32xf32>
    %83 = arith.mulf %81, %82 : vector<56x32xf32>
    %84 = arith.addf %80, %83 : vector<56x32xf32>
    %85 = vector.extract_strided_slice %10 {offsets = [0, 608], sizes = [56, 32], strides = [1, 1]} : vector<56x2304xf32> to vector<56x32xf32>
    %86 = vector.extract_strided_slice %11 {offsets = [0, 64], sizes = [56, 32], strides = [1, 1]} : vector<56x384xf32> to vector<56x32xf32>
    %87 = arith.mulf %85, %86 : vector<56x32xf32>
    %88 = arith.addf %84, %87 : vector<56x32xf32>
    %89 = vector.extract_strided_slice %10 {offsets = [0, 640], sizes = [56, 32], strides = [1, 1]} : vector<56x2304xf32> to vector<56x32xf32>
    %90 = vector.extract_strided_slice %11 {offsets = [0, 96], sizes = [56, 32], strides = [1, 1]} : vector<56x384xf32> to vector<56x32xf32>
    %91 = arith.mulf %89, %90 : vector<56x32xf32>
    %92 = arith.addf %88, %91 : vector<56x32xf32>
    %93 = vector.extract_strided_slice %10 {offsets = [0, 672], sizes = [56, 32], strides = [1, 1]} : vector<56x2304xf32> to vector<56x32xf32>
    %94 = vector.extract_strided_slice %11 {offsets = [0, 160], sizes = [56, 32], strides = [1, 1]} : vector<56x384xf32> to vector<56x32xf32>
    %95 = arith.mulf %93, %94 : vector<56x32xf32>
    %96 = arith.addf %92, %95 : vector<56x32xf32>
    %97 = vector.extract_strided_slice %10 {offsets = [0, 704], sizes = [56, 32], strides = [1, 1]} : vector<56x2304xf32> to vector<56x32xf32>
    %98 = vector.extract_strided_slice %11 {offsets = [0, 192], sizes = [56, 32], strides = [1, 1]} : vector<56x384xf32> to vector<56x32xf32>
    %99 = arith.mulf %97, %98 : vector<56x32xf32>
    %100 = arith.addf %96, %99 : vector<56x32xf32>
    %101 = vector.extract_strided_slice %10 {offsets = [0, 736], sizes = [56, 32], strides = [1, 1]} : vector<56x2304xf32> to vector<56x32xf32>
    %102 = vector.extract_strided_slice %11 {offsets = [0, 224], sizes = [56, 32], strides = [1, 1]} : vector<56x384xf32> to vector<56x32xf32>
    %103 = arith.mulf %101, %102 : vector<56x32xf32>
    %104 = arith.addf %100, %103 : vector<56x32xf32>
    %105 = vector.extract_strided_slice %10 {offsets = [0, 768], sizes = [56, 32], strides = [1, 1]} : vector<56x2304xf32> to vector<56x32xf32>
    %106 = vector.extract_strided_slice %11 {offsets = [0, 0], sizes = [56, 32], strides = [1, 1]} : vector<56x384xf32> to vector<56x32xf32>
    %107 = arith.mulf %105, %106 : vector<56x32xf32>
    %108 = vector.extract_strided_slice %10 {offsets = [0, 800], sizes = [56, 32], strides = [1, 1]} : vector<56x2304xf32> to vector<56x32xf32>
    %109 = vector.extract_strided_slice %11 {offsets = [0, 32], sizes = [56, 32], strides = [1, 1]} : vector<56x384xf32> to vector<56x32xf32>
    %110 = arith.mulf %108, %109 : vector<56x32xf32>
    %111 = arith.addf %107, %110 : vector<56x32xf32>
    %112 = vector.extract_strided_slice %10 {offsets = [0, 832], sizes = [56, 32], strides = [1, 1]} : vector<56x2304xf32> to vector<56x32xf32>
    %113 = vector.extract_strided_slice %11 {offsets = [0, 64], sizes = [56, 32], strides = [1, 1]} : vector<56x384xf32> to vector<56x32xf32>
    %114 = arith.mulf %112, %113 : vector<56x32xf32>
    %115 = arith.addf %111, %114 : vector<56x32xf32>
    %116 = vector.extract_strided_slice %10 {offsets = [0, 864], sizes = [56, 32], strides = [1, 1]} : vector<56x2304xf32> to vector<56x32xf32>
    %117 = vector.extract_strided_slice %11 {offsets = [0, 96], sizes = [56, 32], strides = [1, 1]} : vector<56x384xf32> to vector<56x32xf32>
    %118 = arith.mulf %116, %117 : vector<56x32xf32>
    %119 = arith.addf %115, %118 : vector<56x32xf32>
    %120 = vector.extract_strided_slice %10 {offsets = [0, 896], sizes = [56, 32], strides = [1, 1]} : vector<56x2304xf32> to vector<56x32xf32>
    %121 = vector.extract_strided_slice %11 {offsets = [0, 128], sizes = [56, 32], strides = [1, 1]} : vector<56x384xf32> to vector<56x32xf32>
    %122 = arith.mulf %120, %121 : vector<56x32xf32>
    %123 = arith.addf %119, %122 : vector<56x32xf32>
    %124 = vector.extract_strided_slice %10 {offsets = [0, 928], sizes = [56, 32], strides = [1, 1]} : vector<56x2304xf32> to vector<56x32xf32>
    %125 = vector.extract_strided_slice %11 {offsets = [0, 192], sizes = [56, 32], strides = [1, 1]} : vector<56x384xf32> to vector<56x32xf32>
    %126 = arith.mulf %124, %125 : vector<56x32xf32>
    %127 = arith.addf %123, %126 : vector<56x32xf32>
    %128 = vector.extract_strided_slice %10 {offsets = [0, 960], sizes = [56, 32], strides = [1, 1]} : vector<56x2304xf32> to vector<56x32xf32>
    %129 = vector.extract_strided_slice %11 {offsets = [0, 224], sizes = [56, 32], strides = [1, 1]} : vector<56x384xf32> to vector<56x32xf32>
    %130 = arith.mulf %128, %129 : vector<56x32xf32>
    %131 = arith.addf %127, %130 : vector<56x32xf32>
    %132 = vector.extract_strided_slice %10 {offsets = [0, 992], sizes = [56, 32], strides = [1, 1]} : vector<56x2304xf32> to vector<56x32xf32>
    %133 = vector.extract_strided_slice %11 {offsets = [0, 256], sizes = [56, 32], strides = [1, 1]} : vector<56x384xf32> to vector<56x32xf32>
    %134 = arith.mulf %132, %133 : vector<56x32xf32>
    %135 = arith.addf %131, %134 : vector<56x32xf32>
    %136 = vector.extract_strided_slice %10 {offsets = [0, 1024], sizes = [56, 32], strides = [1, 1]} : vector<56x2304xf32> to vector<56x32xf32>
    %137 = vector.extract_strided_slice %11 {offsets = [0, 0], sizes = [56, 32], strides = [1, 1]} : vector<56x384xf32> to vector<56x32xf32>
    %138 = arith.mulf %136, %137 : vector<56x32xf32>
    %139 = vector.extract_strided_slice %10 {offsets = [0, 1056], sizes = [56, 32], strides = [1, 1]} : vector<56x2304xf32> to vector<56x32xf32>
    %140 = vector.extract_strided_slice %11 {offsets = [0, 32], sizes = [56, 32], strides = [1, 1]} : vector<56x384xf32> to vector<56x32xf32>
    %141 = arith.mulf %139, %140 : vector<56x32xf32>
    %142 = arith.addf %138, %141 : vector<56x32xf32>
    %143 = vector.extract_strided_slice %10 {offsets = [0, 1088], sizes = [56, 32], strides = [1, 1]} : vector<56x2304xf32> to vector<56x32xf32>
    %144 = vector.extract_strided_slice %11 {offsets = [0, 96], sizes = [56, 32], strides = [1, 1]} : vector<56x384xf32> to vector<56x32xf32>
    %145 = arith.mulf %143, %144 : vector<56x32xf32>
    %146 = arith.addf %142, %145 : vector<56x32xf32>
    %147 = vector.extract_strided_slice %10 {offsets = [0, 1120], sizes = [56, 32], strides = [1, 1]} : vector<56x2304xf32> to vector<56x32xf32>
    %148 = vector.extract_strided_slice %11 {offsets = [0, 128], sizes = [56, 32], strides = [1, 1]} : vector<56x384xf32> to vector<56x32xf32>
    %149 = arith.mulf %147, %148 : vector<56x32xf32>
    %150 = arith.addf %146, %149 : vector<56x32xf32>
    %151 = vector.extract_strided_slice %10 {offsets = [0, 1152], sizes = [56, 32], strides = [1, 1]} : vector<56x2304xf32> to vector<56x32xf32>
    %152 = vector.extract_strided_slice %11 {offsets = [0, 160], sizes = [56, 32], strides = [1, 1]} : vector<56x384xf32> to vector<56x32xf32>
    %153 = arith.mulf %151, %152 : vector<56x32xf32>
    %154 = arith.addf %150, %153 : vector<56x32xf32>
    %155 = vector.extract_strided_slice %10 {offsets = [0, 1184], sizes = [56, 32], strides = [1, 1]} : vector<56x2304xf32> to vector<56x32xf32>
    %156 = vector.extract_strided_slice %11 {offsets = [0, 192], sizes = [56, 32], strides = [1, 1]} : vector<56x384xf32> to vector<56x32xf32>
    %157 = arith.mulf %155, %156 : vector<56x32xf32>
    %158 = arith.addf %154, %157 : vector<56x32xf32>
    %159 = vector.extract_strided_slice %10 {offsets = [0, 1216], sizes = [56, 32], strides = [1, 1]} : vector<56x2304xf32> to vector<56x32xf32>
    %160 = vector.extract_strided_slice %11 {offsets = [0, 224], sizes = [56, 32], strides = [1, 1]} : vector<56x384xf32> to vector<56x32xf32>
    %161 = arith.mulf %159, %160 : vector<56x32xf32>
    %162 = arith.addf %158, %161 : vector<56x32xf32>
    %163 = vector.extract_strided_slice %10 {offsets = [0, 1248], sizes = [56, 32], strides = [1, 1]} : vector<56x2304xf32> to vector<56x32xf32>
    %164 = vector.extract_strided_slice %11 {offsets = [0, 0], sizes = [56, 32], strides = [1, 1]} : vector<56x384xf32> to vector<56x32xf32>
    %165 = arith.mulf %163, %164 : vector<56x32xf32>
    %166 = vector.extract_strided_slice %10 {offsets = [0, 1280], sizes = [56, 32], strides = [1, 1]} : vector<56x2304xf32> to vector<56x32xf32>
    %167 = vector.extract_strided_slice %11 {offsets = [0, 32], sizes = [56, 32], strides = [1, 1]} : vector<56x384xf32> to vector<56x32xf32>
    %168 = arith.mulf %166, %167 : vector<56x32xf32>
    %169 = arith.addf %165, %168 : vector<56x32xf32>
    %170 = vector.extract_strided_slice %10 {offsets = [0, 1312], sizes = [56, 32], strides = [1, 1]} : vector<56x2304xf32> to vector<56x32xf32>
    %171 = vector.extract_strided_slice %11 {offsets = [0, 64], sizes = [56, 32], strides = [1, 1]} : vector<56x384xf32> to vector<56x32xf32>
    %172 = arith.mulf %170, %171 : vector<56x32xf32>
    %173 = arith.addf %169, %172 : vector<56x32xf32>
    %174 = vector.extract_strided_slice %10 {offsets = [0, 1344], sizes = [56, 32], strides = [1, 1]} : vector<56x2304xf32> to vector<56x32xf32>
    %175 = vector.extract_strided_slice %11 {offsets = [0, 128], sizes = [56, 32], strides = [1, 1]} : vector<56x384xf32> to vector<56x32xf32>
    %176 = arith.mulf %174, %175 : vector<56x32xf32>
    %177 = arith.addf %173, %176 : vector<56x32xf32>
    %178 = vector.extract_strided_slice %10 {offsets = [0, 1376], sizes = [56, 32], strides = [1, 1]} : vector<56x2304xf32> to vector<56x32xf32>
    %179 = vector.extract_strided_slice %11 {offsets = [0, 160], sizes = [56, 32], strides = [1, 1]} : vector<56x384xf32> to vector<56x32xf32>
    %180 = arith.mulf %178, %179 : vector<56x32xf32>
    %181 = arith.addf %177, %180 : vector<56x32xf32>
    %182 = vector.extract_strided_slice %10 {offsets = [0, 1408], sizes = [56, 32], strides = [1, 1]} : vector<56x2304xf32> to vector<56x32xf32>
    %183 = vector.extract_strided_slice %11 {offsets = [0, 192], sizes = [56, 32], strides = [1, 1]} : vector<56x384xf32> to vector<56x32xf32>
    %184 = arith.mulf %182, %183 : vector<56x32xf32>
    %185 = arith.addf %181, %184 : vector<56x32xf32>
    %186 = vector.extract_strided_slice %10 {offsets = [0, 1440], sizes = [56, 32], strides = [1, 1]} : vector<56x2304xf32> to vector<56x32xf32>
    %187 = vector.extract_strided_slice %11 {offsets = [0, 224], sizes = [56, 32], strides = [1, 1]} : vector<56x384xf32> to vector<56x32xf32>
    %188 = arith.mulf %186, %187 : vector<56x32xf32>
    %189 = arith.addf %185, %188 : vector<56x32xf32>
    %190 = vector.extract_strided_slice %10 {offsets = [0, 1472], sizes = [56, 32], strides = [1, 1]} : vector<56x2304xf32> to vector<56x32xf32>
    %191 = vector.extract_strided_slice %11 {offsets = [0, 256], sizes = [56, 32], strides = [1, 1]} : vector<56x384xf32> to vector<56x32xf32>
    %192 = arith.mulf %190, %191 : vector<56x32xf32>
    %193 = arith.addf %189, %192 : vector<56x32xf32>
    %194 = vector.extract_strided_slice %10 {offsets = [0, 1504], sizes = [56, 32], strides = [1, 1]} : vector<56x2304xf32> to vector<56x32xf32>
    %195 = vector.extract_strided_slice %11 {offsets = [0, 0], sizes = [56, 32], strides = [1, 1]} : vector<56x384xf32> to vector<56x32xf32>
    %196 = arith.mulf %194, %195 : vector<56x32xf32>
    %197 = vector.extract_strided_slice %10 {offsets = [0, 1536], sizes = [56, 32], strides = [1, 1]} : vector<56x2304xf32> to vector<56x32xf32>
    %198 = vector.extract_strided_slice %11 {offsets = [0, 32], sizes = [56, 32], strides = [1, 1]} : vector<56x384xf32> to vector<56x32xf32>
    %199 = arith.mulf %197, %198 : vector<56x32xf32>
    %200 = arith.addf %196, %199 : vector<56x32xf32>
    %201 = vector.extract_strided_slice %10 {offsets = [0, 1568], sizes = [56, 32], strides = [1, 1]} : vector<56x2304xf32> to vector<56x32xf32>
    %202 = vector.extract_strided_slice %11 {offsets = [0, 64], sizes = [56, 32], strides = [1, 1]} : vector<56x384xf32> to vector<56x32xf32>
    %203 = arith.mulf %201, %202 : vector<56x32xf32>
    %204 = arith.addf %200, %203 : vector<56x32xf32>
    %205 = vector.extract_strided_slice %10 {offsets = [0, 1600], sizes = [56, 32], strides = [1, 1]} : vector<56x2304xf32> to vector<56x32xf32>
    %206 = vector.extract_strided_slice %11 {offsets = [0, 96], sizes = [56, 32], strides = [1, 1]} : vector<56x384xf32> to vector<56x32xf32>
    %207 = arith.mulf %205, %206 : vector<56x32xf32>
    %208 = arith.addf %204, %207 : vector<56x32xf32>
    %209 = vector.extract_strided_slice %10 {offsets = [0, 1632], sizes = [56, 32], strides = [1, 1]} : vector<56x2304xf32> to vector<56x32xf32>
    %210 = vector.extract_strided_slice %11 {offsets = [0, 128], sizes = [56, 32], strides = [1, 1]} : vector<56x384xf32> to vector<56x32xf32>
    %211 = arith.mulf %209, %210 : vector<56x32xf32>
    %212 = arith.addf %208, %211 : vector<56x32xf32>
    %213 = vector.extract_strided_slice %10 {offsets = [0, 1664], sizes = [56, 32], strides = [1, 1]} : vector<56x2304xf32> to vector<56x32xf32>
    %214 = vector.extract_strided_slice %11 {offsets = [0, 160], sizes = [56, 32], strides = [1, 1]} : vector<56x384xf32> to vector<56x32xf32>
    %215 = arith.mulf %213, %214 : vector<56x32xf32>
    %216 = arith.addf %212, %215 : vector<56x32xf32>
    %217 = vector.extract_strided_slice %10 {offsets = [0, 1696], sizes = [56, 32], strides = [1, 1]} : vector<56x2304xf32> to vector<56x32xf32>
    %218 = vector.extract_strided_slice %11 {offsets = [0, 192], sizes = [56, 32], strides = [1, 1]} : vector<56x384xf32> to vector<56x32xf32>
    %219 = arith.mulf %217, %218 : vector<56x32xf32>
    %220 = arith.addf %216, %219 : vector<56x32xf32>
    %221 = vector.extract_strided_slice %10 {offsets = [0, 1728], sizes = [56, 32], strides = [1, 1]} : vector<56x2304xf32> to vector<56x32xf32>
    %222 = vector.extract_strided_slice %11 {offsets = [0, 224], sizes = [56, 32], strides = [1, 1]} : vector<56x384xf32> to vector<56x32xf32>
    %223 = arith.mulf %221, %222 : vector<56x32xf32>
    %224 = arith.addf %220, %223 : vector<56x32xf32>
    %225 = vector.extract_strided_slice %10 {offsets = [0, 1760], sizes = [56, 32], strides = [1, 1]} : vector<56x2304xf32> to vector<56x32xf32>
    %226 = vector.extract_strided_slice %11 {offsets = [0, 256], sizes = [56, 32], strides = [1, 1]} : vector<56x384xf32> to vector<56x32xf32>
    %227 = arith.mulf %225, %226 : vector<56x32xf32>
    %228 = arith.addf %224, %227 : vector<56x32xf32>
    %229 = vector.extract_strided_slice %10 {offsets = [0, 1792], sizes = [56, 32], strides = [1, 1]} : vector<56x2304xf32> to vector<56x32xf32>
    %230 = vector.extract_strided_slice %11 {offsets = [0, 0], sizes = [56, 32], strides = [1, 1]} : vector<56x384xf32> to vector<56x32xf32>
    %231 = arith.mulf %229, %230 : vector<56x32xf32>
    %232 = vector.extract_strided_slice %10 {offsets = [0, 1824], sizes = [56, 32], strides = [1, 1]} : vector<56x2304xf32> to vector<56x32xf32>
    %233 = vector.extract_strided_slice %11 {offsets = [0, 64], sizes = [56, 32], strides = [1, 1]} : vector<56x384xf32> to vector<56x32xf32>
    %234 = arith.mulf %232, %233 : vector<56x32xf32>
    %235 = arith.addf %231, %234 : vector<56x32xf32>
    %236 = vector.extract_strided_slice %10 {offsets = [0, 1856], sizes = [56, 32], strides = [1, 1]} : vector<56x2304xf32> to vector<56x32xf32>
    %237 = vector.extract_strided_slice %11 {offsets = [0, 96], sizes = [56, 32], strides = [1, 1]} : vector<56x384xf32> to vector<56x32xf32>
    %238 = arith.mulf %236, %237 : vector<56x32xf32>
    %239 = arith.addf %235, %238 : vector<56x32xf32>
    %240 = vector.extract_strided_slice %10 {offsets = [0, 1888], sizes = [56, 32], strides = [1, 1]} : vector<56x2304xf32> to vector<56x32xf32>
    %241 = vector.extract_strided_slice %11 {offsets = [0, 128], sizes = [56, 32], strides = [1, 1]} : vector<56x384xf32> to vector<56x32xf32>
    %242 = arith.mulf %240, %241 : vector<56x32xf32>
    %243 = arith.addf %239, %242 : vector<56x32xf32>
    %244 = vector.extract_strided_slice %10 {offsets = [0, 1920], sizes = [56, 32], strides = [1, 1]} : vector<56x2304xf32> to vector<56x32xf32>
    %245 = vector.extract_strided_slice %11 {offsets = [0, 160], sizes = [56, 32], strides = [1, 1]} : vector<56x384xf32> to vector<56x32xf32>
    %246 = arith.mulf %244, %245 : vector<56x32xf32>
    %247 = arith.addf %243, %246 : vector<56x32xf32>
    %248 = vector.extract_strided_slice %10 {offsets = [0, 1952], sizes = [56, 32], strides = [1, 1]} : vector<56x2304xf32> to vector<56x32xf32>
    %249 = vector.extract_strided_slice %11 {offsets = [0, 192], sizes = [56, 32], strides = [1, 1]} : vector<56x384xf32> to vector<56x32xf32>
    %250 = arith.mulf %248, %249 : vector<56x32xf32>
    %251 = arith.addf %247, %250 : vector<56x32xf32>
    %252 = vector.extract_strided_slice %10 {offsets = [0, 1984], sizes = [56, 32], strides = [1, 1]} : vector<56x2304xf32> to vector<56x32xf32>
    %253 = vector.extract_strided_slice %11 {offsets = [0, 224], sizes = [56, 32], strides = [1, 1]} : vector<56x384xf32> to vector<56x32xf32>
    %254 = arith.mulf %252, %253 : vector<56x32xf32>
    %255 = arith.addf %251, %254 : vector<56x32xf32>
    %256 = vector.extract_strided_slice %10 {offsets = [0, 2016], sizes = [56, 32], strides = [1, 1]} : vector<56x2304xf32> to vector<56x32xf32>
    %257 = vector.extract_strided_slice %11 {offsets = [0, 256], sizes = [56, 32], strides = [1, 1]} : vector<56x384xf32> to vector<56x32xf32>
    %258 = arith.mulf %256, %257 : vector<56x32xf32>
    %259 = arith.addf %255, %258 : vector<56x32xf32>
    %260 = vector.extract_strided_slice %10 {offsets = [0, 2048], sizes = [56, 32], strides = [1, 1]} : vector<56x2304xf32> to vector<56x32xf32>
    %261 = vector.extract_strided_slice %11 {offsets = [0, 0], sizes = [56, 32], strides = [1, 1]} : vector<56x384xf32> to vector<56x32xf32>
    %262 = arith.mulf %260, %261 : vector<56x32xf32>
    %263 = vector.extract_strided_slice %10 {offsets = [0, 2080], sizes = [56, 32], strides = [1, 1]} : vector<56x2304xf32> to vector<56x32xf32>
    %264 = vector.extract_strided_slice %11 {offsets = [0, 32], sizes = [56, 32], strides = [1, 1]} : vector<56x384xf32> to vector<56x32xf32>
    %265 = arith.mulf %263, %264 : vector<56x32xf32>
    %266 = arith.addf %262, %265 : vector<56x32xf32>
    %267 = vector.extract_strided_slice %10 {offsets = [0, 2112], sizes = [56, 32], strides = [1, 1]} : vector<56x2304xf32> to vector<56x32xf32>
    %268 = vector.extract_strided_slice %11 {offsets = [0, 96], sizes = [56, 32], strides = [1, 1]} : vector<56x384xf32> to vector<56x32xf32>
    %269 = arith.mulf %267, %268 : vector<56x32xf32>
    %270 = arith.addf %266, %269 : vector<56x32xf32>
    %271 = vector.extract_strided_slice %10 {offsets = [0, 2144], sizes = [56, 32], strides = [1, 1]} : vector<56x2304xf32> to vector<56x32xf32>
    %272 = vector.extract_strided_slice %11 {offsets = [0, 160], sizes = [56, 32], strides = [1, 1]} : vector<56x384xf32> to vector<56x32xf32>
    %273 = arith.mulf %271, %272 : vector<56x32xf32>
    %274 = arith.addf %270, %273 : vector<56x32xf32>
    %275 = vector.extract_strided_slice %10 {offsets = [0, 2176], sizes = [56, 32], strides = [1, 1]} : vector<56x2304xf32> to vector<56x32xf32>
    %276 = vector.extract_strided_slice %11 {offsets = [0, 192], sizes = [56, 32], strides = [1, 1]} : vector<56x384xf32> to vector<56x32xf32>
    %277 = arith.mulf %275, %276 : vector<56x32xf32>
    %278 = arith.addf %274, %277 : vector<56x32xf32>
    %279 = vector.extract_strided_slice %10 {offsets = [0, 2208], sizes = [56, 32], strides = [1, 1]} : vector<56x2304xf32> to vector<56x32xf32>
    %280 = vector.extract_strided_slice %11 {offsets = [0, 224], sizes = [56, 32], strides = [1, 1]} : vector<56x384xf32> to vector<56x32xf32>
    %281 = arith.mulf %279, %280 : vector<56x32xf32>
    %282 = arith.addf %278, %281 : vector<56x32xf32>
    %283 = vector.extract_strided_slice %10 {offsets = [0, 2240], sizes = [56, 32], strides = [1, 1]} : vector<56x2304xf32> to vector<56x32xf32>
    %284 = vector.extract_strided_slice %11 {offsets = [0, 256], sizes = [56, 32], strides = [1, 1]} : vector<56x384xf32> to vector<56x32xf32>
    %285 = arith.mulf %283, %284 : vector<56x32xf32>
    %286 = arith.addf %282, %285 : vector<56x32xf32>
    %cst_11 = arith.constant 0.000000e+00 : f32
    %287 = vector.broadcast %cst_11 : f32 to vector<56x96xf32>
    %288 = tpu.concatenate %46, %77, %104, %135, %162, %193, %228, %259, %286, %287 in 1 : vector<56x32xf32>, vector<56x32xf32>, vector<56x32xf32>, vector<56x32xf32>, vector<56x32xf32>, vector<56x32xf32>, vector<56x32xf32>, vector<56x32xf32>, vector<56x32xf32>, vector<56x96xf32> -> vector<56x384xf32>
    %289 = arith.mulf %288, %8 : vector<56x384xf32>
    %290 = tpu.iota {dimensions = array<i32: 0>} : vector<8x56xi32>
    %c0_12 = arith.constant 0 : index
    %c0_13 = arith.constant 0 : index
    %291 = vector.load %arg4[%c0_12, %c0_13] : memref<1x56xi32, #tpu.memory_space<vmem>>, vector<1x56xi32>
    %292 = vector.broadcast %291 : vector<1x56xi32> to vector<8x56xi32>
    %293 = arith.cmpi eq, %290, %292 : vector<8x56xi32>
    %294 = arith.extui %293 : vector<8x56xi1> to vector<8x56xi32>
    %295 = arith.sitofp %294 : vector<8x56xi32> to vector<8x56xf32>
    %296 = arith.truncf %295 : vector<8x56xf32> to vector<8x56xbf16>
    %c0_14 = arith.constant 0 : index
    %c0_15 = arith.constant 0 : index
    %297 = vector.load %arg8[%c0_14, %c0_15] : memref<8x384xf32, #tpu.memory_space<vmem>>, vector<8x384xf32>
    %298 = arith.truncf %289 : vector<56x384xf32> to vector<56x384xbf16>
    %cst_16 = arith.constant dense<0.000000e+00> : vector<8x384xf32>
    %299 = tpu.matmul %296, %298, %cst_16 {dimension_numbers = #tpu.dot_dimension_numbers<[1], [0], [0], [1], [0, 0, 1, 1], [], []>} : vector<8x56xbf16>, vector<56x384xbf16>, vector<8x384xf32> -> vector<8x384xf32>
    %300 = arith.addf %297, %299 : vector<8x384xf32>
    %c0_17 = arith.constant 0 : index
    %c0_18 = arith.constant 0 : index
    %301 = vector.load %arg8[%c0_17, %c0_18] : memref<8x384xf32, #tpu.memory_space<vmem>>, vector<8x384xf32>
    tpu.vector_store %arg8[%c0_17, %c0_18], %300 {strides = array<i32>} : memref<8x384xf32, #tpu.memory_space<vmem>>, vector<8x384xf32>,
    return
  }
  func.func @transform_0(%arg0: i32, %arg1: i32) -> (i32, i32) {
    %c1_i32 = arith.constant 1 : i32
    %0 = arith.muli %arg0, %c1_i32 : i32
    %1 = arith.addi %0, %arg1 : i32
    %c0_i32 = arith.constant 0 : i32
    %c0_i32_0 = arith.constant 0 : i32
    return %1, %c0_i32 : i32, i32
  }
  func.func @transform_1(%arg0: i32, %arg1: i32) -> (i32, i32) {
    %c1_i32 = arith.constant 1 : i32
    %0 = arith.muli %arg0, %c1_i32 : i32
    %1 = arith.addi %0, %arg1 : i32
    %c0_i32 = arith.constant 0 : i32
    %c0_i32_0 = arith.constant 0 : i32
    return %1, %c0_i32 : i32, i32
  }
  func.func @transform_2(%arg0: i32, %arg1: i32) -> (i32, i32) {
    %c1_i32 = arith.constant 1 : i32
    %0 = arith.muli %arg0, %c1_i32 : i32
    %1 = arith.addi %0, %arg1 : i32
    %c0_i32 = arith.constant 0 : i32
    %c0_i32_0 = arith.constant 0 : i32
    return %c0_i32, %1 : i32, i32
  }
  func.func @transform_3(%arg0: i32, %arg1: i32) -> (i32, i32) {
    %c0_i32 = arith.constant 0 : i32
    %c0_i32_0 = arith.constant 0 : i32
    %c0_i32_1 = arith.constant 0 : i32
    return %c0_i32, %c0_i32_0 : i32, i32
  }
  func.func @transform_4(%arg0: i32, %arg1: i32) -> (i32, i32) {
    %c0_i32 = arith.constant 0 : i32
    %c0_i32_0 = arith.constant 0 : i32
    %c0_i32_1 = arith.constant 0 : i32
    return %c0_i32, %c0_i32_0 : i32, i32
  }
  func.func @transform_5(%arg0: i32, %arg1: i32) -> (i32, i32) {
    %c0_i32 = arith.constant 0 : i32
    %c0_i32_0 = arith.constant 0 : i32
    %c0_i32_1 = arith.constant 0 : i32
    return %c0_i32, %c0_i32_0 : i32, i32
  }
  func.func @transform_6(%arg0: i32, %arg1: i32) -> (i32, i32) {
    %c0_i32 = arith.constant 0 : i32
    %c0_i32_0 = arith.constant 0 : i32
    return %arg0, %c0_i32 : i32, i32
  }
}

</mosaic_0001>

<llo_original>
// kernel: so3net_forward.4
$region0: #{so3net_forward.4}
  #allocation0 [shape = 'u32[]', space=smem, size = 0x4, offset = 0x4, fixed_abs, tag = 'smem constant byte address 0x4 - core index']
  #allocation1 [shape = 'u32[144,128]{1,0:T(1,128)}', space=vmem, size = 0x12000, scoped, tag = 'internal scratch']
  %s0 = inlined_call_operand.vmem [shape: f32[56,32], index: 0, kind: input, shape index: {}]
  %s1 = inlined_call_operand.vmem [shape: f32[56,384], index: 1, kind: input, shape index: {}]
  %s2 = inlined_call_operand.hbm [shape: s32[1,56], index: 2, kind: input, shape index: {}]
  %s3 = inlined_call_operand.hbm [shape: f32[32,2304], index: 3, kind: input, shape index: {}]
  %s4 = inlined_call_operand.vmem [shape: f32[32,384], index: 4, kind: input, shape index: {}]
  %s5 = inlined_call_operand.vmem [shape: f32[1,384], index: 5, kind: input, shape index: {}]
  %s6 = inlined_call_operand.vmem [shape: f32[8,384], index: 6, kind: output, shape index: {}]
  %s7 = sld [smem:[#allocation0]]
  $region46: #{so3net_forward.4} parent=0
    _
  %s9 = ssub.s32 1, %s7
  %s10 = scalar_select 0, %s9, %s7
  $region1: #{so3net_forward.4} parent=0
    #allocation2 [shape = 'u8[512]{0}', space=vmem, size = 0x400, scoped, tag = 'input window, operand 2, single buffered']
    #allocation3 [shape = 's32[1]{0}', space=sflag, size = 0x4, scoped, tag = 'scoped memory for so3net_forward.4']
    #allocation4 [shape = 'u8[294912]{0}', space=vmem, size = 0x48000, scoped, tag = 'input window, operand 3, single buffered']
    #allocation5 [shape = 's32[1]{0}', space=sflag, size = 0x4, scoped, tag = 'scoped memory for so3net_forward.4']
    %11 = vsyncpa [#allocation3], 0
    %12 = vsyncpa [#allocation5], 0
    // Predicated region
    $region2: #{so3net_forward.4} parent=1 // pred_check
      _
    $region3: #{so3net_forward.4} parent=1 // pred_check_branch
      %14 = sbr.rel (0) target = $region5
    $region4: #{so3net_forward.4} parent=1 // pred_region
      %s15 = sadd.s32 0, 0
      %s16 = smul.u32 7, %s15
      %p17 = scmp.lt.s32.totalorder %s16, 6
      %s18 = scalar_select %p17, %s16, 6
      %s19 = smul.addr %s18, 8
      %s20 = scalar_lea.vmem %s0, %s19
      %s21 = sadd.s32 0, 0
      %s22 = smul.u32 7, %s21
    $region5: #{so3net_forward.4} parent=1 // pred_fallthru
      _
    // Predicated region
    $region6: #{so3net_forward.4} parent=1 // pred_check
      _
    $region7: #{so3net_forward.4} parent=1 // pred_check_branch
      %24 = sbr.rel (0) target = $region9
    $region8: #{so3net_forward.4} parent=1 // pred_region
      %s25 = sadd.s32 0, 0
      %s26 = smul.u32 7, %s25
      %p27 = scmp.lt.s32.totalorder %s26, 6
      %s28 = scalar_select %p27, %s26, 6
      %s29 = smul.addr %s28, 3
      %s30 = smul.addr %s29, 8
      %s31 = scalar_lea.vmem %s1, %s30
      %s32 = sadd.s32 0, 0
      %s33 = smul.u32 7, %s32
    $region9: #{so3net_forward.4} parent=1 // pred_fallthru
      _
    // Predicated region
    $region10: #{so3net_forward.4} parent=1 // pred_check
      _
    $region11: #{so3net_forward.4} parent=1 // pred_check_branch
      %35 = sbr.rel (0) target = $region13
    $region12: #{so3net_forward.4} parent=1 // pred_region
      %s36 = sadd.s32 0, 0
      %s38 = ssub.s32 16, 16
      %39 = vsyncadd [#allocation3], %s38
      %s40 = smul.addr %s36, 16
      %s41 = scalar_lea.hbm %s2, %s40
      %s43 = sshll.u32 [#allocation2], 4
      %s44 = int_to_ptr.vmem [resolvable:$true] %s43
      %46 = dma.hbm_to_vmem [thread:$0]  %s41, 16, %s44, [#allocation3]
    $region13: #{so3net_forward.4} parent=1 // pred_fallthru
      _
    // Predicated region
    $region14: #{so3net_forward.4} parent=1 // pred_check
      _
    $region15: #{so3net_forward.4} parent=1 // pred_check_branch
      %48 = sbr.rel (0) target = $region17
    $region16: #{so3net_forward.4} parent=1 // pred_region
      %s50 = ssub.s32 9216, 9216
      %51 = vsyncadd [#allocation5], %s50
      %s52 = sshll.u32 [#allocation4], 4
      %s53 = int_to_ptr.vmem [resolvable:$true] %s52
      %58 = dma.hbm_to_vmem [thread:$0]  %s3, 9216, %s53, [#allocation5], 2304, 2304, 144
    $region17: #{so3net_forward.4} parent=1 // pred_fallthru
      _
    // Predicated region
    $region18: #{so3net_forward.4} parent=1 // pred_check
      _
    $region19: #{so3net_forward.4} parent=1 // pred_check_branch
      %60 = sbr.rel (0) target = $region21
    $region20: #{so3net_forward.4} parent=1 // pred_region
      _
    $region21: #{so3net_forward.4} parent=1 // pred_fallthru
      _
    // Predicated region
    $region22: #{so3net_forward.4} parent=1 // pred_check
      _
    $region23: #{so3net_forward.4} parent=1 // pred_check_branch
      %62 = sbr.rel (0) target = $region25
    $region24: #{so3net_forward.4} parent=1 // pred_region
      _
    $region25: #{so3net_forward.4} parent=1 // pred_fallthru
      _
    // Predicated region
    $region26: #{so3net_forward.4} parent=1 // pred_check
      _
    $region27: #{so3net_forward.4} parent=1 // pred_check_branch
      %64 = sbr.rel (0) target = $region29
    $region28: #{so3net_forward.4} parent=1 // pred_region
      %65 = dma.done [#allocation3], 16
    $region29: #{so3net_forward.4} parent=1 // pred_fallthru
      _
    // Predicated region
    $region30: #{so3net_forward.4} parent=1 // pred_check
      _
    $region31: #{so3net_forward.4} parent=1 // pred_check_branch
      %67 = sbr.rel (0) target = $region33
    $region32: #{so3net_forward.4} parent=1 // pred_region
      %68 = dma.done [#allocation5], 9216
    $region33: #{so3net_forward.4} parent=1 // pred_fallthru
      _
    %s69 = sadd.s32 0, 0
    %s70 = smul.u32 7, %s69
    %p71 = scmp.lt.s32.totalorder %s70, 6
    %s72 = scalar_select %p71, %s70, 6
    %s73 = smul.addr %s72, 8
    %s74 = scalar_lea.vmem %s0, %s73
    %s75 = sadd.s32 0, 0
    %s76 = smul.u32 7, %s75
    %p77 = scmp.lt.s32.totalorder %s76, 6
    %s78 = scalar_select %p77, %s76, 6
    %s79 = smul.addr %s78, 3
    %s80 = smul.addr %s79, 8
    %s81 = scalar_lea.vmem %s1, %s80
    %s82 = sadd.s32 0, 0
    %s83 = smul.u32 7, %s82
    %p84 = scmp.lt.s32.totalorder %s83, 6
    %s85 = scalar_select %p84, %s83, 6
    %s86 = smul.addr %s85, 8
    %s87 = scalar_lea.vmem %s0, %s86
    %s88 = sadd.s32 0, 0
    %s89 = smul.u32 7, %s88
    %s90 = sadd.s32 0, 0
    %s91 = smul.u32 7, %s90
    %p92 = scmp.lt.s32.totalorder %s91, 6
    %s93 = scalar_select %p92, %s91, 6
    %s94 = smul.addr %s93, 3
    %s95 = smul.addr %s94, 8
    %s96 = scalar_lea.vmem %s1, %s95
    %s97 = sadd.s32 0, 0
    %s98 = smul.u32 7, %s97
    %s99 = sadd.s32 0, 0
    %p101 = scmp.eq.s32.totalorder 0, 0
    // Predicated region
    $region34: #{so3net_forward.4} parent=1 // pred_check
      %p102 = pneg %p101
    $region35: #{so3net_forward.4} parent=1 // pred_check_branch
      %104 = sbr.rel (%p102) target = $region37
    $region36: #{so3net_forward.4} parent=1 // pred_region
      %105 = vst [vmem:[%s6] sm:$0xff] 0.0
      %106 = vst [vmem:[%s6 + $0x8] sm:$0xff] 0.0
      %107 = vst [vmem:[%s6 + $0x10] sm:$0xff] 0.0
    $region37: #{so3net_forward.4} parent=1 // pred_fallthru
      _
    %v108 = vld [vmem:[%s87] sm:$0xff]
    %v109 = vld [vmem:[%s87 + $0x8] sm:$0xff]
    %v110 = vld [vmem:[%s87 + $0x10] sm:$0xff]
    %v111 = vld [vmem:[%s87 + $0x18] sm:$0xff]
    %v112 = vld [vmem:[%s87 + $0x20] sm:$0xff]
    %v113 = vld [vmem:[%s87 + $0x28] sm:$0xff]
    %v114 = vld [vmem:[%s87 + $0x30] sm:$0xff]
    %v115 = vld [vmem:[%s4] sm:$0xff]
    %v116 = vld [vmem:[%s4 + $0x8] sm:$0xff]
    %v117 = vld [vmem:[%s4 + $0x10] sm:$0xff]
    %v118 = vld [vmem:[%s4 + $0x18] sm:$0xff]
    %v119 = vld [vmem:[%s4 + $0x20] sm:$0xff]
    %v120 = vld [vmem:[%s4 + $0x28] sm:$0xff]
    %v121 = vld [vmem:[%s4 + $0x30] sm:$0xff]
    %v122 = vld [vmem:[%s4 + $0x38] sm:$0xff]
    %v123 = vld [vmem:[%s4 + $0x40] sm:$0xff]
    %v124 = vld [vmem:[%s4 + $0x48] sm:$0xff]
    %v125 = vld [vmem:[%s4 + $0x50] sm:$0xff]
    %v126 = vld [vmem:[%s4 + $0x58] sm:$0xff]
    %v127 = vld [vmem:[%s5] sm:$0x7]
    %v129 = vlaneseq
    %v130 = vshrl.u32 %v129, 7
    %v131 = vsub.s32 0, %v130
    %v132 = vrot.slane %v127, %v131
    %v133 = vlaneseq
    %v134 = vshrl.u32 %v133, 7
    %v135 = vsub.s32 1, %v134
    %v136 = vrot.slane %v127, %v135
    %v137 = vlaneseq
    %v138 = vshrl.u32 %v137, 7
    %v139 = vsub.s32 2, %v138
    %v140 = vrot.slane %v127, %v139
    %vm144 = vcmask 261120
    %v146 = vsel %vm144, %v108, 0
    %v149 = vsel %vm144, %v109, 0
    %v152 = vsel %vm144, %v110, 0
    %v155 = vsel %vm144, %v111, 0
    %v158 = vsel %vm144, %v112, 0
    %v161 = vsel %vm144, %v113, 0
    %v164 = vsel %vm144, %v114, 0
    %166 = vmatprep.subr.mxu0 %v116
    %167 = vmatpush1.msra.mxu0 %v115
    %168 = vmatprep.subr.mxu0 %v119
    %169 = vmatpush1.msra.mxu0 %v118
    %170 = vmatprep.subr.mxu0 %v122
    %171 = vmatpush1.msra.mxu0 %v121
    %172 = vmatprep.subr.mxu0 %v125
    %173 = vmatpush1.msra.mxu0 %v124
    %174 = vmatprep.subr.mxu0 0.0
    %175 = vmatpush1.msra.mxu0 0.0
    %176 = vmatprep.subr.mxu0 0.0
    %177 = vmatpush1.msra.mxu0 0.0
    %178 = vmatprep.subr.mxu0 0.0
    %179 = vmatpush1.msra.mxu0 0.0
    %180 = vmatprep.subr.mxu0 0.0
    %181 = vmatpush1.msra.mxu0 0.0
    %182 = vmatprep.subr.mxu0 0.0
    %183 = vmatpush1.msra.mxu0 0.0
    %184 = vmatprep.subr.mxu0 0.0
    %185 = vmatpush1.msra.mxu0 0.0
    %186 = vmatprep.subr.mxu0 0.0
    %187 = vmatpush1.msra.mxu0 0.0
    %188 = vmatprep.subr.mxu0 0.0
    %189 = vmatpush1.msra.mxu0 0.0
    %190 = vmatprep.subr.mxu0 0.0
    %191 = vmatpush1.msra.mxu0 0.0
    %192 = vmatprep.subr.mxu0 0.0
    %193 = vmatpush1.msra.mxu0 0.0
    %194 = vmatprep.subr.mxu0 0.0
    %195 = vmatpush1.msra.mxu0 0.0
    %196 = vmatprep.subr.mxu0 0.0
    %197 = vmatpush1.msra.mxu0 0.0
    %198 = vmatprep.subr.mxu0 0.0
    %199 = vmatpush1.msra.mxu0 0.0
    %200 = vmatprep.subr.mxu0 0.0
    %201 = vmatpush1.msra.mxu0 0.0
    %202 = vmatprep.subr.mxu0 0.0
    %203 = vmatpush1.msra.mxu0 0.0
    %204 = vmatprep.subr.mxu0 0.0
    %205 = vmatpush1.msra.mxu0 0.0
    %206 = vmatprep.subr.mxu0 0.0
    %207 = vmatpush1.msra.mxu0 0.0
    %208 = vmatprep.subr.mxu0 0.0
    %209 = vmatpush1.msra.mxu0 0.0
    %210 = vmatprep.subr.mxu0 0.0
    %211 = vmatpush1.msra.mxu0 0.0
    %212 = vmatprep.subr.mxu0 0.0
    %213 = vmatpush1.msra.mxu0 0.0
    %214 = vmatprep.subr.mxu0 0.0
    %215 = vmatpush1.msra.mxu0 0.0
    %216 = vmatprep.subr.mxu0 0.0
    %217 = vmatpush1.msra.mxu0 0.0
    %218 = vmatprep.subr.mxu0 0.0
    %219 = vmatpush1.msra.mxu0 0.0
    %220 = vmatprep.subr.mxu0 0.0
    %221 = vmatpush1.msra.mxu0 0.0
    %222 = vmatprep.subr.mxu0 0.0
    %223 = vmatpush1.msra.mxu0 0.0
    %224 = vmatprep.subr.mxu0 0.0
    %225 = vmatpush1.msra.mxu0 0.0
    %226 = vmatprep.subr.mxu0 0.0
    %227 = vmatpush1.msra.mxu0 0.0
    %228 = vmatprep.subr.mxu0 0.0
    %229 = vmatpush1.msra.mxu0 0.0
    %230 = vmatprep.mubr.f32.mxu0 0.0
    %231 = vmatmul.mubr.f32.gmra.mrb[0].mxu0 %v146
    %v232 = vpop.f32.mrb[0].mxu0
    %v233 = vadd.f32 %v132, %v232
    %v234 = vpop.f32.mrb[0].mxu0
    %v235 = vadd.f32 %v136, %v234
    %236 = vmatprep.mubr.f32.mxu0 0.0
    %237 = vmatmul.mubr.f32.gmra.mrb[0].mxu0 %v149
    %v238 = vpop.f32.mrb[0].mxu0
    %v239 = vadd.f32 %v132, %v238
    %v240 = vpop.f32.mrb[0].mxu0
    %v241 = vadd.f32 %v136, %v240
    %242 = vmatprep.mubr.f32.mxu0 0.0
    %243 = vmatmul.mubr.f32.gmra.mrb[0].mxu0 %v152
    %v244 = vpop.f32.mrb[0].mxu0
    %v245 = vadd.f32 %v132, %v244
    %v246 = vpop.f32.mrb[0].mxu0
    %v247 = vadd.f32 %v136, %v246
    %248 = vmatprep.mubr.f32.mxu0 0.0
    %249 = vmatmul.mubr.f32.gmra.mrb[0].mxu0 %v155
    %v250 = vpop.f32.mrb[0].mxu0
    %v251 = vadd.f32 %v132, %v250
    %v252 = vpop.f32.mrb[0].mxu0
    %v253 = vadd.f32 %v136, %v252
    %254 = vmatprep.mubr.f32.mxu0 0.0
    %255 = vmatmul.mubr.f32.gmra.mrb[0].mxu0 %v158
    %v256 = vpop.f32.mrb[0].mxu0
    %v257 = vadd.f32 %v132, %v256
    %v258 = vpop.f32.mrb[0].mxu0
    %v259 = vadd.f32 %v136, %v258
    %260 = vmatprep.mubr.f32.mxu0 0.0
    %261 = vmatmul.mubr.f32.gmra.mrb[0].mxu0 %v161
    %v262 = vpop.f32.mrb[0].mxu0
    %v263 = vadd.f32 %v132, %v262
    %v264 = vpop.f32.mrb[0].mxu0
    %v265 = vadd.f32 %v136, %v264
    %266 = vmatprep.mubr.f32.mxu0 0.0
    %267 = vmatmul.mubr.f32.gmra.mrb[0].mxu0 %v164
    %v268 = vpop.f32.mrb[0].mxu0
    %v269 = vadd.f32 %v132, %v268
    %v270 = vpop.f32.mrb[0].mxu0
    %v271 = vadd.f32 %v136, %v270
    %272 = vdwg.mxu0
    %273 = vmatprep.subr.mxu0 0.0
    %274 = vmatpush1.msra.mxu0 %v117
    %275 = vmatprep.subr.mxu0 0.0
    %276 = vmatpush1.msra.mxu0 %v120
    %277 = vmatprep.subr.mxu0 0.0
    %278 = vmatpush1.msra.mxu0 %v123
    %279 = vmatprep.subr.mxu0 0.0
    %280 = vmatpush1.msra.mxu0 %v126
    %281 = vmatprep.subr.mxu0 0.0
    %282 = vmatpush1.msra.mxu0 0.0
    %283 = vmatprep.subr.mxu0 0.0
    %284 = vmatpush1.msra.mxu0 0.0
    %285 = vmatprep.subr.mxu0 0.0
    %286 = vmatpush1.msra.mxu0 0.0
    %287 = vmatprep.subr.mxu0 0.0
    %288 = vmatpush1.msra.mxu0 0.0
    %289 = vmatprep.subr.mxu0 0.0
    %290 = vmatpush1.msra.mxu0 0.0
    %291 = vmatprep.subr.mxu0 0.0
    %292 = vmatpush1.msra.mxu0 0.0
    %293 = vmatprep.subr.mxu0 0.0
    %294 = vmatpush1.msra.mxu0 0.0
    %295 = vmatprep.subr.mxu0 0.0
    %296 = vmatpush1.msra.mxu0 0.0
    %297 = vmatprep.subr.mxu0 0.0
    %298 = vmatpush1.msra.mxu0 0.0
    %299 = vmatprep.subr.mxu0 0.0
    %300 = vmatpush1.msra.mxu0 0.0
    %301 = vmatprep.subr.mxu0 0.0
    %302 = vmatpush1.msra.mxu0 0.0
    %303 = vmatprep.subr.mxu0 0.0
    %304 = vmatpush1.msra.mxu0 0.0
    %305 = vmatprep.subr.mxu0 0.0
    %306 = vmatpush1.msra.mxu0 0.0
    %307 = vmatprep.subr.mxu0 0.0
    %308 = vmatpush1.msra.mxu0 0.0
    %309 = vmatprep.subr.mxu0 0.0
    %310 = vmatpush1.msra.mxu0 0.0
    %311 = vmatprep.subr.mxu0 0.0
    %312 = vmatpush1.msra.mxu0 0.0
    %313 = vmatprep.subr.mxu0 0.0
    %314 = vmatpush1.msra.mxu0 0.0
    %315 = vmatprep.subr.mxu0 0.0
    %316 = vmatpush1.msra.mxu0 0.0
    %317 = vmatprep.subr.mxu0 0.0
    %318 = vmatpush1.msra.mxu0 0.0
    %319 = vmatprep.subr.mxu0 0.0
    %320 = vmatpush1.msra.mxu0 0.0
    %321 = vmatprep.subr.mxu0 0.0
    %322 = vmatpush1.msra.mxu0 0.0
    %323 = vmatprep.subr.mxu0 0.0
    %324 = vmatpush1.msra.mxu0 0.0
    %325 = vmatprep.subr.mxu0 0.0
    %326 = vmatpush1.msra.mxu0 0.0
    %327 = vmatprep.subr.mxu0 0.0
    %328 = vmatpush1.msra.mxu0 0.0
    %329 = vmatprep.subr.mxu0 0.0
    %330 = vmatpush1.msra.mxu0 0.0
    %331 = vmatprep.subr.mxu0 0.0
    %332 = vmatpush1.msra.mxu0 0.0
    %333 = vmatprep.subr.mxu0 0.0
    %334 = vmatpush1.msra.mxu0 0.0
    %335 = vmatprep.subr.mxu0 0.0
    %336 = vmatpush1.msra.mxu0 0.0
    %337 = vmatprep.mubr.f32.mxu0 0.0
    %338 = vmatmul.mubr.f32.gmra.mrb[0].mxu0 %v146
    %v339 = vpop.f32.mrb[0].mxu0
    %v340 = vadd.f32 %v140, %v339
    %v341 = vpop.f32.mrb[0].mxu0
    %342 = vmatprep.mubr.f32.mxu0 0.0
    %343 = vmatmul.mubr.f32.gmra.mrb[0].mxu0 %v149
    %v344 = vpop.f32.mrb[0].mxu0
    %v345 = vadd.f32 %v140, %v344
    %v346 = vpop.f32.mrb[0].mxu0
    %347 = vmatprep.mubr.f32.mxu0 0.0
    %348 = vmatmul.mubr.f32.gmra.mrb[0].mxu0 %v152
    %v349 = vpop.f32.mrb[0].mxu0
    %v350 = vadd.f32 %v140, %v349
    %v351 = vpop.f32.mrb[0].mxu0
    %352 = vmatprep.mubr.f32.mxu0 0.0
    %353 = vmatmul.mubr.f32.gmra.mrb[0].mxu0 %v155
    %v354 = vpop.f32.mrb[0].mxu0
    %v355 = vadd.f32 %v140, %v354
    %v356 = vpop.f32.mrb[0].mxu0
    %357 = vmatprep.mubr.f32.mxu0 0.0
    %358 = vmatmul.mubr.f32.gmra.mrb[0].mxu0 %v158
    %v359 = vpop.f32.mrb[0].mxu0
    %v360 = vadd.f32 %v140, %v359
    %v361 = vpop.f32.mrb[0].mxu0
    %362 = vmatprep.mubr.f32.mxu0 0.0
    %363 = vmatmul.mubr.f32.gmra.mrb[0].mxu0 %v161
    %v364 = vpop.f32.mrb[0].mxu0
    %v365 = vadd.f32 %v140, %v364
    %v366 = vpop.f32.mrb[0].mxu0
    %367 = vmatprep.mubr.f32.mxu0 0.0
    %368 = vmatmul.mubr.f32.gmra.mrb[0].mxu0 %v164
    %v369 = vpop.f32.mrb[0].mxu0
    %v370 = vadd.f32 %v140, %v369
    %v371 = vpop.f32.mrb[0].mxu0
    %372 = vdwg.mxu0
    %v373 = vld [vmem:[#allocation4] sm:$0xff]
    %v374 = vld [vmem:[#allocation4 + $0x8] sm:$0xff]
    %v375 = vld [vmem:[#allocation4 + $0x10] sm:$0xff]
    %v376 = vld [vmem:[#allocation4 + $0x18] sm:$0xff]
    %v377 = vld [vmem:[#allocation4 + $0x20] sm:$0xff]
    %v378 = vld [vmem:[#allocation4 + $0x28] sm:$0xff]
    %v379 = vld [vmem:[#allocation4 + $0x30] sm:$0xff]
    %v380 = vld [vmem:[#allocation4 + $0x38] sm:$0xff]
    %v381 = vld [vmem:[#allocation4 + $0x40] sm:$0xff]
    %v382 = vld [vmem:[#allocation4 + $0x48] sm:$0xff]
    %v383 = vld [vmem:[#allocation4 + $0x50] sm:$0xff]
    %v384 = vld [vmem:[#allocation4 + $0x58] sm:$0xff]
    %v385 = vld [vmem:[#allocation4 + $0x60] sm:$0xff]
    %v386 = vld [vmem:[#allocation4 + $0x68] sm:$0xff]
    %v387 = vld [vmem:[#allocation4 + $0x70] sm:$0xff]
    %v388 = vld [vmem:[#allocation4 + $0x78] sm:$0xff]
    %v389 = vld [vmem:[#allocation4 + $0x80] sm:$0xff]
    %v390 = vld [vmem:[#allocation4 + $0x88] sm:$0xff]
    %v391 = vld [vmem:[#allocation4 + $0x90] sm:$0xff]
    %v392 = vld [vmem:[#allocation4 + $0x98] sm:$0xff]
    %v393 = vld [vmem:[#allocation4 + $0xa0] sm:$0xff]
    %v394 = vld [vmem:[#allocation4 + $0xa8] sm:$0xff]
    %v395 = vld [vmem:[#allocation4 + $0xb0] sm:$0xff]
    %v396 = vld [vmem:[#allocation4 + $0xb8] sm:$0xff]
    %v397 = vld [vmem:[#allocation4 + $0xc0] sm:$0xff]
    %v398 = vld [vmem:[#allocation4 + $0xc8] sm:$0xff]
    %v399 = vld [vmem:[#allocation4 + $0xd0] sm:$0xff]
    %v400 = vld [vmem:[#allocation4 + $0xd8] sm:$0xff]
    %v401 = vld [vmem:[#allocation4 + $0xe0] sm:$0xff]
    %v402 = vld [vmem:[#allocation4 + $0xe8] sm:$0xff]
    %v403 = vld [vmem:[#allocation4 + $0xf0] sm:$0xff]
    %v404 = vld [vmem:[#allocation4 + $0xf8] sm:$0xff]
    %v405 = vld [vmem:[#allocation4 + $0x100] sm:$0xff]
    %v406 = vld [vmem:[#allocation4 + $0x108] sm:$0xff]
    %v407 = vld [vmem:[#allocation4 + $0x110] sm:$0xff]
    %v408 = vld [vmem:[#allocation4 + $0x118] sm:$0xff]
    %v409 = vld [vmem:[#allocation4 + $0x120] sm:$0xff]
    %v410 = vld [vmem:[#allocation4 + $0x128] sm:$0xff]
    %v411 = vld [vmem:[#allocation4 + $0x130] sm:$0xff]
    %v412 = vld [vmem:[#allocation4 + $0x138] sm:$0xff]
    %v413 = vld [vmem:[#allocation4 + $0x140] sm:$0xff]
    %v414 = vld [vmem:[#allocation4 + $0x148] sm:$0xff]
    %v415 = vld [vmem:[#allocation4 + $0x150] sm:$0xff]
    %v416 = vld [vmem:[#allocation4 + $0x158] sm:$0xff]
    %v417 = vld [vmem:[#allocation4 + $0x160] sm:$0xff]
    %v418 = vld [vmem:[#allocation4 + $0x168] sm:$0xff]
    %v419 = vld [vmem:[#allocation4 + $0x170] sm:$0xff]
    %v420 = vld [vmem:[#allocation4 + $0x178] sm:$0xff]
    %v421 = vld [vmem:[#allocation4 + $0x180] sm:$0xff]
    %v422 = vld [vmem:[#allocation4 + $0x188] sm:$0xff]
    %v423 = vld [vmem:[#allocation4 + $0x190] sm:$0xff]
    %v424 = vld [vmem:[#allocation4 + $0x198] sm:$0xff]
    %v425 = vld [vmem:[#allocation4 + $0x1a0] sm:$0xff]
    %v426 = vld [vmem:[#allocation4 + $0x1a8] sm:$0xff]
    %v427 = vld [vmem:[#allocation4 + $0x1b0] sm:$0xff]
    %v428 = vld [vmem:[#allocation4 + $0x1b8] sm:$0xff]
    %v429 = vld [vmem:[#allocation4 + $0x1c0] sm:$0xff]
    %v430 = vld [vmem:[#allocation4 + $0x1c8] sm:$0xff]
    %v431 = vld [vmem:[#allocation4 + $0x1d0] sm:$0xff]
    %v432 = vld [vmem:[#allocation4 + $0x1d8] sm:$0xff]
    %v433 = vld [vmem:[#allocation4 + $0x1e0] sm:$0xff]
    %v434 = vld [vmem:[#allocation4 + $0x1e8] sm:$0xff]
    %v435 = vld [vmem:[#allocation4 + $0x1f0] sm:$0xff]
    %v436 = vld [vmem:[#allocation4 + $0x1f8] sm:$0xff]
    %v437 = vld [vmem:[#allocation4 + $0x200] sm:$0xff]
    %v438 = vld [vmem:[#allocation4 + $0x208] sm:$0xff]
    %v439 = vld [vmem:[#allocation4 + $0x210] sm:$0xff]
    %v440 = vld [vmem:[#allocation4 + $0x218] sm:$0xff]
    %v441 = vld [vmem:[#allocation4 + $0x220] sm:$0xff]
    %v442 = vld [vmem:[#allocation4 + $0x228] sm:$0xff]
    %v443 = vld [vmem:[#allocation4 + $0x230] sm:$0xff]
    %v444 = vld [vmem:[#allocation4 + $0x238] sm:$0xff]
    %445 = vmatprep.subr.mxu0 %v374
    %446 = vmatpush1.msra.mxu0 %v373
    %447 = vmatprep.subr.mxu0 %v392
    %448 = vmatpush1.msra.mxu0 %v391
    %449 = vmatprep.subr.mxu0 %v410
    %450 = vmatpush1.msra.mxu0 %v409
    %451 = vmatprep.subr.mxu0 %v428
    %452 = vmatpush1.msra.mxu0 %v427
    %453 = vmatprep.subr.mxu0 0.0
    %454 = vmatpush1.msra.mxu0 0.0
    %455 = vmatprep.subr.mxu0 0.0
    %456 = vmatpush1.msra.mxu0 0.0
    %457 = vmatprep.subr.mxu0 0.0
    %458 = vmatpush1.msra.mxu0 0.0
    %459 = vmatprep.subr.mxu0 0.0
    %460 = vmatpush1.msra.mxu0 0.0
    %461 = vmatprep.subr.mxu0 0.0
    %462 = vmatpush1.msra.mxu0 0.0
    %463 = vmatprep.subr.mxu0 0.0
    %464 = vmatpush1.msra.mxu0 0.0
    %465 = vmatprep.subr.mxu0 0.0
    %466 = vmatpush1.msra.mxu0 0.0
    %467 = vmatprep.subr.mxu0 0.0
    %468 = vmatpush1.msra.mxu0 0.0
    %469 = vmatprep.subr.mxu0 0.0
    %470 = vmatpush1.msra.mxu0 0.0
    %471 = vmatprep.subr.mxu0 0.0
    %472 = vmatpush1.msra.mxu0 0.0
    %473 = vmatprep.subr.mxu0 0.0
    %474 = vmatpush1.msra.mxu0 0.0
    %475 = vmatprep.subr.mxu0 0.0
    %476 = vmatpush1.msra.mxu0 0.0
    %477 = vmatprep.subr.mxu0 0.0
    %478 = vmatpush1.msra.mxu0 0.0
    %479 = vmatprep.subr.mxu0 0.0
    %480 = vmatpush1.msra.mxu0 0.0
    %481 = vmatprep.subr.mxu0 0.0
    %482 = vmatpush1.msra.mxu0 0.0
    %483 = vmatprep.subr.mxu0 0.0
    %484 = vmatpush1.msra.mxu0 0.0
    %485 = vmatprep.subr.mxu0 0.0
    %486 = vmatpush1.msra.mxu0 0.0
    %487 = vmatprep.subr.mxu0 0.0
    %488 = vmatpush1.msra.mxu0 0.0
    %489 = vmatprep.subr.mxu0 0.0
    %490 = vmatpush1.msra.mxu0 0.0
    %491 = vmatprep.subr.mxu0 0.0
    %492 = vmatpush1.msra.mxu0 0.0
    %493 = vmatprep.subr.mxu0 0.0
    %494 = vmatpush1.msra.mxu0 0.0
    %495 = vmatprep.subr.mxu0 0.0
    %496 = vmatpush1.msra.mxu0 0.0
    %497 = vmatprep.subr.mxu0 0.0
    %498 = vmatpush1.msra.mxu0 0.0
    %499 = vmatprep.subr.mxu0 0.0
    %500 = vmatpush1.msra.mxu0 0.0
    %501 = vmatprep.subr.mxu0 0.0
    %502 = vmatpush1.msra.mxu0 0.0
    %503 = vmatprep.subr.mxu0 0.0
    %504 = vmatpush1.msra.mxu0 0.0
    %505 = vmatprep.subr.mxu0 0.0
    %506 = vmatpush1.msra.mxu0 0.0
    %507 = vmatprep.subr.mxu0 0.0
    %508 = vmatpush1.msra.mxu0 0.0
    %509 = vmatprep.mubr.f32.mxu0 0.0
    %510 = vmatmul.mubr.f32.gmra.mrb[0].mxu0 %v146
    %v511 = vpop.f32.mrb[0].mxu0
    %v512 = vadd.f32 0.0, %v511
    %v513 = vpop.f32.mrb[0].mxu0
    %v514 = vadd.f32 0.0, %v513
    %515 = vmatprep.mubr.f32.mxu0 0.0
    %516 = vmatmul.mubr.f32.gmra.mrb[0].mxu0 %v149
    %v517 = vpop.f32.mrb[0].mxu0
    %v518 = vadd.f32 0.0, %v517
    %v519 = vpop.f32.mrb[0].mxu0
    %v520 = vadd.f32 0.0, %v519
    %521 = vmatprep.mubr.f32.mxu0 0.0
    %522 = vmatmul.mubr.f32.gmra.mrb[0].mxu0 %v152
    %v523 = vpop.f32.mrb[0].mxu0
    %v524 = vadd.f32 0.0, %v523
    %v525 = vpop.f32.mrb[0].mxu0
    %v526 = vadd.f32 0.0, %v525
    %527 = vmatprep.mubr.f32.mxu0 0.0
    %528 = vmatmul.mubr.f32.gmra.mrb[0].mxu0 %v155
    %v529 = vpop.f32.mrb[0].mxu0
    %v530 = vadd.f32 0.0, %v529
    %v531 = vpop.f32.mrb[0].mxu0
    %v532 = vadd.f32 0.0, %v531
    %533 = vmatprep.mubr.f32.mxu0 0.0
    %534 = vmatmul.mubr.f32.gmra.mrb[0].mxu0 %v158
    %v535 = vpop.f32.mrb[0].mxu0
    %v536 = vadd.f32 0.0, %v535
    %v537 = vpop.f32.mrb[0].mxu0
    %v538 = vadd.f32 0.0, %v537
    %539 = vmatprep.mubr.f32.mxu0 0.0
    %540 = vmatmul.mubr.f32.gmra.mrb[0].mxu0 %v161
    %v541 = vpop.f32.mrb[0].mxu0
    %v542 = vadd.f32 0.0, %v541
    %v543 = vpop.f32.mrb[0].mxu0
    %v544 = vadd.f32 0.0, %v543
    %545 = vmatprep.mubr.f32.mxu0 0.0
    %546 = vmatmul.mubr.f32.gmra.mrb[0].mxu0 %v164
    %v547 = vpop.f32.mrb[0].mxu0
    %v548 = vadd.f32 0.0, %v547
    %v549 = vpop.f32.mrb[0].mxu0
    %v550 = vadd.f32 0.0, %v549
    %551 = vdwg.mxu0
    %552 = vmatprep.subr.mxu0 %v376
    %553 = vmatpush1.msra.mxu0 %v375
    %554 = vmatprep.subr.mxu0 %v394
    %555 = vmatpush1.msra.mxu0 %v393
    %556 = vmatprep.subr.mxu0 %v412
    %557 = vmatpush1.msra.mxu0 %v411
    %558 = vmatprep.subr.mxu0 %v430
    %559 = vmatpush1.msra.mxu0 %v429
    %560 = vmatprep.subr.mxu0 0.0
    %561 = vmatpush1.msra.mxu0 0.0
    %562 = vmatprep.subr.mxu0 0.0
    %563 = vmatpush1.msra.mxu0 0.0
    %564 = vmatprep.subr.mxu0 0.0
    %565 = vmatpush1.msra.mxu0 0.0
    %566 = vmatprep.subr.mxu0 0.0
    %567 = vmatpush1.msra.mxu0 0.0
    %568 = vmatprep.subr.mxu0 0.0
    %569 = vmatpush1.msra.mxu0 0.0
    %570 = vmatprep.subr.mxu0 0.0
    %571 = vmatpush1.msra.mxu0 0.0
    %572 = vmatprep.subr.mxu0 0.0
    %573 = vmatpush1.msra.mxu0 0.0
    %574 = vmatprep.subr.mxu0 0.0
    %575 = vmatpush1.msra.mxu0 0.0
    %576 = vmatprep.subr.mxu0 0.0
    %577 = vmatpush1.msra.mxu0 0.0
    %578 = vmatprep.subr.mxu0 0.0
    %579 = vmatpush1.msra.mxu0 0.0
    %580 = vmatprep.subr.mxu0 0.0
    %581 = vmatpush1.msra.mxu0 0.0
    %582 = vmatprep.subr.mxu0 0.0
    %583 = vmatpush1.msra.mxu0 0.0
    %584 = vmatprep.subr.mxu0 0.0
    %585 = vmatpush1.msra.mxu0 0.0
    %586 = vmatprep.subr.mxu0 0.0
    %587 = vmatpush1.msra.mxu0 0.0
    %588 = vmatprep.subr.mxu0 0.0
    %589 = vmatpush1.msra.mxu0 0.0
    %590 = vmatprep.subr.mxu0 0.0
    %591 = vmatpush1.msra.mxu0 0.0
    %592 = vmatprep.subr.mxu0 0.0
    %593 = vmatpush1.msra.mxu0 0.0
    %594 = vmatprep.subr.mxu0 0.0
    %595 = vmatpush1.msra.mxu0 0.0
    %596 = vmatprep.subr.mxu0 0.0
    %597 = vmatpush1.msra.mxu0 0.0
    %598 = vmatprep.subr.mxu0 0.0
    %599 = vmatpush1.msra.mxu0 0.0
    %600 = vmatprep.subr.mxu0 0.0
    %601 = vmatpush1.msra.mxu0 0.0
    %602 = vmatprep.subr.mxu0 0.0
    %603 = vmatpush1.msra.mxu0 0.0
    %604 = vmatprep.subr.mxu0 0.0
    %605 = vmatpush1.msra.mxu0 0.0
    %606 = vmatprep.subr.mxu0 0.0
    %607 = vmatpush1.msra.mxu0 0.0
    %608 = vmatprep.subr.mxu0 0.0
    %609 = vmatpush1.msra.mxu0 0.0
    %610 = vmatprep.subr.mxu0 0.0
    %611 = vmatpush1.msra.mxu0 0.0
    %612 = vmatprep.subr.mxu0 0.0
    %613 = vmatpush1.msra.mxu0 0.0
    %614 = vmatprep.subr.mxu0 0.0
    %615 = vmatpush1.msra.mxu0 0.0
    %616 = vmatprep.mubr.f32.mxu0 0.0
    %617 = vmatmul.mubr.f32.gmra.mrb[0].mxu0 %v146
    %v618 = vpop.f32.mrb[0].mxu0
    %v619 = vadd.f32 0.0, %v618
    %v620 = vpop.f32.mrb[0].mxu0
    %v621 = vadd.f32 0.0, %v620
    %622 = vmatprep.mubr.f32.mxu0 0.0
    %623 = vmatmul.mubr.f32.gmra.mrb[0].mxu0 %v149
    %v624 = vpop.f32.mrb[0].mxu0
    %v625 = vadd.f32 0.0, %v624
    %v626 = vpop.f32.mrb[0].mxu0
    %v627 = vadd.f32 0.0, %v626
    %628 = vmatprep.mubr.f32.mxu0 0.0
    %629 = vmatmul.mubr.f32.gmra.mrb[0].mxu0 %v152
    %v630 = vpop.f32.mrb[0].mxu0
    %v631 = vadd.f32 0.0, %v630
    %v632 = vpop.f32.mrb[0].mxu0
    %v633 = vadd.f32 0.0, %v632
    %634 = vmatprep.mubr.f32.mxu0 0.0
    %635 = vmatmul.mubr.f32.gmra.mrb[0].mxu0 %v155
    %v636 = vpop.f32.mrb[0].mxu0
    %v637 = vadd.f32 0.0, %v636
    %v638 = vpop.f32.mrb[0].mxu0
    %v639 = vadd.f32 0.0, %v638
    %640 = vmatprep.mubr.f32.mxu0 0.0
    %641 = vmatmul.mubr.f32.gmra.mrb[0].mxu0 %v158
    %v642 = vpop.f32.mrb[0].mxu0
    %v643 = vadd.f32 0.0, %v642
    %v644 = vpop.f32.mrb[0].mxu0
    %v645 = vadd.f32 0.0, %v644
    %646 = vmatprep.mubr.f32.mxu0 0.0
    %647 = vmatmul.mubr.f32.gmra.mrb[0].mxu0 %v161
    %v648 = vpop.f32.mrb[0].mxu0
    %v649 = vadd.f32 0.0, %v648
    %v650 = vpop.f32.mrb[0].mxu0
    %v651 = vadd.f32 0.0, %v650
    %652 = vmatprep.mubr.f32.mxu0 0.0
    %653 = vmatmul.mubr.f32.gmra.mrb[0].mxu0 %v164
    %v654 = vpop.f32.mrb[0].mxu0
    %v655 = vadd.f32 0.0, %v654
    %v656 = vpop.f32.mrb[0].mxu0
    %v657 = vadd.f32 0.0, %v656
    %658 = vdwg.mxu0
    %659 = vmatprep.subr.mxu0 %v378
    %660 = vmatpush1.msra.mxu0 %v377
    %661 = vmatprep.subr.mxu0 %v396
    %662 = vmatpush1.msra.mxu0 %v395
    %663 = vmatprep.subr.mxu0 %v414
    %664 = vmatpush1.msra.mxu0 %v413
    %665 = vmatprep.subr.mxu0 %v432
    %666 = vmatpush1.msra.mxu0 %v431
    %667 = vmatprep.subr.mxu0 0.0
    %668 = vmatpush1.msra.mxu0 0.0
    %669 = vmatprep.subr.mxu0 0.0
    %670 = vmatpush1.msra.mxu0 0.0
    %671 = vmatprep.subr.mxu0 0.0
    %672 = vmatpush1.msra.mxu0 0.0
    %673 = vmatprep.subr.mxu0 0.0
    %674 = vmatpush1.msra.mxu0 0.0
    %675 = vmatprep.subr.mxu0 0.0
    %676 = vmatpush1.msra.mxu0 0.0
    %677 = vmatprep.subr.mxu0 0.0
    %678 = vmatpush1.msra.mxu0 0.0
    %679 = vmatprep.subr.mxu0 0.0
    %680 = vmatpush1.msra.mxu0 0.0
    %681 = vmatprep.subr.mxu0 0.0
    %682 = vmatpush1.msra.mxu0 0.0
    %683 = vmatprep.subr.mxu0 0.0
    %684 = vmatpush1.msra.mxu0 0.0
    %685 = vmatprep.subr.mxu0 0.0
    %686 = vmatpush1.msra.mxu0 0.0
    %687 = vmatprep.subr.mxu0 0.0
    %688 = vmatpush1.msra.mxu0 0.0
    %689 = vmatprep.subr.mxu0 0.0
    %690 = vmatpush1.msra.mxu0 0.0
    %691 = vmatprep.subr.mxu0 0.0
    %692 = vmatpush1.msra.mxu0 0.0
    %693 = vmatprep.subr.mxu0 0.0
    %694 = vmatpush1.msra.mxu0 0.0
    %695 = vmatprep.subr.mxu0 0.0
    %696 = vmatpush1.msra.mxu0 0.0
    %697 = vmatprep.subr.mxu0 0.0
    %698 = vmatpush1.msra.mxu0 0.0
    %699 = vmatprep.subr.mxu0 0.0
    %700 = vmatpush1.msra.mxu0 0.0
    %701 = vmatprep.subr.mxu0 0.0
    %702 = vmatpush1.msra.mxu0 0.0
    %703 = vmatprep.subr.mxu0 0.0
    %704 = vmatpush1.msra.mxu0 0.0
    %705 = vmatprep.subr.mxu0 0.0
    %706 = vmatpush1.msra.mxu0 0.0
    %707 = vmatprep.subr.mxu0 0.0
    %708 = vmatpush1.msra.mxu0 0.0
    %709 = vmatprep.subr.mxu0 0.0
    %710 = vmatpush1.msra.mxu0 0.0
    %711 = vmatprep.subr.mxu0 0.0
    %712 = vmatpush1.msra.mxu0 0.0
    %713 = vmatprep.subr.mxu0 0.0
    %714 = vmatpush1.msra.mxu0 0.0
    %715 = vmatprep.subr.mxu0 0.0
    %716 = vmatpush1.msra.mxu0 0.0
    %717 = vmatprep.subr.mxu0 0.0
    %718 = vmatpush1.msra.mxu0 0.0
    %719 = vmatprep.subr.mxu0 0.0
    %720 = vmatpush1.msra.mxu0 0.0
    %721 = vmatprep.subr.mxu0 0.0
    %722 = vmatpush1.msra.mxu0 0.0
    %723 = vmatprep.mubr.f32.mxu0 0.0
    %724 = vmatmul.mubr.f32.gmra.mrb[0].mxu0 %v146
    %v725 = vpop.f32.mrb[0].mxu0
    %v726 = vadd.f32 0.0, %v725
    %v727 = vpop.f32.mrb[0].mxu0
    %v728 = vadd.f32 0.0, %v727
    %729 = vmatprep.mubr.f32.mxu0 0.0
    %730 = vmatmul.mubr.f32.gmra.mrb[0].mxu0 %v149
    %v731 = vpop.f32.mrb[0].mxu0
    %v732 = vadd.f32 0.0, %v731
    %v733 = vpop.f32.mrb[0].mxu0
    %v734 = vadd.f32 0.0, %v733
    %735 = vmatprep.mubr.f32.mxu0 0.0
    %736 = vmatmul.mubr.f32.gmra.mrb[0].mxu0 %v152
    %v737 = vpop.f32.mrb[0].mxu0
    %v738 = vadd.f32 0.0, %v737
    %v739 = vpop.f32.mrb[0].mxu0
    %v740 = vadd.f32 0.0, %v739
    %741 = vmatprep.mubr.f32.mxu0 0.0
    %742 = vmatmul.mubr.f32.gmra.mrb[0].mxu0 %v155
    %v743 = vpop.f32.mrb[0].mxu0
    %v744 = vadd.f32 0.0, %v743
    %v745 = vpop.f32.mrb[0].mxu0
    %v746 = vadd.f32 0.0, %v745
    %747 = vmatprep.mubr.f32.mxu0 0.0
    %748 = vmatmul.mubr.f32.gmra.mrb[0].mxu0 %v158
    %v749 = vpop.f32.mrb[0].mxu0
    %v750 = vadd.f32 0.0, %v749
    %v751 = vpop.f32.mrb[0].mxu0
    %v752 = vadd.f32 0.0, %v751
    %753 = vmatprep.mubr.f32.mxu0 0.0
    %754 = vmatmul.mubr.f32.gmra.mrb[0].mxu0 %v161
    %v755 = vpop.f32.mrb[0].mxu0
    %v756 = vadd.f32 0.0, %v755
    %v757 = vpop.f32.mrb[0].mxu0
    %v758 = vadd.f32 0.0, %v757
    %759 = vmatprep.mubr.f32.mxu0 0.0
    %760 = vmatmul.mubr.f32.gmra.mrb[0].mxu0 %v164
    %v761 = vpop.f32.mrb[0].mxu0
    %v762 = vadd.f32 0.0, %v761
    %v763 = vpop.f32.mrb[0].mxu0
    %v764 = vadd.f32 0.0, %v763
    %765 = vdwg.mxu0
    %766 = vmatprep.subr.mxu0 %v380
    %767 = vmatpush1.msra.mxu0 %v379
    %768 = vmatprep.subr.mxu0 %v398
    %769 = vmatpush1.msra.mxu0 %v397
    %770 = vmatprep.subr.mxu0 %v416
    %771 = vmatpush1.msra.mxu0 %v415
    %772 = vmatprep.subr.mxu0 %v434
    %773 = vmatpush1.msra.mxu0 %v433
    %774 = vmatprep.subr.mxu0 0.0
    %775 = vmatpush1.msra.mxu0 0.0
    %776 = vmatprep.subr.mxu0 0.0
    %777 = vmatpush1.msra.mxu0 0.0
    %778 = vmatprep.subr.mxu0 0.0
    %779 = vmatpush1.msra.mxu0 0.0
    %780 = vmatprep.subr.mxu0 0.0
    %781 = vmatpush1.msra.mxu0 0.0
    %782 = vmatprep.subr.mxu0 0.0
    %783 = vmatpush1.msra.mxu0 0.0
    %784 = vmatprep.subr.mxu0 0.0
    %785 = vmatpush1.msra.mxu0 0.0
    %786 = vmatprep.subr.mxu0 0.0
    %787 = vmatpush1.msra.mxu0 0.0
    %788 = vmatprep.subr.mxu0 0.0
    %789 = vmatpush1.msra.mxu0 0.0
    %790 = vmatprep.subr.mxu0 0.0
    %791 = vmatpush1.msra.mxu0 0.0
    %792 = vmatprep.subr.mxu0 0.0
    %793 = vmatpush1.msra.mxu0 0.0
    %794 = vmatprep.subr.mxu0 0.0
    %795 = vmatpush1.msra.mxu0 0.0
    %796 = vmatprep.subr.mxu0 0.0
    %797 = vmatpush1.msra.mxu0 0.0
    %798 = vmatprep.subr.mxu0 0.0
    %799 = vmatpush1.msra.mxu0 0.0
    %800 = vmatprep.subr.mxu0 0.0
    %801 = vmatpush1.msra.mxu0 0.0
    %802 = vmatprep.subr.mxu0 0.0
    %803 = vmatpush1.msra.mxu0 0.0
    %804 = vmatprep.subr.mxu0 0.0
    %805 = vmatpush1.msra.mxu0 0.0
    %806 = vmatprep.subr.mxu0 0.0
    %807 = vmatpush1.msra.mxu0 0.0
    %808 = vmatprep.subr.mxu0 0.0
    %809 = vmatpush1.msra.mxu0 0.0
    %810 = vmatprep.subr.mxu0 0.0
    %811 = vmatpush1.msra.mxu0 0.0
    %812 = vmatprep.subr.mxu0 0.0
    %813 = vmatpush1.msra.mxu0 0.0
    %814 = vmatprep.subr.mxu0 0.0
    %815 = vmatpush1.msra.mxu0 0.0
    %816 = vmatprep.subr.mxu0 0.0
    %817 = vmatpush1.msra.mxu0 0.0
    %818 = vmatprep.subr.mxu0 0.0
    %819 = vmatpush1.msra.mxu0 0.0
    %820 = vmatprep.subr.mxu0 0.0
    %821 = vmatpush1.msra.mxu0 0.0
    %822 = vmatprep.subr.mxu0 0.0
    %823 = vmatpush1.msra.mxu0 0.0
    %824 = vmatprep.subr.mxu0 0.0
    %825 = vmatpush1.msra.mxu0 0.0
    %826 = vmatprep.subr.mxu0 0.0
    %827 = vmatpush1.msra.mxu0 0.0
    %828 = vmatprep.subr.mxu0 0.0
    %829 = vmatpush1.msra.mxu0 0.0
    %830 = vmatprep.mubr.f32.mxu0 0.0
    %831 = vmatmul.mubr.f32.gmra.mrb[0].mxu0 %v146
    %v832 = vpop.f32.mrb[0].mxu0
    %v833 = vadd.f32 0.0, %v832
    %v834 = vpop.f32.mrb[0].mxu0
    %v835 = vadd.f32 0.0, %v834
    %836 = vmatprep.mubr.f32.mxu0 0.0
    %837 = vmatmul.mubr.f32.gmra.mrb[0].mxu0 %v149
    %v838 = vpop.f32.mrb[0].mxu0
    %v839 = vadd.f32 0.0, %v838
    %v840 = vpop.f32.mrb[0].mxu0
    %v841 = vadd.f32 0.0, %v840
    %842 = vmatprep.mubr.f32.mxu0 0.0
    %843 = vmatmul.mubr.f32.gmra.mrb[0].mxu0 %v152
    %v844 = vpop.f32.mrb[0].mxu0
    %v845 = vadd.f32 0.0, %v844
    %v846 = vpop.f32.mrb[0].mxu0
    %v847 = vadd.f32 0.0, %v846
    %848 = vmatprep.mubr.f32.mxu0 0.0
    %849 = vmatmul.mubr.f32.gmra.mrb[0].mxu0 %v155
    %v850 = vpop.f32.mrb[0].mxu0
    %v851 = vadd.f32 0.0, %v850
    %v852 = vpop.f32.mrb[0].mxu0
    %v853 = vadd.f32 0.0, %v852
    %854 = vmatprep.mubr.f32.mxu0 0.0
    %855 = vmatmul.mubr.f32.gmra.mrb[0].mxu0 %v158
    %v856 = vpop.f32.mrb[0].mxu0
    %v857 = vadd.f32 0.0, %v856
    %v858 = vpop.f32.mrb[0].mxu0
    %v859 = vadd.f32 0.0, %v858
    %860 = vmatprep.mubr.f32.mxu0 0.0
    %861 = vmatmul.mubr.f32.gmra.mrb[0].mxu0 %v161
    %v862 = vpop.f32.mrb[0].mxu0
    %v863 = vadd.f32 0.0, %v862
    %v864 = vpop.f32.mrb[0].mxu0
    %v865 = vadd.f32 0.0, %v864
    %866 = vmatprep.mubr.f32.mxu0 0.0
    %867 = vmatmul.mubr.f32.gmra.mrb[0].mxu0 %v164
    %v868 = vpop.f32.mrb[0].mxu0
    %v869 = vadd.f32 0.0, %v868
    %v870 = vpop.f32.mrb[0].mxu0
    %v871 = vadd.f32 0.0, %v870
    %872 = vdwg.mxu0
    %873 = vmatprep.subr.mxu0 %v382
    %874 = vmatpush1.msra.mxu0 %v381
    %875 = vmatprep.subr.mxu0 %v400
    %876 = vmatpush1.msra.mxu0 %v399
    %877 = vmatprep.subr.mxu0 %v418
    %878 = vmatpush1.msra.mxu0 %v417
    %879 = vmatprep.subr.mxu0 %v436
    %880 = vmatpush1.msra.mxu0 %v435
    %881 = vmatprep.subr.mxu0 0.0
    %882 = vmatpush1.msra.mxu0 0.0
    %883 = vmatprep.subr.mxu0 0.0
    %884 = vmatpush1.msra.mxu0 0.0
    %885 = vmatprep.subr.mxu0 0.0
    %886 = vmatpush1.msra.mxu0 0.0
    %887 = vmatprep.subr.mxu0 0.0
    %888 = vmatpush1.msra.mxu0 0.0
    %889 = vmatprep.subr.mxu0 0.0
    %890 = vmatpush1.msra.mxu0 0.0
    %891 = vmatprep.subr.mxu0 0.0
    %892 = vmatpush1.msra.mxu0 0.0
    %893 = vmatprep.subr.mxu0 0.0
    %894 = vmatpush1.msra.mxu0 0.0
    %895 = vmatprep.subr.mxu0 0.0
    %896 = vmatpush1.msra.mxu0 0.0
    %897 = vmatprep.subr.mxu0 0.0
    %898 = vmatpush1.msra.mxu0 0.0
    %899 = vmatprep.subr.mxu0 0.0
    %900 = vmatpush1.msra.mxu0 0.0
    %901 = vmatprep.subr.mxu0 0.0
    %902 = vmatpush1.msra.mxu0 0.0
    %903 = vmatprep.subr.mxu0 0.0
    %904 = vmatpush1.msra.mxu0 0.0
    %905 = vmatprep.subr.mxu0 0.0
    %906 = vmatpush1.msra.mxu0 0.0
    %907 = vmatprep.subr.mxu0 0.0
    %908 = vmatpush1.msra.mxu0 0.0
    %909 = vmatprep.subr.mxu0 0.0
    %910 = vmatpush1.msra.mxu0 0.0
    %911 = vmatprep.subr.mxu0 0.0
    %912 = vmatpush1.msra.mxu0 0.0
    %913 = vmatprep.subr.mxu0 0.0
    %914 = vmatpush1.msra.mxu0 0.0
    %915 = vmatprep.subr.mxu0 0.0
    %916 = vmatpush1.msra.mxu0 0.0
    %917 = vmatprep.subr.mxu0 0.0
    %918 = vmatpush1.msra.mxu0 0.0
    %919 = vmatprep.subr.mxu0 0.0
    %920 = vmatpush1.msra.mxu0 0.0
    %921 = vmatprep.subr.mxu0 0.0
    %922 = vmatpush1.msra.mxu0 0.0
    %923 = vmatprep.subr.mxu0 0.0
    %924 = vmatpush1.msra.mxu0 0.0
    %925 = vmatprep.subr.mxu0 0.0
    %926 = vmatpush1.msra.mxu0 0.0
    %927 = vmatprep.subr.mxu0 0.0
    %928 = vmatpush1.msra.mxu0 0.0
    %929 = vmatprep.subr.mxu0 0.0
    %930 = vmatpush1.msra.mxu0 0.0
    %931 = vmatprep.subr.mxu0 0.0
    %932 = vmatpush1.msra.mxu0 0.0
    %933 = vmatprep.subr.mxu0 0.0
    %934 = vmatpush1.msra.mxu0 0.0
    %935 = vmatprep.subr.mxu0 0.0
    %936 = vmatpush1.msra.mxu0 0.0
    %937 = vmatprep.mubr.f32.mxu0 0.0
    %938 = vmatmul.mubr.f32.gmra.mrb[0].mxu0 %v146
    %v939 = vpop.f32.mrb[0].mxu0
    %v940 = vadd.f32 0.0, %v939
    %v941 = vpop.f32.mrb[0].mxu0
    %v942 = vadd.f32 0.0, %v941
    %943 = vmatprep.mubr.f32.mxu0 0.0
    %944 = vmatmul.mubr.f32.gmra.mrb[0].mxu0 %v149
    %v945 = vpop.f32.mrb[0].mxu0
    %v946 = vadd.f32 0.0, %v945
    %v947 = vpop.f32.mrb[0].mxu0
    %v948 = vadd.f32 0.0, %v947
    %949 = vmatprep.mubr.f32.mxu0 0.0
    %950 = vmatmul.mubr.f32.gmra.mrb[0].mxu0 %v152
    %v951 = vpop.f32.mrb[0].mxu0
    %v952 = vadd.f32 0.0, %v951
    %v953 = vpop.f32.mrb[0].mxu0
    %v954 = vadd.f32 0.0, %v953
    %955 = vmatprep.mubr.f32.mxu0 0.0
    %956 = vmatmul.mubr.f32.gmra.mrb[0].mxu0 %v155
    %v957 = vpop.f32.mrb[0].mxu0
    %v958 = vadd.f32 0.0, %v957
    %v959 = vpop.f32.mrb[0].mxu0
    %v960 = vadd.f32 0.0, %v959
    %961 = vmatprep.mubr.f32.mxu0 0.0
    %962 = vmatmul.mubr.f32.gmra.mrb[0].mxu0 %v158
    %v963 = vpop.f32.mrb[0].mxu0
    %v964 = vadd.f32 0.0, %v963
    %v965 = vpop.f32.mrb[0].mxu0
    %v966 = vadd.f32 0.0, %v965
    %967 = vmatprep.mubr.f32.mxu0 0.0
    %968 = vmatmul.mubr.f32.gmra.mrb[0].mxu0 %v161
    %v969 = vpop.f32.mrb[0].mxu0
    %v970 = vadd.f32 0.0, %v969
    %v971 = vpop.f32.mrb[0].mxu0
    %v972 = vadd.f32 0.0, %v971
    %973 = vmatprep.mubr.f32.mxu0 0.0
    %974 = vmatmul.mubr.f32.gmra.mrb[0].mxu0 %v164
    %v975 = vpop.f32.mrb[0].mxu0
    %v976 = vadd.f32 0.0, %v975
    %v977 = vpop.f32.mrb[0].mxu0
    %v978 = vadd.f32 0.0, %v977
    %979 = vdwg.mxu0
    %980 = vmatprep.subr.mxu0 %v384
    %981 = vmatpush1.msra.mxu0 %v383
    %982 = vmatprep.subr.mxu0 %v402
    %983 = vmatpush1.msra.mxu0 %v401
    %984 = vmatprep.subr.mxu0 %v420
    %985 = vmatpush1.msra.mxu0 %v419
    %986 = vmatprep.subr.mxu0 %v438
    %987 = vmatpush1.msra.mxu0 %v437
    %988 = vmatprep.subr.mxu0 0.0
    %989 = vmatpush1.msra.mxu0 0.0
    %990 = vmatprep.subr.mxu0 0.0
    %991 = vmatpush1.msra.mxu0 0.0
    %992 = vmatprep.subr.mxu0 0.0
    %993 = vmatpush1.msra.mxu0 0.0
    %994 = vmatprep.subr.mxu0 0.0
    %995 = vmatpush1.msra.mxu0 0.0
    %996 = vmatprep.subr.mxu0 0.0
    %997 = vmatpush1.msra.mxu0 0.0
    %998 = vmatprep.subr.mxu0 0.0
    %999 = vmatpush1.msra.mxu0 0.0
    %1000 = vmatprep.subr.mxu0 0.0
    %1001 = vmatpush1.msra.mxu0 0.0
    %1002 = vmatprep.subr.mxu0 0.0
    %1003 = vmatpush1.msra.mxu0 0.0
    %1004 = vmatprep.subr.mxu0 0.0
    %1005 = vmatpush1.msra.mxu0 0.0
    %1006 = vmatprep.subr.mxu0 0.0
    %1007 = vmatpush1.msra.mxu0 0.0
    %1008 = vmatprep.subr.mxu0 0.0
    %1009 = vmatpush1.msra.mxu0 0.0
    %1010 = vmatprep.subr.mxu0 0.0
    %1011 = vmatpush1.msra.mxu0 0.0
    %1012 = vmatprep.subr.mxu0 0.0
    %1013 = vmatpush1.msra.mxu0 0.0
    %1014 = vmatprep.subr.mxu0 0.0
    %1015 = vmatpush1.msra.mxu0 0.0
    %1016 = vmatprep.subr.mxu0 0.0
    %1017 = vmatpush1.msra.mxu0 0.0
    %1018 = vmatprep.subr.mxu0 0.0
    %1019 = vmatpush1.msra.mxu0 0.0
    %1020 = vmatprep.subr.mxu0 0.0
    %1021 = vmatpush1.msra.mxu0 0.0
    %1022 = vmatprep.subr.mxu0 0.0
    %1023 = vmatpush1.msra.mxu0 0.0
    %1024 = vmatprep.subr.mxu0 0.0
    %1025 = vmatpush1.msra.mxu0 0.0
    %1026 = vmatprep.subr.mxu0 0.0
    %1027 = vmatpush1.msra.mxu0 0.0
    %1028 = vmatprep.subr.mxu0 0.0
    %1029 = vmatpush1.msra.mxu0 0.0
    %1030 = vmatprep.subr.mxu0 0.0
    %1031 = vmatpush1.msra.mxu0 0.0
    %1032 = vmatprep.subr.mxu0 0.0
    %1033 = vmatpush1.msra.mxu0 0.0
    %1034 = vmatprep.subr.mxu0 0.0
    %1035 = vmatpush1.msra.mxu0 0.0
    %1036 = vmatprep.subr.mxu0 0.0
    %1037 = vmatpush1.msra.mxu0 0.0
    %1038 = vmatprep.subr.mxu0 0.0
    %1039 = vmatpush1.msra.mxu0 0.0
    %1040 = vmatprep.subr.mxu0 0.0
    %1041 = vmatpush1.msra.mxu0 0.0
    %1042 = vmatprep.subr.mxu0 0.0
    %1043 = vmatpush1.msra.mxu0 0.0
    %1044 = vmatprep.mubr.f32.mxu0 0.0
    %1045 = vmatmul.mubr.f32.gmra.mrb[0].mxu0 %v146
    %v1046 = vpop.f32.mrb[0].mxu0
    %v1047 = vadd.f32 0.0, %v1046
    %v1048 = vpop.f32.mrb[0].mxu0
    %v1049 = vadd.f32 0.0, %v1048
    %1050 = vmatprep.mubr.f32.mxu0 0.0
    %1051 = vmatmul.mubr.f32.gmra.mrb[0].mxu0 %v149
    %v1052 = vpop.f32.mrb[0].mxu0
    %v1053 = vadd.f32 0.0, %v1052
    %v1054 = vpop.f32.mrb[0].mxu0
    %v1055 = vadd.f32 0.0, %v1054
    %1056 = vmatprep.mubr.f32.mxu0 0.0
    %1057 = vmatmul.mubr.f32.gmra.mrb[0].mxu0 %v152
    %v1058 = vpop.f32.mrb[0].mxu0
    %v1059 = vadd.f32 0.0, %v1058
    %v1060 = vpop.f32.mrb[0].mxu0
    %v1061 = vadd.f32 0.0, %v1060
    %1062 = vmatprep.mubr.f32.mxu0 0.0
    %1063 = vmatmul.mubr.f32.gmra.mrb[0].mxu0 %v155
    %v1064 = vpop.f32.mrb[0].mxu0
    %v1065 = vadd.f32 0.0, %v1064
    %v1066 = vpop.f32.mrb[0].mxu0
    %v1067 = vadd.f32 0.0, %v1066
    %1068 = vmatprep.mubr.f32.mxu0 0.0
    %1069 = vmatmul.mubr.f32.gmra.mrb[0].mxu0 %v158
    %v1070 = vpop.f32.mrb[0].mxu0
    %v1071 = vadd.f32 0.0, %v1070
    %v1072 = vpop.f32.mrb[0].mxu0
    %v1073 = vadd.f32 0.0, %v1072
    %1074 = vmatprep.mubr.f32.mxu0 0.0
    %1075 = vmatmul.mubr.f32.gmra.mrb[0].mxu0 %v161
    %v1076 = vpop.f32.mrb[0].mxu0
    %v1077 = vadd.f32 0.0, %v1076
    %v1078 = vpop.f32.mrb[0].mxu0
    %v1079 = vadd.f32 0.0, %v1078
    %1080 = vmatprep.mubr.f32.mxu0 0.0
    %1081 = vmatmul.mubr.f32.gmra.mrb[0].mxu0 %v164
    %v1082 = vpop.f32.mrb[0].mxu0
    %v1083 = vadd.f32 0.0, %v1082
    %v1084 = vpop.f32.mrb[0].mxu0
    %v1085 = vadd.f32 0.0, %v1084
    %1086 = vdwg.mxu0
    %1087 = vmatprep.subr.mxu0 %v386
    %1088 = vmatpush1.msra.mxu0 %v385
    %1089 = vmatprep.subr.mxu0 %v404
    %1090 = vmatpush1.msra.mxu0 %v403
    %1091 = vmatprep.subr.mxu0 %v422
    %1092 = vmatpush1.msra.mxu0 %v421
    %1093 = vmatprep.subr.mxu0 %v440
    %1094 = vmatpush1.msra.mxu0 %v439
    %1095 = vmatprep.subr.mxu0 0.0
    %1096 = vmatpush1.msra.mxu0 0.0
    %1097 = vmatprep.subr.mxu0 0.0
    %1098 = vmatpush1.msra.mxu0 0.0
    %1099 = vmatprep.subr.mxu0 0.0
    %1100 = vmatpush1.msra.mxu0 0.0
    %1101 = vmatprep.subr.mxu0 0.0
    %1102 = vmatpush1.msra.mxu0 0.0
    %1103 = vmatprep.subr.mxu0 0.0
    %1104 = vmatpush1.msra.mxu0 0.0
    %1105 = vmatprep.subr.mxu0 0.0
    %1106 = vmatpush1.msra.mxu0 0.0
    %1107 = vmatprep.subr.mxu0 0.0
    %1108 = vmatpush1.msra.mxu0 0.0
    %1109 = vmatprep.subr.mxu0 0.0
    %1110 = vmatpush1.msra.mxu0 0.0
    %1111 = vmatprep.subr.mxu0 0.0
    %1112 = vmatpush1.msra.mxu0 0.0
    %1113 = vmatprep.subr.mxu0 0.0
    %1114 = vmatpush1.msra.mxu0 0.0
    %1115 = vmatprep.subr.mxu0 0.0
    %1116 = vmatpush1.msra.mxu0 0.0
    %1117 = vmatprep.subr.mxu0 0.0
    %1118 = vmatpush1.msra.mxu0 0.0
    %1119 = vmatprep.subr.mxu0 0.0
    %1120 = vmatpush1.msra.mxu0 0.0
    %1121 = vmatprep.subr.mxu0 0.0
    %1122 = vmatpush1.msra.mxu0 0.0
    %1123 = vmatprep.subr.mxu0 0.0
    %1124 = vmatpush1.msra.mxu0 0.0
    %1125 = vmatprep.subr.mxu0 0.0
    %1126 = vmatpush1.msra.mxu0 0.0
    %1127 = vmatprep.subr.mxu0 0.0
    %1128 = vmatpush1.msra.mxu0 0.0
    %1129 = vmatprep.subr.mxu0 0.0
    %1130 = vmatpush1.msra.mxu0 0.0
    %1131 = vmatprep.subr.mxu0 0.0
    %1132 = vmatpush1.msra.mxu0 0.0
    %1133 = vmatprep.subr.mxu0 0.0
    %1134 = vmatpush1.msra.mxu0 0.0
    %1135 = vmatprep.subr.mxu0 0.0
    %1136 = vmatpush1.msra.mxu0 0.0
    %1137 = vmatprep.subr.mxu0 0.0
    %1138 = vmatpush1.msra.mxu0 0.0
    %1139 = vmatprep.subr.mxu0 0.0
    %1140 = vmatpush1.msra.mxu0 0.0
    %1141 = vmatprep.subr.mxu0 0.0
    %1142 = vmatpush1.msra.mxu0 0.0
    %1143 = vmatprep.subr.mxu0 0.0
    %1144 = vmatpush1.msra.mxu0 0.0
    %1145 = vmatprep.subr.mxu0 0.0
    %1146 = vmatpush1.msra.mxu0 0.0
    %1147 = vmatprep.subr.mxu0 0.0
    %1148 = vmatpush1.msra.mxu0 0.0
    %1149 = vmatprep.subr.mxu0 0.0
    %1150 = vmatpush1.msra.mxu0 0.0
    %1151 = vmatprep.mubr.f32.mxu0 0.0
    %1152 = vmatmul.mubr.f32.gmra.mrb[0].mxu0 %v146
    %v1153 = vpop.f32.mrb[0].mxu0
    %v1154 = vadd.f32 0.0, %v1153
    %v1155 = vpop.f32.mrb[0].mxu0
    %v1156 = vadd.f32 0.0, %v1155
    %1157 = vmatprep.mubr.f32.mxu0 0.0
    %1158 = vmatmul.mubr.f32.gmra.mrb[0].mxu0 %v149
    %v1159 = vpop.f32.mrb[0].mxu0
    %v1160 = vadd.f32 0.0, %v1159
    %v1161 = vpop.f32.mrb[0].mxu0
    %v1162 = vadd.f32 0.0, %v1161
    %1163 = vmatprep.mubr.f32.mxu0 0.0
    %1164 = vmatmul.mubr.f32.gmra.mrb[0].mxu0 %v152
    %v1165 = vpop.f32.mrb[0].mxu0
    %v1166 = vadd.f32 0.0, %v1165
    %v1167 = vpop.f32.mrb[0].mxu0
    %v1168 = vadd.f32 0.0, %v1167
    %1169 = vmatprep.mubr.f32.mxu0 0.0
    %1170 = vmatmul.mubr.f32.gmra.mrb[0].mxu0 %v155
    %v1171 = vpop.f32.mrb[0].mxu0
    %v1172 = vadd.f32 0.0, %v1171
    %v1173 = vpop.f32.mrb[0].mxu0
    %v1174 = vadd.f32 0.0, %v1173
    %1175 = vmatprep.mubr.f32.mxu0 0.0
    %1176 = vmatmul.mubr.f32.gmra.mrb[0].mxu0 %v158
    %v1177 = vpop.f32.mrb[0].mxu0
    %v1178 = vadd.f32 0.0, %v1177
    %v1179 = vpop.f32.mrb[0].mxu0
    %v1180 = vadd.f32 0.0, %v1179
    %1181 = vmatprep.mubr.f32.mxu0 0.0
    %1182 = vmatmul.mubr.f32.gmra.mrb[0].mxu0 %v161
    %v1183 = vpop.f32.mrb[0].mxu0
    %v1184 = vadd.f32 0.0, %v1183
    %v1185 = vpop.f32.mrb[0].mxu0
    %v1186 = vadd.f32 0.0, %v1185
    %1187 = vmatprep.mubr.f32.mxu0 0.0
    %1188 = vmatmul.mubr.f32.gmra.mrb[0].mxu0 %v164
    %v1189 = vpop.f32.mrb[0].mxu0
    %v1190 = vadd.f32 0.0, %v1189
    %v1191 = vpop.f32.mrb[0].mxu0
    %v1192 = vadd.f32 0.0, %v1191
    %1193 = vdwg.mxu0
    %1194 = vmatprep.subr.mxu0 %v388
    %1195 = vmatpush1.msra.mxu0 %v387
    %1196 = vmatprep.subr.mxu0 %v406
    %1197 = vmatpush1.msra.mxu0 %v405
    %1198 = vmatprep.subr.mxu0 %v424
    %1199 = vmatpush1.msra.mxu0 %v423
    %1200 = vmatprep.subr.mxu0 %v442
    %1201 = vmatpush1.msra.mxu0 %v441
    %1202 = vmatprep.subr.mxu0 0.0
    %1203 = vmatpush1.msra.mxu0 0.0
    %1204 = vmatprep.subr.mxu0 0.0
    %1205 = vmatpush1.msra.mxu0 0.0
    %1206 = vmatprep.subr.mxu0 0.0
    %1207 = vmatpush1.msra.mxu0 0.0
    %1208 = vmatprep.subr.mxu0 0.0
    %1209 = vmatpush1.msra.mxu0 0.0
    %1210 = vmatprep.subr.mxu0 0.0
    %1211 = vmatpush1.msra.mxu0 0.0
    %1212 = vmatprep.subr.mxu0 0.0
    %1213 = vmatpush1.msra.mxu0 0.0
    %1214 = vmatprep.subr.mxu0 0.0
    %1215 = vmatpush1.msra.mxu0 0.0
    %1216 = vmatprep.subr.mxu0 0.0
    %1217 = vmatpush1.msra.mxu0 0.0
    %1218 = vmatprep.subr.mxu0 0.0
    %1219 = vmatpush1.msra.mxu0 0.0
    %1220 = vmatprep.subr.mxu0 0.0
    %1221 = vmatpush1.msra.mxu0 0.0
    %1222 = vmatprep.subr.mxu0 0.0
    %1223 = vmatpush1.msra.mxu0 0.0
    %1224 = vmatprep.subr.mxu0 0.0
    %1225 = vmatpush1.msra.mxu0 0.0
    %1226 = vmatprep.subr.mxu0 0.0
    %1227 = vmatpush1.msra.mxu0 0.0
    %1228 = vmatprep.subr.mxu0 0.0
    %1229 = vmatpush1.msra.mxu0 0.0
    %1230 = vmatprep.subr.mxu0 0.0
    %1231 = vmatpush1.msra.mxu0 0.0
    %1232 = vmatprep.subr.mxu0 0.0
    %1233 = vmatpush1.msra.mxu0 0.0
    %1234 = vmatprep.subr.mxu0 0.0
    %1235 = vmatpush1.msra.mxu0 0.0
    %1236 = vmatprep.subr.mxu0 0.0
    %1237 = vmatpush1.msra.mxu0 0.0
    %1238 = vmatprep.subr.mxu0 0.0
    %1239 = vmatpush1.msra.mxu0 0.0
    %1240 = vmatprep.subr.mxu0 0.0
    %1241 = vmatpush1.msra.mxu0 0.0
    %1242 = vmatprep.subr.mxu0 0.0
    %1243 = vmatpush1.msra.mxu0 0.0
    %1244 = vmatprep.subr.mxu0 0.0
    %1245 = vmatpush1.msra.mxu0 0.0
    %1246 = vmatprep.subr.mxu0 0.0
    %1247 = vmatpush1.msra.mxu0 0.0
    %1248 = vmatprep.subr.mxu0 0.0
    %1249 = vmatpush1.msra.mxu0 0.0
    %1250 = vmatprep.subr.mxu0 0.0
    %1251 = vmatpush1.msra.mxu0 0.0
    %1252 = vmatprep.subr.mxu0 0.0
    %1253 = vmatpush1.msra.mxu0 0.0
    %1254 = vmatprep.subr.mxu0 0.0
    %1255 = vmatpush1.msra.mxu0 0.0
    %1256 = vmatprep.subr.mxu0 0.0
    %1257 = vmatpush1.msra.mxu0 0.0
    %1258 = vmatprep.mubr.f32.mxu0 0.0
    %1259 = vmatmul.mubr.f32.gmra.mrb[0].mxu0 %v146
    %v1260 = vpop.f32.mrb[0].mxu0
    %v1261 = vadd.f32 0.0, %v1260
    %v1262 = vpop.f32.mrb[0].mxu0
    %v1263 = vadd.f32 0.0, %v1262
    %1264 = vmatprep.mubr.f32.mxu0 0.0
    %1265 = vmatmul.mubr.f32.gmra.mrb[0].mxu0 %v149
    %v1266 = vpop.f32.mrb[0].mxu0
    %v1267 = vadd.f32 0.0, %v1266
    %v1268 = vpop.f32.mrb[0].mxu0
    %v1269 = vadd.f32 0.0, %v1268
    %1270 = vmatprep.mubr.f32.mxu0 0.0
    %1271 = vmatmul.mubr.f32.gmra.mrb[0].mxu0 %v152
    %v1272 = vpop.f32.mrb[0].mxu0
    %v1273 = vadd.f32 0.0, %v1272
    %v1274 = vpop.f32.mrb[0].mxu0
    %v1275 = vadd.f32 0.0, %v1274
    %1276 = vmatprep.mubr.f32.mxu0 0.0
    %1277 = vmatmul.mubr.f32.gmra.mrb[0].mxu0 %v155
    %v1278 = vpop.f32.mrb[0].mxu0
    %v1279 = vadd.f32 0.0, %v1278
    %v1280 = vpop.f32.mrb[0].mxu0
    %v1281 = vadd.f32 0.0, %v1280
    %1282 = vmatprep.mubr.f32.mxu0 0.0
    %1283 = vmatmul.mubr.f32.gmra.mrb[0].mxu0 %v158
    %v1284 = vpop.f32.mrb[0].mxu0
    %v1285 = vadd.f32 0.0, %v1284
    %v1286 = vpop.f32.mrb[0].mxu0
    %v1287 = vadd.f32 0.0, %v1286
    %1288 = vmatprep.mubr.f32.mxu0 0.0
    %1289 = vmatmul.mubr.f32.gmra.mrb[0].mxu0 %v161
    %v1290 = vpop.f32.mrb[0].mxu0
    %v1291 = vadd.f32 0.0, %v1290
    %v1292 = vpop.f32.mrb[0].mxu0
    %v1293 = vadd.f32 0.0, %v1292
    %1294 = vmatprep.mubr.f32.mxu0 0.0
    %1295 = vmatmul.mubr.f32.gmra.mrb[0].mxu0 %v164
    %v1296 = vpop.f32.mrb[0].mxu0
    %v1297 = vadd.f32 0.0, %v1296
    %v1298 = vpop.f32.mrb[0].mxu0
    %v1299 = vadd.f32 0.0, %v1298
    %1300 = vdwg.mxu0
    %1301 = vmatprep.subr.mxu0 %v390
    %1302 = vmatpush1.msra.mxu0 %v389
    %1303 = vmatprep.subr.mxu0 %v408
    %1304 = vmatpush1.msra.mxu0 %v407
    %1305 = vmatprep.subr.mxu0 %v426
    %1306 = vmatpush1.msra.mxu0 %v425
    %1307 = vmatprep.subr.mxu0 %v444
    %1308 = vmatpush1.msra.mxu0 %v443
    %1309 = vmatprep.subr.mxu0 0.0
    %1310 = vmatpush1.msra.mxu0 0.0
    %1311 = vmatprep.subr.mxu0 0.0
    %1312 = vmatpush1.msra.mxu0 0.0
    %1313 = vmatprep.subr.mxu0 0.0
    %1314 = vmatpush1.msra.mxu0 0.0
    %1315 = vmatprep.subr.mxu0 0.0
    %1316 = vmatpush1.msra.mxu0 0.0
    %1317 = vmatprep.subr.mxu0 0.0
    %1318 = vmatpush1.msra.mxu0 0.0
    %1319 = vmatprep.subr.mxu0 0.0
    %1320 = vmatpush1.msra.mxu0 0.0
    %1321 = vmatprep.subr.mxu0 0.0
    %1322 = vmatpush1.msra.mxu0 0.0
    %1323 = vmatprep.subr.mxu0 0.0
    %1324 = vmatpush1.msra.mxu0 0.0
    %1325 = vmatprep.subr.mxu0 0.0
    %1326 = vmatpush1.msra.mxu0 0.0
    %1327 = vmatprep.subr.mxu0 0.0
    %1328 = vmatpush1.msra.mxu0 0.0
    %1329 = vmatprep.subr.mxu0 0.0
    %1330 = vmatpush1.msra.mxu0 0.0
    %1331 = vmatprep.subr.mxu0 0.0
    %1332 = vmatpush1.msra.mxu0 0.0
    %1333 = vmatprep.subr.mxu0 0.0
    %1334 = vmatpush1.msra.mxu0 0.0
    %1335 = vmatprep.subr.mxu0 0.0
    %1336 = vmatpush1.msra.mxu0 0.0
    %1337 = vmatprep.subr.mxu0 0.0
    %1338 = vmatpush1.msra.mxu0 0.0
    %1339 = vmatprep.subr.mxu0 0.0
    %1340 = vmatpush1.msra.mxu0 0.0
    %1341 = vmatprep.subr.mxu0 0.0
    %1342 = vmatpush1.msra.mxu0 0.0
    %1343 = vmatprep.subr.mxu0 0.0
    %1344 = vmatpush1.msra.mxu0 0.0
    %1345 = vmatprep.subr.mxu0 0.0
    %1346 = vmatpush1.msra.mxu0 0.0
    %1347 = vmatprep.subr.mxu0 0.0
    %1348 = vmatpush1.msra.mxu0 0.0
    %1349 = vmatprep.subr.mxu0 0.0
    %1350 = vmatpush1.msra.mxu0 0.0
    %1351 = vmatprep.subr.mxu0 0.0
    %1352 = vmatpush1.msra.mxu0 0.0
    %1353 = vmatprep.subr.mxu0 0.0
    %1354 = vmatpush1.msra.mxu0 0.0
    %1355 = vmatprep.subr.mxu0 0.0
    %1356 = vmatpush1.msra.mxu0 0.0
    %1357 = vmatprep.subr.mxu0 0.0
    %1358 = vmatpush1.msra.mxu0 0.0
    %1359 = vmatprep.subr.mxu0 0.0
    %1360 = vmatpush1.msra.mxu0 0.0
    %1361 = vmatprep.subr.mxu0 0.0
    %1362 = vmatpush1.msra.mxu0 0.0
    %1363 = vmatprep.subr.mxu0 0.0
    %1364 = vmatpush1.msra.mxu0 0.0
    %1365 = vmatprep.mubr.f32.mxu0 0.0
    %1366 = vmatmul.mubr.f32.gmra.mrb[0].mxu0 %v146
    %v1367 = vpop.f32.mrb[0].mxu0
    %v1368 = vadd.f32 0.0, %v1367
    %v1369 = vpop.f32.mrb[0].mxu0
    %v1370 = vadd.f32 0.0, %v1369
    %1371 = vmatprep.mubr.f32.mxu0 0.0
    %1372 = vmatmul.mubr.f32.gmra.mrb[0].mxu0 %v149
    %v1373 = vpop.f32.mrb[0].mxu0
    %v1374 = vadd.f32 0.0, %v1373
    %v1375 = vpop.f32.mrb[0].mxu0
    %v1376 = vadd.f32 0.0, %v1375
    %1377 = vmatprep.mubr.f32.mxu0 0.0
    %1378 = vmatmul.mubr.f32.gmra.mrb[0].mxu0 %v152
    %v1379 = vpop.f32.mrb[0].mxu0
    %v1380 = vadd.f32 0.0, %v1379
    %v1381 = vpop.f32.mrb[0].mxu0
    %v1382 = vadd.f32 0.0, %v1381
    %1383 = vmatprep.mubr.f32.mxu0 0.0
    %1384 = vmatmul.mubr.f32.gmra.mrb[0].mxu0 %v155
    %v1385 = vpop.f32.mrb[0].mxu0
    %v1386 = vadd.f32 0.0, %v1385
    %v1387 = vpop.f32.mrb[0].mxu0
    %v1388 = vadd.f32 0.0, %v1387
    %1389 = vmatprep.mubr.f32.mxu0 0.0
    %1390 = vmatmul.mubr.f32.gmra.mrb[0].mxu0 %v158
    %v1391 = vpop.f32.mrb[0].mxu0
    %v1392 = vadd.f32 0.0, %v1391
    %v1393 = vpop.f32.mrb[0].mxu0
    %v1394 = vadd.f32 0.0, %v1393
    %1395 = vmatprep.mubr.f32.mxu0 0.0
    %1396 = vmatmul.mubr.f32.gmra.mrb[0].mxu0 %v161
    %v1397 = vpop.f32.mrb[0].mxu0
    %v1398 = vadd.f32 0.0, %v1397
    %v1399 = vpop.f32.mrb[0].mxu0
    %v1400 = vadd.f32 0.0, %v1399
    %1401 = vmatprep.mubr.f32.mxu0 0.0
    %1402 = vmatmul.mubr.f32.gmra.mrb[0].mxu0 %v164
    %v1403 = vpop.f32.mrb[0].mxu0
    %v1404 = vadd.f32 0.0, %v1403
    %v1405 = vpop.f32.mrb[0].mxu0
    %v1406 = vadd.f32 0.0, %v1405
    %1407 = vdwg.mxu0
    %v1408 = vld [vmem:[%s96] sm:$0xff]
    %v1409 = vld [vmem:[%s96 + $0x8] sm:$0xff]
    %v1410 = vld [vmem:[%s96 + $0x10] sm:$0xff]
    %v1411 = vld [vmem:[%s96 + $0x18] sm:$0xff]
    %v1412 = vld [vmem:[%s96 + $0x20] sm:$0xff]
    %v1413 = vld [vmem:[%s96 + $0x28] sm:$0xff]
    %v1414 = vld [vmem:[%s96 + $0x30] sm:$0xff]
    %v1415 = vld [vmem:[%s96 + $0x38] sm:$0xff]
    %v1416 = vld [vmem:[%s96 + $0x40] sm:$0xff]
    %v1417 = vld [vmem:[%s96 + $0x48] sm:$0xff]
    %v1418 = vld [vmem:[%s96 + $0x50] sm:$0xff]
    %v1419 = vld [vmem:[%s96 + $0x58] sm:$0xff]
    %v1420 = vld [vmem:[%s96 + $0x60] sm:$0xff]
    %v1421 = vld [vmem:[%s96 + $0x68] sm:$0xff]
    %v1422 = vld [vmem:[%s96 + $0x70] sm:$0xff]
    %v1423 = vld [vmem:[%s96 + $0x78] sm:$0xff]
    %v1424 = vld [vmem:[%s96 + $0x80] sm:$0xff]
    %v1425 = vld [vmem:[%s96 + $0x88] sm:$0xff]
    %v1426 = vld [vmem:[%s96 + $0x90] sm:$0xff]
    %v1427 = vld [vmem:[%s96 + $0x98] sm:$0xff]
    %v1428 = vld [vmem:[%s96 + $0xa0] sm:$0xff]
    %v1429 = vmul.f32 %v512, %v1408
    %v1430 = vmul.f32 %v518, %v1411
    %v1431 = vmul.f32 %v524, %v1414
    %v1432 = vmul.f32 %v530, %v1417
    %v1433 = vmul.f32 %v536, %v1420
    %v1434 = vmul.f32 %v542, %v1423
    %v1435 = vmul.f32 %v548, %v1426
    %1443 = vrot.lane.b32.xlu0 %v1429, 96
    %v1444 = vpop.permute.xlu0 %1443
    %1445 = vrot.lane.b32.xlu0 %v1430, 96
    %v1446 = vpop.permute.xlu0 %1445
    %1447 = vrot.lane.b32.xlu0 %v1431, 96
    %v1448 = vpop.permute.xlu0 %1447
    %1449 = vrot.lane.b32.xlu0 %v1432, 96
    %v1450 = vpop.permute.xlu0 %1449
    %1451 = vrot.lane.b32.xlu0 %v1433, 96
    %v1452 = vpop.permute.xlu0 %1451
    %1453 = vrot.lane.b32.xlu0 %v1434, 96
    %v1454 = vpop.permute.xlu0 %1453
    %1455 = vrot.lane.b32.xlu0 %v1435, 96
    %v1456 = vpop.permute.xlu0 %1455
    %v1464 = vadd.f32 %v1429, %v1444
    %v1465 = vadd.f32 %v1430, %v1446
    %v1466 = vadd.f32 %v1431, %v1448
    %v1467 = vadd.f32 %v1432, %v1450
    %v1468 = vadd.f32 %v1433, %v1452
    %v1469 = vadd.f32 %v1434, %v1454
    %v1470 = vadd.f32 %v1435, %v1456
    %1471 = vrot.lane.b32.xlu0 %v1429, 64
    %v1472 = vpop.permute.xlu0 %1471
    %1473 = vrot.lane.b32.xlu0 %v1430, 64
    %v1474 = vpop.permute.xlu0 %1473
    %1475 = vrot.lane.b32.xlu0 %v1431, 64
    %v1476 = vpop.permute.xlu0 %1475
    %1477 = vrot.lane.b32.xlu0 %v1432, 64
    %v1478 = vpop.permute.xlu0 %1477
    %1479 = vrot.lane.b32.xlu0 %v1433, 64
    %v1480 = vpop.permute.xlu0 %1479
    %1481 = vrot.lane.b32.xlu0 %v1434, 64
    %v1482 = vpop.permute.xlu0 %1481
    %1483 = vrot.lane.b32.xlu0 %v1435, 64
    %v1484 = vpop.permute.xlu0 %1483
    %v1492 = vadd.f32 %v1464, %v1472
    %v1493 = vadd.f32 %v1465, %v1474
    %v1494 = vadd.f32 %v1466, %v1476
    %v1495 = vadd.f32 %v1467, %v1478
    %v1496 = vadd.f32 %v1468, %v1480
    %v1497 = vadd.f32 %v1469, %v1482
    %v1498 = vadd.f32 %v1470, %v1484
    %1499 = vrot.lane.b32.xlu0 %v1429, 32
    %v1500 = vpop.permute.xlu0 %1499
    %1501 = vrot.lane.b32.xlu0 %v1430, 32
    %v1502 = vpop.permute.xlu0 %1501
    %1503 = vrot.lane.b32.xlu0 %v1431, 32
    %v1504 = vpop.permute.xlu0 %1503
    %1505 = vrot.lane.b32.xlu0 %v1432, 32
    %v1506 = vpop.permute.xlu0 %1505
    %1507 = vrot.lane.b32.xlu0 %v1433, 32
    %v1508 = vpop.permute.xlu0 %1507
    %1509 = vrot.lane.b32.xlu0 %v1434, 32
    %v1510 = vpop.permute.xlu0 %1509
    %1511 = vrot.lane.b32.xlu0 %v1435, 32
    %v1512 = vpop.permute.xlu0 %1511
    %v1520 = vadd.f32 %v1492, %v1500
    %v1521 = vadd.f32 %v1493, %v1502
    %v1522 = vadd.f32 %v1494, %v1504
    %v1523 = vadd.f32 %v1495, %v1506
    %v1524 = vadd.f32 %v1496, %v1508
    %v1525 = vadd.f32 %v1497, %v1510
    %v1526 = vadd.f32 %v1498, %v1512
    %v1527 = vmul.f32 %v514, %v1409
    %v1528 = vmul.f32 %v520, %v1412
    %v1529 = vmul.f32 %v526, %v1415
    %v1530 = vmul.f32 %v532, %v1418
    %v1531 = vmul.f32 %v538, %v1421
    %v1532 = vmul.f32 %v544, %v1424
    %v1533 = vmul.f32 %v550, %v1427
    %v1534 = vadd.f32 %v1520, %v1527
    %v1535 = vadd.f32 %v1521, %v1528
    %v1536 = vadd.f32 %v1522, %v1529
    %v1537 = vadd.f32 %v1523, %v1530
    %v1538 = vadd.f32 %v1524, %v1531
    %v1539 = vadd.f32 %v1525, %v1532
    %v1540 = vadd.f32 %v1526, %v1533
    %1548 = vrot.lane.b32.xlu0 %v1527, 96
    %v1549 = vpop.permute.xlu0 %1548
    %1550 = vrot.lane.b32.xlu0 %v1528, 96
    %v1551 = vpop.permute.xlu0 %1550
    %1552 = vrot.lane.b32.xlu0 %v1529, 96
    %v1553 = vpop.permute.xlu0 %1552
    %1554 = vrot.lane.b32.xlu0 %v1530, 96
    %v1555 = vpop.permute.xlu0 %1554
    %1556 = vrot.lane.b32.xlu0 %v1531, 96
    %v1557 = vpop.permute.xlu0 %1556
    %1558 = vrot.lane.b32.xlu0 %v1532, 96
    %v1559 = vpop.permute.xlu0 %1558
    %1560 = vrot.lane.b32.xlu0 %v1533, 96
    %v1561 = vpop.permute.xlu0 %1560
    %v1569 = vadd.f32 %v1534, %v1549
    %v1570 = vadd.f32 %v1535, %v1551
    %v1571 = vadd.f32 %v1536, %v1553
    %v1572 = vadd.f32 %v1537, %v1555
    %v1573 = vadd.f32 %v1538, %v1557
    %v1574 = vadd.f32 %v1539, %v1559
    %v1575 = vadd.f32 %v1540, %v1561
    %1576 = vrot.lane.b32.xlu0 %v1527, 64
    %v1577 = vpop.permute.xlu0 %1576
    %1578 = vrot.lane.b32.xlu0 %v1528, 64
    %v1579 = vpop.permute.xlu0 %1578
    %1580 = vrot.lane.b32.xlu0 %v1529, 64
    %v1581 = vpop.permute.xlu0 %1580
    %1582 = vrot.lane.b32.xlu0 %v1530, 64
    %v1583 = vpop.permute.xlu0 %1582
    %1584 = vrot.lane.b32.xlu0 %v1531, 64
    %v1585 = vpop.permute.xlu0 %1584
    %1586 = vrot.lane.b32.xlu0 %v1532, 64
    %v1587 = vpop.permute.xlu0 %1586
    %1588 = vrot.lane.b32.xlu0 %v1533, 64
    %v1589 = vpop.permute.xlu0 %1588
    %v1597 = vadd.f32 %v1569, %v1577
    %v1598 = vadd.f32 %v1570, %v1579
    %v1599 = vadd.f32 %v1571, %v1581
    %v1600 = vadd.f32 %v1572, %v1583
    %v1601 = vadd.f32 %v1573, %v1585
    %v1602 = vadd.f32 %v1574, %v1587
    %v1603 = vadd.f32 %v1575, %v1589
    %1604 = vrot.lane.b32.xlu0 %v1527, 32
    %v1605 = vpop.permute.xlu0 %1604
    %1606 = vrot.lane.b32.xlu0 %v1528, 32
    %v1607 = vpop.permute.xlu0 %1606
    %1608 = vrot.lane.b32.xlu0 %v1529, 32
    %v1609 = vpop.permute.xlu0 %1608
    %1610 = vrot.lane.b32.xlu0 %v1530, 32
    %v1611 = vpop.permute.xlu0 %1610
    %1612 = vrot.lane.b32.xlu0 %v1531, 32
    %v1613 = vpop.permute.xlu0 %1612
    %1614 = vrot.lane.b32.xlu0 %v1532, 32
    %v1615 = vpop.permute.xlu0 %1614
    %1616 = vrot.lane.b32.xlu0 %v1533, 32
    %v1617 = vpop.permute.xlu0 %1616
    %v1625 = vadd.f32 %v1597, %v1605
    %v1626 = vadd.f32 %v1598, %v1607
    %v1627 = vadd.f32 %v1599, %v1609
    %v1628 = vadd.f32 %v1600, %v1611
    %v1629 = vadd.f32 %v1601, %v1613
    %v1630 = vadd.f32 %v1602, %v1615
    %v1631 = vadd.f32 %v1603, %v1617
    %v1632 = vmul.f32 %v619, %v1410
    %v1633 = vmul.f32 %v625, %v1413
    %v1634 = vmul.f32 %v631, %v1416
    %v1635 = vmul.f32 %v637, %v1419
    %v1636 = vmul.f32 %v643, %v1422
    %v1637 = vmul.f32 %v649, %v1425
    %v1638 = vmul.f32 %v655, %v1428
    %v1639 = vadd.f32 %v1625, %v1632
    %v1640 = vadd.f32 %v1626, %v1633
    %v1641 = vadd.f32 %v1627, %v1634
    %v1642 = vadd.f32 %v1628, %v1635
    %v1643 = vadd.f32 %v1629, %v1636
    %v1644 = vadd.f32 %v1630, %v1637
    %v1645 = vadd.f32 %v1631, %v1638
    %1653 = vrot.lane.b32.xlu0 %v1408, 32
    %v1654 = vpop.permute.xlu0 %1653
    %1655 = vrot.lane.b32.xlu0 %v1411, 32
    %v1656 = vpop.permute.xlu0 %1655
    %1657 = vrot.lane.b32.xlu0 %v1414, 32
    %v1658 = vpop.permute.xlu0 %1657
    %1659 = vrot.lane.b32.xlu0 %v1417, 32
    %v1660 = vpop.permute.xlu0 %1659
    %1661 = vrot.lane.b32.xlu0 %v1420, 32
    %v1662 = vpop.permute.xlu0 %1661
    %1663 = vrot.lane.b32.xlu0 %v1423, 32
    %v1664 = vpop.permute.xlu0 %1663
    %1665 = vrot.lane.b32.xlu0 %v1426, 32
    %v1666 = vpop.permute.xlu0 %1665
    %v1674 = vmul.f32 %v619, %v1654
    %v1675 = vmul.f32 %v625, %v1656
    %v1676 = vmul.f32 %v631, %v1658
    %v1677 = vmul.f32 %v637, %v1660
    %v1678 = vmul.f32 %v643, %v1662
    %v1679 = vmul.f32 %v649, %v1664
    %v1680 = vmul.f32 %v655, %v1666
    %1688 = vrot.lane.b32.xlu0 %v1674, 96
    %v1689 = vpop.permute.xlu0 %1688
    %1690 = vrot.lane.b32.xlu0 %v1675, 96
    %v1691 = vpop.permute.xlu0 %1690
    %1692 = vrot.lane.b32.xlu0 %v1676, 96
    %v1693 = vpop.permute.xlu0 %1692
    %1694 = vrot.lane.b32.xlu0 %v1677, 96
    %v1695 = vpop.permute.xlu0 %1694
    %1696 = vrot.lane.b32.xlu0 %v1678, 96
    %v1697 = vpop.permute.xlu0 %1696
    %1698 = vrot.lane.b32.xlu0 %v1679, 96
    %v1699 = vpop.permute.xlu0 %1698
    %1700 = vrot.lane.b32.xlu0 %v1680, 96
    %v1701 = vpop.permute.xlu0 %1700
    %v1709 = vadd.f32 %v1674, %v1689
    %v1710 = vadd.f32 %v1675, %v1691
    %v1711 = vadd.f32 %v1676, %v1693
    %v1712 = vadd.f32 %v1677, %v1695
    %v1713 = vadd.f32 %v1678, %v1697
    %v1714 = vadd.f32 %v1679, %v1699
    %v1715 = vadd.f32 %v1680, %v1701
    %1716 = vrot.lane.b32.xlu0 %v1674, 64
    %v1717 = vpop.permute.xlu0 %1716
    %1718 = vrot.lane.b32.xlu0 %v1675, 64
    %v1719 = vpop.permute.xlu0 %1718
    %1720 = vrot.lane.b32.xlu0 %v1676, 64
    %v1721 = vpop.permute.xlu0 %1720
    %1722 = vrot.lane.b32.xlu0 %v1677, 64
    %v1723 = vpop.permute.xlu0 %1722
    %1724 = vrot.lane.b32.xlu0 %v1678, 64
    %v1725 = vpop.permute.xlu0 %1724
    %1726 = vrot.lane.b32.xlu0 %v1679, 64
    %v1727 = vpop.permute.xlu0 %1726
    %1728 = vrot.lane.b32.xlu0 %v1680, 64
    %v1729 = vpop.permute.xlu0 %1728
    %v1737 = vadd.f32 %v1709, %v1717
    %v1738 = vadd.f32 %v1710, %v1719
    %v1739 = vadd.f32 %v1711, %v1721
    %v1740 = vadd.f32 %v1712, %v1723
    %v1741 = vadd.f32 %v1713, %v1725
    %v1742 = vadd.f32 %v1714, %v1727
    %v1743 = vadd.f32 %v1715, %v1729
    %v1744 = vmul.f32 %v621, %v1654
    %v1745 = vmul.f32 %v627, %v1656
    %v1746 = vmul.f32 %v633, %v1658
    %v1747 = vmul.f32 %v639, %v1660
    %v1748 = vmul.f32 %v645, %v1662
    %v1749 = vmul.f32 %v651, %v1664
    %v1750 = vmul.f32 %v657, %v1666
    %1758 = vrot.lane.b32.xlu0 %v1744, 32
    %v1759 = vpop.permute.xlu0 %1758
    %1760 = vrot.lane.b32.xlu0 %v1745, 32
    %v1761 = vpop.permute.xlu0 %1760
    %1762 = vrot.lane.b32.xlu0 %v1746, 32
    %v1763 = vpop.permute.xlu0 %1762
    %1764 = vrot.lane.b32.xlu0 %v1747, 32
    %v1765 = vpop.permute.xlu0 %1764
    %1766 = vrot.lane.b32.xlu0 %v1748, 32
    %v1767 = vpop.permute.xlu0 %1766
    %1768 = vrot.lane.b32.xlu0 %v1749, 32
    %v1769 = vpop.permute.xlu0 %1768
    %1770 = vrot.lane.b32.xlu0 %v1750, 32
    %v1771 = vpop.permute.xlu0 %1770
    %v1779 = vadd.f32 %v1737, %v1759
    %v1780 = vadd.f32 %v1738, %v1761
    %v1781 = vadd.f32 %v1739, %v1763
    %v1782 = vadd.f32 %v1740, %v1765
    %v1783 = vadd.f32 %v1741, %v1767
    %v1784 = vadd.f32 %v1742, %v1769
    %v1785 = vadd.f32 %v1743, %v1771
    %1793 = vrot.lane.b32.xlu0 %v1409, 32
    %v1794 = vpop.permute.xlu0 %1793
    %1795 = vrot.lane.b32.xlu0 %v1412, 32
    %v1796 = vpop.permute.xlu0 %1795
    %1797 = vrot.lane.b32.xlu0 %v1415, 32
    %v1798 = vpop.permute.xlu0 %1797
    %1799 = vrot.lane.b32.xlu0 %v1418, 32
    %v1800 = vpop.permute.xlu0 %1799
    %1801 = vrot.lane.b32.xlu0 %v1421, 32
    %v1802 = vpop.permute.xlu0 %1801
    %1803 = vrot.lane.b32.xlu0 %v1424, 32
    %v1804 = vpop.permute.xlu0 %1803
    %1805 = vrot.lane.b32.xlu0 %v1427, 32
    %v1806 = vpop.permute.xlu0 %1805
    %v1814 = vmul.f32 %v621, %v1794
    %v1815 = vmul.f32 %v627, %v1796
    %v1816 = vmul.f32 %v633, %v1798
    %v1817 = vmul.f32 %v639, %v1800
    %v1818 = vmul.f32 %v645, %v1802
    %v1819 = vmul.f32 %v651, %v1804
    %v1820 = vmul.f32 %v657, %v1806
    %v1821 = vadd.f32 %v1779, %v1814
    %v1822 = vadd.f32 %v1780, %v1815
    %v1823 = vadd.f32 %v1781, %v1816
    %v1824 = vadd.f32 %v1782, %v1817
    %v1825 = vadd.f32 %v1783, %v1818
    %v1826 = vadd.f32 %v1784, %v1819
    %v1827 = vadd.f32 %v1785, %v1820
    %1835 = vrot.lane.b32.xlu0 %v1814, 96
    %v1836 = vpop.permute.xlu0 %1835
    %1837 = vrot.lane.b32.xlu0 %v1815, 96
    %v1838 = vpop.permute.xlu0 %1837
    %1839 = vrot.lane.b32.xlu0 %v1816, 96
    %v1840 = vpop.permute.xlu0 %1839
    %1841 = vrot.lane.b32.xlu0 %v1817, 96
    %v1842 = vpop.permute.xlu0 %1841
    %1843 = vrot.lane.b32.xlu0 %v1818, 96
    %v1844 = vpop.permute.xlu0 %1843
    %1845 = vrot.lane.b32.xlu0 %v1819, 96
    %v1846 = vpop.permute.xlu0 %1845
    %1847 = vrot.lane.b32.xlu0 %v1820, 96
    %v1848 = vpop.permute.xlu0 %1847
    %v1856 = vadd.f32 %v1821, %v1836
    %v1857 = vadd.f32 %v1822, %v1838
    %v1858 = vadd.f32 %v1823, %v1840
    %v1859 = vadd.f32 %v1824, %v1842
    %v1860 = vadd.f32 %v1825, %v1844
    %v1861 = vadd.f32 %v1826, %v1846
    %v1862 = vadd.f32 %v1827, %v1848
    %1863 = vrot.lane.b32.xlu0 %v1814, 64
    %v1864 = vpop.permute.xlu0 %1863
    %1865 = vrot.lane.b32.xlu0 %v1815, 64
    %v1866 = vpop.permute.xlu0 %1865
    %1867 = vrot.lane.b32.xlu0 %v1816, 64
    %v1868 = vpop.permute.xlu0 %1867
    %1869 = vrot.lane.b32.xlu0 %v1817, 64
    %v1870 = vpop.permute.xlu0 %1869
    %1871 = vrot.lane.b32.xlu0 %v1818, 64
    %v1872 = vpop.permute.xlu0 %1871
    %1873 = vrot.lane.b32.xlu0 %v1819, 64
    %v1874 = vpop.permute.xlu0 %1873
    %1875 = vrot.lane.b32.xlu0 %v1820, 64
    %v1876 = vpop.permute.xlu0 %1875
    %v1884 = vadd.f32 %v1856, %v1864
    %v1885 = vadd.f32 %v1857, %v1866
    %v1886 = vadd.f32 %v1858, %v1868
    %v1887 = vadd.f32 %v1859, %v1870
    %v1888 = vadd.f32 %v1860, %v1872
    %v1889 = vadd.f32 %v1861, %v1874
    %v1890 = vadd.f32 %v1862, %v1876
    %v1891 = vmul.f32 %v726, %v1410
    %v1892 = vmul.f32 %v732, %v1413
    %v1893 = vmul.f32 %v738, %v1416
    %v1894 = vmul.f32 %v744, %v1419
    %v1895 = vmul.f32 %v750, %v1422
    %v1896 = vmul.f32 %v756, %v1425
    %v1897 = vmul.f32 %v762, %v1428
    %1905 = vrot.lane.b32.xlu0 %v1891, 32
    %v1906 = vpop.permute.xlu0 %1905
    %1907 = vrot.lane.b32.xlu0 %v1892, 32
    %v1908 = vpop.permute.xlu0 %1907
    %1909 = vrot.lane.b32.xlu0 %v1893, 32
    %v1910 = vpop.permute.xlu0 %1909
    %1911 = vrot.lane.b32.xlu0 %v1894, 32
    %v1912 = vpop.permute.xlu0 %1911
    %1913 = vrot.lane.b32.xlu0 %v1895, 32
    %v1914 = vpop.permute.xlu0 %1913
    %1915 = vrot.lane.b32.xlu0 %v1896, 32
    %v1916 = vpop.permute.xlu0 %1915
    %1917 = vrot.lane.b32.xlu0 %v1897, 32
    %v1918 = vpop.permute.xlu0 %1917
    %v1926 = vadd.f32 %v1884, %v1906
    %v1927 = vadd.f32 %v1885, %v1908
    %v1928 = vadd.f32 %v1886, %v1910
    %v1929 = vadd.f32 %v1887, %v1912
    %v1930 = vadd.f32 %v1888, %v1914
    %v1931 = vadd.f32 %v1889, %v1916
    %v1932 = vadd.f32 %v1890, %v1918
    %v1933 = vmul.f32 %v726, %v1654
    %v1934 = vmul.f32 %v732, %v1656
    %v1935 = vmul.f32 %v738, %v1658
    %v1936 = vmul.f32 %v744, %v1660
    %v1937 = vmul.f32 %v750, %v1662
    %v1938 = vmul.f32 %v756, %v1664
    %v1939 = vmul.f32 %v762, %v1666
    %1947 = vrot.lane.b32.xlu0 %v1933, 96
    %v1948 = vpop.permute.xlu0 %1947
    %1949 = vrot.lane.b32.xlu0 %v1934, 96
    %v1950 = vpop.permute.xlu0 %1949
    %1951 = vrot.lane.b32.xlu0 %v1935, 96
    %v1952 = vpop.permute.xlu0 %1951
    %1953 = vrot.lane.b32.xlu0 %v1936, 96
    %v1954 = vpop.permute.xlu0 %1953
    %1955 = vrot.lane.b32.xlu0 %v1937, 96
    %v1956 = vpop.permute.xlu0 %1955
    %1957 = vrot.lane.b32.xlu0 %v1938, 96
    %v1958 = vpop.permute.xlu0 %1957
    %1959 = vrot.lane.b32.xlu0 %v1939, 96
    %v1960 = vpop.permute.xlu0 %1959
    %v1968 = vadd.f32 %v1933, %v1948
    %v1969 = vadd.f32 %v1934, %v1950
    %v1970 = vadd.f32 %v1935, %v1952
    %v1971 = vadd.f32 %v1936, %v1954
    %v1972 = vadd.f32 %v1937, %v1956
    %v1973 = vadd.f32 %v1938, %v1958
    %v1974 = vadd.f32 %v1939, %v1960
    %1975 = vrot.lane.b32.xlu0 %v1933, 64
    %v1976 = vpop.permute.xlu0 %1975
    %1977 = vrot.lane.b32.xlu0 %v1934, 64
    %v1978 = vpop.permute.xlu0 %1977
    %1979 = vrot.lane.b32.xlu0 %v1935, 64
    %v1980 = vpop.permute.xlu0 %1979
    %1981 = vrot.lane.b32.xlu0 %v1936, 64
    %v1982 = vpop.permute.xlu0 %1981
    %1983 = vrot.lane.b32.xlu0 %v1937, 64
    %v1984 = vpop.permute.xlu0 %1983
    %1985 = vrot.lane.b32.xlu0 %v1938, 64
    %v1986 = vpop.permute.xlu0 %1985
    %1987 = vrot.lane.b32.xlu0 %v1939, 64
    %v1988 = vpop.permute.xlu0 %1987
    %v1996 = vadd.f32 %v1968, %v1976
    %v1997 = vadd.f32 %v1969, %v1978
    %v1998 = vadd.f32 %v1970, %v1980
    %v1999 = vadd.f32 %v1971, %v1982
    %v2000 = vadd.f32 %v1972, %v1984
    %v2001 = vadd.f32 %v1973, %v1986
    %v2002 = vadd.f32 %v1974, %v1988
    %v2003 = vmul.f32 %v728, %v1654
    %v2004 = vmul.f32 %v734, %v1656
    %v2005 = vmul.f32 %v740, %v1658
    %v2006 = vmul.f32 %v746, %v1660
    %v2007 = vmul.f32 %v752, %v1662
    %v2008 = vmul.f32 %v758, %v1664
    %v2009 = vmul.f32 %v764, %v1666
    %2017 = vrot.lane.b32.xlu0 %v2003, 32
    %v2018 = vpop.permute.xlu0 %2017
    %2019 = vrot.lane.b32.xlu0 %v2004, 32
    %v2020 = vpop.permute.xlu0 %2019
    %2021 = vrot.lane.b32.xlu0 %v2005, 32
    %v2022 = vpop.permute.xlu0 %2021
    %2023 = vrot.lane.b32.xlu0 %v2006, 32
    %v2024 = vpop.permute.xlu0 %2023
    %2025 = vrot.lane.b32.xlu0 %v2007, 32
    %v2026 = vpop.permute.xlu0 %2025
    %2027 = vrot.lane.b32.xlu0 %v2008, 32
    %v2028 = vpop.permute.xlu0 %2027
    %2029 = vrot.lane.b32.xlu0 %v2009, 32
    %v2030 = vpop.permute.xlu0 %2029
    %v2038 = vadd.f32 %v1996, %v2018
    %v2039 = vadd.f32 %v1997, %v2020
    %v2040 = vadd.f32 %v1998, %v2022
    %v2041 = vadd.f32 %v1999, %v2024
    %v2042 = vadd.f32 %v2000, %v2026
    %v2043 = vadd.f32 %v2001, %v2028
    %v2044 = vadd.f32 %v2002, %v2030
    %v2045 = vmul.f32 %v728, %v1409
    %v2046 = vmul.f32 %v734, %v1412
    %v2047 = vmul.f32 %v740, %v1415
    %v2048 = vmul.f32 %v746, %v1418
    %v2049 = vmul.f32 %v752, %v1421
    %v2050 = vmul.f32 %v758, %v1424
    %v2051 = vmul.f32 %v764, %v1427
    %v2052 = vadd.f32 %v2038, %v2045
    %v2053 = vadd.f32 %v2039, %v2046
    %v2054 = vadd.f32 %v2040, %v2047
    %v2055 = vadd.f32 %v2041, %v2048
    %v2056 = vadd.f32 %v2042, %v2049
    %v2057 = vadd.f32 %v2043, %v2050
    %v2058 = vadd.f32 %v2044, %v2051
    %2066 = vrot.lane.b32.xlu0 %v2045, 96
    %v2067 = vpop.permute.xlu0 %2066
    %2068 = vrot.lane.b32.xlu0 %v2046, 96
    %v2069 = vpop.permute.xlu0 %2068
    %2070 = vrot.lane.b32.xlu0 %v2047, 96
    %v2071 = vpop.permute.xlu0 %2070
    %2072 = vrot.lane.b32.xlu0 %v2048, 96
    %v2073 = vpop.permute.xlu0 %2072
    %2074 = vrot.lane.b32.xlu0 %v2049, 96
    %v2075 = vpop.permute.xlu0 %2074
    %2076 = vrot.lane.b32.xlu0 %v2050, 96
    %v2077 = vpop.permute.xlu0 %2076
    %2078 = vrot.lane.b32.xlu0 %v2051, 96
    %v2079 = vpop.permute.xlu0 %2078
    %v2087 = vadd.f32 %v2052, %v2067
    %v2088 = vadd.f32 %v2053, %v2069
    %v2089 = vadd.f32 %v2054, %v2071
    %v2090 = vadd.f32 %v2055, %v2073
    %v2091 = vadd.f32 %v2056, %v2075
    %v2092 = vadd.f32 %v2057, %v2077
    %v2093 = vadd.f32 %v2058, %v2079
    %2094 = vrot.lane.b32.xlu0 %v2045, 64
    %v2095 = vpop.permute.xlu0 %2094
    %2096 = vrot.lane.b32.xlu0 %v2046, 64
    %v2097 = vpop.permute.xlu0 %2096
    %2098 = vrot.lane.b32.xlu0 %v2047, 64
    %v2099 = vpop.permute.xlu0 %2098
    %2100 = vrot.lane.b32.xlu0 %v2048, 64
    %v2101 = vpop.permute.xlu0 %2100
    %2102 = vrot.lane.b32.xlu0 %v2049, 64
    %v2103 = vpop.permute.xlu0 %2102
    %2104 = vrot.lane.b32.xlu0 %v2050, 64
    %v2105 = vpop.permute.xlu0 %2104
    %2106 = vrot.lane.b32.xlu0 %v2051, 64
    %v2107 = vpop.permute.xlu0 %2106
    %v2115 = vadd.f32 %v2087, %v2095
    %v2116 = vadd.f32 %v2088, %v2097
    %v2117 = vadd.f32 %v2089, %v2099
    %v2118 = vadd.f32 %v2090, %v2101
    %v2119 = vadd.f32 %v2091, %v2103
    %v2120 = vadd.f32 %v2092, %v2105
    %v2121 = vadd.f32 %v2093, %v2107
    %v2122 = vmul.f32 %v833, %v1408
    %v2123 = vmul.f32 %v839, %v1411
    %v2124 = vmul.f32 %v845, %v1414
    %v2125 = vmul.f32 %v851, %v1417
    %v2126 = vmul.f32 %v857, %v1420
    %v2127 = vmul.f32 %v863, %v1423
    %v2128 = vmul.f32 %v869, %v1426
    %2136 = vrot.lane.b32.xlu0 %v2122, 96
    %v2137 = vpop.permute.xlu0 %2136
    %2138 = vrot.lane.b32.xlu0 %v2123, 96
    %v2139 = vpop.permute.xlu0 %2138
    %2140 = vrot.lane.b32.xlu0 %v2124, 96
    %v2141 = vpop.permute.xlu0 %2140
    %2142 = vrot.lane.b32.xlu0 %v2125, 96
    %v2143 = vpop.permute.xlu0 %2142
    %2144 = vrot.lane.b32.xlu0 %v2126, 96
    %v2145 = vpop.permute.xlu0 %2144
    %2146 = vrot.lane.b32.xlu0 %v2127, 96
    %v2147 = vpop.permute.xlu0 %2146
    %2148 = vrot.lane.b32.xlu0 %v2128, 96
    %v2149 = vpop.permute.xlu0 %2148
    %v2157 = vadd.f32 %v2122, %v2137
    %v2158 = vadd.f32 %v2123, %v2139
    %v2159 = vadd.f32 %v2124, %v2141
    %v2160 = vadd.f32 %v2125, %v2143
    %v2161 = vadd.f32 %v2126, %v2145
    %v2162 = vadd.f32 %v2127, %v2147
    %v2163 = vadd.f32 %v2128, %v2149
    %2164 = vrot.lane.b32.xlu0 %v2122, 64
    %v2165 = vpop.permute.xlu0 %2164
    %2166 = vrot.lane.b32.xlu0 %v2123, 64
    %v2167 = vpop.permute.xlu0 %2166
    %2168 = vrot.lane.b32.xlu0 %v2124, 64
    %v2169 = vpop.permute.xlu0 %2168
    %2170 = vrot.lane.b32.xlu0 %v2125, 64
    %v2171 = vpop.permute.xlu0 %2170
    %2172 = vrot.lane.b32.xlu0 %v2126, 64
    %v2173 = vpop.permute.xlu0 %2172
    %2174 = vrot.lane.b32.xlu0 %v2127, 64
    %v2175 = vpop.permute.xlu0 %2174
    %2176 = vrot.lane.b32.xlu0 %v2128, 64
    %v2177 = vpop.permute.xlu0 %2176
    %v2185 = vadd.f32 %v2157, %v2165
    %v2186 = vadd.f32 %v2158, %v2167
    %v2187 = vadd.f32 %v2159, %v2169
    %v2188 = vadd.f32 %v2160, %v2171
    %v2189 = vadd.f32 %v2161, %v2173
    %v2190 = vadd.f32 %v2162, %v2175
    %v2191 = vadd.f32 %v2163, %v2177
    %2192 = vrot.lane.b32.xlu0 %v2122, 32
    %v2193 = vpop.permute.xlu0 %2192
    %2194 = vrot.lane.b32.xlu0 %v2123, 32
    %v2195 = vpop.permute.xlu0 %2194
    %2196 = vrot.lane.b32.xlu0 %v2124, 32
    %v2197 = vpop.permute.xlu0 %2196
    %2198 = vrot.lane.b32.xlu0 %v2125, 32
    %v2199 = vpop.permute.xlu0 %2198
    %2200 = vrot.lane.b32.xlu0 %v2126, 32
    %v2201 = vpop.permute.xlu0 %2200
    %2202 = vrot.lane.b32.xlu0 %v2127, 32
    %v2203 = vpop.permute.xlu0 %2202
    %2204 = vrot.lane.b32.xlu0 %v2128, 32
    %v2205 = vpop.permute.xlu0 %2204
    %v2213 = vadd.f32 %v2185, %v2193
    %v2214 = vadd.f32 %v2186, %v2195
    %v2215 = vadd.f32 %v2187, %v2197
    %v2216 = vadd.f32 %v2188, %v2199
    %v2217 = vadd.f32 %v2189, %v2201
    %v2218 = vadd.f32 %v2190, %v2203
    %v2219 = vadd.f32 %v2191, %v2205
    %v2220 = vmul.f32 %v835, %v1409
    %v2221 = vmul.f32 %v841, %v1412
    %v2222 = vmul.f32 %v847, %v1415
    %v2223 = vmul.f32 %v853, %v1418
    %v2224 = vmul.f32 %v859, %v1421
    %v2225 = vmul.f32 %v865, %v1424
    %v2226 = vmul.f32 %v871, %v1427
    %v2227 = vadd.f32 %v2213, %v2220
    %v2228 = vadd.f32 %v2214, %v2221
    %v2229 = vadd.f32 %v2215, %v2222
    %v2230 = vadd.f32 %v2216, %v2223
    %v2231 = vadd.f32 %v2217, %v2224
    %v2232 = vadd.f32 %v2218, %v2225
    %v2233 = vadd.f32 %v2219, %v2226
    %2234 = vrot.lane.b32.xlu0 %v1409, 96
    %v2235 = vpop.permute.xlu0 %2234
    %2236 = vrot.lane.b32.xlu0 %v1412, 96
    %v2237 = vpop.permute.xlu0 %2236
    %2238 = vrot.lane.b32.xlu0 %v1415, 96
    %v2239 = vpop.permute.xlu0 %2238
    %2240 = vrot.lane.b32.xlu0 %v1418, 96
    %v2241 = vpop.permute.xlu0 %2240
    %2242 = vrot.lane.b32.xlu0 %v1421, 96
    %v2243 = vpop.permute.xlu0 %2242
    %2244 = vrot.lane.b32.xlu0 %v1424, 96
    %v2245 = vpop.permute.xlu0 %2244
    %2246 = vrot.lane.b32.xlu0 %v1427, 96
    %v2247 = vpop.permute.xlu0 %2246
    %v2255 = vmul.f32 %v835, %v2235
    %v2256 = vmul.f32 %v841, %v2237
    %v2257 = vmul.f32 %v847, %v2239
    %v2258 = vmul.f32 %v853, %v2241
    %v2259 = vmul.f32 %v859, %v2243
    %v2260 = vmul.f32 %v865, %v2245
    %v2261 = vmul.f32 %v871, %v2247
    %2269 = vrot.lane.b32.xlu0 %v2255, 96
    %v2270 = vpop.permute.xlu0 %2269
    %2271 = vrot.lane.b32.xlu0 %v2256, 96
    %v2272 = vpop.permute.xlu0 %2271
    %2273 = vrot.lane.b32.xlu0 %v2257, 96
    %v2274 = vpop.permute.xlu0 %2273
    %2275 = vrot.lane.b32.xlu0 %v2258, 96
    %v2276 = vpop.permute.xlu0 %2275
    %2277 = vrot.lane.b32.xlu0 %v2259, 96
    %v2278 = vpop.permute.xlu0 %2277
    %2279 = vrot.lane.b32.xlu0 %v2260, 96
    %v2280 = vpop.permute.xlu0 %2279
    %2281 = vrot.lane.b32.xlu0 %v2261, 96
    %v2282 = vpop.permute.xlu0 %2281
    %v2290 = vadd.f32 %v2227, %v2270
    %v2291 = vadd.f32 %v2228, %v2272
    %v2292 = vadd.f32 %v2229, %v2274
    %v2293 = vadd.f32 %v2230, %v2276
    %v2294 = vadd.f32 %v2231, %v2278
    %v2295 = vadd.f32 %v2232, %v2280
    %v2296 = vadd.f32 %v2233, %v2282
    %2297 = vrot.lane.b32.xlu0 %v2255, 64
    %v2298 = vpop.permute.xlu0 %2297
    %2299 = vrot.lane.b32.xlu0 %v2256, 64
    %v2300 = vpop.permute.xlu0 %2299
    %2301 = vrot.lane.b32.xlu0 %v2257, 64
    %v2302 = vpop.permute.xlu0 %2301
    %2303 = vrot.lane.b32.xlu0 %v2258, 64
    %v2304 = vpop.permute.xlu0 %2303
    %2305 = vrot.lane.b32.xlu0 %v2259, 64
    %v2306 = vpop.permute.xlu0 %2305
    %2307 = vrot.lane.b32.xlu0 %v2260, 64
    %v2308 = vpop.permute.xlu0 %2307
    %2309 = vrot.lane.b32.xlu0 %v2261, 64
    %v2310 = vpop.permute.xlu0 %2309
    %v2318 = vadd.f32 %v2290, %v2298
    %v2319 = vadd.f32 %v2291, %v2300
    %v2320 = vadd.f32 %v2292, %v2302
    %v2321 = vadd.f32 %v2293, %v2304
    %v2322 = vadd.f32 %v2294, %v2306
    %v2323 = vadd.f32 %v2295, %v2308
    %v2324 = vadd.f32 %v2296, %v2310
    %2332 = vrot.lane.b32.xlu0 %v1410, 96
    %v2333 = vpop.permute.xlu0 %2332
    %2334 = vrot.lane.b32.xlu0 %v1413, 96
    %v2335 = vpop.permute.xlu0 %2334
    %2336 = vrot.lane.b32.xlu0 %v1416, 96
    %v2337 = vpop.permute.xlu0 %2336
    %2338 = vrot.lane.b32.xlu0 %v1419, 96
    %v2339 = vpop.permute.xlu0 %2338
    %2340 = vrot.lane.b32.xlu0 %v1422, 96
    %v2341 = vpop.permute.xlu0 %2340
    %2342 = vrot.lane.b32.xlu0 %v1425, 96
    %v2343 = vpop.permute.xlu0 %2342
    %2344 = vrot.lane.b32.xlu0 %v1428, 96
    %v2345 = vpop.permute.xlu0 %2344
    %v2353 = vmul.f32 %v835, %v2333
    %v2354 = vmul.f32 %v841, %v2335
    %v2355 = vmul.f32 %v847, %v2337
    %v2356 = vmul.f32 %v853, %v2339
    %v2357 = vmul.f32 %v859, %v2341
    %v2358 = vmul.f32 %v865, %v2343
    %v2359 = vmul.f32 %v871, %v2345
    %2367 = vrot.lane.b32.xlu0 %v2353, 32
    %v2368 = vpop.permute.xlu0 %2367
    %2369 = vrot.lane.b32.xlu0 %v2354, 32
    %v2370 = vpop.permute.xlu0 %2369
    %2371 = vrot.lane.b32.xlu0 %v2355, 32
    %v2372 = vpop.permute.xlu0 %2371
    %2373 = vrot.lane.b32.xlu0 %v2356, 32
    %v2374 = vpop.permute.xlu0 %2373
    %2375 = vrot.lane.b32.xlu0 %v2357, 32
    %v2376 = vpop.permute.xlu0 %2375
    %2377 = vrot.lane.b32.xlu0 %v2358, 32
    %v2378 = vpop.permute.xlu0 %2377
    %2379 = vrot.lane.b32.xlu0 %v2359, 32
    %v2380 = vpop.permute.xlu0 %2379
    %v2388 = vadd.f32 %v2318, %v2368
    %v2389 = vadd.f32 %v2319, %v2370
    %v2390 = vadd.f32 %v2320, %v2372
    %v2391 = vadd.f32 %v2321, %v2374
    %v2392 = vadd.f32 %v2322, %v2376
    %v2393 = vadd.f32 %v2323, %v2378
    %v2394 = vadd.f32 %v2324, %v2380
    %v2395 = vmul.f32 %v940, %v1408
    %v2396 = vmul.f32 %v946, %v1411
    %v2397 = vmul.f32 %v952, %v1414
    %v2398 = vmul.f32 %v958, %v1417
    %v2399 = vmul.f32 %v964, %v1420
    %v2400 = vmul.f32 %v970, %v1423
    %v2401 = vmul.f32 %v976, %v1426
    %2409 = vrot.lane.b32.xlu0 %v2395, 96
    %v2410 = vpop.permute.xlu0 %2409
    %2411 = vrot.lane.b32.xlu0 %v2396, 96
    %v2412 = vpop.permute.xlu0 %2411
    %2413 = vrot.lane.b32.xlu0 %v2397, 96
    %v2414 = vpop.permute.xlu0 %2413
    %2415 = vrot.lane.b32.xlu0 %v2398, 96
    %v2416 = vpop.permute.xlu0 %2415
    %2417 = vrot.lane.b32.xlu0 %v2399, 96
    %v2418 = vpop.permute.xlu0 %2417
    %2419 = vrot.lane.b32.xlu0 %v2400, 96
    %v2420 = vpop.permute.xlu0 %2419
    %2421 = vrot.lane.b32.xlu0 %v2401, 96
    %v2422 = vpop.permute.xlu0 %2421
    %v2430 = vadd.f32 %v2395, %v2410
    %v2431 = vadd.f32 %v2396, %v2412
    %v2432 = vadd.f32 %v2397, %v2414
    %v2433 = vadd.f32 %v2398, %v2416
    %v2434 = vadd.f32 %v2399, %v2418
    %v2435 = vadd.f32 %v2400, %v2420
    %v2436 = vadd.f32 %v2401, %v2422
    %2437 = vrot.lane.b32.xlu0 %v1408, 96
    %v2438 = vpop.permute.xlu0 %2437
    %2439 = vrot.lane.b32.xlu0 %v1411, 96
    %v2440 = vpop.permute.xlu0 %2439
    %2441 = vrot.lane.b32.xlu0 %v1414, 96
    %v2442 = vpop.permute.xlu0 %2441
    %2443 = vrot.lane.b32.xlu0 %v1417, 96
    %v2444 = vpop.permute.xlu0 %2443
    %2445 = vrot.lane.b32.xlu0 %v1420, 96
    %v2446 = vpop.permute.xlu0 %2445
    %2447 = vrot.lane.b32.xlu0 %v1423, 96
    %v2448 = vpop.permute.xlu0 %2447
    %2449 = vrot.lane.b32.xlu0 %v1426, 96
    %v2450 = vpop.permute.xlu0 %2449
    %v2458 = vmul.f32 %v940, %v2438
    %v2459 = vmul.f32 %v946, %v2440
    %v2460 = vmul.f32 %v952, %v2442
    %v2461 = vmul.f32 %v958, %v2444
    %v2462 = vmul.f32 %v964, %v2446
    %v2463 = vmul.f32 %v970, %v2448
    %v2464 = vmul.f32 %v976, %v2450
    %2472 = vrot.lane.b32.xlu0 %v2458, 64
    %v2473 = vpop.permute.xlu0 %2472
    %2474 = vrot.lane.b32.xlu0 %v2459, 64
    %v2475 = vpop.permute.xlu0 %2474
    %2476 = vrot.lane.b32.xlu0 %v2460, 64
    %v2477 = vpop.permute.xlu0 %2476
    %2478 = vrot.lane.b32.xlu0 %v2461, 64
    %v2479 = vpop.permute.xlu0 %2478
    %2480 = vrot.lane.b32.xlu0 %v2462, 64
    %v2481 = vpop.permute.xlu0 %2480
    %2482 = vrot.lane.b32.xlu0 %v2463, 64
    %v2483 = vpop.permute.xlu0 %2482
    %2484 = vrot.lane.b32.xlu0 %v2464, 64
    %v2485 = vpop.permute.xlu0 %2484
    %v2493 = vadd.f32 %v2430, %v2473
    %v2494 = vadd.f32 %v2431, %v2475
    %v2495 = vadd.f32 %v2432, %v2477
    %v2496 = vadd.f32 %v2433, %v2479
    %v2497 = vadd.f32 %v2434, %v2481
    %v2498 = vadd.f32 %v2435, %v2483
    %v2499 = vadd.f32 %v2436, %v2485
    %v2500 = vmul.f32 %v940, %v2235
    %v2501 = vmul.f32 %v946, %v2237
    %v2502 = vmul.f32 %v952, %v2239
    %v2503 = vmul.f32 %v958, %v2241
    %v2504 = vmul.f32 %v964, %v2243
    %v2505 = vmul.f32 %v970, %v2245
    %v2506 = vmul.f32 %v976, %v2247
    %2514 = vrot.lane.b32.xlu0 %v2500, 32
    %v2515 = vpop.permute.xlu0 %2514
    %2516 = vrot.lane.b32.xlu0 %v2501, 32
    %v2517 = vpop.permute.xlu0 %2516
    %2518 = vrot.lane.b32.xlu0 %v2502, 32
    %v2519 = vpop.permute.xlu0 %2518
    %2520 = vrot.lane.b32.xlu0 %v2503, 32
    %v2521 = vpop.permute.xlu0 %2520
    %2522 = vrot.lane.b32.xlu0 %v2504, 32
    %v2523 = vpop.permute.xlu0 %2522
    %2524 = vrot.lane.b32.xlu0 %v2505, 32
    %v2525 = vpop.permute.xlu0 %2524
    %2526 = vrot.lane.b32.xlu0 %v2506, 32
    %v2527 = vpop.permute.xlu0 %2526
    %v2535 = vadd.f32 %v2493, %v2515
    %v2536 = vadd.f32 %v2494, %v2517
    %v2537 = vadd.f32 %v2495, %v2519
    %v2538 = vadd.f32 %v2496, %v2521
    %v2539 = vadd.f32 %v2497, %v2523
    %v2540 = vadd.f32 %v2498, %v2525
    %v2541 = vadd.f32 %v2499, %v2527
    %v2542 = vmul.f32 %v942, %v2235
    %v2543 = vmul.f32 %v948, %v2237
    %v2544 = vmul.f32 %v954, %v2239
    %v2545 = vmul.f32 %v960, %v2241
    %v2546 = vmul.f32 %v966, %v2243
    %v2547 = vmul.f32 %v972, %v2245
    %v2548 = vmul.f32 %v978, %v2247
    %v2549 = vadd.f32 %v2535, %v2542
    %v2550 = vadd.f32 %v2536, %v2543
    %v2551 = vadd.f32 %v2537, %v2544
    %v2552 = vadd.f32 %v2538, %v2545
    %v2553 = vadd.f32 %v2539, %v2546
    %v2554 = vadd.f32 %v2540, %v2547
    %v2555 = vadd.f32 %v2541, %v2548
    %2563 = vrot.lane.b32.xlu0 %v2542, 96
    %v2564 = vpop.permute.xlu0 %2563
    %2565 = vrot.lane.b32.xlu0 %v2543, 96
    %v2566 = vpop.permute.xlu0 %2565
    %2567 = vrot.lane.b32.xlu0 %v2544, 96
    %v2568 = vpop.permute.xlu0 %2567
    %2569 = vrot.lane.b32.xlu0 %v2545, 96
    %v2570 = vpop.permute.xlu0 %2569
    %2571 = vrot.lane.b32.xlu0 %v2546, 96
    %v2572 = vpop.permute.xlu0 %2571
    %2573 = vrot.lane.b32.xlu0 %v2547, 96
    %v2574 = vpop.permute.xlu0 %2573
    %2575 = vrot.lane.b32.xlu0 %v2548, 96
    %v2576 = vpop.permute.xlu0 %2575
    %v2584 = vadd.f32 %v2549, %v2564
    %v2585 = vadd.f32 %v2550, %v2566
    %v2586 = vadd.f32 %v2551, %v2568
    %v2587 = vadd.f32 %v2552, %v2570
    %v2588 = vadd.f32 %v2553, %v2572
    %v2589 = vadd.f32 %v2554, %v2574
    %v2590 = vadd.f32 %v2555, %v2576
    %2591 = vrot.lane.b32.xlu0 %v2542, 64
    %v2592 = vpop.permute.xlu0 %2591
    %2593 = vrot.lane.b32.xlu0 %v2543, 64
    %v2594 = vpop.permute.xlu0 %2593
    %2595 = vrot.lane.b32.xlu0 %v2544, 64
    %v2596 = vpop.permute.xlu0 %2595
    %2597 = vrot.lane.b32.xlu0 %v2545, 64
    %v2598 = vpop.permute.xlu0 %2597
    %2599 = vrot.lane.b32.xlu0 %v2546, 64
    %v2600 = vpop.permute.xlu0 %2599
    %2601 = vrot.lane.b32.xlu0 %v2547, 64
    %v2602 = vpop.permute.xlu0 %2601
    %2603 = vrot.lane.b32.xlu0 %v2548, 64
    %v2604 = vpop.permute.xlu0 %2603
    %v2612 = vadd.f32 %v2584, %v2592
    %v2613 = vadd.f32 %v2585, %v2594
    %v2614 = vadd.f32 %v2586, %v2596
    %v2615 = vadd.f32 %v2587, %v2598
    %v2616 = vadd.f32 %v2588, %v2600
    %v2617 = vadd.f32 %v2589, %v2602
    %v2618 = vadd.f32 %v2590, %v2604
    %v2619 = vmul.f32 %v942, %v2438
    %v2620 = vmul.f32 %v948, %v2440
    %v2621 = vmul.f32 %v954, %v2442
    %v2622 = vmul.f32 %v960, %v2444
    %v2623 = vmul.f32 %v966, %v2446
    %v2624 = vmul.f32 %v972, %v2448
    %v2625 = vmul.f32 %v978, %v2450
    %v2626 = vmul.f32 %v1047, %v2438
    %v2627 = vmul.f32 %v1053, %v2440
    %v2628 = vmul.f32 %v1059, %v2442
    %v2629 = vmul.f32 %v1065, %v2444
    %v2630 = vmul.f32 %v1071, %v2446
    %v2631 = vmul.f32 %v1077, %v2448
    %v2632 = vmul.f32 %v1083, %v2450
    %2640 = vrot.lane.b32.xlu0 %v2626, 96
    %v2641 = vpop.permute.xlu0 %2640
    %2642 = vrot.lane.b32.xlu0 %v2627, 96
    %v2643 = vpop.permute.xlu0 %2642
    %2644 = vrot.lane.b32.xlu0 %v2628, 96
    %v2645 = vpop.permute.xlu0 %2644
    %2646 = vrot.lane.b32.xlu0 %v2629, 96
    %v2647 = vpop.permute.xlu0 %2646
    %2648 = vrot.lane.b32.xlu0 %v2630, 96
    %v2649 = vpop.permute.xlu0 %2648
    %2650 = vrot.lane.b32.xlu0 %v2631, 96
    %v2651 = vpop.permute.xlu0 %2650
    %2652 = vrot.lane.b32.xlu0 %v2632, 96
    %v2653 = vpop.permute.xlu0 %2652
    %v2661 = vadd.f32 %v2619, %v2641
    %v2662 = vadd.f32 %v2620, %v2643
    %v2663 = vadd.f32 %v2621, %v2645
    %v2664 = vadd.f32 %v2622, %v2647
    %v2665 = vadd.f32 %v2623, %v2649
    %v2666 = vadd.f32 %v2624, %v2651
    %v2667 = vadd.f32 %v2625, %v2653
    %2668 = vrot.lane.b32.xlu0 %v2626, 64
    %v2669 = vpop.permute.xlu0 %2668
    %2670 = vrot.lane.b32.xlu0 %v2627, 64
    %v2671 = vpop.permute.xlu0 %2670
    %2672 = vrot.lane.b32.xlu0 %v2628, 64
    %v2673 = vpop.permute.xlu0 %2672
    %2674 = vrot.lane.b32.xlu0 %v2629, 64
    %v2675 = vpop.permute.xlu0 %2674
    %2676 = vrot.lane.b32.xlu0 %v2630, 64
    %v2677 = vpop.permute.xlu0 %2676
    %2678 = vrot.lane.b32.xlu0 %v2631, 64
    %v2679 = vpop.permute.xlu0 %2678
    %2680 = vrot.lane.b32.xlu0 %v2632, 64
    %v2681 = vpop.permute.xlu0 %2680
    %v2689 = vadd.f32 %v2661, %v2669
    %v2690 = vadd.f32 %v2662, %v2671
    %v2691 = vadd.f32 %v2663, %v2673
    %v2692 = vadd.f32 %v2664, %v2675
    %v2693 = vadd.f32 %v2665, %v2677
    %v2694 = vadd.f32 %v2666, %v2679
    %v2695 = vadd.f32 %v2667, %v2681
    %2696 = vrot.lane.b32.xlu0 %v1409, 64
    %v2697 = vpop.permute.xlu0 %2696
    %2698 = vrot.lane.b32.xlu0 %v1412, 64
    %v2699 = vpop.permute.xlu0 %2698
    %2700 = vrot.lane.b32.xlu0 %v1415, 64
    %v2701 = vpop.permute.xlu0 %2700
    %2702 = vrot.lane.b32.xlu0 %v1418, 64
    %v2703 = vpop.permute.xlu0 %2702
    %2704 = vrot.lane.b32.xlu0 %v1421, 64
    %v2705 = vpop.permute.xlu0 %2704
    %2706 = vrot.lane.b32.xlu0 %v1424, 64
    %v2707 = vpop.permute.xlu0 %2706
    %2708 = vrot.lane.b32.xlu0 %v1427, 64
    %v2709 = vpop.permute.xlu0 %2708
    %v2717 = vmul.f32 %v1047, %v2697
    %v2718 = vmul.f32 %v1053, %v2699
    %v2719 = vmul.f32 %v1059, %v2701
    %v2720 = vmul.f32 %v1065, %v2703
    %v2721 = vmul.f32 %v1071, %v2705
    %v2722 = vmul.f32 %v1077, %v2707
    %v2723 = vmul.f32 %v1083, %v2709
    %2731 = vrot.lane.b32.xlu0 %v2717, 32
    %v2732 = vpop.permute.xlu0 %2731
    %2733 = vrot.lane.b32.xlu0 %v2718, 32
    %v2734 = vpop.permute.xlu0 %2733
    %2735 = vrot.lane.b32.xlu0 %v2719, 32
    %v2736 = vpop.permute.xlu0 %2735
    %2737 = vrot.lane.b32.xlu0 %v2720, 32
    %v2738 = vpop.permute.xlu0 %2737
    %2739 = vrot.lane.b32.xlu0 %v2721, 32
    %v2740 = vpop.permute.xlu0 %2739
    %2741 = vrot.lane.b32.xlu0 %v2722, 32
    %v2742 = vpop.permute.xlu0 %2741
    %2743 = vrot.lane.b32.xlu0 %v2723, 32
    %v2744 = vpop.permute.xlu0 %2743
    %v2752 = vadd.f32 %v2689, %v2732
    %v2753 = vadd.f32 %v2690, %v2734
    %v2754 = vadd.f32 %v2691, %v2736
    %v2755 = vadd.f32 %v2692, %v2738
    %v2756 = vadd.f32 %v2693, %v2740
    %v2757 = vadd.f32 %v2694, %v2742
    %v2758 = vadd.f32 %v2695, %v2744
    %v2759 = vadd.f32 %v2752, %v2717
    %v2760 = vadd.f32 %v2753, %v2718
    %v2761 = vadd.f32 %v2754, %v2719
    %v2762 = vadd.f32 %v2755, %v2720
    %v2763 = vadd.f32 %v2756, %v2721
    %v2764 = vadd.f32 %v2757, %v2722
    %v2765 = vadd.f32 %v2758, %v2723
    %v2766 = vmul.f32 %v1049, %v2697
    %v2767 = vmul.f32 %v1055, %v2699
    %v2768 = vmul.f32 %v1061, %v2701
    %v2769 = vmul.f32 %v1067, %v2703
    %v2770 = vmul.f32 %v1073, %v2705
    %v2771 = vmul.f32 %v1079, %v2707
    %v2772 = vmul.f32 %v1085, %v2709
    %2780 = vrot.lane.b32.xlu0 %v2766, 96
    %v2781 = vpop.permute.xlu0 %2780
    %2782 = vrot.lane.b32.xlu0 %v2767, 96
    %v2783 = vpop.permute.xlu0 %2782
    %2784 = vrot.lane.b32.xlu0 %v2768, 96
    %v2785 = vpop.permute.xlu0 %2784
    %2786 = vrot.lane.b32.xlu0 %v2769, 96
    %v2787 = vpop.permute.xlu0 %2786
    %2788 = vrot.lane.b32.xlu0 %v2770, 96
    %v2789 = vpop.permute.xlu0 %2788
    %2790 = vrot.lane.b32.xlu0 %v2771, 96
    %v2791 = vpop.permute.xlu0 %2790
    %2792 = vrot.lane.b32.xlu0 %v2772, 96
    %v2793 = vpop.permute.xlu0 %2792
    %v2801 = vadd.f32 %v2759, %v2781
    %v2802 = vadd.f32 %v2760, %v2783
    %v2803 = vadd.f32 %v2761, %v2785
    %v2804 = vadd.f32 %v2762, %v2787
    %v2805 = vadd.f32 %v2763, %v2789
    %v2806 = vadd.f32 %v2764, %v2791
    %v2807 = vadd.f32 %v2765, %v2793
    %2808 = vrot.lane.b32.xlu0 %v2766, 64
    %v2809 = vpop.permute.xlu0 %2808
    %2810 = vrot.lane.b32.xlu0 %v2767, 64
    %v2811 = vpop.permute.xlu0 %2810
    %2812 = vrot.lane.b32.xlu0 %v2768, 64
    %v2813 = vpop.permute.xlu0 %2812
    %2814 = vrot.lane.b32.xlu0 %v2769, 64
    %v2815 = vpop.permute.xlu0 %2814
    %2816 = vrot.lane.b32.xlu0 %v2770, 64
    %v2817 = vpop.permute.xlu0 %2816
    %2818 = vrot.lane.b32.xlu0 %v2771, 64
    %v2819 = vpop.permute.xlu0 %2818
    %2820 = vrot.lane.b32.xlu0 %v2772, 64
    %v2821 = vpop.permute.xlu0 %2820
    %v2829 = vadd.f32 %v2801, %v2809
    %v2830 = vadd.f32 %v2802, %v2811
    %v2831 = vadd.f32 %v2803, %v2813
    %v2832 = vadd.f32 %v2804, %v2815
    %v2833 = vadd.f32 %v2805, %v2817
    %v2834 = vadd.f32 %v2806, %v2819
    %v2835 = vadd.f32 %v2807, %v2821
    %2836 = vrot.lane.b32.xlu0 %v1410, 64
    %v2837 = vpop.permute.xlu0 %2836
    %2838 = vrot.lane.b32.xlu0 %v1413, 64
    %v2839 = vpop.permute.xlu0 %2838
    %2840 = vrot.lane.b32.xlu0 %v1416, 64
    %v2841 = vpop.permute.xlu0 %2840
    %2842 = vrot.lane.b32.xlu0 %v1419, 64
    %v2843 = vpop.permute.xlu0 %2842
    %2844 = vrot.lane.b32.xlu0 %v1422, 64
    %v2845 = vpop.permute.xlu0 %2844
    %2846 = vrot.lane.b32.xlu0 %v1425, 64
    %v2847 = vpop.permute.xlu0 %2846
    %2848 = vrot.lane.b32.xlu0 %v1428, 64
    %v2849 = vpop.permute.xlu0 %2848
    %v2857 = vmul.f32 %v1049, %v2837
    %v2858 = vmul.f32 %v1055, %v2839
    %v2859 = vmul.f32 %v1061, %v2841
    %v2860 = vmul.f32 %v1067, %v2843
    %v2861 = vmul.f32 %v1073, %v2845
    %v2862 = vmul.f32 %v1079, %v2847
    %v2863 = vmul.f32 %v1085, %v2849
    %2871 = vrot.lane.b32.xlu0 %v2857, 32
    %v2872 = vpop.permute.xlu0 %2871
    %2873 = vrot.lane.b32.xlu0 %v2858, 32
    %v2874 = vpop.permute.xlu0 %2873
    %2875 = vrot.lane.b32.xlu0 %v2859, 32
    %v2876 = vpop.permute.xlu0 %2875
    %2877 = vrot.lane.b32.xlu0 %v2860, 32
    %v2878 = vpop.permute.xlu0 %2877
    %2879 = vrot.lane.b32.xlu0 %v2861, 32
    %v2880 = vpop.permute.xlu0 %2879
    %2881 = vrot.lane.b32.xlu0 %v2862, 32
    %v2882 = vpop.permute.xlu0 %2881
    %2883 = vrot.lane.b32.xlu0 %v2863, 32
    %v2884 = vpop.permute.xlu0 %2883
    %v2892 = vadd.f32 %v2829, %v2872
    %v2893 = vadd.f32 %v2830, %v2874
    %v2894 = vadd.f32 %v2831, %v2876
    %v2895 = vadd.f32 %v2832, %v2878
    %v2896 = vadd.f32 %v2833, %v2880
    %v2897 = vadd.f32 %v2834, %v2882
    %v2898 = vadd.f32 %v2835, %v2884
    %v2899 = vmul.f32 %v1049, %v2438
    %v2900 = vmul.f32 %v1055, %v2440
    %v2901 = vmul.f32 %v1061, %v2442
    %v2902 = vmul.f32 %v1067, %v2444
    %v2903 = vmul.f32 %v1073, %v2446
    %v2904 = vmul.f32 %v1079, %v2448
    %v2905 = vmul.f32 %v1085, %v2450
    %v2906 = vmul.f32 %v1154, %v2438
    %v2907 = vmul.f32 %v1160, %v2440
    %v2908 = vmul.f32 %v1166, %v2442
    %v2909 = vmul.f32 %v1172, %v2444
    %v2910 = vmul.f32 %v1178, %v2446
    %v2911 = vmul.f32 %v1184, %v2448
    %v2912 = vmul.f32 %v1190, %v2450
    %2920 = vrot.lane.b32.xlu0 %v2906, 96
    %v2921 = vpop.permute.xlu0 %2920
    %2922 = vrot.lane.b32.xlu0 %v2907, 96
    %v2923 = vpop.permute.xlu0 %2922
    %2924 = vrot.lane.b32.xlu0 %v2908, 96
    %v2925 = vpop.permute.xlu0 %2924
    %2926 = vrot.lane.b32.xlu0 %v2909, 96
    %v2927 = vpop.permute.xlu0 %2926
    %2928 = vrot.lane.b32.xlu0 %v2910, 96
    %v2929 = vpop.permute.xlu0 %2928
    %2930 = vrot.lane.b32.xlu0 %v2911, 96
    %v2931 = vpop.permute.xlu0 %2930
    %2932 = vrot.lane.b32.xlu0 %v2912, 96
    %v2933 = vpop.permute.xlu0 %2932
    %v2941 = vadd.f32 %v2899, %v2921
    %v2942 = vadd.f32 %v2900, %v2923
    %v2943 = vadd.f32 %v2901, %v2925
    %v2944 = vadd.f32 %v2902, %v2927
    %v2945 = vadd.f32 %v2903, %v2929
    %v2946 = vadd.f32 %v2904, %v2931
    %v2947 = vadd.f32 %v2905, %v2933
    %2948 = vrot.lane.b32.xlu0 %v2906, 64
    %v2949 = vpop.permute.xlu0 %2948
    %2950 = vrot.lane.b32.xlu0 %v2907, 64
    %v2951 = vpop.permute.xlu0 %2950
    %2952 = vrot.lane.b32.xlu0 %v2908, 64
    %v2953 = vpop.permute.xlu0 %2952
    %2954 = vrot.lane.b32.xlu0 %v2909, 64
    %v2955 = vpop.permute.xlu0 %2954
    %2956 = vrot.lane.b32.xlu0 %v2910, 64
    %v2957 = vpop.permute.xlu0 %2956
    %2958 = vrot.lane.b32.xlu0 %v2911, 64
    %v2959 = vpop.permute.xlu0 %2958
    %2960 = vrot.lane.b32.xlu0 %v2912, 64
    %v2961 = vpop.permute.xlu0 %2960
    %v2969 = vadd.f32 %v2941, %v2949
    %v2970 = vadd.f32 %v2942, %v2951
    %v2971 = vadd.f32 %v2943, %v2953
    %v2972 = vadd.f32 %v2944, %v2955
    %v2973 = vadd.f32 %v2945, %v2957
    %v2974 = vadd.f32 %v2946, %v2959
    %v2975 = vadd.f32 %v2947, %v2961
    %2976 = vrot.lane.b32.xlu0 %v2906, 32
    %v2977 = vpop.permute.xlu0 %2976
    %2978 = vrot.lane.b32.xlu0 %v2907, 32
    %v2979 = vpop.permute.xlu0 %2978
    %2980 = vrot.lane.b32.xlu0 %v2908, 32
    %v2981 = vpop.permute.xlu0 %2980
    %2982 = vrot.lane.b32.xlu0 %v2909, 32
    %v2983 = vpop.permute.xlu0 %2982
    %2984 = vrot.lane.b32.xlu0 %v2910, 32
    %v2985 = vpop.permute.xlu0 %2984
    %2986 = vrot.lane.b32.xlu0 %v2911, 32
    %v2987 = vpop.permute.xlu0 %2986
    %2988 = vrot.lane.b32.xlu0 %v2912, 32
    %v2989 = vpop.permute.xlu0 %2988
    %v2997 = vadd.f32 %v2969, %v2977
    %v2998 = vadd.f32 %v2970, %v2979
    %v2999 = vadd.f32 %v2971, %v2981
    %v3000 = vadd.f32 %v2972, %v2983
    %v3001 = vadd.f32 %v2973, %v2985
    %v3002 = vadd.f32 %v2974, %v2987
    %v3003 = vadd.f32 %v2975, %v2989
    %v3004 = vmul.f32 %v1154, %v2235
    %v3005 = vmul.f32 %v1160, %v2237
    %v3006 = vmul.f32 %v1166, %v2239
    %v3007 = vmul.f32 %v1172, %v2241
    %v3008 = vmul.f32 %v1178, %v2243
    %v3009 = vmul.f32 %v1184, %v2245
    %v3010 = vmul.f32 %v1190, %v2247
    %v3011 = vadd.f32 %v2997, %v3004
    %v3012 = vadd.f32 %v2998, %v3005
    %v3013 = vadd.f32 %v2999, %v3006
    %v3014 = vadd.f32 %v3000, %v3007
    %v3015 = vadd.f32 %v3001, %v3008
    %v3016 = vadd.f32 %v3002, %v3009
    %v3017 = vadd.f32 %v3003, %v3010
    %v3018 = vmul.f32 %v1156, %v2235
    %v3019 = vmul.f32 %v1162, %v2237
    %v3020 = vmul.f32 %v1168, %v2239
    %v3021 = vmul.f32 %v1174, %v2241
    %v3022 = vmul.f32 %v1180, %v2243
    %v3023 = vmul.f32 %v1186, %v2245
    %v3024 = vmul.f32 %v1192, %v2247
    %3032 = vrot.lane.b32.xlu0 %v3018, 96
    %v3033 = vpop.permute.xlu0 %3032
    %3034 = vrot.lane.b32.xlu0 %v3019, 96
    %v3035 = vpop.permute.xlu0 %3034
    %3036 = vrot.lane.b32.xlu0 %v3020, 96
    %v3037 = vpop.permute.xlu0 %3036
    %3038 = vrot.lane.b32.xlu0 %v3021, 96
    %v3039 = vpop.permute.xlu0 %3038
    %3040 = vrot.lane.b32.xlu0 %v3022, 96
    %v3041 = vpop.permute.xlu0 %3040
    %3042 = vrot.lane.b32.xlu0 %v3023, 96
    %v3043 = vpop.permute.xlu0 %3042
    %3044 = vrot.lane.b32.xlu0 %v3024, 96
    %v3045 = vpop.permute.xlu0 %3044
    %v3053 = vadd.f32 %v3011, %v3033
    %v3054 = vadd.f32 %v3012, %v3035
    %v3055 = vadd.f32 %v3013, %v3037
    %v3056 = vadd.f32 %v3014, %v3039
    %v3057 = vadd.f32 %v3015, %v3041
    %v3058 = vadd.f32 %v3016, %v3043
    %v3059 = vadd.f32 %v3017, %v3045
    %3060 = vrot.lane.b32.xlu0 %v3018, 64
    %v3061 = vpop.permute.xlu0 %3060
    %3062 = vrot.lane.b32.xlu0 %v3019, 64
    %v3063 = vpop.permute.xlu0 %3062
    %3064 = vrot.lane.b32.xlu0 %v3020, 64
    %v3065 = vpop.permute.xlu0 %3064
    %3066 = vrot.lane.b32.xlu0 %v3021, 64
    %v3067 = vpop.permute.xlu0 %3066
    %3068 = vrot.lane.b32.xlu0 %v3022, 64
    %v3069 = vpop.permute.xlu0 %3068
    %3070 = vrot.lane.b32.xlu0 %v3023, 64
    %v3071 = vpop.permute.xlu0 %3070
    %3072 = vrot.lane.b32.xlu0 %v3024, 64
    %v3073 = vpop.permute.xlu0 %3072
    %v3081 = vadd.f32 %v3053, %v3061
    %v3082 = vadd.f32 %v3054, %v3063
    %v3083 = vadd.f32 %v3055, %v3065
    %v3084 = vadd.f32 %v3056, %v3067
    %v3085 = vadd.f32 %v3057, %v3069
    %v3086 = vadd.f32 %v3058, %v3071
    %v3087 = vadd.f32 %v3059, %v3073
    %3088 = vrot.lane.b32.xlu0 %v3018, 32
    %v3089 = vpop.permute.xlu0 %3088
    %3090 = vrot.lane.b32.xlu0 %v3019, 32
    %v3091 = vpop.permute.xlu0 %3090
    %3092 = vrot.lane.b32.xlu0 %v3020, 32
    %v3093 = vpop.permute.xlu0 %3092
    %3094 = vrot.lane.b32.xlu0 %v3021, 32
    %v3095 = vpop.permute.xlu0 %3094
    %3096 = vrot.lane.b32.xlu0 %v3022, 32
    %v3097 = vpop.permute.xlu0 %3096
    %3098 = vrot.lane.b32.xlu0 %v3023, 32
    %v3099 = vpop.permute.xlu0 %3098
    %3100 = vrot.lane.b32.xlu0 %v3024, 32
    %v3101 = vpop.permute.xlu0 %3100
    %v3109 = vadd.f32 %v3081, %v3089
    %v3110 = vadd.f32 %v3082, %v3091
    %v3111 = vadd.f32 %v3083, %v3093
    %v3112 = vadd.f32 %v3084, %v3095
    %v3113 = vadd.f32 %v3085, %v3097
    %v3114 = vadd.f32 %v3086, %v3099
    %v3115 = vadd.f32 %v3087, %v3101
    %v3116 = vmul.f32 %v1156, %v2333
    %v3117 = vmul.f32 %v1162, %v2335
    %v3118 = vmul.f32 %v1168, %v2337
    %v3119 = vmul.f32 %v1174, %v2339
    %v3120 = vmul.f32 %v1180, %v2341
    %v3121 = vmul.f32 %v1186, %v2343
    %v3122 = vmul.f32 %v1192, %v2345
    %v3123 = vadd.f32 %v3109, %v3116
    %v3124 = vadd.f32 %v3110, %v3117
    %v3125 = vadd.f32 %v3111, %v3118
    %v3126 = vadd.f32 %v3112, %v3119
    %v3127 = vadd.f32 %v3113, %v3120
    %v3128 = vadd.f32 %v3114, %v3121
    %v3129 = vadd.f32 %v3115, %v3122
    %v3130 = vmul.f32 %v1261, %v1408
    %v3131 = vmul.f32 %v1267, %v1411
    %v3132 = vmul.f32 %v1273, %v1414
    %v3133 = vmul.f32 %v1279, %v1417
    %v3134 = vmul.f32 %v1285, %v1420
    %v3135 = vmul.f32 %v1291, %v1423
    %v3136 = vmul.f32 %v1297, %v1426
    %v3137 = vmul.f32 %v1261, %v2438
    %v3138 = vmul.f32 %v1267, %v2440
    %v3139 = vmul.f32 %v1273, %v2442
    %v3140 = vmul.f32 %v1279, %v2444
    %v3141 = vmul.f32 %v1285, %v2446
    %v3142 = vmul.f32 %v1291, %v2448
    %v3143 = vmul.f32 %v1297, %v2450
    %3151 = vrot.lane.b32.xlu0 %v3137, 96
    %v3152 = vpop.permute.xlu0 %3151
    %3153 = vrot.lane.b32.xlu0 %v3138, 96
    %v3154 = vpop.permute.xlu0 %3153
    %3155 = vrot.lane.b32.xlu0 %v3139, 96
    %v3156 = vpop.permute.xlu0 %3155
    %3157 = vrot.lane.b32.xlu0 %v3140, 96
    %v3158 = vpop.permute.xlu0 %3157
    %3159 = vrot.lane.b32.xlu0 %v3141, 96
    %v3160 = vpop.permute.xlu0 %3159
    %3161 = vrot.lane.b32.xlu0 %v3142, 96
    %v3162 = vpop.permute.xlu0 %3161
    %3163 = vrot.lane.b32.xlu0 %v3143, 96
    %v3164 = vpop.permute.xlu0 %3163
    %v3172 = vadd.f32 %v3130, %v3152
    %v3173 = vadd.f32 %v3131, %v3154
    %v3174 = vadd.f32 %v3132, %v3156
    %v3175 = vadd.f32 %v3133, %v3158
    %v3176 = vadd.f32 %v3134, %v3160
    %v3177 = vadd.f32 %v3135, %v3162
    %v3178 = vadd.f32 %v3136, %v3164
    %3179 = vrot.lane.b32.xlu0 %v3137, 64
    %v3180 = vpop.permute.xlu0 %3179
    %3181 = vrot.lane.b32.xlu0 %v3138, 64
    %v3182 = vpop.permute.xlu0 %3181
    %3183 = vrot.lane.b32.xlu0 %v3139, 64
    %v3184 = vpop.permute.xlu0 %3183
    %3185 = vrot.lane.b32.xlu0 %v3140, 64
    %v3186 = vpop.permute.xlu0 %3185
    %3187 = vrot.lane.b32.xlu0 %v3141, 64
    %v3188 = vpop.permute.xlu0 %3187
    %3189 = vrot.lane.b32.xlu0 %v3142, 64
    %v3190 = vpop.permute.xlu0 %3189
    %3191 = vrot.lane.b32.xlu0 %v3143, 64
    %v3192 = vpop.permute.xlu0 %3191
    %v3200 = vadd.f32 %v3172, %v3180
    %v3201 = vadd.f32 %v3173, %v3182
    %v3202 = vadd.f32 %v3174, %v3184
    %v3203 = vadd.f32 %v3175, %v3186
    %v3204 = vadd.f32 %v3176, %v3188
    %v3205 = vadd.f32 %v3177, %v3190
    %v3206 = vadd.f32 %v3178, %v3192
    %v3207 = vmul.f32 %v1261, %v2235
    %v3208 = vmul.f32 %v1267, %v2237
    %v3209 = vmul.f32 %v1273, %v2239
    %v3210 = vmul.f32 %v1279, %v2241
    %v3211 = vmul.f32 %v1285, %v2243
    %v3212 = vmul.f32 %v1291, %v2245
    %v3213 = vmul.f32 %v1297, %v2247
    %3221 = vrot.lane.b32.xlu0 %v3207, 32
    %v3222 = vpop.permute.xlu0 %3221
    %3223 = vrot.lane.b32.xlu0 %v3208, 32
    %v3224 = vpop.permute.xlu0 %3223
    %3225 = vrot.lane.b32.xlu0 %v3209, 32
    %v3226 = vpop.permute.xlu0 %3225
    %3227 = vrot.lane.b32.xlu0 %v3210, 32
    %v3228 = vpop.permute.xlu0 %3227
    %3229 = vrot.lane.b32.xlu0 %v3211, 32
    %v3230 = vpop.permute.xlu0 %3229
    %3231 = vrot.lane.b32.xlu0 %v3212, 32
    %v3232 = vpop.permute.xlu0 %3231
    %3233 = vrot.lane.b32.xlu0 %v3213, 32
    %v3234 = vpop.permute.xlu0 %3233
    %v3242 = vadd.f32 %v3200, %v3222
    %v3243 = vadd.f32 %v3201, %v3224
    %v3244 = vadd.f32 %v3202, %v3226
    %v3245 = vadd.f32 %v3203, %v3228
    %v3246 = vadd.f32 %v3204, %v3230
    %v3247 = vadd.f32 %v3205, %v3232
    %v3248 = vadd.f32 %v3206, %v3234
    %v3249 = vmul.f32 %v1263, %v2235
    %v3250 = vmul.f32 %v1269, %v2237
    %v3251 = vmul.f32 %v1275, %v2239
    %v3252 = vmul.f32 %v1281, %v2241
    %v3253 = vmul.f32 %v1287, %v2243
    %v3254 = vmul.f32 %v1293, %v2245
    %v3255 = vmul.f32 %v1299, %v2247
    %v3256 = vadd.f32 %v3242, %v3249
    %v3257 = vadd.f32 %v3243, %v3250
    %v3258 = vadd.f32 %v3244, %v3251
    %v3259 = vadd.f32 %v3245, %v3252
    %v3260 = vadd.f32 %v3246, %v3253
    %v3261 = vadd.f32 %v3247, %v3254
    %v3262 = vadd.f32 %v3248, %v3255
    %3270 = vrot.lane.b32.xlu0 %v3249, 96
    %v3271 = vpop.permute.xlu0 %3270
    %3272 = vrot.lane.b32.xlu0 %v3250, 96
    %v3273 = vpop.permute.xlu0 %3272
    %3274 = vrot.lane.b32.xlu0 %v3251, 96
    %v3275 = vpop.permute.xlu0 %3274
    %3276 = vrot.lane.b32.xlu0 %v3252, 96
    %v3277 = vpop.permute.xlu0 %3276
    %3278 = vrot.lane.b32.xlu0 %v3253, 96
    %v3279 = vpop.permute.xlu0 %3278
    %3280 = vrot.lane.b32.xlu0 %v3254, 96
    %v3281 = vpop.permute.xlu0 %3280
    %3282 = vrot.lane.b32.xlu0 %v3255, 96
    %v3283 = vpop.permute.xlu0 %3282
    %v3291 = vadd.f32 %v3256, %v3271
    %v3292 = vadd.f32 %v3257, %v3273
    %v3293 = vadd.f32 %v3258, %v3275
    %v3294 = vadd.f32 %v3259, %v3277
    %v3295 = vadd.f32 %v3260, %v3279
    %v3296 = vadd.f32 %v3261, %v3281
    %v3297 = vadd.f32 %v3262, %v3283
    %3298 = vrot.lane.b32.xlu0 %v3249, 64
    %v3299 = vpop.permute.xlu0 %3298
    %3300 = vrot.lane.b32.xlu0 %v3250, 64
    %v3301 = vpop.permute.xlu0 %3300
    %3302 = vrot.lane.b32.xlu0 %v3251, 64
    %v3303 = vpop.permute.xlu0 %3302
    %3304 = vrot.lane.b32.xlu0 %v3252, 64
    %v3305 = vpop.permute.xlu0 %3304
    %3306 = vrot.lane.b32.xlu0 %v3253, 64
    %v3307 = vpop.permute.xlu0 %3306
    %3308 = vrot.lane.b32.xlu0 %v3254, 64
    %v3309 = vpop.permute.xlu0 %3308
    %3310 = vrot.lane.b32.xlu0 %v3255, 64
    %v3311 = vpop.permute.xlu0 %3310
    %v3319 = vadd.f32 %v3291, %v3299
    %v3320 = vadd.f32 %v3292, %v3301
    %v3321 = vadd.f32 %v3293, %v3303
    %v3322 = vadd.f32 %v3294, %v3305
    %v3323 = vadd.f32 %v3295, %v3307
    %v3324 = vadd.f32 %v3296, %v3309
    %v3325 = vadd.f32 %v3297, %v3311
    %v3326 = vmul.f32 %v1263, %v2333
    %v3327 = vmul.f32 %v1269, %v2335
    %v3328 = vmul.f32 %v1275, %v2337
    %v3329 = vmul.f32 %v1281, %v2339
    %v3330 = vmul.f32 %v1287, %v2341
    %v3331 = vmul.f32 %v1293, %v2343
    %v3332 = vmul.f32 %v1299, %v2345
    %3340 = vrot.lane.b32.xlu0 %v3326, 32
    %v3341 = vpop.permute.xlu0 %3340
    %3342 = vrot.lane.b32.xlu0 %v3327, 32
    %v3343 = vpop.permute.xlu0 %3342
    %3344 = vrot.lane.b32.xlu0 %v3328, 32
    %v3345 = vpop.permute.xlu0 %3344
    %3346 = vrot.lane.b32.xlu0 %v3329, 32
    %v3347 = vpop.permute.xlu0 %3346
    %3348 = vrot.lane.b32.xlu0 %v3330, 32
    %v3349 = vpop.permute.xlu0 %3348
    %3350 = vrot.lane.b32.xlu0 %v3331, 32
    %v3351 = vpop.permute.xlu0 %3350
    %3352 = vrot.lane.b32.xlu0 %v3332, 32
    %v3353 = vpop.permute.xlu0 %3352
    %v3361 = vadd.f32 %v3319, %v3341
    %v3362 = vadd.f32 %v3320, %v3343
    %v3363 = vadd.f32 %v3321, %v3345
    %v3364 = vadd.f32 %v3322, %v3347
    %v3365 = vadd.f32 %v3323, %v3349
    %v3366 = vadd.f32 %v3324, %v3351
    %v3367 = vadd.f32 %v3325, %v3353
    %v3368 = vmul.f32 %v1368, %v1408
    %v3369 = vmul.f32 %v1374, %v1411
    %v3370 = vmul.f32 %v1380, %v1414
    %v3371 = vmul.f32 %v1386, %v1417
    %v3372 = vmul.f32 %v1392, %v1420
    %v3373 = vmul.f32 %v1398, %v1423
    %v3374 = vmul.f32 %v1404, %v1426
    %3382 = vrot.lane.b32.xlu0 %v3368, 96
    %v3383 = vpop.permute.xlu0 %3382
    %3384 = vrot.lane.b32.xlu0 %v3369, 96
    %v3385 = vpop.permute.xlu0 %3384
    %3386 = vrot.lane.b32.xlu0 %v3370, 96
    %v3387 = vpop.permute.xlu0 %3386
    %3388 = vrot.lane.b32.xlu0 %v3371, 96
    %v3389 = vpop.permute.xlu0 %3388
    %3390 = vrot.lane.b32.xlu0 %v3372, 96
    %v3391 = vpop.permute.xlu0 %3390
    %3392 = vrot.lane.b32.xlu0 %v3373, 96
    %v3393 = vpop.permute.xlu0 %3392
    %3394 = vrot.lane.b32.xlu0 %v3374, 96
    %v3395 = vpop.permute.xlu0 %3394
    %v3403 = vadd.f32 %v3368, %v3383
    %v3404 = vadd.f32 %v3369, %v3385
    %v3405 = vadd.f32 %v3370, %v3387
    %v3406 = vadd.f32 %v3371, %v3389
    %v3407 = vadd.f32 %v3372, %v3391
    %v3408 = vadd.f32 %v3373, %v3393
    %v3409 = vadd.f32 %v3374, %v3395
    %v3410 = vmul.f32 %v1368, %v2438
    %v3411 = vmul.f32 %v1374, %v2440
    %v3412 = vmul.f32 %v1380, %v2442
    %v3413 = vmul.f32 %v1386, %v2444
    %v3414 = vmul.f32 %v1392, %v2446
    %v3415 = vmul.f32 %v1398, %v2448
    %v3416 = vmul.f32 %v1404, %v2450
    %3424 = vrot.lane.b32.xlu0 %v3410, 64
    %v3425 = vpop.permute.xlu0 %3424
    %3426 = vrot.lane.b32.xlu0 %v3411, 64
    %v3427 = vpop.permute.xlu0 %3426
    %3428 = vrot.lane.b32.xlu0 %v3412, 64
    %v3429 = vpop.permute.xlu0 %3428
    %3430 = vrot.lane.b32.xlu0 %v3413, 64
    %v3431 = vpop.permute.xlu0 %3430
    %3432 = vrot.lane.b32.xlu0 %v3414, 64
    %v3433 = vpop.permute.xlu0 %3432
    %3434 = vrot.lane.b32.xlu0 %v3415, 64
    %v3435 = vpop.permute.xlu0 %3434
    %3436 = vrot.lane.b32.xlu0 %v3416, 64
    %v3437 = vpop.permute.xlu0 %3436
    %v3445 = vadd.f32 %v3403, %v3425
    %v3446 = vadd.f32 %v3404, %v3427
    %v3447 = vadd.f32 %v3405, %v3429
    %v3448 = vadd.f32 %v3406, %v3431
    %v3449 = vadd.f32 %v3407, %v3433
    %v3450 = vadd.f32 %v3408, %v3435
    %v3451 = vadd.f32 %v3409, %v3437
    %v3452 = vmul.f32 %v1368, %v2697
    %v3453 = vmul.f32 %v1374, %v2699
    %v3454 = vmul.f32 %v1380, %v2701
    %v3455 = vmul.f32 %v1386, %v2703
    %v3456 = vmul.f32 %v1392, %v2705
    %v3457 = vmul.f32 %v1398, %v2707
    %v3458 = vmul.f32 %v1404, %v2709
    %3466 = vrot.lane.b32.xlu0 %v3452, 32
    %v3467 = vpop.permute.xlu0 %3466
    %3468 = vrot.lane.b32.xlu0 %v3453, 32
    %v3469 = vpop.permute.xlu0 %3468
    %3470 = vrot.lane.b32.xlu0 %v3454, 32
    %v3471 = vpop.permute.xlu0 %3470
    %3472 = vrot.lane.b32.xlu0 %v3455, 32
    %v3473 = vpop.permute.xlu0 %3472
    %3474 = vrot.lane.b32.xlu0 %v3456, 32
    %v3475 = vpop.permute.xlu0 %3474
    %3476 = vrot.lane.b32.xlu0 %v3457, 32
    %v3477 = vpop.permute.xlu0 %3476
    %3478 = vrot.lane.b32.xlu0 %v3458, 32
    %v3479 = vpop.permute.xlu0 %3478
    %v3487 = vadd.f32 %v3445, %v3467
    %v3488 = vadd.f32 %v3446, %v3469
    %v3489 = vadd.f32 %v3447, %v3471
    %v3490 = vadd.f32 %v3448, %v3473
    %v3491 = vadd.f32 %v3449, %v3475
    %v3492 = vadd.f32 %v3450, %v3477
    %v3493 = vadd.f32 %v3451, %v3479
    %v3494 = vmul.f32 %v1370, %v2697
    %v3495 = vmul.f32 %v1376, %v2699
    %v3496 = vmul.f32 %v1382, %v2701
    %v3497 = vmul.f32 %v1388, %v2703
    %v3498 = vmul.f32 %v1394, %v2705
    %v3499 = vmul.f32 %v1400, %v2707
    %v3500 = vmul.f32 %v1406, %v2709
    %v3501 = vadd.f32 %v3487, %v3494
    %v3502 = vadd.f32 %v3488, %v3495
    %v3503 = vadd.f32 %v3489, %v3496
    %v3504 = vadd.f32 %v3490, %v3497
    %v3505 = vadd.f32 %v3491, %v3498
    %v3506 = vadd.f32 %v3492, %v3499
    %v3507 = vadd.f32 %v3493, %v3500
    %3515 = vrot.lane.b32.xlu0 %v3494, 96
    %v3516 = vpop.permute.xlu0 %3515
    %3517 = vrot.lane.b32.xlu0 %v3495, 96
    %v3518 = vpop.permute.xlu0 %3517
    %3519 = vrot.lane.b32.xlu0 %v3496, 96
    %v3520 = vpop.permute.xlu0 %3519
    %3521 = vrot.lane.b32.xlu0 %v3497, 96
    %v3522 = vpop.permute.xlu0 %3521
    %3523 = vrot.lane.b32.xlu0 %v3498, 96
    %v3524 = vpop.permute.xlu0 %3523
    %3525 = vrot.lane.b32.xlu0 %v3499, 96
    %v3526 = vpop.permute.xlu0 %3525
    %3527 = vrot.lane.b32.xlu0 %v3500, 96
    %v3528 = vpop.permute.xlu0 %3527
    %v3536 = vadd.f32 %v3501, %v3516
    %v3537 = vadd.f32 %v3502, %v3518
    %v3538 = vadd.f32 %v3503, %v3520
    %v3539 = vadd.f32 %v3504, %v3522
    %v3540 = vadd.f32 %v3505, %v3524
    %v3541 = vadd.f32 %v3506, %v3526
    %v3542 = vadd.f32 %v3507, %v3528
    %v3543 = vmul.f32 %v1370, %v2837
    %v3544 = vmul.f32 %v1376, %v2839
    %v3545 = vmul.f32 %v1382, %v2841
    %v3546 = vmul.f32 %v1388, %v2843
    %v3547 = vmul.f32 %v1394, %v2845
    %v3548 = vmul.f32 %v1400, %v2847
    %v3549 = vmul.f32 %v1406, %v2849
    %3557 = vrot.lane.b32.xlu0 %v3543, 64
    %v3558 = vpop.permute.xlu0 %3557
    %3559 = vrot.lane.b32.xlu0 %v3544, 64
    %v3560 = vpop.permute.xlu0 %3559
    %3561 = vrot.lane.b32.xlu0 %v3545, 64
    %v3562 = vpop.permute.xlu0 %3561
    %3563 = vrot.lane.b32.xlu0 %v3546, 64
    %v3564 = vpop.permute.xlu0 %3563
    %3565 = vrot.lane.b32.xlu0 %v3547, 64
    %v3566 = vpop.permute.xlu0 %3565
    %3567 = vrot.lane.b32.xlu0 %v3548, 64
    %v3568 = vpop.permute.xlu0 %3567
    %3569 = vrot.lane.b32.xlu0 %v3549, 64
    %v3570 = vpop.permute.xlu0 %3569
    %v3578 = vadd.f32 %v3536, %v3558
    %v3579 = vadd.f32 %v3537, %v3560
    %v3580 = vadd.f32 %v3538, %v3562
    %v3581 = vadd.f32 %v3539, %v3564
    %v3582 = vadd.f32 %v3540, %v3566
    %v3583 = vadd.f32 %v3541, %v3568
    %v3584 = vadd.f32 %v3542, %v3570
    %3592 = vrot.lane.b32.xlu0 %v2115, 32
    %v3593 = vpop.permute.xlu0 %3592
    %3594 = vrot.lane.b32.xlu0 %v2116, 32
    %v3595 = vpop.permute.xlu0 %3594
    %3596 = vrot.lane.b32.xlu0 %v2117, 32
    %v3597 = vpop.permute.xlu0 %3596
    %3598 = vrot.lane.b32.xlu0 %v2118, 32
    %v3599 = vpop.permute.xlu0 %3598
    %3600 = vrot.lane.b32.xlu0 %v2119, 32
    %v3601 = vpop.permute.xlu0 %3600
    %3602 = vrot.lane.b32.xlu0 %v2120, 32
    %v3603 = vpop.permute.xlu0 %3602
    %3604 = vrot.lane.b32.xlu0 %v2121, 32
    %v3605 = vpop.permute.xlu0 %3604
    %3620 = vrot.lane.b32.xlu0 %v2388, 96
    %v3621 = vpop.permute.xlu0 %3620
    %3622 = vrot.lane.b32.xlu0 %v2389, 96
    %v3623 = vpop.permute.xlu0 %3622
    %3624 = vrot.lane.b32.xlu0 %v2390, 96
    %v3625 = vpop.permute.xlu0 %3624
    %3626 = vrot.lane.b32.xlu0 %v2391, 96
    %v3627 = vpop.permute.xlu0 %3626
    %3628 = vrot.lane.b32.xlu0 %v2392, 96
    %v3629 = vpop.permute.xlu0 %3628
    %3630 = vrot.lane.b32.xlu0 %v2393, 96
    %v3631 = vpop.permute.xlu0 %3630
    %3632 = vrot.lane.b32.xlu0 %v2394, 96
    %v3633 = vpop.permute.xlu0 %3632
    %3648 = vrot.lane.b32.xlu0 %v2892, 64
    %v3649 = vpop.permute.xlu0 %3648
    %3650 = vrot.lane.b32.xlu0 %v2893, 64
    %v3651 = vpop.permute.xlu0 %3650
    %3652 = vrot.lane.b32.xlu0 %v2894, 64
    %v3653 = vpop.permute.xlu0 %3652
    %3654 = vrot.lane.b32.xlu0 %v2895, 64
    %v3655 = vpop.permute.xlu0 %3654
    %3656 = vrot.lane.b32.xlu0 %v2896, 64
    %v3657 = vpop.permute.xlu0 %3656
    %3658 = vrot.lane.b32.xlu0 %v2897, 64
    %v3659 = vpop.permute.xlu0 %3658
    %3660 = vrot.lane.b32.xlu0 %v2898, 64
    %v3661 = vpop.permute.xlu0 %3660
    %3676 = vrot.lane.b32.xlu0 %v3123, 96
    %v3677 = vpop.permute.xlu0 %3676
    %3678 = vrot.lane.b32.xlu0 %v3124, 96
    %v3679 = vpop.permute.xlu0 %3678
    %3680 = vrot.lane.b32.xlu0 %v3125, 96
    %v3681 = vpop.permute.xlu0 %3680
    %3682 = vrot.lane.b32.xlu0 %v3126, 96
    %v3683 = vpop.permute.xlu0 %3682
    %3684 = vrot.lane.b32.xlu0 %v3127, 96
    %v3685 = vpop.permute.xlu0 %3684
    %3686 = vrot.lane.b32.xlu0 %v3128, 96
    %v3687 = vpop.permute.xlu0 %3686
    %3688 = vrot.lane.b32.xlu0 %v3129, 96
    %v3689 = vpop.permute.xlu0 %3688
    %3704 = vrot.lane.b32.xlu0 %v3361, 96
    %v3705 = vpop.permute.xlu0 %3704
    %3706 = vrot.lane.b32.xlu0 %v3362, 96
    %v3707 = vpop.permute.xlu0 %3706
    %3708 = vrot.lane.b32.xlu0 %v3363, 96
    %v3709 = vpop.permute.xlu0 %3708
    %3710 = vrot.lane.b32.xlu0 %v3364, 96
    %v3711 = vpop.permute.xlu0 %3710
    %3712 = vrot.lane.b32.xlu0 %v3365, 96
    %v3713 = vpop.permute.xlu0 %3712
    %3714 = vrot.lane.b32.xlu0 %v3366, 96
    %v3715 = vpop.permute.xlu0 %3714
    %3716 = vrot.lane.b32.xlu0 %v3367, 96
    %v3717 = vpop.permute.xlu0 %3716
    %v3725 = vsel %vm144, %v1639, %v1926
    %v3726 = vsel %vm144, %v1640, %v1927
    %v3727 = vsel %vm144, %v1641, %v1928
    %v3728 = vsel %vm144, %v1642, %v1929
    %v3729 = vsel %vm144, %v1643, %v1930
    %v3730 = vsel %vm144, %v1644, %v1931
    %v3731 = vsel %vm144, %v1645, %v1932
    %vm3732 = vcmask 523264
    %v3733 = vsel %vm3732, %v3725, %v3593
    %v3734 = vsel %vm3732, %v3726, %v3595
    %v3735 = vsel %vm3732, %v3727, %v3597
    %v3736 = vsel %vm3732, %v3728, %v3599
    %v3737 = vsel %vm3732, %v3729, %v3601
    %v3738 = vsel %vm3732, %v3730, %v3603
    %v3739 = vsel %vm3732, %v3731, %v3605
    %vm3740 = vcmask 785408
    %v3741 = vsel %vm3740, %v3733, %v3621
    %v3742 = vsel %vm3740, %v3734, %v3623
    %v3743 = vsel %vm3740, %v3735, %v3625
    %v3744 = vsel %vm3740, %v3736, %v3627
    %v3745 = vsel %vm3740, %v3737, %v3629
    %v3746 = vsel %vm3740, %v3738, %v3631
    %v3747 = vsel %vm3740, %v3739, %v3633
    %v3748 = vsel %vm144, %v2612, %v3649
    %v3749 = vsel %vm144, %v2613, %v3651
    %v3750 = vsel %vm144, %v2614, %v3653
    %v3751 = vsel %vm144, %v2615, %v3655
    %v3752 = vsel %vm144, %v2616, %v3657
    %v3753 = vsel %vm144, %v2617, %v3659
    %v3754 = vsel %vm144, %v2618, %v3661
    %v3755 = vsel %vm3732, %v3748, %v3677
    %v3756 = vsel %vm3732, %v3749, %v3679
    %v3757 = vsel %vm3732, %v3750, %v3681
    %v3758 = vsel %vm3732, %v3751, %v3683
    %v3759 = vsel %vm3732, %v3752, %v3685
    %v3760 = vsel %vm3732, %v3753, %v3687
    %v3761 = vsel %vm3732, %v3754, %v3689
    %v3762 = vsel %vm3740, %v3755, %v3705
    %v3763 = vsel %vm3740, %v3756, %v3707
    %v3764 = vsel %vm3740, %v3757, %v3709
    %v3765 = vsel %vm3740, %v3758, %v3711
    %v3766 = vsel %vm3740, %v3759, %v3713
    %v3767 = vsel %vm3740, %v3760, %v3715
    %v3768 = vsel %vm3740, %v3761, %v3717
    %v3769 = vsel %vm144, %v3578, 0.0
    %v3770 = vsel %vm144, %v3579, 0.0
    %v3771 = vsel %vm144, %v3580, 0.0
    %v3772 = vsel %vm144, %v3581, 0.0
    %v3773 = vsel %vm144, %v3582, 0.0
    %v3774 = vsel %vm144, %v3583, 0.0
    %v3775 = vsel %vm144, %v3584, 0.0
    %v3776 = vmul.f32 %v3741, %v233
    %v3777 = vmul.f32 %v3762, %v235
    %v3778 = vmul.f32 %v3769, %v340
    %v3779 = vmul.f32 %v3742, %v239
    %v3780 = vmul.f32 %v3763, %v241
    %v3781 = vmul.f32 %v3770, %v345
    %v3782 = vmul.f32 %v3743, %v245
    %v3783 = vmul.f32 %v3764, %v247
    %v3784 = vmul.f32 %v3771, %v350
    %v3785 = vmul.f32 %v3744, %v251
    %v3786 = vmul.f32 %v3765, %v253
    %v3787 = vmul.f32 %v3772, %v355
    %v3788 = vmul.f32 %v3745, %v257
    %v3789 = vmul.f32 %v3766, %v259
    %v3790 = vmul.f32 %v3773, %v360
    %v3791 = vmul.f32 %v3746, %v263
    %v3792 = vmul.f32 %v3767, %v265
    %v3793 = vmul.f32 %v3774, %v365
    %v3794 = vmul.f32 %v3747, %v269
    %v3795 = vmul.f32 %v3768, %v271
    %v3796 = vmul.f32 %v3775, %v370
    %v3797 = vlaneseq
    %v3798 = vshrl.u32 %v3797, 7
    %v3799 = vld [vmem:[#allocation2] sm:$0x1]
    %v3800 = vlaneseq
    %v3801 = vshrl.u32 %v3800, 7
    %v3802 = vsub.s32 0, %v3801
    %v3803 = vrot.slane %v3799, %v3802
    %vm3804 = vcmp.eq.s32.totalorder %v3798, %v3803
    %v3805 = vsel %vm3804, 1, 0
    %v3806 = vcvt.s32.f32 %v3805
    %v3807 = vpack.c.bf16 %v3806, %v3806
    %v3808 = vld [vmem:[%s6] sm:$0xff]
    %v3809 = vld [vmem:[%s6 + $0x8] sm:$0xff]
    %v3810 = vld [vmem:[%s6 + $0x10] sm:$0xff]
    %v3811 = vpack.c.bf16 %v3779, %v3776
    %v3812 = vpack.c.bf16 %v3780, %v3777
    %v3813 = vpack.c.bf16 %v3781, %v3778
    %v3814 = vpack.c.bf16 %v3785, %v3782
    %v3815 = vpack.c.bf16 %v3786, %v3783
    %v3816 = vpack.c.bf16 %v3787, %v3784
    %v3817 = vpack.c.bf16 %v3791, %v3788
    %v3818 = vpack.c.bf16 %v3792, %v3789
    %v3819 = vpack.c.bf16 %v3793, %v3790
    %v3820 = vpack.c.bf16 %v3794, %v3794
    %v3821 = vpack.c.bf16 %v3795, %v3795
    %v3822 = vpack.c.bf16 %v3796, %v3796
    %vm3823 = vcmask 457728
    %v3825 = vsel %vm3823, %v3807, 0
    %vm3827 = vcmask 1043456
    %v3829 = vsel %vm3827, %v3820, 0
    %v3832 = vsel %vm3827, %v3821, 0
    %v3835 = vsel %vm3827, %v3822, 0
    %3837 = vmatprep.subr.bf16.mxu0 %v3812
    %3838 = vmatpush1.bf16.msra.mxu0 %v3811
    %3839 = vmatprep.subr.bf16.mxu0 %v3815
    %3840 = vmatpush1.bf16.msra.mxu0 %v3814
    %3841 = vmatprep.subr.bf16.mxu0 %v3818
    %3842 = vmatpush1.bf16.msra.mxu0 %v3817
    %3843 = vmatprep.subr.bf16.mxu0 %v3832
    %3844 = vmatpush1.bf16.msra.mxu0 %v3829
    %3845 = vmatprep.subr.bf16.mxu0 0
    %3846 = vmatpush1.bf16.msra.mxu0 0
    %3847 = vmatprep.subr.bf16.mxu0 0
    %3848 = vmatpush1.bf16.msra.mxu0 0
    %3849 = vmatprep.subr.bf16.mxu0 0
    %3850 = vmatpush1.bf16.msra.mxu0 0
    %3851 = vmatprep.subr.bf16.mxu0 0
    %3852 = vmatpush1.bf16.msra.mxu0 0
    %3853 = vmatprep.subr.bf16.mxu0 0
    %3854 = vmatpush1.bf16.msra.mxu0 0
    %3855 = vmatprep.subr.bf16.mxu0 0
    %3856 = vmatpush1.bf16.msra.mxu0 0
    %3857 = vmatprep.subr.bf16.mxu0 0
    %3858 = vmatpush1.bf16.msra.mxu0 0
    %3859 = vmatprep.subr.bf16.mxu0 0
    %3860 = vmatpush1.bf16.msra.mxu0 0
    %3861 = vmatprep.subr.bf16.mxu0 0
    %3862 = vmatpush1.bf16.msra.mxu0 0
    %3863 = vmatprep.subr.bf16.mxu0 0
    %3864 = vmatpush1.bf16.msra.mxu0 0
    %3865 = vmatprep.subr.bf16.mxu0 0
    %3866 = vmatpush1.bf16.msra.mxu0 0
    %3867 = vmatprep.subr.bf16.mxu0 0
    %3868 = vmatpush1.bf16.msra.mxu0 0
    %3869 = vmatprep.mubr.bf16.mxu0 0
    %3870 = vmatmul.mubr.bf16.gmra.mrb[0].mxu0 %v3825
    %v3871 = vpop.f32.mrb[0].mxu0
    %v3872 = vadd.f32 0.0, %v3871
    %v3873 = vpop.f32.mrb[0].mxu0
    %v3874 = vadd.f32 0.0, %v3873
    %v3875 = vpop.f32.mrb[0].mxu0
    %v3876 = vpop.f32.mrb[0].mxu0
    %3877 = vdwg.mxu0
    %3878 = vmatprep.subr.bf16.mxu0 0
    %3879 = vmatpush1.bf16.msra.mxu0 %v3813
    %3880 = vmatprep.subr.bf16.mxu0 0
    %3881 = vmatpush1.bf16.msra.mxu0 %v3816
    %3882 = vmatprep.subr.bf16.mxu0 0
    %3883 = vmatpush1.bf16.msra.mxu0 %v3819
    %3884 = vmatprep.subr.bf16.mxu0 0
    %3885 = vmatpush1.bf16.msra.mxu0 %v3835
    %3886 = vmatprep.subr.bf16.mxu0 0
    %3887 = vmatpush1.bf16.msra.mxu0 0
    %3888 = vmatprep.subr.bf16.mxu0 0
    %3889 = vmatpush1.bf16.msra.mxu0 0
    %3890 = vmatprep.subr.bf16.mxu0 0
    %3891 = vmatpush1.bf16.msra.mxu0 0
    %3892 = vmatprep.subr.bf16.mxu0 0
    %3893 = vmatpush1.bf16.msra.mxu0 0
    %3894 = vmatprep.subr.bf16.mxu0 0
    %3895 = vmatpush1.bf16.msra.mxu0 0
    %3896 = vmatprep.subr.bf16.mxu0 0
    %3897 = vmatpush1.bf16.msra.mxu0 0
    %3898 = vmatprep.subr.bf16.mxu0 0
    %3899 = vmatpush1.bf16.msra.mxu0 0
    %3900 = vmatprep.subr.bf16.mxu0 0
    %3901 = vmatpush1.bf16.msra.mxu0 0
    %3902 = vmatprep.subr.bf16.mxu0 0
    %3903 = vmatpush1.bf16.msra.mxu0 0
    %3904 = vmatprep.subr.bf16.mxu0 0
    %3905 = vmatpush1.bf16.msra.mxu0 0
    %3906 = vmatprep.subr.bf16.mxu0 0
    %3907 = vmatpush1.bf16.msra.mxu0 0
    %3908 = vmatprep.subr.bf16.mxu0 0
    %3909 = vmatpush1.bf16.msra.mxu0 0
    %3910 = vmatprep.mubr.bf16.mxu0 0
    %3911 = vmatmul.mubr.bf16.gmra.mrb[0].mxu0 %v3825
    %v3912 = vpop.f32.mrb[0].mxu0
    %v3913 = vadd.f32 0.0, %v3912
    %v3914 = vpop.f32.mrb[0].mxu0
    %v3915 = vpop.f32.mrb[0].mxu0
    %v3916 = vpop.f32.mrb[0].mxu0
    %3917 = vdwg.mxu0
    %v3918 = vadd.f32 %v3808, %v3872
    %v3919 = vadd.f32 %v3809, %v3874
    %v3920 = vadd.f32 %v3810, %v3913
    %3921 = vst [vmem:[%s6] sm:$0xff] %v3918
    %3922 = vst [vmem:[%s6 + $0x8] sm:$0xff] %v3919
    %3923 = vst [vmem:[%s6 + $0x10] sm:$0xff] %v3920
    // Predicated region
    $region38: #{so3net_forward.4} parent=1 // pred_check
      _
    $region39: #{so3net_forward.4} parent=1 // pred_check_branch
      %3925 = sbr.rel (0) target = $region41
    $region40: #{so3net_forward.4} parent=1 // pred_region
      _
    $region41: #{so3net_forward.4} parent=1 // pred_fallthru
      _
    // Predicated region
    $region42: #{so3net_forward.4} parent=1 // pred_check
      _
    $region43: #{so3net_forward.4} parent=1 // pred_check_branch
      %3927 = sbr.rel (0) target = $region45
    $region44: #{so3net_forward.4} parent=1 // pred_region
      _
    $region45: #{so3net_forward.4} parent=1 // pred_fallthru
      _
    %3928 = vsyncpa [#allocation3], 1
    %3929 = vsyncpa [#allocation5], 1

// kernel: so3net_forward.5
$region0: #{so3net_forward.5}
  #allocation0 [shape = 'u32[]', space=smem, size = 0x4, offset = 0x4, fixed_abs, tag = 'smem constant byte address 0x4 - core index']
  #allocation1 [shape = 'u32[144,128]{1,0:T(1,128)}', space=vmem, size = 0x12000, scoped, tag = 'internal scratch']
  %s0 = inlined_call_operand.vmem [shape: f32[8,384], index: 0, kind: input, shape index: {}]
  %s1 = inlined_call_operand.vmem [shape: f32[8,384], index: 1, kind: input, shape index: {}]
  %s2 = inlined_call_operand.vmem [shape: f32[384,384], index: 2, kind: input, shape index: {}]
  %s3 = inlined_call_operand.vmem [shape: f32[384,384], index: 3, kind: input, shape index: {}]
  %s4 = inlined_call_operand.vmem [shape: f32[32,384], index: 4, kind: input, shape index: {}]
  %s5 = inlined_call_operand.vmem [shape: f32[1,384], index: 5, kind: input, shape index: {}]
  %s6 = inlined_call_operand.vmem [shape: f32[384,384], index: 6, kind: input, shape index: {}]
  %s7 = inlined_call_operand.vmem [shape: f32[8,384], index: 7, kind: output, shape index: {}]
  %s8 = sld [smem:[#allocation0]]
  $region38: #{so3net_forward.5} parent=0
    _
  %s10 = ssub.s32 1, %s8
  %s11 = scalar_select 0, %s10, %s8
  // Predicated region
  $region2: #{so3net_forward.5} parent=0 // pred_check
    _
  $region3: #{so3net_forward.5} parent=0 // pred_check_branch
    %13 = sbr.rel (0) target = $region5
  $region4: #{so3net_forward.5} parent=0 // pred_region
    _
  $region5: #{so3net_forward.5} parent=0 // pred_fallthru
    _
  // Predicated region
  $region6: #{so3net_forward.5} parent=0 // pred_check
    _
  $region7: #{so3net_forward.5} parent=0 // pred_check_branch
    %15 = sbr.rel (0) target = $region9
  $region8: #{so3net_forward.5} parent=0 // pred_region
    _
  $region9: #{so3net_forward.5} parent=0 // pred_fallthru
    _
  // Predicated region
  $region10: #{so3net_forward.5} parent=0 // pred_check
    _
  $region11: #{so3net_forward.5} parent=0 // pred_check_branch
    %17 = sbr.rel (0) target = $region13
  $region12: #{so3net_forward.5} parent=0 // pred_region
    _
  $region13: #{so3net_forward.5} parent=0 // pred_fallthru
    _
  // Predicated region
  $region14: #{so3net_forward.5} parent=0 // pred_check
    _
  $region15: #{so3net_forward.5} parent=0 // pred_check_branch
    %19 = sbr.rel (0) target = $region17
  $region16: #{so3net_forward.5} parent=0 // pred_region
    _
  $region17: #{so3net_forward.5} parent=0 // pred_fallthru
    _
  // Predicated region
  $region18: #{so3net_forward.5} parent=0 // pred_check
    _
  $region19: #{so3net_forward.5} parent=0 // pred_check_branch
    %21 = sbr.rel (0) target = $region21
  $region20: #{so3net_forward.5} parent=0 // pred_region
    _
  $region21: #{so3net_forward.5} parent=0 // pred_fallthru
    _
  // Predicated region
  $region22: #{so3net_forward.5} parent=0 // pred_check
    _
  $region23: #{so3net_forward.5} parent=0 // pred_check_branch
    %23 = sbr.rel (0) target = $region25
  $region24: #{so3net_forward.5} parent=0 // pred_region
    _
  $region25: #{so3net_forward.5} parent=0 // pred_fallthru
    _
  // Predicated region
  $region26: #{so3net_forward.5} parent=0 // pred_check
    _
  $region27: #{so3net_forward.5} parent=0 // pred_check_branch
    %25 = sbr.rel (0) target = $region29
  $region28: #{so3net_forward.5} parent=0 // pred_region
    _
  $region29: #{so3net_forward.5} parent=0 // pred_fallthru
    _
  %v26 = vld [vmem:[%s1] sm:$0xff]
  %v27 = vld [vmem:[%s1 + $0x8] sm:$0xff]
  %v28 = vld [vmem:[%s1 + $0x10] sm:$0xff]
  %v29 = vld [vmem:[%s2] sm:$0xff]
  %v30 = vld [vmem:[%s2 + $0x8] sm:$0xff]
  %v31 = vld [vmem:[%s2 + $0x10] sm:$0xff]
  %v32 = vld [vmem:[%s2 + $0x18] sm:$0xff]
  %v33 = vld [vmem:[%s2 + $0x20] sm:$0xff]
  %v34 = vld [vmem:[%s2 + $0x28] sm:$0xff]
  %v35 = vld [vmem:[%s2 + $0x30] sm:$0xff]
  %v36 = vld [vmem:[%s2 + $0x38] sm:$0xff]
  %v37 = vld [vmem:[%s2 + $0x40] sm:$0xff]
  %v38 = vld [vmem:[%s2 + $0x48] sm:$0xff]
  %v39 = vld [vmem:[%s2 + $0x50] sm:$0xff]
  %v40 = vld [vmem:[%s2 + $0x58] sm:$0xff]
  %v41 = vld [vmem:[%s2 + $0x60] sm:$0xff]
  %v42 = vld [vmem:[%s2 + $0x68] sm:$0xff]
  %v43 = vld [vmem:[%s2 + $0x70] sm:$0xff]
  %v44 = vld [vmem:[%s2 + $0x78] sm:$0xff]
  %v45 = vld [vmem:[%s2 + $0x80] sm:$0xff]
  %v46 = vld [vmem:[%s2 + $0x88] sm:$0xff]
  %v47 = vld [vmem:[%s2 + $0x90] sm:$0xff]
  %v48 = vld [vmem:[%s2 + $0x98] sm:$0xff]
  %v49 = vld [vmem:[%s2 + $0xa0] sm:$0xff]
  %v50 = vld [vmem:[%s2 + $0xa8] sm:$0xff]
  %v51 = vld [vmem:[%s2 + $0xb0] sm:$0xff]
  %v52 = vld [vmem:[%s2 + $0xb8] sm:$0xff]
  %v53 = vld [vmem:[%s2 + $0xc0] sm:$0xff]
  %v54 = vld [vmem:[%s2 + $0xc8] sm:$0xff]
  %v55 = vld [vmem:[%s2 + $0xd0] sm:$0xff]
  %v56 = vld [vmem:[%s2 + $0xd8] sm:$0xff]
  %v57 = vld [vmem:[%s2 + $0xe0] sm:$0xff]
  %v58 = vld [vmem:[%s2 + $0xe8] sm:$0xff]
  %v59 = vld [vmem:[%s2 + $0xf0] sm:$0xff]
  %v60 = vld [vmem:[%s2 + $0xf8] sm:$0xff]
  %v61 = vld [vmem:[%s2 + $0x100] sm:$0xff]
  %v62 = vld [vmem:[%s2 + $0x108] sm:$0xff]
  %v63 = vld [vmem:[%s2 + $0x110] sm:$0xff]
  %v64 = vld [vmem:[%s2 + $0x118] sm:$0xff]
  %v65 = vld [vmem:[%s2 + $0x120] sm:$0xff]
  %v66 = vld [vmem:[%s2 + $0x128] sm:$0xff]
  %v67 = vld [vmem:[%s2 + $0x130] sm:$0xff]
  %v68 = vld [vmem:[%s2 + $0x138] sm:$0xff]
  %v69 = vld [vmem:[%s2 + $0x140] sm:$0xff]
  %v70 = vld [vmem:[%s2 + $0x148] sm:$0xff]
  %v71 = vld [vmem:[%s2 + $0x150] sm:$0xff]
  %v72 = vld [vmem:[%s2 + $0x158] sm:$0xff]
  %v73 = vld [vmem:[%s2 + $0x160] sm:$0xff]
  %v74 = vld [vmem:[%s2 + $0x168] sm:$0xff]
  %v75 = vld [vmem:[%s2 + $0x170] sm:$0xff]
  %v76 = vld [vmem:[%s2 + $0x178] sm:$0xff]
  %v77 = vld [vmem:[%s2 + $0x180] sm:$0xff]
  %v78 = vld [vmem:[%s2 + $0x188] sm:$0xff]
  %v79 = vld [vmem:[%s2 + $0x190] sm:$0xff]
  %v80 = vld [vmem:[%s2 + $0x198] sm:$0xff]
  %v81 = vld [vmem:[%s2 + $0x1a0] sm:$0xff]
  %v82 = vld [vmem:[%s2 + $0x1a8] sm:$0xff]
  %v83 = vld [vmem:[%s2 + $0x1b0] sm:$0xff]
  %v84 = vld [vmem:[%s2 + $0x1b8] sm:$0xff]
  %v85 = vld [vmem:[%s2 + $0x1c0] sm:$0xff]
  %v86 = vld [vmem:[%s2 + $0x1c8] sm:$0xff]
  %v87 = vld [vmem:[%s2 + $0x1d0] sm:$0xff]
  %v88 = vld [vmem:[%s2 + $0x1d8] sm:$0xff]
  %v89 = vld [vmem:[%s2 + $0x1e0] sm:$0xff]
  %v90 = vld [vmem:[%s2 + $0x1e8] sm:$0xff]
  %v91 = vld [vmem:[%s2 + $0x1f0] sm:$0xff]
  %v92 = vld [vmem:[%s2 + $0x1f8] sm:$0xff]
  %v93 = vld [vmem:[%s2 + $0x200] sm:$0xff]
  %v94 = vld [vmem:[%s2 + $0x208] sm:$0xff]
  %v95 = vld [vmem:[%s2 + $0x210] sm:$0xff]
  %v96 = vld [vmem:[%s2 + $0x218] sm:$0xff]
  %v97 = vld [vmem:[%s2 + $0x220] sm:$0xff]
  %v98 = vld [vmem:[%s2 + $0x228] sm:$0xff]
  %v99 = vld [vmem:[%s2 + $0x230] sm:$0xff]
  %v100 = vld [vmem:[%s2 + $0x238] sm:$0xff]
  %v101 = vld [vmem:[%s2 + $0x240] sm:$0xff]
  %v102 = vld [vmem:[%s2 + $0x248] sm:$0xff]
  %v103 = vld [vmem:[%s2 + $0x250] sm:$0xff]
  %v104 = vld [vmem:[%s2 + $0x258] sm:$0xff]
  %v105 = vld [vmem:[%s2 + $0x260] sm:$0xff]
  %v106 = vld [vmem:[%s2 + $0x268] sm:$0xff]
  %v107 = vld [vmem:[%s2 + $0x270] sm:$0xff]
  %v108 = vld [vmem:[%s2 + $0x278] sm:$0xff]
  %v109 = vld [vmem:[%s2 + $0x280] sm:$0xff]
  %v110 = vld [vmem:[%s2 + $0x288] sm:$0xff]
  %v111 = vld [vmem:[%s2 + $0x290] sm:$0xff]
  %v112 = vld [vmem:[%s2 + $0x298] sm:$0xff]
  %v113 = vld [vmem:[%s2 + $0x2a0] sm:$0xff]
  %v114 = vld [vmem:[%s2 + $0x2a8] sm:$0xff]
  %v115 = vld [vmem:[%s2 + $0x2b0] sm:$0xff]
  %v116 = vld [vmem:[%s2 + $0x2b8] sm:$0xff]
  %v117 = vld [vmem:[%s2 + $0x2c0] sm:$0xff]
  %v118 = vld [vmem:[%s2 + $0x2c8] sm:$0xff]
  %v119 = vld [vmem:[%s2 + $0x2d0] sm:$0xff]
  %v120 = vld [vmem:[%s2 + $0x2d8] sm:$0xff]
  %v121 = vld [vmem:[%s2 + $0x2e0] sm:$0xff]
  %v122 = vld [vmem:[%s2 + $0x2e8] sm:$0xff]
  %v123 = vld [vmem:[%s2 + $0x2f0] sm:$0xff]
  %v124 = vld [vmem:[%s2 + $0x2f8] sm:$0xff]
  %v125 = vld [vmem:[%s2 + $0x300] sm:$0xff]
  %v126 = vld [vmem:[%s2 + $0x308] sm:$0xff]
  %v127 = vld [vmem:[%s2 + $0x310] sm:$0xff]
  %v128 = vld [vmem:[%s2 + $0x318] sm:$0xff]
  %v129 = vld [vmem:[%s2 + $0x320] sm:$0xff]
  %v130 = vld [vmem:[%s2 + $0x328] sm:$0xff]
  %v131 = vld [vmem:[%s2 + $0x330] sm:$0xff]
  %v132 = vld [vmem:[%s2 + $0x338] sm:$0xff]
  %v133 = vld [vmem:[%s2 + $0x340] sm:$0xff]
  %v134 = vld [vmem:[%s2 + $0x348] sm:$0xff]
  %v135 = vld [vmem:[%s2 + $0x350] sm:$0xff]
  %v136 = vld [vmem:[%s2 + $0x358] sm:$0xff]
  %v137 = vld [vmem:[%s2 + $0x360] sm:$0xff]
  %v138 = vld [vmem:[%s2 + $0x368] sm:$0xff]
  %v139 = vld [vmem:[%s2 + $0x370] sm:$0xff]
  %v140 = vld [vmem:[%s2 + $0x378] sm:$0xff]
  %v141 = vld [vmem:[%s2 + $0x380] sm:$0xff]
  %v142 = vld [vmem:[%s2 + $0x388] sm:$0xff]
  %v143 = vld [vmem:[%s2 + $0x390] sm:$0xff]
  %v144 = vld [vmem:[%s2 + $0x398] sm:$0xff]
  %v145 = vld [vmem:[%s2 + $0x3a0] sm:$0xff]
  %v146 = vld [vmem:[%s2 + $0x3a8] sm:$0xff]
  %v147 = vld [vmem:[%s2 + $0x3b0] sm:$0xff]
  %v148 = vld [vmem:[%s2 + $0x3b8] sm:$0xff]
  %v149 = vld [vmem:[%s2 + $0x3c0] sm:$0xff]
  %v150 = vld [vmem:[%s2 + $0x3c8] sm:$0xff]
  %v151 = vld [vmem:[%s2 + $0x3d0] sm:$0xff]
  %v152 = vld [vmem:[%s2 + $0x3d8] sm:$0xff]
  %v153 = vld [vmem:[%s2 + $0x3e0] sm:$0xff]
  %v154 = vld [vmem:[%s2 + $0x3e8] sm:$0xff]
  %v155 = vld [vmem:[%s2 + $0x3f0] sm:$0xff]
  %v156 = vld [vmem:[%s2 + $0x3f8] sm:$0xff]
  %v157 = vld [vmem:[%s2 + $0x400] sm:$0xff]
  %v158 = vld [vmem:[%s2 + $0x408] sm:$0xff]
  %v159 = vld [vmem:[%s2 + $0x410] sm:$0xff]
  %v160 = vld [vmem:[%s2 + $0x418] sm:$0xff]
  %v161 = vld [vmem:[%s2 + $0x420] sm:$0xff]
  %v162 = vld [vmem:[%s2 + $0x428] sm:$0xff]
  %v163 = vld [vmem:[%s2 + $0x430] sm:$0xff]
  %v164 = vld [vmem:[%s2 + $0x438] sm:$0xff]
  %v165 = vld [vmem:[%s2 + $0x440] sm:$0xff]
  %v166 = vld [vmem:[%s2 + $0x448] sm:$0xff]
  %v167 = vld [vmem:[%s2 + $0x450] sm:$0xff]
  %v168 = vld [vmem:[%s2 + $0x458] sm:$0xff]
  %v169 = vld [vmem:[%s2 + $0x460] sm:$0xff]
  %v170 = vld [vmem:[%s2 + $0x468] sm:$0xff]
  %v171 = vld [vmem:[%s2 + $0x470] sm:$0xff]
  %v172 = vld [vmem:[%s2 + $0x478] sm:$0xff]
  %173 = vmatprep.subr.mxu0 %v30
  %174 = vmatpush1.msra.mxu0 %v29
  %175 = vmatprep.subr.mxu0 %v33
  %176 = vmatpush1.msra.mxu0 %v32
  %177 = vmatprep.subr.mxu0 %v36
  %178 = vmatpush1.msra.mxu0 %v35
  %179 = vmatprep.subr.mxu0 %v39
  %180 = vmatpush1.msra.mxu0 %v38
  %181 = vmatprep.subr.mxu0 %v42
  %182 = vmatpush1.msra.mxu0 %v41
  %183 = vmatprep.subr.mxu0 %v45
  %184 = vmatpush1.msra.mxu0 %v44
  %185 = vmatprep.subr.mxu0 %v48
  %186 = vmatpush1.msra.mxu0 %v47
  %187 = vmatprep.subr.mxu0 %v51
  %188 = vmatpush1.msra.mxu0 %v50
  %189 = vmatprep.subr.mxu0 %v54
  %190 = vmatpush1.msra.mxu0 %v53
  %191 = vmatprep.subr.mxu0 %v57
  %192 = vmatpush1.msra.mxu0 %v56
  %193 = vmatprep.subr.mxu0 %v60
  %194 = vmatpush1.msra.mxu0 %v59
  %195 = vmatprep.subr.mxu0 %v63
  %196 = vmatpush1.msra.mxu0 %v62
  %197 = vmatprep.subr.mxu0 %v66
  %198 = vmatpush1.msra.mxu0 %v65
  %199 = vmatprep.subr.mxu0 %v69
  %200 = vmatpush1.msra.mxu0 %v68
  %201 = vmatprep.subr.mxu0 %v72
  %202 = vmatpush1.msra.mxu0 %v71
  %203 = vmatprep.subr.mxu0 %v75
  %204 = vmatpush1.msra.mxu0 %v74
  %205 = vmatprep.subr.mxu0 %v78
  %206 = vmatpush1.msra.mxu0 %v77
  %207 = vmatprep.subr.mxu0 %v81
  %208 = vmatpush1.msra.mxu0 %v80
  %209 = vmatprep.subr.mxu0 %v84
  %210 = vmatpush1.msra.mxu0 %v83
  %211 = vmatprep.subr.mxu0 %v87
  %212 = vmatpush1.msra.mxu0 %v86
  %213 = vmatprep.subr.mxu0 %v90
  %214 = vmatpush1.msra.mxu0 %v89
  %215 = vmatprep.subr.mxu0 %v93
  %216 = vmatpush1.msra.mxu0 %v92
  %217 = vmatprep.subr.mxu0 %v96
  %218 = vmatpush1.msra.mxu0 %v95
  %219 = vmatprep.subr.mxu0 %v99
  %220 = vmatpush1.msra.mxu0 %v98
  %221 = vmatprep.subr.mxu0 %v102
  %222 = vmatpush1.msra.mxu0 %v101
  %223 = vmatprep.subr.mxu0 %v105
  %224 = vmatpush1.msra.mxu0 %v104
  %225 = vmatprep.subr.mxu0 %v108
  %226 = vmatpush1.msra.mxu0 %v107
  %227 = vmatprep.subr.mxu0 %v111
  %228 = vmatpush1.msra.mxu0 %v110
  %229 = vmatprep.subr.mxu0 %v114
  %230 = vmatpush1.msra.mxu0 %v113
  %231 = vmatprep.subr.mxu0 %v117
  %232 = vmatpush1.msra.mxu0 %v116
  %233 = vmatprep.subr.mxu0 %v120
  %234 = vmatpush1.msra.mxu0 %v119
  %235 = vmatprep.subr.mxu0 %v123
  %236 = vmatpush1.msra.mxu0 %v122
  %237 = vmatprep.mubr.f32.mxu0 %v27
  %238 = vmatmul.mubr.f32.gmra.mrb[0].mxu0 %v26
  %v239 = vpop.f32.mrb[0].mxu0
  %v240 = vadd.f32 0.0, %v239
  %v241 = vpop.f32.mrb[0].mxu0
  %v242 = vadd.f32 0.0, %v241
  %243 = vdwg.mxu0
  %244 = vmatprep.subr.mxu0 %v126
  %245 = vmatpush1.msra.mxu0 %v125
  %246 = vmatprep.subr.mxu0 %v129
  %247 = vmatpush1.msra.mxu0 %v128
  %248 = vmatprep.subr.mxu0 %v132
  %249 = vmatpush1.msra.mxu0 %v131
  %250 = vmatprep.subr.mxu0 %v135
  %251 = vmatpush1.msra.mxu0 %v134
  %252 = vmatprep.subr.mxu0 %v138
  %253 = vmatpush1.msra.mxu0 %v137
  %254 = vmatprep.subr.mxu0 %v141
  %255 = vmatpush1.msra.mxu0 %v140
  %256 = vmatprep.subr.mxu0 %v144
  %257 = vmatpush1.msra.mxu0 %v143
  %258 = vmatprep.subr.mxu0 %v147
  %259 = vmatpush1.msra.mxu0 %v146
  %260 = vmatprep.subr.mxu0 %v150
  %261 = vmatpush1.msra.mxu0 %v149
  %262 = vmatprep.subr.mxu0 %v153
  %263 = vmatpush1.msra.mxu0 %v152
  %264 = vmatprep.subr.mxu0 %v156
  %265 = vmatpush1.msra.mxu0 %v155
  %266 = vmatprep.subr.mxu0 %v159
  %267 = vmatpush1.msra.mxu0 %v158
  %268 = vmatprep.subr.mxu0 %v162
  %269 = vmatpush1.msra.mxu0 %v161
  %270 = vmatprep.subr.mxu0 %v165
  %271 = vmatpush1.msra.mxu0 %v164
  %272 = vmatprep.subr.mxu0 %v168
  %273 = vmatpush1.msra.mxu0 %v167
  %274 = vmatprep.subr.mxu0 %v171
  %275 = vmatpush1.msra.mxu0 %v170
  %276 = vmatprep.subr.mxu0 0.0
  %277 = vmatpush1.msra.mxu0 0.0
  %278 = vmatprep.subr.mxu0 0.0
  %279 = vmatpush1.msra.mxu0 0.0
  %280 = vmatprep.subr.mxu0 0.0
  %281 = vmatpush1.msra.mxu0 0.0
  %282 = vmatprep.subr.mxu0 0.0
  %283 = vmatpush1.msra.mxu0 0.0
  %284 = vmatprep.subr.mxu0 0.0
  %285 = vmatpush1.msra.mxu0 0.0
  %286 = vmatprep.subr.mxu0 0.0
  %287 = vmatpush1.msra.mxu0 0.0
  %288 = vmatprep.subr.mxu0 0.0
  %289 = vmatpush1.msra.mxu0 0.0
  %290 = vmatprep.subr.mxu0 0.0
  %291 = vmatpush1.msra.mxu0 0.0
  %292 = vmatprep.subr.mxu0 0.0
  %293 = vmatpush1.msra.mxu0 0.0
  %294 = vmatprep.subr.mxu0 0.0
  %295 = vmatpush1.msra.mxu0 0.0
  %296 = vmatprep.subr.mxu0 0.0
  %297 = vmatpush1.msra.mxu0 0.0
  %298 = vmatprep.subr.mxu0 0.0
  %299 = vmatpush1.msra.mxu0 0.0
  %300 = vmatprep.subr.mxu0 0.0
  %301 = vmatpush1.msra.mxu0 0.0
  %302 = vmatprep.subr.mxu0 0.0
  %303 = vmatpush1.msra.mxu0 0.0
  %304 = vmatprep.subr.mxu0 0.0
  %305 = vmatpush1.msra.mxu0 0.0
  %306 = vmatprep.subr.mxu0 0.0
  %307 = vmatpush1.msra.mxu0 0.0
  %308 = vmatprep.mubr.f32.mxu0 0.0
  %309 = vmatmul.mubr.f32.gmra.mrb[0].mxu0 %v28
  %v310 = vpop.f32.mrb[0].mxu0
  %v311 = vadd.f32 %v240, %v310
  %v312 = vpop.f32.mrb[0].mxu0
  %v313 = vadd.f32 %v242, %v312
  %314 = vdwg.mxu0
  %315 = vmatprep.subr.mxu0 0.0
  %316 = vmatpush1.msra.mxu0 %v31
  %317 = vmatprep.subr.mxu0 0.0
  %318 = vmatpush1.msra.mxu0 %v34
  %319 = vmatprep.subr.mxu0 0.0
  %320 = vmatpush1.msra.mxu0 %v37
  %321 = vmatprep.subr.mxu0 0.0
  %322 = vmatpush1.msra.mxu0 %v40
  %323 = vmatprep.subr.mxu0 0.0
  %324 = vmatpush1.msra.mxu0 %v43
  %325 = vmatprep.subr.mxu0 0.0
  %326 = vmatpush1.msra.mxu0 %v46
  %327 = vmatprep.subr.mxu0 0.0
  %328 = vmatpush1.msra.mxu0 %v49
  %329 = vmatprep.subr.mxu0 0.0
  %330 = vmatpush1.msra.mxu0 %v52
  %331 = vmatprep.subr.mxu0 0.0
  %332 = vmatpush1.msra.mxu0 %v55
  %333 = vmatprep.subr.mxu0 0.0
  %334 = vmatpush1.msra.mxu0 %v58
  %335 = vmatprep.subr.mxu0 0.0
  %336 = vmatpush1.msra.mxu0 %v61
  %337 = vmatprep.subr.mxu0 0.0
  %338 = vmatpush1.msra.mxu0 %v64
  %339 = vmatprep.subr.mxu0 0.0
  %340 = vmatpush1.msra.mxu0 %v67
  %341 = vmatprep.subr.mxu0 0.0
  %342 = vmatpush1.msra.mxu0 %v70
  %343 = vmatprep.subr.mxu0 0.0
  %344 = vmatpush1.msra.mxu0 %v73
  %345 = vmatprep.subr.mxu0 0.0
  %346 = vmatpush1.msra.mxu0 %v76
  %347 = vmatprep.subr.mxu0 0.0
  %348 = vmatpush1.msra.mxu0 %v79
  %349 = vmatprep.subr.mxu0 0.0
  %350 = vmatpush1.msra.mxu0 %v82
  %351 = vmatprep.subr.mxu0 0.0
  %352 = vmatpush1.msra.mxu0 %v85
  %353 = vmatprep.subr.mxu0 0.0
  %354 = vmatpush1.msra.mxu0 %v88
  %355 = vmatprep.subr.mxu0 0.0
  %356 = vmatpush1.msra.mxu0 %v91
  %357 = vmatprep.subr.mxu0 0.0
  %358 = vmatpush1.msra.mxu0 %v94
  %359 = vmatprep.subr.mxu0 0.0
  %360 = vmatpush1.msra.mxu0 %v97
  %361 = vmatprep.subr.mxu0 0.0
  %362 = vmatpush1.msra.mxu0 %v100
  %363 = vmatprep.subr.mxu0 0.0
  %364 = vmatpush1.msra.mxu0 %v103
  %365 = vmatprep.subr.mxu0 0.0
  %366 = vmatpush1.msra.mxu0 %v106
  %367 = vmatprep.subr.mxu0 0.0
  %368 = vmatpush1.msra.mxu0 %v109
  %369 = vmatprep.subr.mxu0 0.0
  %370 = vmatpush1.msra.mxu0 %v112
  %371 = vmatprep.subr.mxu0 0.0
  %372 = vmatpush1.msra.mxu0 %v115
  %373 = vmatprep.subr.mxu0 0.0
  %374 = vmatpush1.msra.mxu0 %v118
  %375 = vmatprep.subr.mxu0 0.0
  %376 = vmatpush1.msra.mxu0 %v121
  %377 = vmatprep.subr.mxu0 0.0
  %378 = vmatpush1.msra.mxu0 %v124
  %379 = vmatprep.mubr.f32.mxu0 %v27
  %380 = vmatmul.mubr.f32.gmra.mrb[0].mxu0 %v26
  %v381 = vpop.f32.mrb[0].mxu0
  %v382 = vadd.f32 0.0, %v381
  %v383 = vpop.f32.mrb[0].mxu0
  %384 = vdwg.mxu0
  %385 = vmatprep.subr.mxu0 0.0
  %386 = vmatpush1.msra.mxu0 %v127
  %387 = vmatprep.subr.mxu0 0.0
  %388 = vmatpush1.msra.mxu0 %v130
  %389 = vmatprep.subr.mxu0 0.0
  %390 = vmatpush1.msra.mxu0 %v133
  %391 = vmatprep.subr.mxu0 0.0
  %392 = vmatpush1.msra.mxu0 %v136
  %393 = vmatprep.subr.mxu0 0.0
  %394 = vmatpush1.msra.mxu0 %v139
  %395 = vmatprep.subr.mxu0 0.0
  %396 = vmatpush1.msra.mxu0 %v142
  %397 = vmatprep.subr.mxu0 0.0
  %398 = vmatpush1.msra.mxu0 %v145
  %399 = vmatprep.subr.mxu0 0.0
  %400 = vmatpush1.msra.mxu0 %v148
  %401 = vmatprep.subr.mxu0 0.0
  %402 = vmatpush1.msra.mxu0 %v151
  %403 = vmatprep.subr.mxu0 0.0
  %404 = vmatpush1.msra.mxu0 %v154
  %405 = vmatprep.subr.mxu0 0.0
  %406 = vmatpush1.msra.mxu0 %v157
  %407 = vmatprep.subr.mxu0 0.0
  %408 = vmatpush1.msra.mxu0 %v160
  %409 = vmatprep.subr.mxu0 0.0
  %410 = vmatpush1.msra.mxu0 %v163
  %411 = vmatprep.subr.mxu0 0.0
  %412 = vmatpush1.msra.mxu0 %v166
  %413 = vmatprep.subr.mxu0 0.0
  %414 = vmatpush1.msra.mxu0 %v169
  %415 = vmatprep.subr.mxu0 0.0
  %416 = vmatpush1.msra.mxu0 %v172
  %417 = vmatprep.subr.mxu0 0.0
  %418 = vmatpush1.msra.mxu0 0.0
  %419 = vmatprep.subr.mxu0 0.0
  %420 = vmatpush1.msra.mxu0 0.0
  %421 = vmatprep.subr.mxu0 0.0
  %422 = vmatpush1.msra.mxu0 0.0
  %423 = vmatprep.subr.mxu0 0.0
  %424 = vmatpush1.msra.mxu0 0.0
  %425 = vmatprep.subr.mxu0 0.0
  %426 = vmatpush1.msra.mxu0 0.0
  %427 = vmatprep.subr.mxu0 0.0
  %428 = vmatpush1.msra.mxu0 0.0
  %429 = vmatprep.subr.mxu0 0.0
  %430 = vmatpush1.msra.mxu0 0.0
  %431 = vmatprep.subr.mxu0 0.0
  %432 = vmatpush1.msra.mxu0 0.0
  %433 = vmatprep.subr.mxu0 0.0
  %434 = vmatpush1.msra.mxu0 0.0
  %435 = vmatprep.subr.mxu0 0.0
  %436 = vmatpush1.msra.mxu0 0.0
  %437 = vmatprep.subr.mxu0 0.0
  %438 = vmatpush1.msra.mxu0 0.0
  %439 = vmatprep.subr.mxu0 0.0
  %440 = vmatpush1.msra.mxu0 0.0
  %441 = vmatprep.subr.mxu0 0.0
  %442 = vmatpush1.msra.mxu0 0.0
  %443 = vmatprep.subr.mxu0 0.0
  %444 = vmatpush1.msra.mxu0 0.0
  %445 = vmatprep.subr.mxu0 0.0
  %446 = vmatpush1.msra.mxu0 0.0
  %447 = vmatprep.subr.mxu0 0.0
  %448 = vmatpush1.msra.mxu0 0.0
  %449 = vmatprep.mubr.f32.mxu0 0.0
  %450 = vmatmul.mubr.f32.gmra.mrb[0].mxu0 %v28
  %v451 = vpop.f32.mrb[0].mxu0
  %v452 = vadd.f32 %v382, %v451
  %v453 = vpop.f32.mrb[0].mxu0
  %454 = vdwg.mxu0
  %v455 = vmul.f32 %v26, %v311
  %v456 = vadd.f32 %v26, %v455
  %v457 = vmul.f32 %v26, -0.57735026
  %v458 = vmul.f32 %v457, %v311
  %460 = vrot.lane.b32.xlu0 %v458, 96
  %v461 = vpop.permute.xlu0 %460
  %v463 = vadd.f32 %v456, %v461
  %464 = vrot.lane.b32.xlu0 %v458, 64
  %v465 = vpop.permute.xlu0 %464
  %v467 = vadd.f32 %v463, %v465
  %468 = vrot.lane.b32.xlu0 %v458, 32
  %v469 = vpop.permute.xlu0 %468
  %v471 = vadd.f32 %v467, %v469
  %v472 = vmul.f32 %v27, 0.4472136
  %v473 = vmul.f32 %v472, %v313
  %v474 = vadd.f32 %v471, %v473
  %476 = vrot.lane.b32.xlu0 %v473, 96
  %v477 = vpop.permute.xlu0 %476
  %v479 = vadd.f32 %v474, %v477
  %480 = vrot.lane.b32.xlu0 %v473, 64
  %v481 = vpop.permute.xlu0 %480
  %v483 = vadd.f32 %v479, %v481
  %484 = vrot.lane.b32.xlu0 %v473, 32
  %v485 = vpop.permute.xlu0 %484
  %v487 = vadd.f32 %v483, %v485
  %v488 = vmul.f32 %v28, 0.4472136
  %v489 = vmul.f32 %v488, %v452
  %v490 = vadd.f32 %v487, %v489
  %492 = vrot.lane.b32.xlu0 %v311, 96
  %v493 = vpop.permute.xlu0 %492
  %v495 = vmul.f32 %v26, %v493
  %497 = vrot.lane.b32.xlu0 %v495, 32
  %v498 = vpop.permute.xlu0 %497
  %v500 = vadd.f32 %v26, %v498
  %501 = vrot.lane.b32.xlu0 %v311, 32
  %v502 = vpop.permute.xlu0 %501
  %v504 = vmul.f32 %v26, %v502
  %v505 = vadd.f32 %v500, %v504
  %v506 = vmul.f32 %v26, 0.31622776
  %508 = vrot.lane.b32.xlu0 %v313, 96
  %v509 = vpop.permute.xlu0 %508
  %v511 = vmul.f32 %v506, %v509
  %v512 = vadd.f32 %v505, %v511
  %v513 = vmul.f32 %v26, 0.5477226
  %515 = vrot.lane.b32.xlu0 %v452, 32
  %v516 = vpop.permute.xlu0 %515
  %v518 = vmul.f32 %v513, %v516
  %v519 = vadd.f32 %v512, %v518
  %v520 = vmul.f32 %v26, -0.5477226
  %521 = vrot.lane.b32.xlu0 %v313, 32
  %v522 = vpop.permute.xlu0 %521
  %v524 = vmul.f32 %v520, %v522
  %526 = vrot.lane.b32.xlu0 %v524, 96
  %v527 = vpop.permute.xlu0 %526
  %v529 = vadd.f32 %v519, %v527
  %v530 = vmul.f32 %v520, %v509
  %532 = vrot.lane.b32.xlu0 %v530, 64
  %v533 = vpop.permute.xlu0 %532
  %v535 = vadd.f32 %v529, %v533
  %v536 = vmul.f32 %v27, -0.5477226
  %v537 = vmul.f32 %v536, %v502
  %539 = vrot.lane.b32.xlu0 %v537, 32
  %v540 = vpop.permute.xlu0 %539
  %v542 = vadd.f32 %v535, %v540
  %v543 = vmul.f32 %v536, %v493
  %v544 = vadd.f32 %v542, %v543
  %v545 = vmul.f32 %v27, 0.31622776
  %v546 = vmul.f32 %v545, %v502
  %548 = vrot.lane.b32.xlu0 %v546, 96
  %v549 = vpop.permute.xlu0 %548
  %v551 = vadd.f32 %v544, %v549
  %v552 = vmul.f32 %v28, 0.5477226
  %v553 = vmul.f32 %v552, %v493
  %555 = vrot.lane.b32.xlu0 %v553, 32
  %v556 = vpop.permute.xlu0 %555
  %v558 = vadd.f32 %v551, %v556
  %559 = vrot.lane.b32.xlu0 %v311, 64
  %v560 = vpop.permute.xlu0 %559
  %v562 = vmul.f32 %v26, %v560
  %564 = vrot.lane.b32.xlu0 %v562, 64
  %v565 = vpop.permute.xlu0 %564
  %v567 = vadd.f32 %v26, %v565
  %v568 = vmul.f32 %v520, %v313
  %570 = vrot.lane.b32.xlu0 %v568, 32
  %v571 = vpop.permute.xlu0 %570
  %v573 = vadd.f32 %v567, %v571
  %v574 = vadd.f32 %v573, %v562
  %v575 = vmul.f32 %v26, -0.6324555
  %v576 = vmul.f32 %v575, %v313
  %v577 = vadd.f32 %v574, %v576
  %578 = vrot.lane.b32.xlu0 %v568, 96
  %v579 = vpop.permute.xlu0 %578
  %v581 = vadd.f32 %v577, %v579
  %v582 = vmul.f32 %v536, %v311
  %584 = vrot.lane.b32.xlu0 %v582, 32
  %v585 = vpop.permute.xlu0 %584
  %v587 = vadd.f32 %v581, %v585
  %v588 = vmul.f32 %v27, -0.6324555
  %v589 = vmul.f32 %v588, %v311
  %v590 = vadd.f32 %v587, %v589
  %591 = vrot.lane.b32.xlu0 %v582, 96
  %v592 = vpop.permute.xlu0 %591
  %v594 = vadd.f32 %v590, %v592
  %596 = vrot.lane.b32.xlu0 %v504, 96
  %v597 = vpop.permute.xlu0 %596
  %v599 = vadd.f32 %v26, %v597
  %600 = vrot.lane.b32.xlu0 %v524, 64
  %v601 = vpop.permute.xlu0 %600
  %v603 = vadd.f32 %v599, %v601
  %604 = vrot.lane.b32.xlu0 %v530, 32
  %v605 = vpop.permute.xlu0 %604
  %v607 = vadd.f32 %v603, %v605
  %v608 = vadd.f32 %v607, %v495
  %v609 = vmul.f32 %v506, %v522
  %v610 = vadd.f32 %v608, %v609
  %611 = vrot.lane.b32.xlu0 %v452, 96
  %v612 = vpop.permute.xlu0 %611
  %v614 = vmul.f32 %v520, %v612
  %v615 = vadd.f32 %v610, %v614
  %617 = vrot.lane.b32.xlu0 %v543, 96
  %v618 = vpop.permute.xlu0 %617
  %v620 = vadd.f32 %v615, %v618
  %v621 = vmul.f32 %v545, %v493
  %623 = vrot.lane.b32.xlu0 %v621, 32
  %v624 = vpop.permute.xlu0 %623
  %v626 = vadd.f32 %v620, %v624
  %v627 = vadd.f32 %v626, %v537
  %v628 = vmul.f32 %v28, -0.5477226
  %v629 = vmul.f32 %v628, %v502
  %631 = vrot.lane.b32.xlu0 %v629, 96
  %v632 = vpop.permute.xlu0 %631
  %v634 = vadd.f32 %v627, %v632
  %v635 = vmul.f32 %v26, %v313
  %v636 = vadd.f32 %v27, %v635
  %v637 = vmul.f32 %v26, 0.70710677
  %v638 = vmul.f32 %v637, %v560
  %640 = vrot.lane.b32.xlu0 %v638, 96
  %v641 = vpop.permute.xlu0 %640
  %v643 = vadd.f32 %v636, %v641
  %644 = vrot.lane.b32.xlu0 %v638, 32
  %v645 = vpop.permute.xlu0 %644
  %v647 = vadd.f32 %v643, %v645
  %v648 = vmul.f32 %v27, %v311
  %v649 = vadd.f32 %v647, %v648
  %v650 = vmul.f32 %v27, 0.5345225
  %651 = vrot.lane.b32.xlu0 %v313, 64
  %v652 = vpop.permute.xlu0 %651
  %v654 = vmul.f32 %v650, %v652
  %v655 = vadd.f32 %v649, %v654
  %v656 = vmul.f32 %v27, -0.46291006
  %v657 = vmul.f32 %v656, %v652
  %659 = vrot.lane.b32.xlu0 %v657, 96
  %v660 = vpop.permute.xlu0 %659
  %v662 = vadd.f32 %v655, %v660
  %664 = vrot.lane.b32.xlu0 %v654, 64
  %v665 = vpop.permute.xlu0 %664
  %v667 = vadd.f32 %v662, %v665
  %668 = vrot.lane.b32.xlu0 %v657, 32
  %v669 = vpop.permute.xlu0 %668
  %v671 = vadd.f32 %v667, %v669
  %v672 = vmul.f32 %v26, %v509
  %674 = vrot.lane.b32.xlu0 %v672, 32
  %v675 = vpop.permute.xlu0 %674
  %v677 = vadd.f32 %v27, %v675
  %v678 = vmul.f32 %v637, %v493
  %v679 = vadd.f32 %v677, %v678
  %v680 = vmul.f32 %v637, %v502
  %682 = vrot.lane.b32.xlu0 %v680, 96
  %v683 = vpop.permute.xlu0 %682
  %v685 = vadd.f32 %v679, %v683
  %v686 = vmul.f32 %v656, %v522
  %688 = vrot.lane.b32.xlu0 %v686, 32
  %v689 = vpop.permute.xlu0 %688
  %v691 = vadd.f32 %v685, %v689
  %v692 = vmul.f32 %v27, %v502
  %v693 = vadd.f32 %v691, %v692
  %v694 = vmul.f32 %v27, -0.26726124
  %v695 = vmul.f32 %v694, %v509
  %v696 = vadd.f32 %v693, %v695
  %v697 = vmul.f32 %v27, 0.46291006
  %v698 = vmul.f32 %v697, %v516
  %v699 = vadd.f32 %v696, %v698
  %v700 = vmul.f32 %v694, %v522
  %702 = vrot.lane.b32.xlu0 %v700, 96
  %v703 = vpop.permute.xlu0 %702
  %v705 = vadd.f32 %v699, %v703
  %v706 = vmul.f32 %v656, %v509
  %708 = vrot.lane.b32.xlu0 %v706, 64
  %v709 = vpop.permute.xlu0 %708
  %v711 = vadd.f32 %v705, %v709
  %v712 = vmul.f32 %v28, 0.46291006
  %v713 = vmul.f32 %v712, %v509
  %715 = vrot.lane.b32.xlu0 %v713, 32
  %v716 = vpop.permute.xlu0 %715
  %v718 = vadd.f32 %v711, %v716
  %v719 = vmul.f32 %v26, %v652
  %721 = vrot.lane.b32.xlu0 %v719, 64
  %v722 = vpop.permute.xlu0 %721
  %v724 = vadd.f32 %v27, %v722
  %v725 = vmul.f32 %v26, -0.4082483
  %v726 = vmul.f32 %v725, %v311
  %728 = vrot.lane.b32.xlu0 %v726, 32
  %v729 = vpop.permute.xlu0 %728
  %v731 = vadd.f32 %v724, %v729
  %v732 = vmul.f32 %v26, 0.8164966
  %v733 = vmul.f32 %v732, %v311
  %v734 = vadd.f32 %v731, %v733
  %735 = vrot.lane.b32.xlu0 %v726, 96
  %v736 = vpop.permute.xlu0 %735
  %v738 = vadd.f32 %v734, %v736
  %v739 = vmul.f32 %v650, %v313
  %741 = vrot.lane.b32.xlu0 %v739, 64
  %v742 = vpop.permute.xlu0 %741
  %v744 = vadd.f32 %v738, %v742
  %v745 = vmul.f32 %v694, %v313
  %747 = vrot.lane.b32.xlu0 %v745, 32
  %v748 = vpop.permute.xlu0 %747
  %v750 = vadd.f32 %v744, %v748
  %v751 = vmul.f32 %v27, %v560
  %v752 = vadd.f32 %v750, %v751
  %v753 = vmul.f32 %v27, -0.5345225
  %v754 = vmul.f32 %v753, %v313
  %v755 = vadd.f32 %v752, %v754
  %756 = vrot.lane.b32.xlu0 %v745, 96
  %v757 = vpop.permute.xlu0 %756
  %v759 = vadd.f32 %v755, %v757
  %v760 = vmul.f32 %v28, 0.5345225
  %v761 = vmul.f32 %v760, %v452
  %763 = vrot.lane.b32.xlu0 %v761, 64
  %v764 = vpop.permute.xlu0 %763
  %v766 = vadd.f32 %v759, %v764
  %v767 = vmul.f32 %v26, %v522
  %769 = vrot.lane.b32.xlu0 %v767, 96
  %v770 = vpop.permute.xlu0 %769
  %v772 = vadd.f32 %v27, %v770
  %774 = vrot.lane.b32.xlu0 %v678, 32
  %v775 = vpop.permute.xlu0 %774
  %v777 = vadd.f32 %v772, %v775
  %v778 = vadd.f32 %v777, %v680
  %779 = vrot.lane.b32.xlu0 %v706, 96
  %v780 = vpop.permute.xlu0 %779
  %v782 = vadd.f32 %v778, %v780
  %783 = vrot.lane.b32.xlu0 %v686, 64
  %v784 = vpop.permute.xlu0 %783
  %v786 = vadd.f32 %v782, %v784
  %788 = vrot.lane.b32.xlu0 %v695, 32
  %v789 = vpop.permute.xlu0 %788
  %v791 = vadd.f32 %v786, %v789
  %v792 = vmul.f32 %v27, %v493
  %v793 = vadd.f32 %v791, %v792
  %v794 = vadd.f32 %v793, %v700
  %v795 = vmul.f32 %v656, %v612
  %v796 = vadd.f32 %v794, %v795
  %v797 = vmul.f32 %v28, -0.46291006
  %v798 = vmul.f32 %v797, %v522
  %800 = vrot.lane.b32.xlu0 %v798, 96
  %v801 = vpop.permute.xlu0 %800
  %v803 = vadd.f32 %v796, %v801
  %v804 = vmul.f32 %v26, %v452
  %v805 = vadd.f32 %v28, %v804
  %v806 = vmul.f32 %v26, -0.70710677
  %v807 = vmul.f32 %v806, %v311
  %809 = vrot.lane.b32.xlu0 %v807, 96
  %v810 = vpop.permute.xlu0 %809
  %v812 = vadd.f32 %v805, %v810
  %v813 = vmul.f32 %v637, %v311
  %815 = vrot.lane.b32.xlu0 %v813, 32
  %v816 = vpop.permute.xlu0 %815
  %v818 = vadd.f32 %v812, %v816
  %v819 = vmul.f32 %v697, %v313
  %821 = vrot.lane.b32.xlu0 %v819, 96
  %v822 = vpop.permute.xlu0 %821
  %v824 = vadd.f32 %v818, %v822
  %825 = vrot.lane.b32.xlu0 %v452, 64
  %v826 = vpop.permute.xlu0 %825
  %v828 = vmul.f32 %v650, %v826
  %830 = vrot.lane.b32.xlu0 %v828, 64
  %v831 = vpop.permute.xlu0 %830
  %v833 = vadd.f32 %v824, %v831
  %v834 = vmul.f32 %v656, %v313
  %836 = vrot.lane.b32.xlu0 %v834, 32
  %v837 = vpop.permute.xlu0 %836
  %v839 = vadd.f32 %v833, %v837
  %v840 = vmul.f32 %v28, %v311
  %v841 = vadd.f32 %v839, %v840
  %v842 = vmul.f32 %v760, %v652
  %v843 = vadd.f32 %v841, %v842
  %vm844 = vcmask 261120
  %v845 = vsel %vm844, %v490, %v558
  %vm846 = vcmask 523264
  %v847 = vsel %vm846, %v845, %v594
  %vm848 = vcmask 785408
  %v849 = vsel %vm848, %v847, %v634
  %v850 = vsel %vm844, %v671, %v718
  %v851 = vsel %vm846, %v850, %v766
  %v852 = vsel %vm848, %v851, %v803
  %v853 = vsel %vm844, %v843, 0.0
  %v854 = vld [vmem:[%s3] sm:$0xff]
  %v855 = vld [vmem:[%s3 + $0x8] sm:$0xff]
  %v856 = vld [vmem:[%s3 + $0x10] sm:$0xff]
  %v857 = vld [vmem:[%s3 + $0x18] sm:$0xff]
  %v858 = vld [vmem:[%s3 + $0x20] sm:$0xff]
  %v859 = vld [vmem:[%s3 + $0x28] sm:$0xff]
  %v860 = vld [vmem:[%s3 + $0x30] sm:$0xff]
  %v861 = vld [vmem:[%s3 + $0x38] sm:$0xff]
  %v862 = vld [vmem:[%s3 + $0x40] sm:$0xff]
  %v863 = vld [vmem:[%s3 + $0x48] sm:$0xff]
  %v864 = vld [vmem:[%s3 + $0x50] sm:$0xff]
  %v865 = vld [vmem:[%s3 + $0x58] sm:$0xff]
  %v866 = vld [vmem:[%s3 + $0x60] sm:$0xff]
  %v867 = vld [vmem:[%s3 + $0x68] sm:$0xff]
  %v868 = vld [vmem:[%s3 + $0x70] sm:$0xff]
  %v869 = vld [vmem:[%s3 + $0x78] sm:$0xff]
  %v870 = vld [vmem:[%s3 + $0x80] sm:$0xff]
  %v871 = vld [vmem:[%s3 + $0x88] sm:$0xff]
  %v872 = vld [vmem:[%s3 + $0x90] sm:$0xff]
  %v873 = vld [vmem:[%s3 + $0x98] sm:$0xff]
  %v874 = vld [vmem:[%s3 + $0xa0] sm:$0xff]
  %v875 = vld [vmem:[%s3 + $0xa8] sm:$0xff]
  %v876 = vld [vmem:[%s3 + $0xb0] sm:$0xff]
  %v877 = vld [vmem:[%s3 + $0xb8] sm:$0xff]
  %v878 = vld [vmem:[%s3 + $0xc0] sm:$0xff]
  %v879 = vld [vmem:[%s3 + $0xc8] sm:$0xff]
  %v880 = vld [vmem:[%s3 + $0xd0] sm:$0xff]
  %v881 = vld [vmem:[%s3 + $0xd8] sm:$0xff]
  %v882 = vld [vmem:[%s3 + $0xe0] sm:$0xff]
  %v883 = vld [vmem:[%s3 + $0xe8] sm:$0xff]
  %v884 = vld [vmem:[%s3 + $0xf0] sm:$0xff]
  %v885 = vld [vmem:[%s3 + $0xf8] sm:$0xff]
  %v886 = vld [vmem:[%s3 + $0x100] sm:$0xff]
  %v887 = vld [vmem:[%s3 + $0x108] sm:$0xff]
  %v888 = vld [vmem:[%s3 + $0x110] sm:$0xff]
  %v889 = vld [vmem:[%s3 + $0x118] sm:$0xff]
  %v890 = vld [vmem:[%s3 + $0x120] sm:$0xff]
  %v891 = vld [vmem:[%s3 + $0x128] sm:$0xff]
  %v892 = vld [vmem:[%s3 + $0x130] sm:$0xff]
  %v893 = vld [vmem:[%s3 + $0x138] sm:$0xff]
  %v894 = vld [vmem:[%s3 + $0x140] sm:$0xff]
  %v895 = vld [vmem:[%s3 + $0x148] sm:$0xff]
  %v896 = vld [vmem:[%s3 + $0x150] sm:$0xff]
  %v897 = vld [vmem:[%s3 + $0x158] sm:$0xff]
  %v898 = vld [vmem:[%s3 + $0x160] sm:$0xff]
  %v899 = vld [vmem:[%s3 + $0x168] sm:$0xff]
  %v900 = vld [vmem:[%s3 + $0x170] sm:$0xff]
  %v901 = vld [vmem:[%s3 + $0x178] sm:$0xff]
  %v902 = vld [vmem:[%s3 + $0x180] sm:$0xff]
  %v903 = vld [vmem:[%s3 + $0x188] sm:$0xff]
  %v904 = vld [vmem:[%s3 + $0x190] sm:$0xff]
  %v905 = vld [vmem:[%s3 + $0x198] sm:$0xff]
  %v906 = vld [vmem:[%s3 + $0x1a0] sm:$0xff]
  %v907 = vld [vmem:[%s3 + $0x1a8] sm:$0xff]
  %v908 = vld [vmem:[%s3 + $0x1b0] sm:$0xff]
  %v909 = vld [vmem:[%s3 + $0x1b8] sm:$0xff]
  %v910 = vld [vmem:[%s3 + $0x1c0] sm:$0xff]
  %v911 = vld [vmem:[%s3 + $0x1c8] sm:$0xff]
  %v912 = vld [vmem:[%s3 + $0x1d0] sm:$0xff]
  %v913 = vld [vmem:[%s3 + $0x1d8] sm:$0xff]
  %v914 = vld [vmem:[%s3 + $0x1e0] sm:$0xff]
  %v915 = vld [vmem:[%s3 + $0x1e8] sm:$0xff]
  %v916 = vld [vmem:[%s3 + $0x1f0] sm:$0xff]
  %v917 = vld [vmem:[%s3 + $0x1f8] sm:$0xff]
  %v918 = vld [vmem:[%s3 + $0x200] sm:$0xff]
  %v919 = vld [vmem:[%s3 + $0x208] sm:$0xff]
  %v920 = vld [vmem:[%s3 + $0x210] sm:$0xff]
  %v921 = vld [vmem:[%s3 + $0x218] sm:$0xff]
  %v922 = vld [vmem:[%s3 + $0x220] sm:$0xff]
  %v923 = vld [vmem:[%s3 + $0x228] sm:$0xff]
  %v924 = vld [vmem:[%s3 + $0x230] sm:$0xff]
  %v925 = vld [vmem:[%s3 + $0x238] sm:$0xff]
  %v926 = vld [vmem:[%s3 + $0x240] sm:$0xff]
  %v927 = vld [vmem:[%s3 + $0x248] sm:$0xff]
  %v928 = vld [vmem:[%s3 + $0x250] sm:$0xff]
  %v929 = vld [vmem:[%s3 + $0x258] sm:$0xff]
  %v930 = vld [vmem:[%s3 + $0x260] sm:$0xff]
  %v931 = vld [vmem:[%s3 + $0x268] sm:$0xff]
  %v932 = vld [vmem:[%s3 + $0x270] sm:$0xff]
  %v933 = vld [vmem:[%s3 + $0x278] sm:$0xff]
  %v934 = vld [vmem:[%s3 + $0x280] sm:$0xff]
  %v935 = vld [vmem:[%s3 + $0x288] sm:$0xff]
  %v936 = vld [vmem:[%s3 + $0x290] sm:$0xff]
  %v937 = vld [vmem:[%s3 + $0x298] sm:$0xff]
  %v938 = vld [vmem:[%s3 + $0x2a0] sm:$0xff]
  %v939 = vld [vmem:[%s3 + $0x2a8] sm:$0xff]
  %v940 = vld [vmem:[%s3 + $0x2b0] sm:$0xff]
  %v941 = vld [vmem:[%s3 + $0x2b8] sm:$0xff]
  %v942 = vld [vmem:[%s3 + $0x2c0] sm:$0xff]
  %v943 = vld [vmem:[%s3 + $0x2c8] sm:$0xff]
  %v944 = vld [vmem:[%s3 + $0x2d0] sm:$0xff]
  %v945 = vld [vmem:[%s3 + $0x2d8] sm:$0xff]
  %v946 = vld [vmem:[%s3 + $0x2e0] sm:$0xff]
  %v947 = vld [vmem:[%s3 + $0x2e8] sm:$0xff]
  %v948 = vld [vmem:[%s3 + $0x2f0] sm:$0xff]
  %v949 = vld [vmem:[%s3 + $0x2f8] sm:$0xff]
  %v950 = vld [vmem:[%s3 + $0x300] sm:$0xff]
  %v951 = vld [vmem:[%s3 + $0x308] sm:$0xff]
  %v952 = vld [vmem:[%s3 + $0x310] sm:$0xff]
  %v953 = vld [vmem:[%s3 + $0x318] sm:$0xff]
  %v954 = vld [vmem:[%s3 + $0x320] sm:$0xff]
  %v955 = vld [vmem:[%s3 + $0x328] sm:$0xff]
  %v956 = vld [vmem:[%s3 + $0x330] sm:$0xff]
  %v957 = vld [vmem:[%s3 + $0x338] sm:$0xff]
  %v958 = vld [vmem:[%s3 + $0x340] sm:$0xff]
  %v959 = vld [vmem:[%s3 + $0x348] sm:$0xff]
  %v960 = vld [vmem:[%s3 + $0x350] sm:$0xff]
  %v961 = vld [vmem:[%s3 + $0x358] sm:$0xff]
  %v962 = vld [vmem:[%s3 + $0x360] sm:$0xff]
  %v963 = vld [vmem:[%s3 + $0x368] sm:$0xff]
  %v964 = vld [vmem:[%s3 + $0x370] sm:$0xff]
  %v965 = vld [vmem:[%s3 + $0x378] sm:$0xff]
  %v966 = vld [vmem:[%s3 + $0x380] sm:$0xff]
  %v967 = vld [vmem:[%s3 + $0x388] sm:$0xff]
  %v968 = vld [vmem:[%s3 + $0x390] sm:$0xff]
  %v969 = vld [vmem:[%s3 + $0x398] sm:$0xff]
  %v970 = vld [vmem:[%s3 + $0x3a0] sm:$0xff]
  %v971 = vld [vmem:[%s3 + $0x3a8] sm:$0xff]
  %v972 = vld [vmem:[%s3 + $0x3b0] sm:$0xff]
  %v973 = vld [vmem:[%s3 + $0x3b8] sm:$0xff]
  %v974 = vld [vmem:[%s3 + $0x3c0] sm:$0xff]
  %v975 = vld [vmem:[%s3 + $0x3c8] sm:$0xff]
  %v976 = vld [vmem:[%s3 + $0x3d0] sm:$0xff]
  %v977 = vld [vmem:[%s3 + $0x3d8] sm:$0xff]
  %v978 = vld [vmem:[%s3 + $0x3e0] sm:$0xff]
  %v979 = vld [vmem:[%s3 + $0x3e8] sm:$0xff]
  %v980 = vld [vmem:[%s3 + $0x3f0] sm:$0xff]
  %v981 = vld [vmem:[%s3 + $0x3f8] sm:$0xff]
  %v982 = vld [vmem:[%s3 + $0x400] sm:$0xff]
  %v983 = vld [vmem:[%s3 + $0x408] sm:$0xff]
  %v984 = vld [vmem:[%s3 + $0x410] sm:$0xff]
  %v985 = vld [vmem:[%s3 + $0x418] sm:$0xff]
  %v986 = vld [vmem:[%s3 + $0x420] sm:$0xff]
  %v987 = vld [vmem:[%s3 + $0x428] sm:$0xff]
  %v988 = vld [vmem:[%s3 + $0x430] sm:$0xff]
  %v989 = vld [vmem:[%s3 + $0x438] sm:$0xff]
  %v990 = vld [vmem:[%s3 + $0x440] sm:$0xff]
  %v991 = vld [vmem:[%s3 + $0x448] sm:$0xff]
  %v992 = vld [vmem:[%s3 + $0x450] sm:$0xff]
  %v993 = vld [vmem:[%s3 + $0x458] sm:$0xff]
  %v994 = vld [vmem:[%s3 + $0x460] sm:$0xff]
  %v995 = vld [vmem:[%s3 + $0x468] sm:$0xff]
  %v996 = vld [vmem:[%s3 + $0x470] sm:$0xff]
  %v997 = vld [vmem:[%s3 + $0x478] sm:$0xff]
  %998 = vmatprep.subr.mxu0 %v855
  %999 = vmatpush1.msra.mxu0 %v854
  %1000 = vmatprep.subr.mxu0 %v858
  %1001 = vmatpush1.msra.mxu0 %v857
  %1002 = vmatprep.subr.mxu0 %v861
  %1003 = vmatpush1.msra.mxu0 %v860
  %1004 = vmatprep.subr.mxu0 %v864
  %1005 = vmatpush1.msra.mxu0 %v863
  %1006 = vmatprep.subr.mxu0 %v867
  %1007 = vmatpush1.msra.mxu0 %v866
  %1008 = vmatprep.subr.mxu0 %v870
  %1009 = vmatpush1.msra.mxu0 %v869
  %1010 = vmatprep.subr.mxu0 %v873
  %1011 = vmatpush1.msra.mxu0 %v872
  %1012 = vmatprep.subr.mxu0 %v876
  %1013 = vmatpush1.msra.mxu0 %v875
  %1014 = vmatprep.subr.mxu0 %v879
  %1015 = vmatpush1.msra.mxu0 %v878
  %1016 = vmatprep.subr.mxu0 %v882
  %1017 = vmatpush1.msra.mxu0 %v881
  %1018 = vmatprep.subr.mxu0 %v885
  %1019 = vmatpush1.msra.mxu0 %v884
  %1020 = vmatprep.subr.mxu0 %v888
  %1021 = vmatpush1.msra.mxu0 %v887
  %1022 = vmatprep.subr.mxu0 %v891
  %1023 = vmatpush1.msra.mxu0 %v890
  %1024 = vmatprep.subr.mxu0 %v894
  %1025 = vmatpush1.msra.mxu0 %v893
  %1026 = vmatprep.subr.mxu0 %v897
  %1027 = vmatpush1.msra.mxu0 %v896
  %1028 = vmatprep.subr.mxu0 %v900
  %1029 = vmatpush1.msra.mxu0 %v899
  %1030 = vmatprep.subr.mxu0 %v903
  %1031 = vmatpush1.msra.mxu0 %v902
  %1032 = vmatprep.subr.mxu0 %v906
  %1033 = vmatpush1.msra.mxu0 %v905
  %1034 = vmatprep.subr.mxu0 %v909
  %1035 = vmatpush1.msra.mxu0 %v908
  %1036 = vmatprep.subr.mxu0 %v912
  %1037 = vmatpush1.msra.mxu0 %v911
  %1038 = vmatprep.subr.mxu0 %v915
  %1039 = vmatpush1.msra.mxu0 %v914
  %1040 = vmatprep.subr.mxu0 %v918
  %1041 = vmatpush1.msra.mxu0 %v917
  %1042 = vmatprep.subr.mxu0 %v921
  %1043 = vmatpush1.msra.mxu0 %v920
  %1044 = vmatprep.subr.mxu0 %v924
  %1045 = vmatpush1.msra.mxu0 %v923
  %1046 = vmatprep.subr.mxu0 %v927
  %1047 = vmatpush1.msra.mxu0 %v926
  %1048 = vmatprep.subr.mxu0 %v930
  %1049 = vmatpush1.msra.mxu0 %v929
  %1050 = vmatprep.subr.mxu0 %v933
  %1051 = vmatpush1.msra.mxu0 %v932
  %1052 = vmatprep.subr.mxu0 %v936
  %1053 = vmatpush1.msra.mxu0 %v935
  %1054 = vmatprep.subr.mxu0 %v939
  %1055 = vmatpush1.msra.mxu0 %v938
  %1056 = vmatprep.subr.mxu0 %v942
  %1057 = vmatpush1.msra.mxu0 %v941
  %1058 = vmatprep.subr.mxu0 %v945
  %1059 = vmatpush1.msra.mxu0 %v944
  %1060 = vmatprep.subr.mxu0 %v948
  %1061 = vmatpush1.msra.mxu0 %v947
  %1062 = vmatprep.mubr.f32.mxu0 %v852
  %1063 = vmatmul.mubr.f32.gmra.mrb[0].mxu0 %v849
  %v1064 = vpop.f32.mrb[0].mxu0
  %v1065 = vadd.f32 0.0, %v1064
  %v1066 = vpop.f32.mrb[0].mxu0
  %v1067 = vadd.f32 0.0, %v1066
  %1068 = vdwg.mxu0
  %1069 = vmatprep.subr.mxu0 %v951
  %1070 = vmatpush1.msra.mxu0 %v950
  %1071 = vmatprep.subr.mxu0 %v954
  %1072 = vmatpush1.msra.mxu0 %v953
  %1073 = vmatprep.subr.mxu0 %v957
  %1074 = vmatpush1.msra.mxu0 %v956
  %1075 = vmatprep.subr.mxu0 %v960
  %1076 = vmatpush1.msra.mxu0 %v959
  %1077 = vmatprep.subr.mxu0 %v963
  %1078 = vmatpush1.msra.mxu0 %v962
  %1079 = vmatprep.subr.mxu0 %v966
  %1080 = vmatpush1.msra.mxu0 %v965
  %1081 = vmatprep.subr.mxu0 %v969
  %1082 = vmatpush1.msra.mxu0 %v968
  %1083 = vmatprep.subr.mxu0 %v972
  %1084 = vmatpush1.msra.mxu0 %v971
  %1085 = vmatprep.subr.mxu0 %v975
  %1086 = vmatpush1.msra.mxu0 %v974
  %1087 = vmatprep.subr.mxu0 %v978
  %1088 = vmatpush1.msra.mxu0 %v977
  %1089 = vmatprep.subr.mxu0 %v981
  %1090 = vmatpush1.msra.mxu0 %v980
  %1091 = vmatprep.subr.mxu0 %v984
  %1092 = vmatpush1.msra.mxu0 %v983
  %1093 = vmatprep.subr.mxu0 %v987
  %1094 = vmatpush1.msra.mxu0 %v986
  %1095 = vmatprep.subr.mxu0 %v990
  %1096 = vmatpush1.msra.mxu0 %v989
  %1097 = vmatprep.subr.mxu0 %v993
  %1098 = vmatpush1.msra.mxu0 %v992
  %1099 = vmatprep.subr.mxu0 %v996
  %1100 = vmatpush1.msra.mxu0 %v995
  %1101 = vmatprep.subr.mxu0 0.0
  %1102 = vmatpush1.msra.mxu0 0.0
  %1103 = vmatprep.subr.mxu0 0.0
  %1104 = vmatpush1.msra.mxu0 0.0
  %1105 = vmatprep.subr.mxu0 0.0
  %1106 = vmatpush1.msra.mxu0 0.0
  %1107 = vmatprep.subr.mxu0 0.0
  %1108 = vmatpush1.msra.mxu0 0.0
  %1109 = vmatprep.subr.mxu0 0.0
  %1110 = vmatpush1.msra.mxu0 0.0
  %1111 = vmatprep.subr.mxu0 0.0
  %1112 = vmatpush1.msra.mxu0 0.0
  %1113 = vmatprep.subr.mxu0 0.0
  %1114 = vmatpush1.msra.mxu0 0.0
  %1115 = vmatprep.subr.mxu0 0.0
  %1116 = vmatpush1.msra.mxu0 0.0
  %1117 = vmatprep.subr.mxu0 0.0
  %1118 = vmatpush1.msra.mxu0 0.0
  %1119 = vmatprep.subr.mxu0 0.0
  %1120 = vmatpush1.msra.mxu0 0.0
  %1121 = vmatprep.subr.mxu0 0.0
  %1122 = vmatpush1.msra.mxu0 0.0
  %1123 = vmatprep.subr.mxu0 0.0
  %1124 = vmatpush1.msra.mxu0 0.0
  %1125 = vmatprep.subr.mxu0 0.0
  %1126 = vmatpush1.msra.mxu0 0.0
  %1127 = vmatprep.subr.mxu0 0.0
  %1128 = vmatpush1.msra.mxu0 0.0
  %1129 = vmatprep.subr.mxu0 0.0
  %1130 = vmatpush1.msra.mxu0 0.0
  %1131 = vmatprep.subr.mxu0 0.0
  %1132 = vmatpush1.msra.mxu0 0.0
  %1133 = vmatprep.mubr.f32.mxu0 0.0
  %1134 = vmatmul.mubr.f32.gmra.mrb[0].mxu0 %v853
  %v1135 = vpop.f32.mrb[0].mxu0
  %v1136 = vadd.f32 %v1065, %v1135
  %v1137 = vpop.f32.mrb[0].mxu0
  %v1138 = vadd.f32 %v1067, %v1137
  %1139 = vdwg.mxu0
  %1140 = vmatprep.subr.mxu0 0.0
  %1141 = vmatpush1.msra.mxu0 %v856
  %1142 = vmatprep.subr.mxu0 0.0
  %1143 = vmatpush1.msra.mxu0 %v859
  %1144 = vmatprep.subr.mxu0 0.0
  %1145 = vmatpush1.msra.mxu0 %v862
  %1146 = vmatprep.subr.mxu0 0.0
  %1147 = vmatpush1.msra.mxu0 %v865
  %1148 = vmatprep.subr.mxu0 0.0
  %1149 = vmatpush1.msra.mxu0 %v868
  %1150 = vmatprep.subr.mxu0 0.0
  %1151 = vmatpush1.msra.mxu0 %v871
  %1152 = vmatprep.subr.mxu0 0.0
  %1153 = vmatpush1.msra.mxu0 %v874
  %1154 = vmatprep.subr.mxu0 0.0
  %1155 = vmatpush1.msra.mxu0 %v877
  %1156 = vmatprep.subr.mxu0 0.0
  %1157 = vmatpush1.msra.mxu0 %v880
  %1158 = vmatprep.subr.mxu0 0.0
  %1159 = vmatpush1.msra.mxu0 %v883
  %1160 = vmatprep.subr.mxu0 0.0
  %1161 = vmatpush1.msra.mxu0 %v886
  %1162 = vmatprep.subr.mxu0 0.0
  %1163 = vmatpush1.msra.mxu0 %v889
  %1164 = vmatprep.subr.mxu0 0.0
  %1165 = vmatpush1.msra.mxu0 %v892
  %1166 = vmatprep.subr.mxu0 0.0
  %1167 = vmatpush1.msra.mxu0 %v895
  %1168 = vmatprep.subr.mxu0 0.0
  %1169 = vmatpush1.msra.mxu0 %v898
  %1170 = vmatprep.subr.mxu0 0.0
  %1171 = vmatpush1.msra.mxu0 %v901
  %1172 = vmatprep.subr.mxu0 0.0
  %1173 = vmatpush1.msra.mxu0 %v904
  %1174 = vmatprep.subr.mxu0 0.0
  %1175 = vmatpush1.msra.mxu0 %v907
  %1176 = vmatprep.subr.mxu0 0.0
  %1177 = vmatpush1.msra.mxu0 %v910
  %1178 = vmatprep.subr.mxu0 0.0
  %1179 = vmatpush1.msra.mxu0 %v913
  %1180 = vmatprep.subr.mxu0 0.0
  %1181 = vmatpush1.msra.mxu0 %v916
  %1182 = vmatprep.subr.mxu0 0.0
  %1183 = vmatpush1.msra.mxu0 %v919
  %1184 = vmatprep.subr.mxu0 0.0
  %1185 = vmatpush1.msra.mxu0 %v922
  %1186 = vmatprep.subr.mxu0 0.0
  %1187 = vmatpush1.msra.mxu0 %v925
  %1188 = vmatprep.subr.mxu0 0.0
  %1189 = vmatpush1.msra.mxu0 %v928
  %1190 = vmatprep.subr.mxu0 0.0
  %1191 = vmatpush1.msra.mxu0 %v931
  %1192 = vmatprep.subr.mxu0 0.0
  %1193 = vmatpush1.msra.mxu0 %v934
  %1194 = vmatprep.subr.mxu0 0.0
  %1195 = vmatpush1.msra.mxu0 %v937
  %1196 = vmatprep.subr.mxu0 0.0
  %1197 = vmatpush1.msra.mxu0 %v940
  %1198 = vmatprep.subr.mxu0 0.0
  %1199 = vmatpush1.msra.mxu0 %v943
  %1200 = vmatprep.subr.mxu0 0.0
  %1201 = vmatpush1.msra.mxu0 %v946
  %1202 = vmatprep.subr.mxu0 0.0
  %1203 = vmatpush1.msra.mxu0 %v949
  %1204 = vmatprep.mubr.f32.mxu0 %v852
  %1205 = vmatmul.mubr.f32.gmra.mrb[0].mxu0 %v849
  %v1206 = vpop.f32.mrb[0].mxu0
  %v1207 = vadd.f32 0.0, %v1206
  %v1208 = vpop.f32.mrb[0].mxu0
  %1209 = vdwg.mxu0
  %1210 = vmatprep.subr.mxu0 0.0
  %1211 = vmatpush1.msra.mxu0 %v952
  %1212 = vmatprep.subr.mxu0 0.0
  %1213 = vmatpush1.msra.mxu0 %v955
  %1214 = vmatprep.subr.mxu0 0.0
  %1215 = vmatpush1.msra.mxu0 %v958
  %1216 = vmatprep.subr.mxu0 0.0
  %1217 = vmatpush1.msra.mxu0 %v961
  %1218 = vmatprep.subr.mxu0 0.0
  %1219 = vmatpush1.msra.mxu0 %v964
  %1220 = vmatprep.subr.mxu0 0.0
  %1221 = vmatpush1.msra.mxu0 %v967
  %1222 = vmatprep.subr.mxu0 0.0
  %1223 = vmatpush1.msra.mxu0 %v970
  %1224 = vmatprep.subr.mxu0 0.0
  %1225 = vmatpush1.msra.mxu0 %v973
  %1226 = vmatprep.subr.mxu0 0.0
  %1227 = vmatpush1.msra.mxu0 %v976
  %1228 = vmatprep.subr.mxu0 0.0
  %1229 = vmatpush1.msra.mxu0 %v979
  %1230 = vmatprep.subr.mxu0 0.0
  %1231 = vmatpush1.msra.mxu0 %v982
  %1232 = vmatprep.subr.mxu0 0.0
  %1233 = vmatpush1.msra.mxu0 %v985
  %1234 = vmatprep.subr.mxu0 0.0
  %1235 = vmatpush1.msra.mxu0 %v988
  %1236 = vmatprep.subr.mxu0 0.0
  %1237 = vmatpush1.msra.mxu0 %v991
  %1238 = vmatprep.subr.mxu0 0.0
  %1239 = vmatpush1.msra.mxu0 %v994
  %1240 = vmatprep.subr.mxu0 0.0
  %1241 = vmatpush1.msra.mxu0 %v997
  %1242 = vmatprep.subr.mxu0 0.0
  %1243 = vmatpush1.msra.mxu0 0.0
  %1244 = vmatprep.subr.mxu0 0.0
  %1245 = vmatpush1.msra.mxu0 0.0
  %1246 = vmatprep.subr.mxu0 0.0
  %1247 = vmatpush1.msra.mxu0 0.0
  %1248 = vmatprep.subr.mxu0 0.0
  %1249 = vmatpush1.msra.mxu0 0.0
  %1250 = vmatprep.subr.mxu0 0.0
  %1251 = vmatpush1.msra.mxu0 0.0
  %1252 = vmatprep.subr.mxu0 0.0
  %1253 = vmatpush1.msra.mxu0 0.0
  %1254 = vmatprep.subr.mxu0 0.0
  %1255 = vmatpush1.msra.mxu0 0.0
  %1256 = vmatprep.subr.mxu0 0.0
  %1257 = vmatpush1.msra.mxu0 0.0
  %1258 = vmatprep.subr.mxu0 0.0
  %1259 = vmatpush1.msra.mxu0 0.0
  %1260 = vmatprep.subr.mxu0 0.0
  %1261 = vmatpush1.msra.mxu0 0.0
  %1262 = vmatprep.subr.mxu0 0.0
  %1263 = vmatpush1.msra.mxu0 0.0
  %1264 = vmatprep.subr.mxu0 0.0
  %1265 = vmatpush1.msra.mxu0 0.0
  %1266 = vmatprep.subr.mxu0 0.0
  %1267 = vmatpush1.msra.mxu0 0.0
  %1268 = vmatprep.subr.mxu0 0.0
  %1269 = vmatpush1.msra.mxu0 0.0
  %1270 = vmatprep.subr.mxu0 0.0
  %1271 = vmatpush1.msra.mxu0 0.0
  %1272 = vmatprep.subr.mxu0 0.0
  %1273 = vmatpush1.msra.mxu0 0.0
  %1274 = vmatprep.mubr.f32.mxu0 0.0
  %1275 = vmatmul.mubr.f32.gmra.mrb[0].mxu0 %v853
  %v1276 = vpop.f32.mrb[0].mxu0
  %v1277 = vadd.f32 %v1207, %v1276
  %v1278 = vpop.f32.mrb[0].mxu0
  %1279 = vdwg.mxu0
  %v1280 = vld [vmem:[%s4] sm:$0xff]
  %v1281 = vld [vmem:[%s4 + $0x8] sm:$0xff]
  %v1282 = vld [vmem:[%s4 + $0x10] sm:$0xff]
  %v1283 = vld [vmem:[%s4 + $0x18] sm:$0xff]
  %v1284 = vld [vmem:[%s4 + $0x20] sm:$0xff]
  %v1285 = vld [vmem:[%s4 + $0x28] sm:$0xff]
  %v1286 = vld [vmem:[%s4 + $0x30] sm:$0xff]
  %v1287 = vld [vmem:[%s4 + $0x38] sm:$0xff]
  %v1288 = vld [vmem:[%s4 + $0x40] sm:$0xff]
  %v1289 = vld [vmem:[%s4 + $0x48] sm:$0xff]
  %v1290 = vld [vmem:[%s4 + $0x50] sm:$0xff]
  %v1291 = vld [vmem:[%s4 + $0x58] sm:$0xff]
  %v1292 = vld [vmem:[%s5] sm:$0x7]
  %v1294 = vlaneseq
  %v1295 = vshrl.u32 %v1294, 7
  %v1296 = vsub.s32 0, %v1295
  %v1297 = vrot.slane %v1292, %v1296
  %v1298 = vlaneseq
  %v1299 = vshrl.u32 %v1298, 7
  %v1300 = vsub.s32 1, %v1299
  %v1301 = vrot.slane %v1292, %v1300
  %v1302 = vlaneseq
  %v1303 = vshrl.u32 %v1302, 7
  %v1304 = vsub.s32 2, %v1303
  %v1305 = vrot.slane %v1292, %v1304
  %v1310 = vsel %vm844, %v1136, 0
  %1312 = vmatprep.subr.mxu0 %v1281
  %1313 = vmatpush1.msra.mxu0 %v1280
  %1314 = vmatprep.subr.mxu0 %v1284
  %1315 = vmatpush1.msra.mxu0 %v1283
  %1316 = vmatprep.subr.mxu0 %v1287
  %1317 = vmatpush1.msra.mxu0 %v1286
  %1318 = vmatprep.subr.mxu0 %v1290
  %1319 = vmatpush1.msra.mxu0 %v1289
  %1320 = vmatprep.subr.mxu0 0.0
  %1321 = vmatpush1.msra.mxu0 0.0
  %1322 = vmatprep.subr.mxu0 0.0
  %1323 = vmatpush1.msra.mxu0 0.0
  %1324 = vmatprep.subr.mxu0 0.0
  %1325 = vmatpush1.msra.mxu0 0.0
  %1326 = vmatprep.subr.mxu0 0.0
  %1327 = vmatpush1.msra.mxu0 0.0
  %1328 = vmatprep.subr.mxu0 0.0
  %1329 = vmatpush1.msra.mxu0 0.0
  %1330 = vmatprep.subr.mxu0 0.0
  %1331 = vmatpush1.msra.mxu0 0.0
  %1332 = vmatprep.subr.mxu0 0.0
  %1333 = vmatpush1.msra.mxu0 0.0
  %1334 = vmatprep.subr.mxu0 0.0
  %1335 = vmatpush1.msra.mxu0 0.0
  %1336 = vmatprep.subr.mxu0 0.0
  %1337 = vmatpush1.msra.mxu0 0.0
  %1338 = vmatprep.subr.mxu0 0.0
  %1339 = vmatpush1.msra.mxu0 0.0
  %1340 = vmatprep.subr.mxu0 0.0
  %1341 = vmatpush1.msra.mxu0 0.0
  %1342 = vmatprep.subr.mxu0 0.0
  %1343 = vmatpush1.msra.mxu0 0.0
  %1344 = vmatprep.subr.mxu0 0.0
  %1345 = vmatpush1.msra.mxu0 0.0
  %1346 = vmatprep.subr.mxu0 0.0
  %1347 = vmatpush1.msra.mxu0 0.0
  %1348 = vmatprep.subr.mxu0 0.0
  %1349 = vmatpush1.msra.mxu0 0.0
  %1350 = vmatprep.subr.mxu0 0.0
  %1351 = vmatpush1.msra.mxu0 0.0
  %1352 = vmatprep.subr.mxu0 0.0
  %1353 = vmatpush1.msra.mxu0 0.0
  %1354 = vmatprep.subr.mxu0 0.0
  %1355 = vmatpush1.msra.mxu0 0.0
  %1356 = vmatprep.subr.mxu0 0.0
  %1357 = vmatpush1.msra.mxu0 0.0
  %1358 = vmatprep.subr.mxu0 0.0
  %1359 = vmatpush1.msra.mxu0 0.0
  %1360 = vmatprep.subr.mxu0 0.0
  %1361 = vmatpush1.msra.mxu0 0.0
  %1362 = vmatprep.subr.mxu0 0.0
  %1363 = vmatpush1.msra.mxu0 0.0
  %1364 = vmatprep.subr.mxu0 0.0
  %1365 = vmatpush1.msra.mxu0 0.0
  %1366 = vmatprep.subr.mxu0 0.0
  %1367 = vmatpush1.msra.mxu0 0.0
  %1368 = vmatprep.subr.mxu0 0.0
  %1369 = vmatpush1.msra.mxu0 0.0
  %1370 = vmatprep.subr.mxu0 0.0
  %1371 = vmatpush1.msra.mxu0 0.0
  %1372 = vmatprep.subr.mxu0 0.0
  %1373 = vmatpush1.msra.mxu0 0.0
  %1374 = vmatprep.subr.mxu0 0.0
  %1375 = vmatpush1.msra.mxu0 0.0
  %1376 = vmatprep.mubr.f32.mxu0 0.0
  %1377 = vmatmul.mubr.f32.gmra.mrb[0].mxu0 %v1310
  %v1378 = vpop.f32.mrb[0].mxu0
  %v1379 = vadd.f32 %v1297, %v1378
  %v1380 = vpop.f32.mrb[0].mxu0
  %v1381 = vadd.f32 %v1301, %v1380
  %1382 = vdwg.mxu0
  %1383 = vmatprep.subr.mxu0 0.0
  %1384 = vmatpush1.msra.mxu0 %v1282
  %1385 = vmatprep.subr.mxu0 0.0
  %1386 = vmatpush1.msra.mxu0 %v1285
  %1387 = vmatprep.subr.mxu0 0.0
  %1388 = vmatpush1.msra.mxu0 %v1288
  %1389 = vmatprep.subr.mxu0 0.0
  %1390 = vmatpush1.msra.mxu0 %v1291
  %1391 = vmatprep.subr.mxu0 0.0
  %1392 = vmatpush1.msra.mxu0 0.0
  %1393 = vmatprep.subr.mxu0 0.0
  %1394 = vmatpush1.msra.mxu0 0.0
  %1395 = vmatprep.subr.mxu0 0.0
  %1396 = vmatpush1.msra.mxu0 0.0
  %1397 = vmatprep.subr.mxu0 0.0
  %1398 = vmatpush1.msra.mxu0 0.0
  %1399 = vmatprep.subr.mxu0 0.0
  %1400 = vmatpush1.msra.mxu0 0.0
  %1401 = vmatprep.subr.mxu0 0.0
  %1402 = vmatpush1.msra.mxu0 0.0
  %1403 = vmatprep.subr.mxu0 0.0
  %1404 = vmatpush1.msra.mxu0 0.0
  %1405 = vmatprep.subr.mxu0 0.0
  %1406 = vmatpush1.msra.mxu0 0.0
  %1407 = vmatprep.subr.mxu0 0.0
  %1408 = vmatpush1.msra.mxu0 0.0
  %1409 = vmatprep.subr.mxu0 0.0
  %1410 = vmatpush1.msra.mxu0 0.0
  %1411 = vmatprep.subr.mxu0 0.0
  %1412 = vmatpush1.msra.mxu0 0.0
  %1413 = vmatprep.subr.mxu0 0.0
  %1414 = vmatpush1.msra.mxu0 0.0
  %1415 = vmatprep.subr.mxu0 0.0
  %1416 = vmatpush1.msra.mxu0 0.0
  %1417 = vmatprep.subr.mxu0 0.0
  %1418 = vmatpush1.msra.mxu0 0.0
  %1419 = vmatprep.subr.mxu0 0.0
  %1420 = vmatpush1.msra.mxu0 0.0
  %1421 = vmatprep.subr.mxu0 0.0
  %1422 = vmatpush1.msra.mxu0 0.0
  %1423 = vmatprep.subr.mxu0 0.0
  %1424 = vmatpush1.msra.mxu0 0.0
  %1425 = vmatprep.subr.mxu0 0.0
  %1426 = vmatpush1.msra.mxu0 0.0
  %1427 = vmatprep.subr.mxu0 0.0
  %1428 = vmatpush1.msra.mxu0 0.0
  %1429 = vmatprep.subr.mxu0 0.0
  %1430 = vmatpush1.msra.mxu0 0.0
  %1431 = vmatprep.subr.mxu0 0.0
  %1432 = vmatpush1.msra.mxu0 0.0
  %1433 = vmatprep.subr.mxu0 0.0
  %1434 = vmatpush1.msra.mxu0 0.0
  %1435 = vmatprep.subr.mxu0 0.0
  %1436 = vmatpush1.msra.mxu0 0.0
  %1437 = vmatprep.subr.mxu0 0.0
  %1438 = vmatpush1.msra.mxu0 0.0
  %1439 = vmatprep.subr.mxu0 0.0
  %1440 = vmatpush1.msra.mxu0 0.0
  %1441 = vmatprep.subr.mxu0 0.0
  %1442 = vmatpush1.msra.mxu0 0.0
  %1443 = vmatprep.subr.mxu0 0.0
  %1444 = vmatpush1.msra.mxu0 0.0
  %1445 = vmatprep.subr.mxu0 0.0
  %1446 = vmatpush1.msra.mxu0 0.0
  %1447 = vmatprep.mubr.f32.mxu0 0.0
  %1448 = vmatmul.mubr.f32.gmra.mrb[0].mxu0 %v1310
  %v1449 = vpop.f32.mrb[0].mxu0
  %v1450 = vadd.f32 %v1305, %v1449
  %v1451 = vpop.f32.mrb[0].mxu0
  %1452 = vdwg.mxu0
  %v1453 = vsub.f32 0.0, %v1379
  %v1454 = vsub.f32 0.0, %v1381
  %v1455 = vsub.f32 0.0, %v1450
  %v1456 = vmul.f32 %v1453, 1.442695
  %v1457 = vpow.pop %v1456
  %v1458 = vmul.f32 %v1454, 1.442695
  %v1459 = vpow.pop %v1458
  %v1460 = vmul.f32 %v1455, 1.442695
  %v1461 = vpow.pop %v1460
  %v1462 = vadd.f32 %v1457, 1.0
  %v1463 = vadd.f32 %v1459, 1.0
  %v1464 = vadd.f32 %v1461, 1.0
  %v1465 = vrcp.pop %v1462
  %v1466 = vmul.f32 1.0, %v1465
  %v1467 = vrcp.pop %v1463
  %v1468 = vmul.f32 1.0, %v1467
  %v1469 = vrcp.pop %v1464
  %v1470 = vmul.f32 1.0, %v1469
  %v1471 = vmul.f32 %v1136, %v1466
  %v1472 = vmul.f32 %v1138, %v1468
  %v1473 = vmul.f32 %v1277, %v1470
  %v1474 = vld [vmem:[%s6] sm:$0xff]
  %v1475 = vld [vmem:[%s6 + $0x8] sm:$0xff]
  %v1476 = vld [vmem:[%s6 + $0x10] sm:$0xff]
  %v1477 = vld [vmem:[%s6 + $0x18] sm:$0xff]
  %v1478 = vld [vmem:[%s6 + $0x20] sm:$0xff]
  %v1479 = vld [vmem:[%s6 + $0x28] sm:$0xff]
  %v1480 = vld [vmem:[%s6 + $0x30] sm:$0xff]
  %v1481 = vld [vmem:[%s6 + $0x38] sm:$0xff]
  %v1482 = vld [vmem:[%s6 + $0x40] sm:$0xff]
  %v1483 = vld [vmem:[%s6 + $0x48] sm:$0xff]
  %v1484 = vld [vmem:[%s6 + $0x50] sm:$0xff]
  %v1485 = vld [vmem:[%s6 + $0x58] sm:$0xff]
  %v1486 = vld [vmem:[%s6 + $0x60] sm:$0xff]
  %v1487 = vld [vmem:[%s6 + $0x68] sm:$0xff]
  %v1488 = vld [vmem:[%s6 + $0x70] sm:$0xff]
  %v1489 = vld [vmem:[%s6 + $0x78] sm:$0xff]
  %v1490 = vld [vmem:[%s6 + $0x80] sm:$0xff]
  %v1491 = vld [vmem:[%s6 + $0x88] sm:$0xff]
  %v1492 = vld [vmem:[%s6 + $0x90] sm:$0xff]
  %v1493 = vld [vmem:[%s6 + $0x98] sm:$0xff]
  %v1494 = vld [vmem:[%s6 + $0xa0] sm:$0xff]
  %v1495 = vld [vmem:[%s6 + $0xa8] sm:$0xff]
  %v1496 = vld [vmem:[%s6 + $0xb0] sm:$0xff]
  %v1497 = vld [vmem:[%s6 + $0xb8] sm:$0xff]
  %v1498 = vld [vmem:[%s6 + $0xc0] sm:$0xff]
  %v1499 = vld [vmem:[%s6 + $0xc8] sm:$0xff]
  %v1500 = vld [vmem:[%s6 + $0xd0] sm:$0xff]
  %v1501 = vld [vmem:[%s6 + $0xd8] sm:$0xff]
  %v1502 = vld [vmem:[%s6 + $0xe0] sm:$0xff]
  %v1503 = vld [vmem:[%s6 + $0xe8] sm:$0xff]
  %v1504 = vld [vmem:[%s6 + $0xf0] sm:$0xff]
  %v1505 = vld [vmem:[%s6 + $0xf8] sm:$0xff]
  %v1506 = vld [vmem:[%s6 + $0x100] sm:$0xff]
  %v1507 = vld [vmem:[%s6 + $0x108] sm:$0xff]
  %v1508 = vld [vmem:[%s6 + $0x110] sm:$0xff]
  %v1509 = vld [vmem:[%s6 + $0x118] sm:$0xff]
  %v1510 = vld [vmem:[%s6 + $0x120] sm:$0xff]
  %v1511 = vld [vmem:[%s6 + $0x128] sm:$0xff]
  %v1512 = vld [vmem:[%s6 + $0x130] sm:$0xff]
  %v1513 = vld [vmem:[%s6 + $0x138] sm:$0xff]
  %v1514 = vld [vmem:[%s6 + $0x140] sm:$0xff]
  %v1515 = vld [vmem:[%s6 + $0x148] sm:$0xff]
  %v1516 = vld [vmem:[%s6 + $0x150] sm:$0xff]
  %v1517 = vld [vmem:[%s6 + $0x158] sm:$0xff]
  %v1518 = vld [vmem:[%s6 + $0x160] sm:$0xff]
  %v1519 = vld [vmem:[%s6 + $0x168] sm:$0xff]
  %v1520 = vld [vmem:[%s6 + $0x170] sm:$0xff]
  %v1521 = vld [vmem:[%s6 + $0x178] sm:$0xff]
  %v1522 = vld [vmem:[%s6 + $0x180] sm:$0xff]
  %v1523 = vld [vmem:[%s6 + $0x188] sm:$0xff]
  %v1524 = vld [vmem:[%s6 + $0x190] sm:$0xff]
  %v1525 = vld [vmem:[%s6 + $0x198] sm:$0xff]
  %v1526 = vld [vmem:[%s6 + $0x1a0] sm:$0xff]
  %v1527 = vld [vmem:[%s6 + $0x1a8] sm:$0xff]
  %v1528 = vld [vmem:[%s6 + $0x1b0] sm:$0xff]
  %v1529 = vld [vmem:[%s6 + $0x1b8] sm:$0xff]
  %v1530 = vld [vmem:[%s6 + $0x1c0] sm:$0xff]
  %v1531 = vld [vmem:[%s6 + $0x1c8] sm:$0xff]
  %v1532 = vld [vmem:[%s6 + $0x1d0] sm:$0xff]
  %v1533 = vld [vmem:[%s6 + $0x1d8] sm:$0xff]
  %v1534 = vld [vmem:[%s6 + $0x1e0] sm:$0xff]
  %v1535 = vld [vmem:[%s6 + $0x1e8] sm:$0xff]
  %v1536 = vld [vmem:[%s6 + $0x1f0] sm:$0xff]
  %v1537 = vld [vmem:[%s6 + $0x1f8] sm:$0xff]
  %v1538 = vld [vmem:[%s6 + $0x200] sm:$0xff]
  %v1539 = vld [vmem:[%s6 + $0x208] sm:$0xff]
  %v1540 = vld [vmem:[%s6 + $0x210] sm:$0xff]
  %v1541 = vld [vmem:[%s6 + $0x218] sm:$0xff]
  %v1542 = vld [vmem:[%s6 + $0x220] sm:$0xff]
  %v1543 = vld [vmem:[%s6 + $0x228] sm:$0xff]
  %v1544 = vld [vmem:[%s6 + $0x230] sm:$0xff]
  %v1545 = vld [vmem:[%s6 + $0x238] sm:$0xff]
  %v1546 = vld [vmem:[%s6 + $0x240] sm:$0xff]
  %v1547 = vld [vmem:[%s6 + $0x248] sm:$0xff]
  %v1548 = vld [vmem:[%s6 + $0x250] sm:$0xff]
  %v1549 = vld [vmem:[%s6 + $0x258] sm:$0xff]
  %v1550 = vld [vmem:[%s6 + $0x260] sm:$0xff]
  %v1551 = vld [vmem:[%s6 + $0x268] sm:$0xff]
  %v1552 = vld [vmem:[%s6 + $0x270] sm:$0xff]
  %v1553 = vld [vmem:[%s6 + $0x278] sm:$0xff]
  %v1554 = vld [vmem:[%s6 + $0x280] sm:$0xff]
  %v1555 = vld [vmem:[%s6 + $0x288] sm:$0xff]
  %v1556 = vld [vmem:[%s6 + $0x290] sm:$0xff]
  %v1557 = vld [vmem:[%s6 + $0x298] sm:$0xff]
  %v1558 = vld [vmem:[%s6 + $0x2a0] sm:$0xff]
  %v1559 = vld [vmem:[%s6 + $0x2a8] sm:$0xff]
  %v1560 = vld [vmem:[%s6 + $0x2b0] sm:$0xff]
  %v1561 = vld [vmem:[%s6 + $0x2b8] sm:$0xff]
  %v1562 = vld [vmem:[%s6 + $0x2c0] sm:$0xff]
  %v1563 = vld [vmem:[%s6 + $0x2c8] sm:$0xff]
  %v1564 = vld [vmem:[%s6 + $0x2d0] sm:$0xff]
  %v1565 = vld [vmem:[%s6 + $0x2d8] sm:$0xff]
  %v1566 = vld [vmem:[%s6 + $0x2e0] sm:$0xff]
  %v1567 = vld [vmem:[%s6 + $0x2e8] sm:$0xff]
  %v1568 = vld [vmem:[%s6 + $0x2f0] sm:$0xff]
  %v1569 = vld [vmem:[%s6 + $0x2f8] sm:$0xff]
  %v1570 = vld [vmem:[%s6 + $0x300] sm:$0xff]
  %v1571 = vld [vmem:[%s6 + $0x308] sm:$0xff]
  %v1572 = vld [vmem:[%s6 + $0x310] sm:$0xff]
  %v1573 = vld [vmem:[%s6 + $0x318] sm:$0xff]
  %v1574 = vld [vmem:[%s6 + $0x320] sm:$0xff]
  %v1575 = vld [vmem:[%s6 + $0x328] sm:$0xff]
  %v1576 = vld [vmem:[%s6 + $0x330] sm:$0xff]
  %v1577 = vld [vmem:[%s6 + $0x338] sm:$0xff]
  %v1578 = vld [vmem:[%s6 + $0x340] sm:$0xff]
  %v1579 = vld [vmem:[%s6 + $0x348] sm:$0xff]
  %v1580 = vld [vmem:[%s6 + $0x350] sm:$0xff]
  %v1581 = vld [vmem:[%s6 + $0x358] sm:$0xff]
  %v1582 = vld [vmem:[%s6 + $0x360] sm:$0xff]
  %v1583 = vld [vmem:[%s6 + $0x368] sm:$0xff]
  %v1584 = vld [vmem:[%s6 + $0x370] sm:$0xff]
  %v1585 = vld [vmem:[%s6 + $0x378] sm:$0xff]
  %v1586 = vld [vmem:[%s6 + $0x380] sm:$0xff]
  %v1587 = vld [vmem:[%s6 + $0x388] sm:$0xff]
  %v1588 = vld [vmem:[%s6 + $0x390] sm:$0xff]
  %v1589 = vld [vmem:[%s6 + $0x398] sm:$0xff]
  %v1590 = vld [vmem:[%s6 + $0x3a0] sm:$0xff]
  %v1591 = vld [vmem:[%s6 + $0x3a8] sm:$0xff]
  %v1592 = vld [vmem:[%s6 + $0x3b0] sm:$0xff]
  %v1593 = vld [vmem:[%s6 + $0x3b8] sm:$0xff]
  %v1594 = vld [vmem:[%s6 + $0x3c0] sm:$0xff]
  %v1595 = vld [vmem:[%s6 + $0x3c8] sm:$0xff]
  %v1596 = vld [vmem:[%s6 + $0x3d0] sm:$0xff]
  %v1597 = vld [vmem:[%s6 + $0x3d8] sm:$0xff]
  %v1598 = vld [vmem:[%s6 + $0x3e0] sm:$0xff]
  %v1599 = vld [vmem:[%s6 + $0x3e8] sm:$0xff]
  %v1600 = vld [vmem:[%s6 + $0x3f0] sm:$0xff]
  %v1601 = vld [vmem:[%s6 + $0x3f8] sm:$0xff]
  %v1602 = vld [vmem:[%s6 + $0x400] sm:$0xff]
  %v1603 = vld [vmem:[%s6 + $0x408] sm:$0xff]
  %v1604 = vld [vmem:[%s6 + $0x410] sm:$0xff]
  %v1605 = vld [vmem:[%s6 + $0x418] sm:$0xff]
  %v1606 = vld [vmem:[%s6 + $0x420] sm:$0xff]
  %v1607 = vld [vmem:[%s6 + $0x428] sm:$0xff]
  %v1608 = vld [vmem:[%s6 + $0x430] sm:$0xff]
  %v1609 = vld [vmem:[%s6 + $0x438] sm:$0xff]
  %v1610 = vld [vmem:[%s6 + $0x440] sm:$0xff]
  %v1611 = vld [vmem:[%s6 + $0x448] sm:$0xff]
  %v1612 = vld [vmem:[%s6 + $0x450] sm:$0xff]
  %v1613 = vld [vmem:[%s6 + $0x458] sm:$0xff]
  %v1614 = vld [vmem:[%s6 + $0x460] sm:$0xff]
  %v1615 = vld [vmem:[%s6 + $0x468] sm:$0xff]
  %v1616 = vld [vmem:[%s6 + $0x470] sm:$0xff]
  %v1617 = vld [vmem:[%s6 + $0x478] sm:$0xff]
  %1618 = vmatprep.subr.mxu0 %v1475
  %1619 = vmatpush1.msra.mxu0 %v1474
  %1620 = vmatprep.subr.mxu0 %v1478
  %1621 = vmatpush1.msra.mxu0 %v1477
  %1622 = vmatprep.subr.mxu0 %v1481
  %1623 = vmatpush1.msra.mxu0 %v1480
  %1624 = vmatprep.subr.mxu0 %v1484
  %1625 = vmatpush1.msra.mxu0 %v1483
  %1626 = vmatprep.subr.mxu0 %v1487
  %1627 = vmatpush1.msra.mxu0 %v1486
  %1628 = vmatprep.subr.mxu0 %v1490
  %1629 = vmatpush1.msra.mxu0 %v1489
  %1630 = vmatprep.subr.mxu0 %v1493
  %1631 = vmatpush1.msra.mxu0 %v1492
  %1632 = vmatprep.subr.mxu0 %v1496
  %1633 = vmatpush1.msra.mxu0 %v1495
  %1634 = vmatprep.subr.mxu0 %v1499
  %1635 = vmatpush1.msra.mxu0 %v1498
  %1636 = vmatprep.subr.mxu0 %v1502
  %1637 = vmatpush1.msra.mxu0 %v1501
  %1638 = vmatprep.subr.mxu0 %v1505
  %1639 = vmatpush1.msra.mxu0 %v1504
  %1640 = vmatprep.subr.mxu0 %v1508
  %1641 = vmatpush1.msra.mxu0 %v1507
  %1642 = vmatprep.subr.mxu0 %v1511
  %1643 = vmatpush1.msra.mxu0 %v1510
  %1644 = vmatprep.subr.mxu0 %v1514
  %1645 = vmatpush1.msra.mxu0 %v1513
  %1646 = vmatprep.subr.mxu0 %v1517
  %1647 = vmatpush1.msra.mxu0 %v1516
  %1648 = vmatprep.subr.mxu0 %v1520
  %1649 = vmatpush1.msra.mxu0 %v1519
  %1650 = vmatprep.subr.mxu0 %v1523
  %1651 = vmatpush1.msra.mxu0 %v1522
  %1652 = vmatprep.subr.mxu0 %v1526
  %1653 = vmatpush1.msra.mxu0 %v1525
  %1654 = vmatprep.subr.mxu0 %v1529
  %1655 = vmatpush1.msra.mxu0 %v1528
  %1656 = vmatprep.subr.mxu0 %v1532
  %1657 = vmatpush1.msra.mxu0 %v1531
  %1658 = vmatprep.subr.mxu0 %v1535
  %1659 = vmatpush1.msra.mxu0 %v1534
  %1660 = vmatprep.subr.mxu0 %v1538
  %1661 = vmatpush1.msra.mxu0 %v1537
  %1662 = vmatprep.subr.mxu0 %v1541
  %1663 = vmatpush1.msra.mxu0 %v1540
  %1664 = vmatprep.subr.mxu0 %v1544
  %1665 = vmatpush1.msra.mxu0 %v1543
  %1666 = vmatprep.subr.mxu0 %v1547
  %1667 = vmatpush1.msra.mxu0 %v1546
  %1668 = vmatprep.subr.mxu0 %v1550
  %1669 = vmatpush1.msra.mxu0 %v1549
  %1670 = vmatprep.subr.mxu0 %v1553
  %1671 = vmatpush1.msra.mxu0 %v1552
  %1672 = vmatprep.subr.mxu0 %v1556
  %1673 = vmatpush1.msra.mxu0 %v1555
  %1674 = vmatprep.subr.mxu0 %v1559
  %1675 = vmatpush1.msra.mxu0 %v1558
  %1676 = vmatprep.subr.mxu0 %v1562
  %1677 = vmatpush1.msra.mxu0 %v1561
  %1678 = vmatprep.subr.mxu0 %v1565
  %1679 = vmatpush1.msra.mxu0 %v1564
  %1680 = vmatprep.subr.mxu0 %v1568
  %1681 = vmatpush1.msra.mxu0 %v1567
  %1682 = vmatprep.mubr.f32.mxu0 %v1472
  %1683 = vmatmul.mubr.f32.gmra.mrb[0].mxu0 %v1471
  %v1684 = vpop.f32.mrb[0].mxu0
  %v1685 = vadd.f32 0.0, %v1684
  %v1686 = vpop.f32.mrb[0].mxu0
  %v1687 = vadd.f32 0.0, %v1686
  %1688 = vdwg.mxu0
  %1689 = vmatprep.subr.mxu0 %v1571
  %1690 = vmatpush1.msra.mxu0 %v1570
  %1691 = vmatprep.subr.mxu0 %v1574
  %1692 = vmatpush1.msra.mxu0 %v1573
  %1693 = vmatprep.subr.mxu0 %v1577
  %1694 = vmatpush1.msra.mxu0 %v1576
  %1695 = vmatprep.subr.mxu0 %v1580
  %1696 = vmatpush1.msra.mxu0 %v1579
  %1697 = vmatprep.subr.mxu0 %v1583
  %1698 = vmatpush1.msra.mxu0 %v1582
  %1699 = vmatprep.subr.mxu0 %v1586
  %1700 = vmatpush1.msra.mxu0 %v1585
  %1701 = vmatprep.subr.mxu0 %v1589
  %1702 = vmatpush1.msra.mxu0 %v1588
  %1703 = vmatprep.subr.mxu0 %v1592
  %1704 = vmatpush1.msra.mxu0 %v1591
  %1705 = vmatprep.subr.mxu0 %v1595
  %1706 = vmatpush1.msra.mxu0 %v1594
  %1707 = vmatprep.subr.mxu0 %v1598
  %1708 = vmatpush1.msra.mxu0 %v1597
  %1709 = vmatprep.subr.mxu0 %v1601
  %1710 = vmatpush1.msra.mxu0 %v1600
  %1711 = vmatprep.subr.mxu0 %v1604
  %1712 = vmatpush1.msra.mxu0 %v1603
  %1713 = vmatprep.subr.mxu0 %v1607
  %1714 = vmatpush1.msra.mxu0 %v1606
  %1715 = vmatprep.subr.mxu0 %v1610
  %1716 = vmatpush1.msra.mxu0 %v1609
  %1717 = vmatprep.subr.mxu0 %v1613
  %1718 = vmatpush1.msra.mxu0 %v1612
  %1719 = vmatprep.subr.mxu0 %v1616
  %1720 = vmatpush1.msra.mxu0 %v1615
  %1721 = vmatprep.subr.mxu0 0.0
  %1722 = vmatpush1.msra.mxu0 0.0
  %1723 = vmatprep.subr.mxu0 0.0
  %1724 = vmatpush1.msra.mxu0 0.0
  %1725 = vmatprep.subr.mxu0 0.0
  %1726 = vmatpush1.msra.mxu0 0.0
  %1727 = vmatprep.subr.mxu0 0.0
  %1728 = vmatpush1.msra.mxu0 0.0
  %1729 = vmatprep.subr.mxu0 0.0
  %1730 = vmatpush1.msra.mxu0 0.0
  %1731 = vmatprep.subr.mxu0 0.0
  %1732 = vmatpush1.msra.mxu0 0.0
  %1733 = vmatprep.subr.mxu0 0.0
  %1734 = vmatpush1.msra.mxu0 0.0
  %1735 = vmatprep.subr.mxu0 0.0
  %1736 = vmatpush1.msra.mxu0 0.0
  %1737 = vmatprep.subr.mxu0 0.0
  %1738 = vmatpush1.msra.mxu0 0.0
  %1739 = vmatprep.subr.mxu0 0.0
  %1740 = vmatpush1.msra.mxu0 0.0
  %1741 = vmatprep.subr.mxu0 0.0
  %1742 = vmatpush1.msra.mxu0 0.0
  %1743 = vmatprep.subr.mxu0 0.0
  %1744 = vmatpush1.msra.mxu0 0.0
  %1745 = vmatprep.subr.mxu0 0.0
  %1746 = vmatpush1.msra.mxu0 0.0
  %1747 = vmatprep.subr.mxu0 0.0
  %1748 = vmatpush1.msra.mxu0 0.0
  %1749 = vmatprep.subr.mxu0 0.0
  %1750 = vmatpush1.msra.mxu0 0.0
  %1751 = vmatprep.subr.mxu0 0.0
  %1752 = vmatpush1.msra.mxu0 0.0
  %1753 = vmatprep.mubr.f32.mxu0 0.0
  %1754 = vmatmul.mubr.f32.gmra.mrb[0].mxu0 %v1473
  %v1755 = vpop.f32.mrb[0].mxu0
  %v1756 = vadd.f32 %v1685, %v1755
  %v1757 = vpop.f32.mrb[0].mxu0
  %v1758 = vadd.f32 %v1687, %v1757
  %1759 = vdwg.mxu0
  %1760 = vmatprep.subr.mxu0 0.0
  %1761 = vmatpush1.msra.mxu0 %v1476
  %1762 = vmatprep.subr.mxu0 0.0
  %1763 = vmatpush1.msra.mxu0 %v1479
  %1764 = vmatprep.subr.mxu0 0.0
  %1765 = vmatpush1.msra.mxu0 %v1482
  %1766 = vmatprep.subr.mxu0 0.0
  %1767 = vmatpush1.msra.mxu0 %v1485
  %1768 = vmatprep.subr.mxu0 0.0
  %1769 = vmatpush1.msra.mxu0 %v1488
  %1770 = vmatprep.subr.mxu0 0.0
  %1771 = vmatpush1.msra.mxu0 %v1491
  %1772 = vmatprep.subr.mxu0 0.0
  %1773 = vmatpush1.msra.mxu0 %v1494
  %1774 = vmatprep.subr.mxu0 0.0
  %1775 = vmatpush1.msra.mxu0 %v1497
  %1776 = vmatprep.subr.mxu0 0.0
  %1777 = vmatpush1.msra.mxu0 %v1500
  %1778 = vmatprep.subr.mxu0 0.0
  %1779 = vmatpush1.msra.mxu0 %v1503
  %1780 = vmatprep.subr.mxu0 0.0
  %1781 = vmatpush1.msra.mxu0 %v1506
  %1782 = vmatprep.subr.mxu0 0.0
  %1783 = vmatpush1.msra.mxu0 %v1509
  %1784 = vmatprep.subr.mxu0 0.0
  %1785 = vmatpush1.msra.mxu0 %v1512
  %1786 = vmatprep.subr.mxu0 0.0
  %1787 = vmatpush1.msra.mxu0 %v1515
  %1788 = vmatprep.subr.mxu0 0.0
  %1789 = vmatpush1.msra.mxu0 %v1518
  %1790 = vmatprep.subr.mxu0 0.0
  %1791 = vmatpush1.msra.mxu0 %v1521
  %1792 = vmatprep.subr.mxu0 0.0
  %1793 = vmatpush1.msra.mxu0 %v1524
  %1794 = vmatprep.subr.mxu0 0.0
  %1795 = vmatpush1.msra.mxu0 %v1527
  %1796 = vmatprep.subr.mxu0 0.0
  %1797 = vmatpush1.msra.mxu0 %v1530
  %1798 = vmatprep.subr.mxu0 0.0
  %1799 = vmatpush1.msra.mxu0 %v1533
  %1800 = vmatprep.subr.mxu0 0.0
  %1801 = vmatpush1.msra.mxu0 %v1536
  %1802 = vmatprep.subr.mxu0 0.0
  %1803 = vmatpush1.msra.mxu0 %v1539
  %1804 = vmatprep.subr.mxu0 0.0
  %1805 = vmatpush1.msra.mxu0 %v1542
  %1806 = vmatprep.subr.mxu0 0.0
  %1807 = vmatpush1.msra.mxu0 %v1545
  %1808 = vmatprep.subr.mxu0 0.0
  %1809 = vmatpush1.msra.mxu0 %v1548
  %1810 = vmatprep.subr.mxu0 0.0
  %1811 = vmatpush1.msra.mxu0 %v1551
  %1812 = vmatprep.subr.mxu0 0.0
  %1813 = vmatpush1.msra.mxu0 %v1554
  %1814 = vmatprep.subr.mxu0 0.0
  %1815 = vmatpush1.msra.mxu0 %v1557
  %1816 = vmatprep.subr.mxu0 0.0
  %1817 = vmatpush1.msra.mxu0 %v1560
  %1818 = vmatprep.subr.mxu0 0.0
  %1819 = vmatpush1.msra.mxu0 %v1563
  %1820 = vmatprep.subr.mxu0 0.0
  %1821 = vmatpush1.msra.mxu0 %v1566
  %1822 = vmatprep.subr.mxu0 0.0
  %1823 = vmatpush1.msra.mxu0 %v1569
  %1824 = vmatprep.mubr.f32.mxu0 %v1472
  %1825 = vmatmul.mubr.f32.gmra.mrb[0].mxu0 %v1471
  %v1826 = vpop.f32.mrb[0].mxu0
  %v1827 = vadd.f32 0.0, %v1826
  %v1828 = vpop.f32.mrb[0].mxu0
  %1829 = vdwg.mxu0
  %1830 = vmatprep.subr.mxu0 0.0
  %1831 = vmatpush1.msra.mxu0 %v1572
  %1832 = vmatprep.subr.mxu0 0.0
  %1833 = vmatpush1.msra.mxu0 %v1575
  %1834 = vmatprep.subr.mxu0 0.0
  %1835 = vmatpush1.msra.mxu0 %v1578
  %1836 = vmatprep.subr.mxu0 0.0
  %1837 = vmatpush1.msra.mxu0 %v1581
  %1838 = vmatprep.subr.mxu0 0.0
  %1839 = vmatpush1.msra.mxu0 %v1584
  %1840 = vmatprep.subr.mxu0 0.0
  %1841 = vmatpush1.msra.mxu0 %v1587
  %1842 = vmatprep.subr.mxu0 0.0
  %1843 = vmatpush1.msra.mxu0 %v1590
  %1844 = vmatprep.subr.mxu0 0.0
  %1845 = vmatpush1.msra.mxu0 %v1593
  %1846 = vmatprep.subr.mxu0 0.0
  %1847 = vmatpush1.msra.mxu0 %v1596
  %1848 = vmatprep.subr.mxu0 0.0
  %1849 = vmatpush1.msra.mxu0 %v1599
  %1850 = vmatprep.subr.mxu0 0.0
  %1851 = vmatpush1.msra.mxu0 %v1602
  %1852 = vmatprep.subr.mxu0 0.0
  %1853 = vmatpush1.msra.mxu0 %v1605
  %1854 = vmatprep.subr.mxu0 0.0
  %1855 = vmatpush1.msra.mxu0 %v1608
  %1856 = vmatprep.subr.mxu0 0.0
  %1857 = vmatpush1.msra.mxu0 %v1611
  %1858 = vmatprep.subr.mxu0 0.0
  %1859 = vmatpush1.msra.mxu0 %v1614
  %1860 = vmatprep.subr.mxu0 0.0
  %1861 = vmatpush1.msra.mxu0 %v1617
  %1862 = vmatprep.subr.mxu0 0.0
  %1863 = vmatpush1.msra.mxu0 0.0
  %1864 = vmatprep.subr.mxu0 0.0
  %1865 = vmatpush1.msra.mxu0 0.0
  %1866 = vmatprep.subr.mxu0 0.0
  %1867 = vmatpush1.msra.mxu0 0.0
  %1868 = vmatprep.subr.mxu0 0.0
  %1869 = vmatpush1.msra.mxu0 0.0
  %1870 = vmatprep.subr.mxu0 0.0
  %1871 = vmatpush1.msra.mxu0 0.0
  %1872 = vmatprep.subr.mxu0 0.0
  %1873 = vmatpush1.msra.mxu0 0.0
  %1874 = vmatprep.subr.mxu0 0.0
  %1875 = vmatpush1.msra.mxu0 0.0
  %1876 = vmatprep.subr.mxu0 0.0
  %1877 = vmatpush1.msra.mxu0 0.0
  %1878 = vmatprep.subr.mxu0 0.0
  %1879 = vmatpush1.msra.mxu0 0.0
  %1880 = vmatprep.subr.mxu0 0.0
  %1881 = vmatpush1.msra.mxu0 0.0
  %1882 = vmatprep.subr.mxu0 0.0
  %1883 = vmatpush1.msra.mxu0 0.0
  %1884 = vmatprep.subr.mxu0 0.0
  %1885 = vmatpush1.msra.mxu0 0.0
  %1886 = vmatprep.subr.mxu0 0.0
  %1887 = vmatpush1.msra.mxu0 0.0
  %1888 = vmatprep.subr.mxu0 0.0
  %1889 = vmatpush1.msra.mxu0 0.0
  %1890 = vmatprep.subr.mxu0 0.0
  %1891 = vmatpush1.msra.mxu0 0.0
  %1892 = vmatprep.subr.mxu0 0.0
  %1893 = vmatpush1.msra.mxu0 0.0
  %1894 = vmatprep.mubr.f32.mxu0 0.0
  %1895 = vmatmul.mubr.f32.gmra.mrb[0].mxu0 %v1473
  %v1896 = vpop.f32.mrb[0].mxu0
  %v1897 = vadd.f32 %v1827, %v1896
  %v1898 = vpop.f32.mrb[0].mxu0
  %1899 = vdwg.mxu0
  %v1900 = vld [vmem:[%s0] sm:$0xff]
  %v1901 = vld [vmem:[%s0 + $0x8] sm:$0xff]
  %v1902 = vld [vmem:[%s0 + $0x10] sm:$0xff]
  %v1903 = vadd.f32 %v1900, %v1756
  %v1904 = vadd.f32 %v1901, %v1758
  %v1905 = vadd.f32 %v1902, %v1897
  %1906 = vst [vmem:[%s7] sm:$0xff] %v1903
  %1907 = vst [vmem:[%s7 + $0x8] sm:$0xff] %v1904
  %1908 = vst [vmem:[%s7 + $0x10] sm:$0xff] %v1905
  // Predicated region
  $region30: #{so3net_forward.5} parent=0 // pred_check
    _
  $region31: #{so3net_forward.5} parent=0 // pred_check_branch
    %1910 = sbr.rel (0) target = $region33
  $region32: #{so3net_forward.5} parent=0 // pred_region
    _
  $region33: #{so3net_forward.5} parent=0 // pred_fallthru
    _
  // Predicated region
  $region34: #{so3net_forward.5} parent=0 // pred_check
    _
  $region35: #{so3net_forward.5} parent=0 // pred_check_branch
    %1912 = sbr.rel (0) target = $region37
  $region36: #{so3net_forward.5} parent=0 // pred_region
    _
  $region37: #{so3net_forward.5} parent=0 // pred_fallthru
    _

// kernel: so3net_forward.6
$region0: #{so3net_forward.6}
  #allocation0 [shape = 'u32[]', space=smem, size = 0x4, offset = 0x4, fixed_abs, tag = 'smem constant byte address 0x4 - core index']
  #allocation1 [shape = 'u32[144,128]{1,0:T(1,128)}', space=vmem, size = 0x12000, scoped, tag = 'internal scratch']
  %s0 = inlined_call_operand.vmem [shape: f32[56,32], index: 0, kind: input, shape index: {}]
  %s1 = inlined_call_operand.vmem [shape: f32[56,384], index: 1, kind: input, shape index: {}]
  %s2 = inlined_call_operand.vmem [shape: s32[1,56], index: 2, kind: input, shape index: {}]
  %s3 = inlined_call_operand.vmem [shape: f32[32,2304], index: 3, kind: input, shape index: {}]
  %s4 = inlined_call_operand.vmem [shape: f32[32,384], index: 4, kind: input, shape index: {}]
  %s5 = inlined_call_operand.vmem [shape: f32[1,384], index: 5, kind: input, shape index: {}]
  %s6 = inlined_call_operand.vmem [shape: f32[8,384], index: 6, kind: output, shape index: {}]
  %s7 = sld [smem:[#allocation0]]
  $region38: #{so3net_forward.6} parent=0
    _
  %s9 = ssub.s32 1, %s7
  %s10 = scalar_select 0, %s9, %s7
  // Predicated region
  $region2: #{so3net_forward.6} parent=0 // pred_check
    _
  $region3: #{so3net_forward.6} parent=0 // pred_check_branch
    %12 = sbr.rel (0) target = $region5
  $region4: #{so3net_forward.6} parent=0 // pred_region
    %s13 = sadd.s32 0, 0
    %s14 = smul.u32 7, %s13
    %p15 = scmp.lt.s32.totalorder %s14, 6
    %s16 = scalar_select %p15, %s14, 6
    %s17 = smul.addr %s16, 8
    %s18 = scalar_lea.vmem %s0, %s17
    %s19 = sadd.s32 0, 0
    %s20 = smul.u32 7, %s19
  $region5: #{so3net_forward.6} parent=0 // pred_fallthru
    _
  // Predicated region
  $region6: #{so3net_forward.6} parent=0 // pred_check
    _
  $region7: #{so3net_forward.6} parent=0 // pred_check_branch
    %22 = sbr.rel (0) target = $region9
  $region8: #{so3net_forward.6} parent=0 // pred_region
    %s23 = sadd.s32 0, 0
    %s24 = smul.u32 7, %s23
    %p25 = scmp.lt.s32.totalorder %s24, 6
    %s26 = scalar_select %p25, %s24, 6
    %s27 = smul.addr %s26, 3
    %s28 = smul.addr %s27, 8
    %s29 = scalar_lea.vmem %s1, %s28
    %s30 = sadd.s32 0, 0
    %s31 = smul.u32 7, %s30
  $region9: #{so3net_forward.6} parent=0 // pred_fallthru
    _
  // Predicated region
  $region10: #{so3net_forward.6} parent=0 // pred_check
    _
  $region11: #{so3net_forward.6} parent=0 // pred_check_branch
    %33 = sbr.rel (0) target = $region13
  $region12: #{so3net_forward.6} parent=0 // pred_region
    %s34 = sadd.s32 0, 0
    %p35 = scmp.lt.s32.totalorder %s34, 0
    %s36 = scalar_select %p35, %s34, 0
    %s37 = scalar_lea.vmem %s2, %s36
    %s38 = sadd.s32 0, 0
  $region13: #{so3net_forward.6} parent=0 // pred_fallthru
    _
  // Predicated region
  $region14: #{so3net_forward.6} parent=0 // pred_check
    _
  $region15: #{so3net_forward.6} parent=0 // pred_check_branch
    %40 = sbr.rel (0) target = $region17
  $region16: #{so3net_forward.6} parent=0 // pred_region
    _
  $region17: #{so3net_forward.6} parent=0 // pred_fallthru
    _
  // Predicated region
  $region18: #{so3net_forward.6} parent=0 // pred_check
    _
  $region19: #{so3net_forward.6} parent=0 // pred_check_branch
    %42 = sbr.rel (0) target = $region21
  $region20: #{so3net_forward.6} parent=0 // pred_region
    _
  $region21: #{so3net_forward.6} parent=0 // pred_fallthru
    _
  // Predicated region
  $region22: #{so3net_forward.6} parent=0 // pred_check
    _
  $region23: #{so3net_forward.6} parent=0 // pred_check_branch
    %44 = sbr.rel (0) target = $region25
  $region24: #{so3net_forward.6} parent=0 // pred_region
    _
  $region25: #{so3net_forward.6} parent=0 // pred_fallthru
    _
  %s45 = sadd.s32 0, 0
  %s46 = smul.u32 7, %s45
  %p47 = scmp.lt.s32.totalorder %s46, 6
  %s48 = scalar_select %p47, %s46, 6
  %s49 = smul.addr %s48, 8
  %s50 = scalar_lea.vmem %s0, %s49
  %s51 = sadd.s32 0, 0
  %s52 = smul.u32 7, %s51
  %p53 = scmp.lt.s32.totalorder %s52, 6
  %s54 = scalar_select %p53, %s52, 6
  %s55 = smul.addr %s54, 3
  %s56 = smul.addr %s55, 8
  %s57 = scalar_lea.vmem %s1, %s56
  %s58 = sadd.s32 0, 0
  %p59 = scmp.lt.s32.totalorder %s58, 0
  %s60 = scalar_select %p59, %s58, 0
  %s61 = scalar_lea.vmem %s2, %s60
  %s62 = sadd.s32 0, 0
  %s63 = smul.u32 7, %s62
  %p64 = scmp.lt.s32.totalorder %s63, 6
  %s65 = scalar_select %p64, %s63, 6
  %s66 = smul.addr %s65, 8
  %s67 = scalar_lea.vmem %s0, %s66
  %s68 = sadd.s32 0, 0
  %s69 = smul.u32 7, %s68
  %s70 = sadd.s32 0, 0
  %s71 = smul.u32 7, %s70
  %p72 = scmp.lt.s32.totalorder %s71, 6
  %s73 = scalar_select %p72, %s71, 6
  %s74 = smul.addr %s73, 3
  %s75 = smul.addr %s74, 8
  %s76 = scalar_lea.vmem %s1, %s75
  %s77 = sadd.s32 0, 0
  %s78 = smul.u32 7, %s77
  %s79 = sadd.s32 0, 0
  %p80 = scmp.lt.s32.totalorder %s79, 0
  %s81 = scalar_select %p80, %s79, 0
  %s82 = scalar_lea.vmem %s2, %s81
  %s83 = sadd.s32 0, 0
  %p85 = scmp.eq.s32.totalorder 0, 0
  // Predicated region
  $region26: #{so3net_forward.6} parent=0 // pred_check
    %p86 = pneg %p85
  $region27: #{so3net_forward.6} parent=0 // pred_check_branch
    %88 = sbr.rel (%p86) target = $region29
  $region28: #{so3net_forward.6} parent=0 // pred_region
    %89 = vst [vmem:[%s6] sm:$0xff] 0.0
    %90 = vst [vmem:[%s6 + $0x8] sm:$0xff] 0.0
    %91 = vst [vmem:[%s6 + $0x10] sm:$0xff] 0.0
  $region29: #{so3net_forward.6} parent=0 // pred_fallthru
    _
  %v92 = vld [vmem:[%s67] sm:$0xff]
  %v93 = vld [vmem:[%s67 + $0x8] sm:$0xff]
  %v94 = vld [vmem:[%s67 + $0x10] sm:$0xff]
  %v95 = vld [vmem:[%s67 + $0x18] sm:$0xff]
  %v96 = vld [vmem:[%s67 + $0x20] sm:$0xff]
  %v97 = vld [vmem:[%s67 + $0x28] sm:$0xff]
  %v98 = vld [vmem:[%s67 + $0x30] sm:$0xff]
  %v99 = vld [vmem:[%s4] sm:$0xff]
  %v100 = vld [vmem:[%s4 + $0x8] sm:$0xff]
  %v101 = vld [vmem:[%s4 + $0x10] sm:$0xff]
  %v102 = vld [vmem:[%s4 + $0x18] sm:$0xff]
  %v103 = vld [vmem:[%s4 + $0x20] sm:$0xff]
  %v104 = vld [vmem:[%s4 + $0x28] sm:$0xff]
  %v105 = vld [vmem:[%s4 + $0x30] sm:$0xff]
  %v106 = vld [vmem:[%s4 + $0x38] sm:$0xff]
  %v107 = vld [vmem:[%s4 + $0x40] sm:$0xff]
  %v108 = vld [vmem:[%s4 + $0x48] sm:$0xff]
  %v109 = vld [vmem:[%s4 + $0x50] sm:$0xff]
  %v110 = vld [vmem:[%s4 + $0x58] sm:$0xff]
  %v111 = vld [vmem:[%s5] sm:$0x7]
  %v113 = vlaneseq
  %v114 = vshrl.u32 %v113, 7
  %v115 = vsub.s32 0, %v114
  %v116 = vrot.slane %v111, %v115
  %v117 = vlaneseq
  %v118 = vshrl.u32 %v117, 7
  %v119 = vsub.s32 1, %v118
  %v120 = vrot.slane %v111, %v119
  %v121 = vlaneseq
  %v122 = vshrl.u32 %v121, 7
  %v123 = vsub.s32 2, %v122
  %v124 = vrot.slane %v111, %v123
  %vm128 = vcmask 261120
  %v130 = vsel %vm128, %v92, 0
  %v133 = vsel %vm128, %v93, 0
  %v136 = vsel %vm128, %v94, 0
  %v139 = vsel %vm128, %v95, 0
  %v142 = vsel %vm128, %v96, 0
  %v145 = vsel %vm128, %v97, 0
  %v148 = vsel %vm128, %v98, 0
  %150 = vmatprep.subr.mxu0 %v100
  %151 = vmatpush1.msra.mxu0 %v99
  %152 = vmatprep.subr.mxu0 %v103
  %153 = vmatpush1.msra.mxu0 %v102
  %154 = vmatprep.subr.mxu0 %v106
  %155 = vmatpush1.msra.mxu0 %v105
  %156 = vmatprep.subr.mxu0 %v109
  %157 = vmatpush1.msra.mxu0 %v108
  %158 = vmatprep.subr.mxu0 0.0
  %159 = vmatpush1.msra.mxu0 0.0
  %160 = vmatprep.subr.mxu0 0.0
  %161 = vmatpush1.msra.mxu0 0.0
  %162 = vmatprep.subr.mxu0 0.0
  %163 = vmatpush1.msra.mxu0 0.0
  %164 = vmatprep.subr.mxu0 0.0
  %165 = vmatpush1.msra.mxu0 0.0
  %166 = vmatprep.subr.mxu0 0.0
  %167 = vmatpush1.msra.mxu0 0.0
  %168 = vmatprep.subr.mxu0 0.0
  %169 = vmatpush1.msra.mxu0 0.0
  %170 = vmatprep.subr.mxu0 0.0
  %171 = vmatpush1.msra.mxu0 0.0
  %172 = vmatprep.subr.mxu0 0.0
  %173 = vmatpush1.msra.mxu0 0.0
  %174 = vmatprep.subr.mxu0 0.0
  %175 = vmatpush1.msra.mxu0 0.0
  %176 = vmatprep.subr.mxu0 0.0
  %177 = vmatpush1.msra.mxu0 0.0
  %178 = vmatprep.subr.mxu0 0.0
  %179 = vmatpush1.msra.mxu0 0.0
  %180 = vmatprep.subr.mxu0 0.0
  %181 = vmatpush1.msra.mxu0 0.0
  %182 = vmatprep.subr.mxu0 0.0
  %183 = vmatpush1.msra.mxu0 0.0
  %184 = vmatprep.subr.mxu0 0.0
  %185 = vmatpush1.msra.mxu0 0.0
  %186 = vmatprep.subr.mxu0 0.0
  %187 = vmatpush1.msra.mxu0 0.0
  %188 = vmatprep.subr.mxu0 0.0
  %189 = vmatpush1.msra.mxu0 0.0
  %190 = vmatprep.subr.mxu0 0.0
  %191 = vmatpush1.msra.mxu0 0.0
  %192 = vmatprep.subr.mxu0 0.0
  %193 = vmatpush1.msra.mxu0 0.0
  %194 = vmatprep.subr.mxu0 0.0
  %195 = vmatpush1.msra.mxu0 0.0
  %196 = vmatprep.subr.mxu0 0.0
  %197 = vmatpush1.msra.mxu0 0.0
  %198 = vmatprep.subr.mxu0 0.0
  %199 = vmatpush1.msra.mxu0 0.0
  %200 = vmatprep.subr.mxu0 0.0
  %201 = vmatpush1.msra.mxu0 0.0
  %202 = vmatprep.subr.mxu0 0.0
  %203 = vmatpush1.msra.mxu0 0.0
  %204 = vmatprep.subr.mxu0 0.0
  %205 = vmatpush1.msra.mxu0 0.0
  %206 = vmatprep.subr.mxu0 0.0
  %207 = vmatpush1.msra.mxu0 0.0
  %208 = vmatprep.subr.mxu0 0.0
  %209 = vmatpush1.msra.mxu0 0.0
  %210 = vmatprep.subr.mxu0 0.0
  %211 = vmatpush1.msra.mxu0 0.0
  %212 = vmatprep.subr.mxu0 0.0
  %213 = vmatpush1.msra.mxu0 0.0
  %214 = vmatprep.mubr.f32.mxu0 0.0
  %215 = vmatmul.mubr.f32.gmra.mrb[0].mxu0 %v130
  %v216 = vpop.f32.mrb[0].mxu0
  %v217 = vadd.f32 %v116, %v216
  %v218 = vpop.f32.mrb[0].mxu0
  %v219 = vadd.f32 %v120, %v218
  %220 = vmatprep.mubr.f32.mxu0 0.0
  %221 = vmatmul.mubr.f32.gmra.mrb[0].mxu0 %v133
  %v222 = vpop.f32.mrb[0].mxu0
  %v223 = vadd.f32 %v116, %v222
  %v224 = vpop.f32.mrb[0].mxu0
  %v225 = vadd.f32 %v120, %v224
  %226 = vmatprep.mubr.f32.mxu0 0.0
  %227 = vmatmul.mubr.f32.gmra.mrb[0].mxu0 %v136
  %v228 = vpop.f32.mrb[0].mxu0
  %v229 = vadd.f32 %v116, %v228
  %v230 = vpop.f32.mrb[0].mxu0
  %v231 = vadd.f32 %v120, %v230
  %232 = vmatprep.mubr.f32.mxu0 0.0
  %233 = vmatmul.mubr.f32.gmra.mrb[0].mxu0 %v139
  %v234 = vpop.f32.mrb[0].mxu0
  %v235 = vadd.f32 %v116, %v234
  %v236 = vpop.f32.mrb[0].mxu0
  %v237 = vadd.f32 %v120, %v236
  %238 = vmatprep.mubr.f32.mxu0 0.0
  %239 = vmatmul.mubr.f32.gmra.mrb[0].mxu0 %v142
  %v240 = vpop.f32.mrb[0].mxu0
  %v241 = vadd.f32 %v116, %v240
  %v242 = vpop.f32.mrb[0].mxu0
  %v243 = vadd.f32 %v120, %v242
  %244 = vmatprep.mubr.f32.mxu0 0.0
  %245 = vmatmul.mubr.f32.gmra.mrb[0].mxu0 %v145
  %v246 = vpop.f32.mrb[0].mxu0
  %v247 = vadd.f32 %v116, %v246
  %v248 = vpop.f32.mrb[0].mxu0
  %v249 = vadd.f32 %v120, %v248
  %250 = vmatprep.mubr.f32.mxu0 0.0
  %251 = vmatmul.mubr.f32.gmra.mrb[0].mxu0 %v148
  %v252 = vpop.f32.mrb[0].mxu0
  %v253 = vadd.f32 %v116, %v252
  %v254 = vpop.f32.mrb[0].mxu0
  %v255 = vadd.f32 %v120, %v254
  %256 = vdwg.mxu0
  %257 = vmatprep.subr.mxu0 0.0
  %258 = vmatpush1.msra.mxu0 %v101
  %259 = vmatprep.subr.mxu0 0.0
  %260 = vmatpush1.msra.mxu0 %v104
  %261 = vmatprep.subr.mxu0 0.0
  %262 = vmatpush1.msra.mxu0 %v107
  %263 = vmatprep.subr.mxu0 0.0
  %264 = vmatpush1.msra.mxu0 %v110
  %265 = vmatprep.subr.mxu0 0.0
  %266 = vmatpush1.msra.mxu0 0.0
  %267 = vmatprep.subr.mxu0 0.0
  %268 = vmatpush1.msra.mxu0 0.0
  %269 = vmatprep.subr.mxu0 0.0
  %270 = vmatpush1.msra.mxu0 0.0
  %271 = vmatprep.subr.mxu0 0.0
  %272 = vmatpush1.msra.mxu0 0.0
  %273 = vmatprep.subr.mxu0 0.0
  %274 = vmatpush1.msra.mxu0 0.0
  %275 = vmatprep.subr.mxu0 0.0
  %276 = vmatpush1.msra.mxu0 0.0
  %277 = vmatprep.subr.mxu0 0.0
  %278 = vmatpush1.msra.mxu0 0.0
  %279 = vmatprep.subr.mxu0 0.0
  %280 = vmatpush1.msra.mxu0 0.0
  %281 = vmatprep.subr.mxu0 0.0
  %282 = vmatpush1.msra.mxu0 0.0
  %283 = vmatprep.subr.mxu0 0.0
  %284 = vmatpush1.msra.mxu0 0.0
  %285 = vmatprep.subr.mxu0 0.0
  %286 = vmatpush1.msra.mxu0 0.0
  %287 = vmatprep.subr.mxu0 0.0
  %288 = vmatpush1.msra.mxu0 0.0
  %289 = vmatprep.subr.mxu0 0.0
  %290 = vmatpush1.msra.mxu0 0.0
  %291 = vmatprep.subr.mxu0 0.0
  %292 = vmatpush1.msra.mxu0 0.0
  %293 = vmatprep.subr.mxu0 0.0
  %294 = vmatpush1.msra.mxu0 0.0
  %295 = vmatprep.subr.mxu0 0.0
  %296 = vmatpush1.msra.mxu0 0.0
  %297 = vmatprep.subr.mxu0 0.0
  %298 = vmatpush1.msra.mxu0 0.0
  %299 = vmatprep.subr.mxu0 0.0
  %300 = vmatpush1.msra.mxu0 0.0
  %301 = vmatprep.subr.mxu0 0.0
  %302 = vmatpush1.msra.mxu0 0.0
  %303 = vmatprep.subr.mxu0 0.0
  %304 = vmatpush1.msra.mxu0 0.0
  %305 = vmatprep.subr.mxu0 0.0
  %306 = vmatpush1.msra.mxu0 0.0
  %307 = vmatprep.subr.mxu0 0.0
  %308 = vmatpush1.msra.mxu0 0.0
  %309 = vmatprep.subr.mxu0 0.0
  %310 = vmatpush1.msra.mxu0 0.0
  %311 = vmatprep.subr.mxu0 0.0
  %312 = vmatpush1.msra.mxu0 0.0
  %313 = vmatprep.subr.mxu0 0.0
  %314 = vmatpush1.msra.mxu0 0.0
  %315 = vmatprep.subr.mxu0 0.0
  %316 = vmatpush1.msra.mxu0 0.0
  %317 = vmatprep.subr.mxu0 0.0
  %318 = vmatpush1.msra.mxu0 0.0
  %319 = vmatprep.subr.mxu0 0.0
  %320 = vmatpush1.msra.mxu0 0.0
  %321 = vmatprep.mubr.f32.mxu0 0.0
  %322 = vmatmul.mubr.f32.gmra.mrb[0].mxu0 %v130
  %v323 = vpop.f32.mrb[0].mxu0
  %v324 = vadd.f32 %v124, %v323
  %v325 = vpop.f32.mrb[0].mxu0
  %326 = vmatprep.mubr.f32.mxu0 0.0
  %327 = vmatmul.mubr.f32.gmra.mrb[0].mxu0 %v133
  %v328 = vpop.f32.mrb[0].mxu0
  %v329 = vadd.f32 %v124, %v328
  %v330 = vpop.f32.mrb[0].mxu0
  %331 = vmatprep.mubr.f32.mxu0 0.0
  %332 = vmatmul.mubr.f32.gmra.mrb[0].mxu0 %v136
  %v333 = vpop.f32.mrb[0].mxu0
  %v334 = vadd.f32 %v124, %v333
  %v335 = vpop.f32.mrb[0].mxu0
  %336 = vmatprep.mubr.f32.mxu0 0.0
  %337 = vmatmul.mubr.f32.gmra.mrb[0].mxu0 %v139
  %v338 = vpop.f32.mrb[0].mxu0
  %v339 = vadd.f32 %v124, %v338
  %v340 = vpop.f32.mrb[0].mxu0
  %341 = vmatprep.mubr.f32.mxu0 0.0
  %342 = vmatmul.mubr.f32.gmra.mrb[0].mxu0 %v142
  %v343 = vpop.f32.mrb[0].mxu0
  %v344 = vadd.f32 %v124, %v343
  %v345 = vpop.f32.mrb[0].mxu0
  %346 = vmatprep.mubr.f32.mxu0 0.0
  %347 = vmatmul.mubr.f32.gmra.mrb[0].mxu0 %v145
  %v348 = vpop.f32.mrb[0].mxu0
  %v349 = vadd.f32 %v124, %v348
  %v350 = vpop.f32.mrb[0].mxu0
  %351 = vmatprep.mubr.f32.mxu0 0.0
  %352 = vmatmul.mubr.f32.gmra.mrb[0].mxu0 %v148
  %v353 = vpop.f32.mrb[0].mxu0
  %v354 = vadd.f32 %v124, %v353
  %v355 = vpop.f32.mrb[0].mxu0
  %356 = vdwg.mxu0
  %v357 = vld [vmem:[%s3] sm:$0xff]
  %v358 = vld [vmem:[%s3 + $0x8] sm:$0xff]
  %v359 = vld [vmem:[%s3 + $0x10] sm:$0xff]
  %v360 = vld [vmem:[%s3 + $0x18] sm:$0xff]
  %v361 = vld [vmem:[%s3 + $0x20] sm:$0xff]
  %v362 = vld [vmem:[%s3 + $0x28] sm:$0xff]
  %v363 = vld [vmem:[%s3 + $0x30] sm:$0xff]
  %v364 = vld [vmem:[%s3 + $0x38] sm:$0xff]
  %v365 = vld [vmem:[%s3 + $0x40] sm:$0xff]
  %v366 = vld [vmem:[%s3 + $0x48] sm:$0xff]
  %v367 = vld [vmem:[%s3 + $0x50] sm:$0xff]
  %v368 = vld [vmem:[%s3 + $0x58] sm:$0xff]
  %v369 = vld [vmem:[%s3 + $0x60] sm:$0xff]
  %v370 = vld [vmem:[%s3 + $0x68] sm:$0xff]
  %v371 = vld [vmem:[%s3 + $0x70] sm:$0xff]
  %v372 = vld [vmem:[%s3 + $0x78] sm:$0xff]
  %v373 = vld [vmem:[%s3 + $0x80] sm:$0xff]
  %v374 = vld [vmem:[%s3 + $0x88] sm:$0xff]
  %v375 = vld [vmem:[%s3 + $0x90] sm:$0xff]
  %v376 = vld [vmem:[%s3 + $0x98] sm:$0xff]
  %v377 = vld [vmem:[%s3 + $0xa0] sm:$0xff]
  %v378 = vld [vmem:[%s3 + $0xa8] sm:$0xff]
  %v379 = vld [vmem:[%s3 + $0xb0] sm:$0xff]
  %v380 = vld [vmem:[%s3 + $0xb8] sm:$0xff]
  %v381 = vld [vmem:[%s3 + $0xc0] sm:$0xff]
  %v382 = vld [vmem:[%s3 + $0xc8] sm:$0xff]
  %v383 = vld [vmem:[%s3 + $0xd0] sm:$0xff]
  %v384 = vld [vmem:[%s3 + $0xd8] sm:$0xff]
  %v385 = vld [vmem:[%s3 + $0xe0] sm:$0xff]
  %v386 = vld [vmem:[%s3 + $0xe8] sm:$0xff]
  %v387 = vld [vmem:[%s3 + $0xf0] sm:$0xff]
  %v388 = vld [vmem:[%s3 + $0xf8] sm:$0xff]
  %v389 = vld [vmem:[%s3 + $0x100] sm:$0xff]
  %v390 = vld [vmem:[%s3 + $0x108] sm:$0xff]
  %v391 = vld [vmem:[%s3 + $0x110] sm:$0xff]
  %v392 = vld [vmem:[%s3 + $0x118] sm:$0xff]
  %v393 = vld [vmem:[%s3 + $0x120] sm:$0xff]
  %v394 = vld [vmem:[%s3 + $0x128] sm:$0xff]
  %v395 = vld [vmem:[%s3 + $0x130] sm:$0xff]
  %v396 = vld [vmem:[%s3 + $0x138] sm:$0xff]
  %v397 = vld [vmem:[%s3 + $0x140] sm:$0xff]
  %v398 = vld [vmem:[%s3 + $0x148] sm:$0xff]
  %v399 = vld [vmem:[%s3 + $0x150] sm:$0xff]
  %v400 = vld [vmem:[%s3 + $0x158] sm:$0xff]
  %v401 = vld [vmem:[%s3 + $0x160] sm:$0xff]
  %v402 = vld [vmem:[%s3 + $0x168] sm:$0xff]
  %v403 = vld [vmem:[%s3 + $0x170] sm:$0xff]
  %v404 = vld [vmem:[%s3 + $0x178] sm:$0xff]
  %v405 = vld [vmem:[%s3 + $0x180] sm:$0xff]
  %v406 = vld [vmem:[%s3 + $0x188] sm:$0xff]
  %v407 = vld [vmem:[%s3 + $0x190] sm:$0xff]
  %v408 = vld [vmem:[%s3 + $0x198] sm:$0xff]
  %v409 = vld [vmem:[%s3 + $0x1a0] sm:$0xff]
  %v410 = vld [vmem:[%s3 + $0x1a8] sm:$0xff]
  %v411 = vld [vmem:[%s3 + $0x1b0] sm:$0xff]
  %v412 = vld [vmem:[%s3 + $0x1b8] sm:$0xff]
  %v413 = vld [vmem:[%s3 + $0x1c0] sm:$0xff]
  %v414 = vld [vmem:[%s3 + $0x1c8] sm:$0xff]
  %v415 = vld [vmem:[%s3 + $0x1d0] sm:$0xff]
  %v416 = vld [vmem:[%s3 + $0x1d8] sm:$0xff]
  %v417 = vld [vmem:[%s3 + $0x1e0] sm:$0xff]
  %v418 = vld [vmem:[%s3 + $0x1e8] sm:$0xff]
  %v419 = vld [vmem:[%s3 + $0x1f0] sm:$0xff]
  %v420 = vld [vmem:[%s3 + $0x1f8] sm:$0xff]
  %v421 = vld [vmem:[%s3 + $0x200] sm:$0xff]
  %v422 = vld [vmem:[%s3 + $0x208] sm:$0xff]
  %v423 = vld [vmem:[%s3 + $0x210] sm:$0xff]
  %v424 = vld [vmem:[%s3 + $0x218] sm:$0xff]
  %v425 = vld [vmem:[%s3 + $0x220] sm:$0xff]
  %v426 = vld [vmem:[%s3 + $0x228] sm:$0xff]
  %v427 = vld [vmem:[%s3 + $0x230] sm:$0xff]
  %v428 = vld [vmem:[%s3 + $0x238] sm:$0xff]
  %429 = vmatprep.subr.mxu0 %v358
  %430 = vmatpush1.msra.mxu0 %v357
  %431 = vmatprep.subr.mxu0 %v376
  %432 = vmatpush1.msra.mxu0 %v375
  %433 = vmatprep.subr.mxu0 %v394
  %434 = vmatpush1.msra.mxu0 %v393
  %435 = vmatprep.subr.mxu0 %v412
  %436 = vmatpush1.msra.mxu0 %v411
  %437 = vmatprep.subr.mxu0 0.0
  %438 = vmatpush1.msra.mxu0 0.0
  %439 = vmatprep.subr.mxu0 0.0
  %440 = vmatpush1.msra.mxu0 0.0
  %441 = vmatprep.subr.mxu0 0.0
  %442 = vmatpush1.msra.mxu0 0.0
  %443 = vmatprep.subr.mxu0 0.0
  %444 = vmatpush1.msra.mxu0 0.0
  %445 = vmatprep.subr.mxu0 0.0
  %446 = vmatpush1.msra.mxu0 0.0
  %447 = vmatprep.subr.mxu0 0.0
  %448 = vmatpush1.msra.mxu0 0.0
  %449 = vmatprep.subr.mxu0 0.0
  %450 = vmatpush1.msra.mxu0 0.0
  %451 = vmatprep.subr.mxu0 0.0
  %452 = vmatpush1.msra.mxu0 0.0
  %453 = vmatprep.subr.mxu0 0.0
  %454 = vmatpush1.msra.mxu0 0.0
  %455 = vmatprep.subr.mxu0 0.0
  %456 = vmatpush1.msra.mxu0 0.0
  %457 = vmatprep.subr.mxu0 0.0
  %458 = vmatpush1.msra.mxu0 0.0
  %459 = vmatprep.subr.mxu0 0.0
  %460 = vmatpush1.msra.mxu0 0.0
  %461 = vmatprep.subr.mxu0 0.0
  %462 = vmatpush1.msra.mxu0 0.0
  %463 = vmatprep.subr.mxu0 0.0
  %464 = vmatpush1.msra.mxu0 0.0
  %465 = vmatprep.subr.mxu0 0.0
  %466 = vmatpush1.msra.mxu0 0.0
  %467 = vmatprep.subr.mxu0 0.0
  %468 = vmatpush1.msra.mxu0 0.0
  %469 = vmatprep.subr.mxu0 0.0
  %470 = vmatpush1.msra.mxu0 0.0
  %471 = vmatprep.subr.mxu0 0.0
  %472 = vmatpush1.msra.mxu0 0.0
  %473 = vmatprep.subr.mxu0 0.0
  %474 = vmatpush1.msra.mxu0 0.0
  %475 = vmatprep.subr.mxu0 0.0
  %476 = vmatpush1.msra.mxu0 0.0
  %477 = vmatprep.subr.mxu0 0.0
  %478 = vmatpush1.msra.mxu0 0.0
  %479 = vmatprep.subr.mxu0 0.0
  %480 = vmatpush1.msra.mxu0 0.0
  %481 = vmatprep.subr.mxu0 0.0
  %482 = vmatpush1.msra.mxu0 0.0
  %483 = vmatprep.subr.mxu0 0.0
  %484 = vmatpush1.msra.mxu0 0.0
  %485 = vmatprep.subr.mxu0 0.0
  %486 = vmatpush1.msra.mxu0 0.0
  %487 = vmatprep.subr.mxu0 0.0
  %488 = vmatpush1.msra.mxu0 0.0
  %489 = vmatprep.subr.mxu0 0.0
  %490 = vmatpush1.msra.mxu0 0.0
  %491 = vmatprep.subr.mxu0 0.0
  %492 = vmatpush1.msra.mxu0 0.0
  %493 = vmatprep.mubr.f32.mxu0 0.0
  %494 = vmatmul.mubr.f32.gmra.mrb[0].mxu0 %v130
  %v495 = vpop.f32.mrb[0].mxu0
  %v496 = vadd.f32 0.0, %v495
  %v497 = vpop.f32.mrb[0].mxu0
  %v498 = vadd.f32 0.0, %v497
  %499 = vmatprep.mubr.f32.mxu0 0.0
  %500 = vmatmul.mubr.f32.gmra.mrb[0].mxu0 %v133
  %v501 = vpop.f32.mrb[0].mxu0
  %v502 = vadd.f32 0.0, %v501
  %v503 = vpop.f32.mrb[0].mxu0
  %v504 = vadd.f32 0.0, %v503
  %505 = vmatprep.mubr.f32.mxu0 0.0
  %506 = vmatmul.mubr.f32.gmra.mrb[0].mxu0 %v136
  %v507 = vpop.f32.mrb[0].mxu0
  %v508 = vadd.f32 0.0, %v507
  %v509 = vpop.f32.mrb[0].mxu0
  %v510 = vadd.f32 0.0, %v509
  %511 = vmatprep.mubr.f32.mxu0 0.0
  %512 = vmatmul.mubr.f32.gmra.mrb[0].mxu0 %v139
  %v513 = vpop.f32.mrb[0].mxu0
  %v514 = vadd.f32 0.0, %v513
  %v515 = vpop.f32.mrb[0].mxu0
  %v516 = vadd.f32 0.0, %v515
  %517 = vmatprep.mubr.f32.mxu0 0.0
  %518 = vmatmul.mubr.f32.gmra.mrb[0].mxu0 %v142
  %v519 = vpop.f32.mrb[0].mxu0
  %v520 = vadd.f32 0.0, %v519
  %v521 = vpop.f32.mrb[0].mxu0
  %v522 = vadd.f32 0.0, %v521
  %523 = vmatprep.mubr.f32.mxu0 0.0
  %524 = vmatmul.mubr.f32.gmra.mrb[0].mxu0 %v145
  %v525 = vpop.f32.mrb[0].mxu0
  %v526 = vadd.f32 0.0, %v525
  %v527 = vpop.f32.mrb[0].mxu0
  %v528 = vadd.f32 0.0, %v527
  %529 = vmatprep.mubr.f32.mxu0 0.0
  %530 = vmatmul.mubr.f32.gmra.mrb[0].mxu0 %v148
  %v531 = vpop.f32.mrb[0].mxu0
  %v532 = vadd.f32 0.0, %v531
  %v533 = vpop.f32.mrb[0].mxu0
  %v534 = vadd.f32 0.0, %v533
  %535 = vdwg.mxu0
  %536 = vmatprep.subr.mxu0 %v360
  %537 = vmatpush1.msra.mxu0 %v359
  %538 = vmatprep.subr.mxu0 %v378
  %539 = vmatpush1.msra.mxu0 %v377
  %540 = vmatprep.subr.mxu0 %v396
  %541 = vmatpush1.msra.mxu0 %v395
  %542 = vmatprep.subr.mxu0 %v414
  %543 = vmatpush1.msra.mxu0 %v413
  %544 = vmatprep.subr.mxu0 0.0
  %545 = vmatpush1.msra.mxu0 0.0
  %546 = vmatprep.subr.mxu0 0.0
  %547 = vmatpush1.msra.mxu0 0.0
  %548 = vmatprep.subr.mxu0 0.0
  %549 = vmatpush1.msra.mxu0 0.0
  %550 = vmatprep.subr.mxu0 0.0
  %551 = vmatpush1.msra.mxu0 0.0
  %552 = vmatprep.subr.mxu0 0.0
  %553 = vmatpush1.msra.mxu0 0.0
  %554 = vmatprep.subr.mxu0 0.0
  %555 = vmatpush1.msra.mxu0 0.0
  %556 = vmatprep.subr.mxu0 0.0
  %557 = vmatpush1.msra.mxu0 0.0
  %558 = vmatprep.subr.mxu0 0.0
  %559 = vmatpush1.msra.mxu0 0.0
  %560 = vmatprep.subr.mxu0 0.0
  %561 = vmatpush1.msra.mxu0 0.0
  %562 = vmatprep.subr.mxu0 0.0
  %563 = vmatpush1.msra.mxu0 0.0
  %564 = vmatprep.subr.mxu0 0.0
  %565 = vmatpush1.msra.mxu0 0.0
  %566 = vmatprep.subr.mxu0 0.0
  %567 = vmatpush1.msra.mxu0 0.0
  %568 = vmatprep.subr.mxu0 0.0
  %569 = vmatpush1.msra.mxu0 0.0
  %570 = vmatprep.subr.mxu0 0.0
  %571 = vmatpush1.msra.mxu0 0.0
  %572 = vmatprep.subr.mxu0 0.0
  %573 = vmatpush1.msra.mxu0 0.0
  %574 = vmatprep.subr.mxu0 0.0
  %575 = vmatpush1.msra.mxu0 0.0
  %576 = vmatprep.subr.mxu0 0.0
  %577 = vmatpush1.msra.mxu0 0.0
  %578 = vmatprep.subr.mxu0 0.0
  %579 = vmatpush1.msra.mxu0 0.0
  %580 = vmatprep.subr.mxu0 0.0
  %581 = vmatpush1.msra.mxu0 0.0
  %582 = vmatprep.subr.mxu0 0.0
  %583 = vmatpush1.msra.mxu0 0.0
  %584 = vmatprep.subr.mxu0 0.0
  %585 = vmatpush1.msra.mxu0 0.0
  %586 = vmatprep.subr.mxu0 0.0
  %587 = vmatpush1.msra.mxu0 0.0
  %588 = vmatprep.subr.mxu0 0.0
  %589 = vmatpush1.msra.mxu0 0.0
  %590 = vmatprep.subr.mxu0 0.0
  %591 = vmatpush1.msra.mxu0 0.0
  %592 = vmatprep.subr.mxu0 0.0
  %593 = vmatpush1.msra.mxu0 0.0
  %594 = vmatprep.subr.mxu0 0.0
  %595 = vmatpush1.msra.mxu0 0.0
  %596 = vmatprep.subr.mxu0 0.0
  %597 = vmatpush1.msra.mxu0 0.0
  %598 = vmatprep.subr.mxu0 0.0
  %599 = vmatpush1.msra.mxu0 0.0
  %600 = vmatprep.mubr.f32.mxu0 0.0
  %601 = vmatmul.mubr.f32.gmra.mrb[0].mxu0 %v130
  %v602 = vpop.f32.mrb[0].mxu0
  %v603 = vadd.f32 0.0, %v602
  %v604 = vpop.f32.mrb[0].mxu0
  %v605 = vadd.f32 0.0, %v604
  %606 = vmatprep.mubr.f32.mxu0 0.0
  %607 = vmatmul.mubr.f32.gmra.mrb[0].mxu0 %v133
  %v608 = vpop.f32.mrb[0].mxu0
  %v609 = vadd.f32 0.0, %v608
  %v610 = vpop.f32.mrb[0].mxu0
  %v611 = vadd.f32 0.0, %v610
  %612 = vmatprep.mubr.f32.mxu0 0.0
  %613 = vmatmul.mubr.f32.gmra.mrb[0].mxu0 %v136
  %v614 = vpop.f32.mrb[0].mxu0
  %v615 = vadd.f32 0.0, %v614
  %v616 = vpop.f32.mrb[0].mxu0
  %v617 = vadd.f32 0.0, %v616
  %618 = vmatprep.mubr.f32.mxu0 0.0
  %619 = vmatmul.mubr.f32.gmra.mrb[0].mxu0 %v139
  %v620 = vpop.f32.mrb[0].mxu0
  %v621 = vadd.f32 0.0, %v620
  %v622 = vpop.f32.mrb[0].mxu0
  %v623 = vadd.f32 0.0, %v622
  %624 = vmatprep.mubr.f32.mxu0 0.0
  %625 = vmatmul.mubr.f32.gmra.mrb[0].mxu0 %v142
  %v626 = vpop.f32.mrb[0].mxu0
  %v627 = vadd.f32 0.0, %v626
  %v628 = vpop.f32.mrb[0].mxu0
  %v629 = vadd.f32 0.0, %v628
  %630 = vmatprep.mubr.f32.mxu0 0.0
  %631 = vmatmul.mubr.f32.gmra.mrb[0].mxu0 %v145
  %v632 = vpop.f32.mrb[0].mxu0
  %v633 = vadd.f32 0.0, %v632
  %v634 = vpop.f32.mrb[0].mxu0
  %v635 = vadd.f32 0.0, %v634
  %636 = vmatprep.mubr.f32.mxu0 0.0
  %637 = vmatmul.mubr.f32.gmra.mrb[0].mxu0 %v148
  %v638 = vpop.f32.mrb[0].mxu0
  %v639 = vadd.f32 0.0, %v638
  %v640 = vpop.f32.mrb[0].mxu0
  %v641 = vadd.f32 0.0, %v640
  %642 = vdwg.mxu0
  %643 = vmatprep.subr.mxu0 %v362
  %644 = vmatpush1.msra.mxu0 %v361
  %645 = vmatprep.subr.mxu0 %v380
  %646 = vmatpush1.msra.mxu0 %v379
  %647 = vmatprep.subr.mxu0 %v398
  %648 = vmatpush1.msra.mxu0 %v397
  %649 = vmatprep.subr.mxu0 %v416
  %650 = vmatpush1.msra.mxu0 %v415
  %651 = vmatprep.subr.mxu0 0.0
  %652 = vmatpush1.msra.mxu0 0.0
  %653 = vmatprep.subr.mxu0 0.0
  %654 = vmatpush1.msra.mxu0 0.0
  %655 = vmatprep.subr.mxu0 0.0
  %656 = vmatpush1.msra.mxu0 0.0
  %657 = vmatprep.subr.mxu0 0.0
  %658 = vmatpush1.msra.mxu0 0.0
  %659 = vmatprep.subr.mxu0 0.0
  %660 = vmatpush1.msra.mxu0 0.0
  %661 = vmatprep.subr.mxu0 0.0
  %662 = vmatpush1.msra.mxu0 0.0
  %663 = vmatprep.subr.mxu0 0.0
  %664 = vmatpush1.msra.mxu0 0.0
  %665 = vmatprep.subr.mxu0 0.0
  %666 = vmatpush1.msra.mxu0 0.0
  %667 = vmatprep.subr.mxu0 0.0
  %668 = vmatpush1.msra.mxu0 0.0
  %669 = vmatprep.subr.mxu0 0.0
  %670 = vmatpush1.msra.mxu0 0.0
  %671 = vmatprep.subr.mxu0 0.0
  %672 = vmatpush1.msra.mxu0 0.0
  %673 = vmatprep.subr.mxu0 0.0
  %674 = vmatpush1.msra.mxu0 0.0
  %675 = vmatprep.subr.mxu0 0.0
  %676 = vmatpush1.msra.mxu0 0.0
  %677 = vmatprep.subr.mxu0 0.0
  %678 = vmatpush1.msra.mxu0 0.0
  %679 = vmatprep.subr.mxu0 0.0
  %680 = vmatpush1.msra.mxu0 0.0
  %681 = vmatprep.subr.mxu0 0.0
  %682 = vmatpush1.msra.mxu0 0.0
  %683 = vmatprep.subr.mxu0 0.0
  %684 = vmatpush1.msra.mxu0 0.0
  %685 = vmatprep.subr.mxu0 0.0
  %686 = vmatpush1.msra.mxu0 0.0
  %687 = vmatprep.subr.mxu0 0.0
  %688 = vmatpush1.msra.mxu0 0.0
  %689 = vmatprep.subr.mxu0 0.0
  %690 = vmatpush1.msra.mxu0 0.0
  %691 = vmatprep.subr.mxu0 0.0
  %692 = vmatpush1.msra.mxu0 0.0
  %693 = vmatprep.subr.mxu0 0.0
  %694 = vmatpush1.msra.mxu0 0.0
  %695 = vmatprep.subr.mxu0 0.0
  %696 = vmatpush1.msra.mxu0 0.0
  %697 = vmatprep.subr.mxu0 0.0
  %698 = vmatpush1.msra.mxu0 0.0
  %699 = vmatprep.subr.mxu0 0.0
  %700 = vmatpush1.msra.mxu0 0.0
  %701 = vmatprep.subr.mxu0 0.0
  %702 = vmatpush1.msra.mxu0 0.0
  %703 = vmatprep.subr.mxu0 0.0
  %704 = vmatpush1.msra.mxu0 0.0
  %705 = vmatprep.subr.mxu0 0.0
  %706 = vmatpush1.msra.mxu0 0.0
  %707 = vmatprep.mubr.f32.mxu0 0.0
  %708 = vmatmul.mubr.f32.gmra.mrb[0].mxu0 %v130
  %v709 = vpop.f32.mrb[0].mxu0
  %v710 = vadd.f32 0.0, %v709
  %v711 = vpop.f32.mrb[0].mxu0
  %v712 = vadd.f32 0.0, %v711
  %713 = vmatprep.mubr.f32.mxu0 0.0
  %714 = vmatmul.mubr.f32.gmra.mrb[0].mxu0 %v133
  %v715 = vpop.f32.mrb[0].mxu0
  %v716 = vadd.f32 0.0, %v715
  %v717 = vpop.f32.mrb[0].mxu0
  %v718 = vadd.f32 0.0, %v717
  %719 = vmatprep.mubr.f32.mxu0 0.0
  %720 = vmatmul.mubr.f32.gmra.mrb[0].mxu0 %v136
  %v721 = vpop.f32.mrb[0].mxu0
  %v722 = vadd.f32 0.0, %v721
  %v723 = vpop.f32.mrb[0].mxu0
  %v724 = vadd.f32 0.0, %v723
  %725 = vmatprep.mubr.f32.mxu0 0.0
  %726 = vmatmul.mubr.f32.gmra.mrb[0].mxu0 %v139
  %v727 = vpop.f32.mrb[0].mxu0
  %v728 = vadd.f32 0.0, %v727
  %v729 = vpop.f32.mrb[0].mxu0
  %v730 = vadd.f32 0.0, %v729
  %731 = vmatprep.mubr.f32.mxu0 0.0
  %732 = vmatmul.mubr.f32.gmra.mrb[0].mxu0 %v142
  %v733 = vpop.f32.mrb[0].mxu0
  %v734 = vadd.f32 0.0, %v733
  %v735 = vpop.f32.mrb[0].mxu0
  %v736 = vadd.f32 0.0, %v735
  %737 = vmatprep.mubr.f32.mxu0 0.0
  %738 = vmatmul.mubr.f32.gmra.mrb[0].mxu0 %v145
  %v739 = vpop.f32.mrb[0].mxu0
  %v740 = vadd.f32 0.0, %v739
  %v741 = vpop.f32.mrb[0].mxu0
  %v742 = vadd.f32 0.0, %v741
  %743 = vmatprep.mubr.f32.mxu0 0.0
  %744 = vmatmul.mubr.f32.gmra.mrb[0].mxu0 %v148
  %v745 = vpop.f32.mrb[0].mxu0
  %v746 = vadd.f32 0.0, %v745
  %v747 = vpop.f32.mrb[0].mxu0
  %v748 = vadd.f32 0.0, %v747
  %749 = vdwg.mxu0
  %750 = vmatprep.subr.mxu0 %v364
  %751 = vmatpush1.msra.mxu0 %v363
  %752 = vmatprep.subr.mxu0 %v382
  %753 = vmatpush1.msra.mxu0 %v381
  %754 = vmatprep.subr.mxu0 %v400
  %755 = vmatpush1.msra.mxu0 %v399
  %756 = vmatprep.subr.mxu0 %v418
  %757 = vmatpush1.msra.mxu0 %v417
  %758 = vmatprep.subr.mxu0 0.0
  %759 = vmatpush1.msra.mxu0 0.0
  %760 = vmatprep.subr.mxu0 0.0
  %761 = vmatpush1.msra.mxu0 0.0
  %762 = vmatprep.subr.mxu0 0.0
  %763 = vmatpush1.msra.mxu0 0.0
  %764 = vmatprep.subr.mxu0 0.0
  %765 = vmatpush1.msra.mxu0 0.0
  %766 = vmatprep.subr.mxu0 0.0
  %767 = vmatpush1.msra.mxu0 0.0
  %768 = vmatprep.subr.mxu0 0.0
  %769 = vmatpush1.msra.mxu0 0.0
  %770 = vmatprep.subr.mxu0 0.0
  %771 = vmatpush1.msra.mxu0 0.0
  %772 = vmatprep.subr.mxu0 0.0
  %773 = vmatpush1.msra.mxu0 0.0
  %774 = vmatprep.subr.mxu0 0.0
  %775 = vmatpush1.msra.mxu0 0.0
  %776 = vmatprep.subr.mxu0 0.0
  %777 = vmatpush1.msra.mxu0 0.0
  %778 = vmatprep.subr.mxu0 0.0
  %779 = vmatpush1.msra.mxu0 0.0
  %780 = vmatprep.subr.mxu0 0.0
  %781 = vmatpush1.msra.mxu0 0.0
  %782 = vmatprep.subr.mxu0 0.0
  %783 = vmatpush1.msra.mxu0 0.0
  %784 = vmatprep.subr.mxu0 0.0
  %785 = vmatpush1.msra.mxu0 0.0
  %786 = vmatprep.subr.mxu0 0.0
  %787 = vmatpush1.msra.mxu0 0.0
  %788 = vmatprep.subr.mxu0 0.0
  %789 = vmatpush1.msra.mxu0 0.0
  %790 = vmatprep.subr.mxu0 0.0
  %791 = vmatpush1.msra.mxu0 0.0
  %792 = vmatprep.subr.mxu0 0.0
  %793 = vmatpush1.msra.mxu0 0.0
  %794 = vmatprep.subr.mxu0 0.0
  %795 = vmatpush1.msra.mxu0 0.0
  %796 = vmatprep.subr.mxu0 0.0
  %797 = vmatpush1.msra.mxu0 0.0
  %798 = vmatprep.subr.mxu0 0.0
  %799 = vmatpush1.msra.mxu0 0.0
  %800 = vmatprep.subr.mxu0 0.0
  %801 = vmatpush1.msra.mxu0 0.0
  %802 = vmatprep.subr.mxu0 0.0
  %803 = vmatpush1.msra.mxu0 0.0
  %804 = vmatprep.subr.mxu0 0.0
  %805 = vmatpush1.msra.mxu0 0.0
  %806 = vmatprep.subr.mxu0 0.0
  %807 = vmatpush1.msra.mxu0 0.0
  %808 = vmatprep.subr.mxu0 0.0
  %809 = vmatpush1.msra.mxu0 0.0
  %810 = vmatprep.subr.mxu0 0.0
  %811 = vmatpush1.msra.mxu0 0.0
  %812 = vmatprep.subr.mxu0 0.0
  %813 = vmatpush1.msra.mxu0 0.0
  %814 = vmatprep.mubr.f32.mxu0 0.0
  %815 = vmatmul.mubr.f32.gmra.mrb[0].mxu0 %v130
  %v816 = vpop.f32.mrb[0].mxu0
  %v817 = vadd.f32 0.0, %v816
  %v818 = vpop.f32.mrb[0].mxu0
  %v819 = vadd.f32 0.0, %v818
  %820 = vmatprep.mubr.f32.mxu0 0.0
  %821 = vmatmul.mubr.f32.gmra.mrb[0].mxu0 %v133
  %v822 = vpop.f32.mrb[0].mxu0
  %v823 = vadd.f32 0.0, %v822
  %v824 = vpop.f32.mrb[0].mxu0
  %v825 = vadd.f32 0.0, %v824
  %826 = vmatprep.mubr.f32.mxu0 0.0
  %827 = vmatmul.mubr.f32.gmra.mrb[0].mxu0 %v136
  %v828 = vpop.f32.mrb[0].mxu0
  %v829 = vadd.f32 0.0, %v828
  %v830 = vpop.f32.mrb[0].mxu0
  %v831 = vadd.f32 0.0, %v830
  %832 = vmatprep.mubr.f32.mxu0 0.0
  %833 = vmatmul.mubr.f32.gmra.mrb[0].mxu0 %v139
  %v834 = vpop.f32.mrb[0].mxu0
  %v835 = vadd.f32 0.0, %v834
  %v836 = vpop.f32.mrb[0].mxu0
  %v837 = vadd.f32 0.0, %v836
  %838 = vmatprep.mubr.f32.mxu0 0.0
  %839 = vmatmul.mubr.f32.gmra.mrb[0].mxu0 %v142
  %v840 = vpop.f32.mrb[0].mxu0
  %v841 = vadd.f32 0.0, %v840
  %v842 = vpop.f32.mrb[0].mxu0
  %v843 = vadd.f32 0.0, %v842
  %844 = vmatprep.mubr.f32.mxu0 0.0
  %845 = vmatmul.mubr.f32.gmra.mrb[0].mxu0 %v145
  %v846 = vpop.f32.mrb[0].mxu0
  %v847 = vadd.f32 0.0, %v846
  %v848 = vpop.f32.mrb[0].mxu0
  %v849 = vadd.f32 0.0, %v848
  %850 = vmatprep.mubr.f32.mxu0 0.0
  %851 = vmatmul.mubr.f32.gmra.mrb[0].mxu0 %v148
  %v852 = vpop.f32.mrb[0].mxu0
  %v853 = vadd.f32 0.0, %v852
  %v854 = vpop.f32.mrb[0].mxu0
  %v855 = vadd.f32 0.0, %v854
  %856 = vdwg.mxu0
  %857 = vmatprep.subr.mxu0 %v366
  %858 = vmatpush1.msra.mxu0 %v365
  %859 = vmatprep.subr.mxu0 %v384
  %860 = vmatpush1.msra.mxu0 %v383
  %861 = vmatprep.subr.mxu0 %v402
  %862 = vmatpush1.msra.mxu0 %v401
  %863 = vmatprep.subr.mxu0 %v420
  %864 = vmatpush1.msra.mxu0 %v419
  %865 = vmatprep.subr.mxu0 0.0
  %866 = vmatpush1.msra.mxu0 0.0
  %867 = vmatprep.subr.mxu0 0.0
  %868 = vmatpush1.msra.mxu0 0.0
  %869 = vmatprep.subr.mxu0 0.0
  %870 = vmatpush1.msra.mxu0 0.0
  %871 = vmatprep.subr.mxu0 0.0
  %872 = vmatpush1.msra.mxu0 0.0
  %873 = vmatprep.subr.mxu0 0.0
  %874 = vmatpush1.msra.mxu0 0.0
  %875 = vmatprep.subr.mxu0 0.0
  %876 = vmatpush1.msra.mxu0 0.0
  %877 = vmatprep.subr.mxu0 0.0
  %878 = vmatpush1.msra.mxu0 0.0
  %879 = vmatprep.subr.mxu0 0.0
  %880 = vmatpush1.msra.mxu0 0.0
  %881 = vmatprep.subr.mxu0 0.0
  %882 = vmatpush1.msra.mxu0 0.0
  %883 = vmatprep.subr.mxu0 0.0
  %884 = vmatpush1.msra.mxu0 0.0
  %885 = vmatprep.subr.mxu0 0.0
  %886 = vmatpush1.msra.mxu0 0.0
  %887 = vmatprep.subr.mxu0 0.0
  %888 = vmatpush1.msra.mxu0 0.0
  %889 = vmatprep.subr.mxu0 0.0
  %890 = vmatpush1.msra.mxu0 0.0
  %891 = vmatprep.subr.mxu0 0.0
  %892 = vmatpush1.msra.mxu0 0.0
  %893 = vmatprep.subr.mxu0 0.0
  %894 = vmatpush1.msra.mxu0 0.0
  %895 = vmatprep.subr.mxu0 0.0
  %896 = vmatpush1.msra.mxu0 0.0
  %897 = vmatprep.subr.mxu0 0.0
  %898 = vmatpush1.msra.mxu0 0.0
  %899 = vmatprep.subr.mxu0 0.0
  %900 = vmatpush1.msra.mxu0 0.0
  %901 = vmatprep.subr.mxu0 0.0
  %902 = vmatpush1.msra.mxu0 0.0
  %903 = vmatprep.subr.mxu0 0.0
  %904 = vmatpush1.msra.mxu0 0.0
  %905 = vmatprep.subr.mxu0 0.0
  %906 = vmatpush1.msra.mxu0 0.0
  %907 = vmatprep.subr.mxu0 0.0
  %908 = vmatpush1.msra.mxu0 0.0
  %909 = vmatprep.subr.mxu0 0.0
  %910 = vmatpush1.msra.mxu0 0.0
  %911 = vmatprep.subr.mxu0 0.0
  %912 = vmatpush1.msra.mxu0 0.0
  %913 = vmatprep.subr.mxu0 0.0
  %914 = vmatpush1.msra.mxu0 0.0
  %915 = vmatprep.subr.mxu0 0.0
  %916 = vmatpush1.msra.mxu0 0.0
  %917 = vmatprep.subr.mxu0 0.0
  %918 = vmatpush1.msra.mxu0 0.0
  %919 = vmatprep.subr.mxu0 0.0
  %920 = vmatpush1.msra.mxu0 0.0
  %921 = vmatprep.mubr.f32.mxu0 0.0
  %922 = vmatmul.mubr.f32.gmra.mrb[0].mxu0 %v130
  %v923 = vpop.f32.mrb[0].mxu0
  %v924 = vadd.f32 0.0, %v923
  %v925 = vpop.f32.mrb[0].mxu0
  %v926 = vadd.f32 0.0, %v925
  %927 = vmatprep.mubr.f32.mxu0 0.0
  %928 = vmatmul.mubr.f32.gmra.mrb[0].mxu0 %v133
  %v929 = vpop.f32.mrb[0].mxu0
  %v930 = vadd.f32 0.0, %v929
  %v931 = vpop.f32.mrb[0].mxu0
  %v932 = vadd.f32 0.0, %v931
  %933 = vmatprep.mubr.f32.mxu0 0.0
  %934 = vmatmul.mubr.f32.gmra.mrb[0].mxu0 %v136
  %v935 = vpop.f32.mrb[0].mxu0
  %v936 = vadd.f32 0.0, %v935
  %v937 = vpop.f32.mrb[0].mxu0
  %v938 = vadd.f32 0.0, %v937
  %939 = vmatprep.mubr.f32.mxu0 0.0
  %940 = vmatmul.mubr.f32.gmra.mrb[0].mxu0 %v139
  %v941 = vpop.f32.mrb[0].mxu0
  %v942 = vadd.f32 0.0, %v941
  %v943 = vpop.f32.mrb[0].mxu0
  %v944 = vadd.f32 0.0, %v943
  %945 = vmatprep.mubr.f32.mxu0 0.0
  %946 = vmatmul.mubr.f32.gmra.mrb[0].mxu0 %v142
  %v947 = vpop.f32.mrb[0].mxu0
  %v948 = vadd.f32 0.0, %v947
  %v949 = vpop.f32.mrb[0].mxu0
  %v950 = vadd.f32 0.0, %v949
  %951 = vmatprep.mubr.f32.mxu0 0.0
  %952 = vmatmul.mubr.f32.gmra.mrb[0].mxu0 %v145
  %v953 = vpop.f32.mrb[0].mxu0
  %v954 = vadd.f32 0.0, %v953
  %v955 = vpop.f32.mrb[0].mxu0
  %v956 = vadd.f32 0.0, %v955
  %957 = vmatprep.mubr.f32.mxu0 0.0
  %958 = vmatmul.mubr.f32.gmra.mrb[0].mxu0 %v148
  %v959 = vpop.f32.mrb[0].mxu0
  %v960 = vadd.f32 0.0, %v959
  %v961 = vpop.f32.mrb[0].mxu0
  %v962 = vadd.f32 0.0, %v961
  %963 = vdwg.mxu0
  %964 = vmatprep.subr.mxu0 %v368
  %965 = vmatpush1.msra.mxu0 %v367
  %966 = vmatprep.subr.mxu0 %v386
  %967 = vmatpush1.msra.mxu0 %v385
  %968 = vmatprep.subr.mxu0 %v404
  %969 = vmatpush1.msra.mxu0 %v403
  %970 = vmatprep.subr.mxu0 %v422
  %971 = vmatpush1.msra.mxu0 %v421
  %972 = vmatprep.subr.mxu0 0.0
  %973 = vmatpush1.msra.mxu0 0.0
  %974 = vmatprep.subr.mxu0 0.0
  %975 = vmatpush1.msra.mxu0 0.0
  %976 = vmatprep.subr.mxu0 0.0
  %977 = vmatpush1.msra.mxu0 0.0
  %978 = vmatprep.subr.mxu0 0.0
  %979 = vmatpush1.msra.mxu0 0.0
  %980 = vmatprep.subr.mxu0 0.0
  %981 = vmatpush1.msra.mxu0 0.0
  %982 = vmatprep.subr.mxu0 0.0
  %983 = vmatpush1.msra.mxu0 0.0
  %984 = vmatprep.subr.mxu0 0.0
  %985 = vmatpush1.msra.mxu0 0.0
  %986 = vmatprep.subr.mxu0 0.0
  %987 = vmatpush1.msra.mxu0 0.0
  %988 = vmatprep.subr.mxu0 0.0
  %989 = vmatpush1.msra.mxu0 0.0
  %990 = vmatprep.subr.mxu0 0.0
  %991 = vmatpush1.msra.mxu0 0.0
  %992 = vmatprep.subr.mxu0 0.0
  %993 = vmatpush1.msra.mxu0 0.0
  %994 = vmatprep.subr.mxu0 0.0
  %995 = vmatpush1.msra.mxu0 0.0
  %996 = vmatprep.subr.mxu0 0.0
  %997 = vmatpush1.msra.mxu0 0.0
  %998 = vmatprep.subr.mxu0 0.0
  %999 = vmatpush1.msra.mxu0 0.0
  %1000 = vmatprep.subr.mxu0 0.0
  %1001 = vmatpush1.msra.mxu0 0.0
  %1002 = vmatprep.subr.mxu0 0.0
  %1003 = vmatpush1.msra.mxu0 0.0
  %1004 = vmatprep.subr.mxu0 0.0
  %1005 = vmatpush1.msra.mxu0 0.0
  %1006 = vmatprep.subr.mxu0 0.0
  %1007 = vmatpush1.msra.mxu0 0.0
  %1008 = vmatprep.subr.mxu0 0.0
  %1009 = vmatpush1.msra.mxu0 0.0
  %1010 = vmatprep.subr.mxu0 0.0
  %1011 = vmatpush1.msra.mxu0 0.0
  %1012 = vmatprep.subr.mxu0 0.0
  %1013 = vmatpush1.msra.mxu0 0.0
  %1014 = vmatprep.subr.mxu0 0.0
  %1015 = vmatpush1.msra.mxu0 0.0
  %1016 = vmatprep.subr.mxu0 0.0
  %1017 = vmatpush1.msra.mxu0 0.0
  %1018 = vmatprep.subr.mxu0 0.0
  %1019 = vmatpush1.msra.mxu0 0.0
  %1020 = vmatprep.subr.mxu0 0.0
  %1021 = vmatpush1.msra.mxu0 0.0
  %1022 = vmatprep.subr.mxu0 0.0
  %1023 = vmatpush1.msra.mxu0 0.0
  %1024 = vmatprep.subr.mxu0 0.0
  %1025 = vmatpush1.msra.mxu0 0.0
  %1026 = vmatprep.subr.mxu0 0.0
  %1027 = vmatpush1.msra.mxu0 0.0
  %1028 = vmatprep.mubr.f32.mxu0 0.0
  %1029 = vmatmul.mubr.f32.gmra.mrb[0].mxu0 %v130
  %v1030 = vpop.f32.mrb[0].mxu0
  %v1031 = vadd.f32 0.0, %v1030
  %v1032 = vpop.f32.mrb[0].mxu0
  %v1033 = vadd.f32 0.0, %v1032
  %1034 = vmatprep.mubr.f32.mxu0 0.0
  %1035 = vmatmul.mubr.f32.gmra.mrb[0].mxu0 %v133
  %v1036 = vpop.f32.mrb[0].mxu0
  %v1037 = vadd.f32 0.0, %v1036
  %v1038 = vpop.f32.mrb[0].mxu0
  %v1039 = vadd.f32 0.0, %v1038
  %1040 = vmatprep.mubr.f32.mxu0 0.0
  %1041 = vmatmul.mubr.f32.gmra.mrb[0].mxu0 %v136
  %v1042 = vpop.f32.mrb[0].mxu0
  %v1043 = vadd.f32 0.0, %v1042
  %v1044 = vpop.f32.mrb[0].mxu0
  %v1045 = vadd.f32 0.0, %v1044
  %1046 = vmatprep.mubr.f32.mxu0 0.0
  %1047 = vmatmul.mubr.f32.gmra.mrb[0].mxu0 %v139
  %v1048 = vpop.f32.mrb[0].mxu0
  %v1049 = vadd.f32 0.0, %v1048
  %v1050 = vpop.f32.mrb[0].mxu0
  %v1051 = vadd.f32 0.0, %v1050
  %1052 = vmatprep.mubr.f32.mxu0 0.0
  %1053 = vmatmul.mubr.f32.gmra.mrb[0].mxu0 %v142
  %v1054 = vpop.f32.mrb[0].mxu0
  %v1055 = vadd.f32 0.0, %v1054
  %v1056 = vpop.f32.mrb[0].mxu0
  %v1057 = vadd.f32 0.0, %v1056
  %1058 = vmatprep.mubr.f32.mxu0 0.0
  %1059 = vmatmul.mubr.f32.gmra.mrb[0].mxu0 %v145
  %v1060 = vpop.f32.mrb[0].mxu0
  %v1061 = vadd.f32 0.0, %v1060
  %v1062 = vpop.f32.mrb[0].mxu0
  %v1063 = vadd.f32 0.0, %v1062
  %1064 = vmatprep.mubr.f32.mxu0 0.0
  %1065 = vmatmul.mubr.f32.gmra.mrb[0].mxu0 %v148
  %v1066 = vpop.f32.mrb[0].mxu0
  %v1067 = vadd.f32 0.0, %v1066
  %v1068 = vpop.f32.mrb[0].mxu0
  %v1069 = vadd.f32 0.0, %v1068
  %1070 = vdwg.mxu0
  %1071 = vmatprep.subr.mxu0 %v370
  %1072 = vmatpush1.msra.mxu0 %v369
  %1073 = vmatprep.subr.mxu0 %v388
  %1074 = vmatpush1.msra.mxu0 %v387
  %1075 = vmatprep.subr.mxu0 %v406
  %1076 = vmatpush1.msra.mxu0 %v405
  %1077 = vmatprep.subr.mxu0 %v424
  %1078 = vmatpush1.msra.mxu0 %v423
  %1079 = vmatprep.subr.mxu0 0.0
  %1080 = vmatpush1.msra.mxu0 0.0
  %1081 = vmatprep.subr.mxu0 0.0
  %1082 = vmatpush1.msra.mxu0 0.0
  %1083 = vmatprep.subr.mxu0 0.0
  %1084 = vmatpush1.msra.mxu0 0.0
  %1085 = vmatprep.subr.mxu0 0.0
  %1086 = vmatpush1.msra.mxu0 0.0
  %1087 = vmatprep.subr.mxu0 0.0
  %1088 = vmatpush1.msra.mxu0 0.0
  %1089 = vmatprep.subr.mxu0 0.0
  %1090 = vmatpush1.msra.mxu0 0.0
  %1091 = vmatprep.subr.mxu0 0.0
  %1092 = vmatpush1.msra.mxu0 0.0
  %1093 = vmatprep.subr.mxu0 0.0
  %1094 = vmatpush1.msra.mxu0 0.0
  %1095 = vmatprep.subr.mxu0 0.0
  %1096 = vmatpush1.msra.mxu0 0.0
  %1097 = vmatprep.subr.mxu0 0.0
  %1098 = vmatpush1.msra.mxu0 0.0
  %1099 = vmatprep.subr.mxu0 0.0
  %1100 = vmatpush1.msra.mxu0 0.0
  %1101 = vmatprep.subr.mxu0 0.0
  %1102 = vmatpush1.msra.mxu0 0.0
  %1103 = vmatprep.subr.mxu0 0.0
  %1104 = vmatpush1.msra.mxu0 0.0
  %1105 = vmatprep.subr.mxu0 0.0
  %1106 = vmatpush1.msra.mxu0 0.0
  %1107 = vmatprep.subr.mxu0 0.0
  %1108 = vmatpush1.msra.mxu0 0.0
  %1109 = vmatprep.subr.mxu0 0.0
  %1110 = vmatpush1.msra.mxu0 0.0
  %1111 = vmatprep.subr.mxu0 0.0
  %1112 = vmatpush1.msra.mxu0 0.0
  %1113 = vmatprep.subr.mxu0 0.0
  %1114 = vmatpush1.msra.mxu0 0.0
  %1115 = vmatprep.subr.mxu0 0.0
  %1116 = vmatpush1.msra.mxu0 0.0
  %1117 = vmatprep.subr.mxu0 0.0
  %1118 = vmatpush1.msra.mxu0 0.0
  %1119 = vmatprep.subr.mxu0 0.0
  %1120 = vmatpush1.msra.mxu0 0.0
  %1121 = vmatprep.subr.mxu0 0.0
  %1122 = vmatpush1.msra.mxu0 0.0
  %1123 = vmatprep.subr.mxu0 0.0
  %1124 = vmatpush1.msra.mxu0 0.0
  %1125 = vmatprep.subr.mxu0 0.0
  %1126 = vmatpush1.msra.mxu0 0.0
  %1127 = vmatprep.subr.mxu0 0.0
  %1128 = vmatpush1.msra.mxu0 0.0
  %1129 = vmatprep.subr.mxu0 0.0
  %1130 = vmatpush1.msra.mxu0 0.0
  %1131 = vmatprep.subr.mxu0 0.0
  %1132 = vmatpush1.msra.mxu0 0.0
  %1133 = vmatprep.subr.mxu0 0.0
  %1134 = vmatpush1.msra.mxu0 0.0
  %1135 = vmatprep.mubr.f32.mxu0 0.0
  %1136 = vmatmul.mubr.f32.gmra.mrb[0].mxu0 %v130
  %v1137 = vpop.f32.mrb[0].mxu0
  %v1138 = vadd.f32 0.0, %v1137
  %v1139 = vpop.f32.mrb[0].mxu0
  %v1140 = vadd.f32 0.0, %v1139
  %1141 = vmatprep.mubr.f32.mxu0 0.0
  %1142 = vmatmul.mubr.f32.gmra.mrb[0].mxu0 %v133
  %v1143 = vpop.f32.mrb[0].mxu0
  %v1144 = vadd.f32 0.0, %v1143
  %v1145 = vpop.f32.mrb[0].mxu0
  %v1146 = vadd.f32 0.0, %v1145
  %1147 = vmatprep.mubr.f32.mxu0 0.0
  %1148 = vmatmul.mubr.f32.gmra.mrb[0].mxu0 %v136
  %v1149 = vpop.f32.mrb[0].mxu0
  %v1150 = vadd.f32 0.0, %v1149
  %v1151 = vpop.f32.mrb[0].mxu0
  %v1152 = vadd.f32 0.0, %v1151
  %1153 = vmatprep.mubr.f32.mxu0 0.0
  %1154 = vmatmul.mubr.f32.gmra.mrb[0].mxu0 %v139
  %v1155 = vpop.f32.mrb[0].mxu0
  %v1156 = vadd.f32 0.0, %v1155
  %v1157 = vpop.f32.mrb[0].mxu0
  %v1158 = vadd.f32 0.0, %v1157
  %1159 = vmatprep.mubr.f32.mxu0 0.0
  %1160 = vmatmul.mubr.f32.gmra.mrb[0].mxu0 %v142
  %v1161 = vpop.f32.mrb[0].mxu0
  %v1162 = vadd.f32 0.0, %v1161
  %v1163 = vpop.f32.mrb[0].mxu0
  %v1164 = vadd.f32 0.0, %v1163
  %1165 = vmatprep.mubr.f32.mxu0 0.0
  %1166 = vmatmul.mubr.f32.gmra.mrb[0].mxu0 %v145
  %v1167 = vpop.f32.mrb[0].mxu0
  %v1168 = vadd.f32 0.0, %v1167
  %v1169 = vpop.f32.mrb[0].mxu0
  %v1170 = vadd.f32 0.0, %v1169
  %1171 = vmatprep.mubr.f32.mxu0 0.0
  %1172 = vmatmul.mubr.f32.gmra.mrb[0].mxu0 %v148
  %v1173 = vpop.f32.mrb[0].mxu0
  %v1174 = vadd.f32 0.0, %v1173
  %v1175 = vpop.f32.mrb[0].mxu0
  %v1176 = vadd.f32 0.0, %v1175
  %1177 = vdwg.mxu0
  %1178 = vmatprep.subr.mxu0 %v372
  %1179 = vmatpush1.msra.mxu0 %v371
  %1180 = vmatprep.subr.mxu0 %v390
  %1181 = vmatpush1.msra.mxu0 %v389
  %1182 = vmatprep.subr.mxu0 %v408
  %1183 = vmatpush1.msra.mxu0 %v407
  %1184 = vmatprep.subr.mxu0 %v426
  %1185 = vmatpush1.msra.mxu0 %v425
  %1186 = vmatprep.subr.mxu0 0.0
  %1187 = vmatpush1.msra.mxu0 0.0
  %1188 = vmatprep.subr.mxu0 0.0
  %1189 = vmatpush1.msra.mxu0 0.0
  %1190 = vmatprep.subr.mxu0 0.0
  %1191 = vmatpush1.msra.mxu0 0.0
  %1192 = vmatprep.subr.mxu0 0.0
  %1193 = vmatpush1.msra.mxu0 0.0
  %1194 = vmatprep.subr.mxu0 0.0
  %1195 = vmatpush1.msra.mxu0 0.0
  %1196 = vmatprep.subr.mxu0 0.0
  %1197 = vmatpush1.msra.mxu0 0.0
  %1198 = vmatprep.subr.mxu0 0.0
  %1199 = vmatpush1.msra.mxu0 0.0
  %1200 = vmatprep.subr.mxu0 0.0
  %1201 = vmatpush1.msra.mxu0 0.0
  %1202 = vmatprep.subr.mxu0 0.0
  %1203 = vmatpush1.msra.mxu0 0.0
  %1204 = vmatprep.subr.mxu0 0.0
  %1205 = vmatpush1.msra.mxu0 0.0
  %1206 = vmatprep.subr.mxu0 0.0
  %1207 = vmatpush1.msra.mxu0 0.0
  %1208 = vmatprep.subr.mxu0 0.0
  %1209 = vmatpush1.msra.mxu0 0.0
  %1210 = vmatprep.subr.mxu0 0.0
  %1211 = vmatpush1.msra.mxu0 0.0
  %1212 = vmatprep.subr.mxu0 0.0
  %1213 = vmatpush1.msra.mxu0 0.0
  %1214 = vmatprep.subr.mxu0 0.0
  %1215 = vmatpush1.msra.mxu0 0.0
  %1216 = vmatprep.subr.mxu0 0.0
  %1217 = vmatpush1.msra.mxu0 0.0
  %1218 = vmatprep.subr.mxu0 0.0
  %1219 = vmatpush1.msra.mxu0 0.0
  %1220 = vmatprep.subr.mxu0 0.0
  %1221 = vmatpush1.msra.mxu0 0.0
  %1222 = vmatprep.subr.mxu0 0.0
  %1223 = vmatpush1.msra.mxu0 0.0
  %1224 = vmatprep.subr.mxu0 0.0
  %1225 = vmatpush1.msra.mxu0 0.0
  %1226 = vmatprep.subr.mxu0 0.0
  %1227 = vmatpush1.msra.mxu0 0.0
  %1228 = vmatprep.subr.mxu0 0.0
  %1229 = vmatpush1.msra.mxu0 0.0
  %1230 = vmatprep.subr.mxu0 0.0
  %1231 = vmatpush1.msra.mxu0 0.0
  %1232 = vmatprep.subr.mxu0 0.0
  %1233 = vmatpush1.msra.mxu0 0.0
  %1234 = vmatprep.subr.mxu0 0.0
  %1235 = vmatpush1.msra.mxu0 0.0
  %1236 = vmatprep.subr.mxu0 0.0
  %1237 = vmatpush1.msra.mxu0 0.0
  %1238 = vmatprep.subr.mxu0 0.0
  %1239 = vmatpush1.msra.mxu0 0.0
  %1240 = vmatprep.subr.mxu0 0.0
  %1241 = vmatpush1.msra.mxu0 0.0
  %1242 = vmatprep.mubr.f32.mxu0 0.0
  %1243 = vmatmul.mubr.f32.gmra.mrb[0].mxu0 %v130
  %v1244 = vpop.f32.mrb[0].mxu0
  %v1245 = vadd.f32 0.0, %v1244
  %v1246 = vpop.f32.mrb[0].mxu0
  %v1247 = vadd.f32 0.0, %v1246
  %1248 = vmatprep.mubr.f32.mxu0 0.0
  %1249 = vmatmul.mubr.f32.gmra.mrb[0].mxu0 %v133
  %v1250 = vpop.f32.mrb[0].mxu0
  %v1251 = vadd.f32 0.0, %v1250
  %v1252 = vpop.f32.mrb[0].mxu0
  %v1253 = vadd.f32 0.0, %v1252
  %1254 = vmatprep.mubr.f32.mxu0 0.0
  %1255 = vmatmul.mubr.f32.gmra.mrb[0].mxu0 %v136
  %v1256 = vpop.f32.mrb[0].mxu0
  %v1257 = vadd.f32 0.0, %v1256
  %v1258 = vpop.f32.mrb[0].mxu0
  %v1259 = vadd.f32 0.0, %v1258
  %1260 = vmatprep.mubr.f32.mxu0 0.0
  %1261 = vmatmul.mubr.f32.gmra.mrb[0].mxu0 %v139
  %v1262 = vpop.f32.mrb[0].mxu0
  %v1263 = vadd.f32 0.0, %v1262
  %v1264 = vpop.f32.mrb[0].mxu0
  %v1265 = vadd.f32 0.0, %v1264
  %1266 = vmatprep.mubr.f32.mxu0 0.0
  %1267 = vmatmul.mubr.f32.gmra.mrb[0].mxu0 %v142
  %v1268 = vpop.f32.mrb[0].mxu0
  %v1269 = vadd.f32 0.0, %v1268
  %v1270 = vpop.f32.mrb[0].mxu0
  %v1271 = vadd.f32 0.0, %v1270
  %1272 = vmatprep.mubr.f32.mxu0 0.0
  %1273 = vmatmul.mubr.f32.gmra.mrb[0].mxu0 %v145
  %v1274 = vpop.f32.mrb[0].mxu0
  %v1275 = vadd.f32 0.0, %v1274
  %v1276 = vpop.f32.mrb[0].mxu0
  %v1277 = vadd.f32 0.0, %v1276
  %1278 = vmatprep.mubr.f32.mxu0 0.0
  %1279 = vmatmul.mubr.f32.gmra.mrb[0].mxu0 %v148
  %v1280 = vpop.f32.mrb[0].mxu0
  %v1281 = vadd.f32 0.0, %v1280
  %v1282 = vpop.f32.mrb[0].mxu0
  %v1283 = vadd.f32 0.0, %v1282
  %1284 = vdwg.mxu0
  %1285 = vmatprep.subr.mxu0 %v374
  %1286 = vmatpush1.msra.mxu0 %v373
  %1287 = vmatprep.subr.mxu0 %v392
  %1288 = vmatpush1.msra.mxu0 %v391
  %1289 = vmatprep.subr.mxu0 %v410
  %1290 = vmatpush1.msra.mxu0 %v409
  %1291 = vmatprep.subr.mxu0 %v428
  %1292 = vmatpush1.msra.mxu0 %v427
  %1293 = vmatprep.subr.mxu0 0.0
  %1294 = vmatpush1.msra.mxu0 0.0
  %1295 = vmatprep.subr.mxu0 0.0
  %1296 = vmatpush1.msra.mxu0 0.0
  %1297 = vmatprep.subr.mxu0 0.0
  %1298 = vmatpush1.msra.mxu0 0.0
  %1299 = vmatprep.subr.mxu0 0.0
  %1300 = vmatpush1.msra.mxu0 0.0
  %1301 = vmatprep.subr.mxu0 0.0
  %1302 = vmatpush1.msra.mxu0 0.0
  %1303 = vmatprep.subr.mxu0 0.0
  %1304 = vmatpush1.msra.mxu0 0.0
  %1305 = vmatprep.subr.mxu0 0.0
  %1306 = vmatpush1.msra.mxu0 0.0
  %1307 = vmatprep.subr.mxu0 0.0
  %1308 = vmatpush1.msra.mxu0 0.0
  %1309 = vmatprep.subr.mxu0 0.0
  %1310 = vmatpush1.msra.mxu0 0.0
  %1311 = vmatprep.subr.mxu0 0.0
  %1312 = vmatpush1.msra.mxu0 0.0
  %1313 = vmatprep.subr.mxu0 0.0
  %1314 = vmatpush1.msra.mxu0 0.0
  %1315 = vmatprep.subr.mxu0 0.0
  %1316 = vmatpush1.msra.mxu0 0.0
  %1317 = vmatprep.subr.mxu0 0.0
  %1318 = vmatpush1.msra.mxu0 0.0
  %1319 = vmatprep.subr.mxu0 0.0
  %1320 = vmatpush1.msra.mxu0 0.0
  %1321 = vmatprep.subr.mxu0 0.0
  %1322 = vmatpush1.msra.mxu0 0.0
  %1323 = vmatprep.subr.mxu0 0.0
  %1324 = vmatpush1.msra.mxu0 0.0
  %1325 = vmatprep.subr.mxu0 0.0
  %1326 = vmatpush1.msra.mxu0 0.0
  %1327 = vmatprep.subr.mxu0 0.0
  %1328 = vmatpush1.msra.mxu0 0.0
  %1329 = vmatprep.subr.mxu0 0.0
  %1330 = vmatpush1.msra.mxu0 0.0
  %1331 = vmatprep.subr.mxu0 0.0
  %1332 = vmatpush1.msra.mxu0 0.0
  %1333 = vmatprep.subr.mxu0 0.0
  %1334 = vmatpush1.msra.mxu0 0.0
  %1335 = vmatprep.subr.mxu0 0.0
  %1336 = vmatpush1.msra.mxu0 0.0
  %1337 = vmatprep.subr.mxu0 0.0
  %1338 = vmatpush1.msra.mxu0 0.0
  %1339 = vmatprep.subr.mxu0 0.0
  %1340 = vmatpush1.msra.mxu0 0.0
  %1341 = vmatprep.subr.mxu0 0.0
  %1342 = vmatpush1.msra.mxu0 0.0
  %1343 = vmatprep.subr.mxu0 0.0
  %1344 = vmatpush1.msra.mxu0 0.0
  %1345 = vmatprep.subr.mxu0 0.0
  %1346 = vmatpush1.msra.mxu0 0.0
  %1347 = vmatprep.subr.mxu0 0.0
  %1348 = vmatpush1.msra.mxu0 0.0
  %1349 = vmatprep.mubr.f32.mxu0 0.0
  %1350 = vmatmul.mubr.f32.gmra.mrb[0].mxu0 %v130
  %v1351 = vpop.f32.mrb[0].mxu0
  %v1352 = vadd.f32 0.0, %v1351
  %v1353 = vpop.f32.mrb[0].mxu0
  %v1354 = vadd.f32 0.0, %v1353
  %1355 = vmatprep.mubr.f32.mxu0 0.0
  %1356 = vmatmul.mubr.f32.gmra.mrb[0].mxu0 %v133
  %v1357 = vpop.f32.mrb[0].mxu0
  %v1358 = vadd.f32 0.0, %v1357
  %v1359 = vpop.f32.mrb[0].mxu0
  %v1360 = vadd.f32 0.0, %v1359
  %1361 = vmatprep.mubr.f32.mxu0 0.0
  %1362 = vmatmul.mubr.f32.gmra.mrb[0].mxu0 %v136
  %v1363 = vpop.f32.mrb[0].mxu0
  %v1364 = vadd.f32 0.0, %v1363
  %v1365 = vpop.f32.mrb[0].mxu0
  %v1366 = vadd.f32 0.0, %v1365
  %1367 = vmatprep.mubr.f32.mxu0 0.0
  %1368 = vmatmul.mubr.f32.gmra.mrb[0].mxu0 %v139
  %v1369 = vpop.f32.mrb[0].mxu0
  %v1370 = vadd.f32 0.0, %v1369
  %v1371 = vpop.f32.mrb[0].mxu0
  %v1372 = vadd.f32 0.0, %v1371
  %1373 = vmatprep.mubr.f32.mxu0 0.0
  %1374 = vmatmul.mubr.f32.gmra.mrb[0].mxu0 %v142
  %v1375 = vpop.f32.mrb[0].mxu0
  %v1376 = vadd.f32 0.0, %v1375
  %v1377 = vpop.f32.mrb[0].mxu0
  %v1378 = vadd.f32 0.0, %v1377
  %1379 = vmatprep.mubr.f32.mxu0 0.0
  %1380 = vmatmul.mubr.f32.gmra.mrb[0].mxu0 %v145
  %v1381 = vpop.f32.mrb[0].mxu0
  %v1382 = vadd.f32 0.0, %v1381
  %v1383 = vpop.f32.mrb[0].mxu0
  %v1384 = vadd.f32 0.0, %v1383
  %1385 = vmatprep.mubr.f32.mxu0 0.0
  %1386 = vmatmul.mubr.f32.gmra.mrb[0].mxu0 %v148
  %v1387 = vpop.f32.mrb[0].mxu0
  %v1388 = vadd.f32 0.0, %v1387
  %v1389 = vpop.f32.mrb[0].mxu0
  %v1390 = vadd.f32 0.0, %v1389
  %1391 = vdwg.mxu0
  %v1392 = vld [vmem:[%s76] sm:$0xff]
  %v1393 = vld [vmem:[%s76 + $0x8] sm:$0xff]
  %v1394 = vld [vmem:[%s76 + $0x10] sm:$0xff]
  %v1395 = vld [vmem:[%s76 + $0x18] sm:$0xff]
  %v1396 = vld [vmem:[%s76 + $0x20] sm:$0xff]
  %v1397 = vld [vmem:[%s76 + $0x28] sm:$0xff]
  %v1398 = vld [vmem:[%s76 + $0x30] sm:$0xff]
  %v1399 = vld [vmem:[%s76 + $0x38] sm:$0xff]
  %v1400 = vld [vmem:[%s76 + $0x40] sm:$0xff]
  %v1401 = vld [vmem:[%s76 + $0x48] sm:$0xff]
  %v1402 = vld [vmem:[%s76 + $0x50] sm:$0xff]
  %v1403 = vld [vmem:[%s76 + $0x58] sm:$0xff]
  %v1404 = vld [vmem:[%s76 + $0x60] sm:$0xff]
  %v1405 = vld [vmem:[%s76 + $0x68] sm:$0xff]
  %v1406 = vld [vmem:[%s76 + $0x70] sm:$0xff]
  %v1407 = vld [vmem:[%s76 + $0x78] sm:$0xff]
  %v1408 = vld [vmem:[%s76 + $0x80] sm:$0xff]
  %v1409 = vld [vmem:[%s76 + $0x88] sm:$0xff]
  %v1410 = vld [vmem:[%s76 + $0x90] sm:$0xff]
  %v1411 = vld [vmem:[%s76 + $0x98] sm:$0xff]
  %v1412 = vld [vmem:[%s76 + $0xa0] sm:$0xff]
  %v1413 = vmul.f32 %v496, %v1392
  %v1414 = vmul.f32 %v502, %v1395
  %v1415 = vmul.f32 %v508, %v1398
  %v1416 = vmul.f32 %v514, %v1401
  %v1417 = vmul.f32 %v520, %v1404
  %v1418 = vmul.f32 %v526, %v1407
  %v1419 = vmul.f32 %v532, %v1410
  %1427 = vrot.lane.b32.xlu0 %v1413, 96
  %v1428 = vpop.permute.xlu0 %1427
  %1429 = vrot.lane.b32.xlu0 %v1414, 96
  %v1430 = vpop.permute.xlu0 %1429
  %1431 = vrot.lane.b32.xlu0 %v1415, 96
  %v1432 = vpop.permute.xlu0 %1431
  %1433 = vrot.lane.b32.xlu0 %v1416, 96
  %v1434 = vpop.permute.xlu0 %1433
  %1435 = vrot.lane.b32.xlu0 %v1417, 96
  %v1436 = vpop.permute.xlu0 %1435
  %1437 = vrot.lane.b32.xlu0 %v1418, 96
  %v1438 = vpop.permute.xlu0 %1437
  %1439 = vrot.lane.b32.xlu0 %v1419, 96
  %v1440 = vpop.permute.xlu0 %1439
  %v1448 = vadd.f32 %v1413, %v1428
  %v1449 = vadd.f32 %v1414, %v1430
  %v1450 = vadd.f32 %v1415, %v1432
  %v1451 = vadd.f32 %v1416, %v1434
  %v1452 = vadd.f32 %v1417, %v1436
  %v1453 = vadd.f32 %v1418, %v1438
  %v1454 = vadd.f32 %v1419, %v1440
  %1455 = vrot.lane.b32.xlu0 %v1413, 64
  %v1456 = vpop.permute.xlu0 %1455
  %1457 = vrot.lane.b32.xlu0 %v1414, 64
  %v1458 = vpop.permute.xlu0 %1457
  %1459 = vrot.lane.b32.xlu0 %v1415, 64
  %v1460 = vpop.permute.xlu0 %1459
  %1461 = vrot.lane.b32.xlu0 %v1416, 64
  %v1462 = vpop.permute.xlu0 %1461
  %1463 = vrot.lane.b32.xlu0 %v1417, 64
  %v1464 = vpop.permute.xlu0 %1463
  %1465 = vrot.lane.b32.xlu0 %v1418, 64
  %v1466 = vpop.permute.xlu0 %1465
  %1467 = vrot.lane.b32.xlu0 %v1419, 64
  %v1468 = vpop.permute.xlu0 %1467
  %v1476 = vadd.f32 %v1448, %v1456
  %v1477 = vadd.f32 %v1449, %v1458
  %v1478 = vadd.f32 %v1450, %v1460
  %v1479 = vadd.f32 %v1451, %v1462
  %v1480 = vadd.f32 %v1452, %v1464
  %v1481 = vadd.f32 %v1453, %v1466
  %v1482 = vadd.f32 %v1454, %v1468
  %1483 = vrot.lane.b32.xlu0 %v1413, 32
  %v1484 = vpop.permute.xlu0 %1483
  %1485 = vrot.lane.b32.xlu0 %v1414, 32
  %v1486 = vpop.permute.xlu0 %1485
  %1487 = vrot.lane.b32.xlu0 %v1415, 32
  %v1488 = vpop.permute.xlu0 %1487
  %1489 = vrot.lane.b32.xlu0 %v1416, 32
  %v1490 = vpop.permute.xlu0 %1489
  %1491 = vrot.lane.b32.xlu0 %v1417, 32
  %v1492 = vpop.permute.xlu0 %1491
  %1493 = vrot.lane.b32.xlu0 %v1418, 32
  %v1494 = vpop.permute.xlu0 %1493
  %1495 = vrot.lane.b32.xlu0 %v1419, 32
  %v1496 = vpop.permute.xlu0 %1495
  %v1504 = vadd.f32 %v1476, %v1484
  %v1505 = vadd.f32 %v1477, %v1486
  %v1506 = vadd.f32 %v1478, %v1488
  %v1507 = vadd.f32 %v1479, %v1490
  %v1508 = vadd.f32 %v1480, %v1492
  %v1509 = vadd.f32 %v1481, %v1494
  %v1510 = vadd.f32 %v1482, %v1496
  %v1511 = vmul.f32 %v498, %v1393
  %v1512 = vmul.f32 %v504, %v1396
  %v1513 = vmul.f32 %v510, %v1399
  %v1514 = vmul.f32 %v516, %v1402
  %v1515 = vmul.f32 %v522, %v1405
  %v1516 = vmul.f32 %v528, %v1408
  %v1517 = vmul.f32 %v534, %v1411
  %v1518 = vadd.f32 %v1504, %v1511
  %v1519 = vadd.f32 %v1505, %v1512
  %v1520 = vadd.f32 %v1506, %v1513
  %v1521 = vadd.f32 %v1507, %v1514
  %v1522 = vadd.f32 %v1508, %v1515
  %v1523 = vadd.f32 %v1509, %v1516
  %v1524 = vadd.f32 %v1510, %v1517
  %1532 = vrot.lane.b32.xlu0 %v1511, 96
  %v1533 = vpop.permute.xlu0 %1532
  %1534 = vrot.lane.b32.xlu0 %v1512, 96
  %v1535 = vpop.permute.xlu0 %1534
  %1536 = vrot.lane.b32.xlu0 %v1513, 96
  %v1537 = vpop.permute.xlu0 %1536
  %1538 = vrot.lane.b32.xlu0 %v1514, 96
  %v1539 = vpop.permute.xlu0 %1538
  %1540 = vrot.lane.b32.xlu0 %v1515, 96
  %v1541 = vpop.permute.xlu0 %1540
  %1542 = vrot.lane.b32.xlu0 %v1516, 96
  %v1543 = vpop.permute.xlu0 %1542
  %1544 = vrot.lane.b32.xlu0 %v1517, 96
  %v1545 = vpop.permute.xlu0 %1544
  %v1553 = vadd.f32 %v1518, %v1533
  %v1554 = vadd.f32 %v1519, %v1535
  %v1555 = vadd.f32 %v1520, %v1537
  %v1556 = vadd.f32 %v1521, %v1539
  %v1557 = vadd.f32 %v1522, %v1541
  %v1558 = vadd.f32 %v1523, %v1543
  %v1559 = vadd.f32 %v1524, %v1545
  %1560 = vrot.lane.b32.xlu0 %v1511, 64
  %v1561 = vpop.permute.xlu0 %1560
  %1562 = vrot.lane.b32.xlu0 %v1512, 64
  %v1563 = vpop.permute.xlu0 %1562
  %1564 = vrot.lane.b32.xlu0 %v1513, 64
  %v1565 = vpop.permute.xlu0 %1564
  %1566 = vrot.lane.b32.xlu0 %v1514, 64
  %v1567 = vpop.permute.xlu0 %1566
  %1568 = vrot.lane.b32.xlu0 %v1515, 64
  %v1569 = vpop.permute.xlu0 %1568
  %1570 = vrot.lane.b32.xlu0 %v1516, 64
  %v1571 = vpop.permute.xlu0 %1570
  %1572 = vrot.lane.b32.xlu0 %v1517, 64
  %v1573 = vpop.permute.xlu0 %1572
  %v1581 = vadd.f32 %v1553, %v1561
  %v1582 = vadd.f32 %v1554, %v1563
  %v1583 = vadd.f32 %v1555, %v1565
  %v1584 = vadd.f32 %v1556, %v1567
  %v1585 = vadd.f32 %v1557, %v1569
  %v1586 = vadd.f32 %v1558, %v1571
  %v1587 = vadd.f32 %v1559, %v1573
  %1588 = vrot.lane.b32.xlu0 %v1511, 32
  %v1589 = vpop.permute.xlu0 %1588
  %1590 = vrot.lane.b32.xlu0 %v1512, 32
  %v1591 = vpop.permute.xlu0 %1590
  %1592 = vrot.lane.b32.xlu0 %v1513, 32
  %v1593 = vpop.permute.xlu0 %1592
  %1594 = vrot.lane.b32.xlu0 %v1514, 32
  %v1595 = vpop.permute.xlu0 %1594
  %1596 = vrot.lane.b32.xlu0 %v1515, 32
  %v1597 = vpop.permute.xlu0 %1596
  %1598 = vrot.lane.b32.xlu0 %v1516, 32
  %v1599 = vpop.permute.xlu0 %1598
  %1600 = vrot.lane.b32.xlu0 %v1517, 32
  %v1601 = vpop.permute.xlu0 %1600
  %v1609 = vadd.f32 %v1581, %v1589
  %v1610 = vadd.f32 %v1582, %v1591
  %v1611 = vadd.f32 %v1583, %v1593
  %v1612 = vadd.f32 %v1584, %v1595
  %v1613 = vadd.f32 %v1585, %v1597
  %v1614 = vadd.f32 %v1586, %v1599
  %v1615 = vadd.f32 %v1587, %v1601
  %v1616 = vmul.f32 %v603, %v1394
  %v1617 = vmul.f32 %v609, %v1397
  %v1618 = vmul.f32 %v615, %v1400
  %v1619 = vmul.f32 %v621, %v1403
  %v1620 = vmul.f32 %v627, %v1406
  %v1621 = vmul.f32 %v633, %v1409
  %v1622 = vmul.f32 %v639, %v1412
  %v1623 = vadd.f32 %v1609, %v1616
  %v1624 = vadd.f32 %v1610, %v1617
  %v1625 = vadd.f32 %v1611, %v1618
  %v1626 = vadd.f32 %v1612, %v1619
  %v1627 = vadd.f32 %v1613, %v1620
  %v1628 = vadd.f32 %v1614, %v1621
  %v1629 = vadd.f32 %v1615, %v1622
  %1637 = vrot.lane.b32.xlu0 %v1392, 32
  %v1638 = vpop.permute.xlu0 %1637
  %1639 = vrot.lane.b32.xlu0 %v1395, 32
  %v1640 = vpop.permute.xlu0 %1639
  %1641 = vrot.lane.b32.xlu0 %v1398, 32
  %v1642 = vpop.permute.xlu0 %1641
  %1643 = vrot.lane.b32.xlu0 %v1401, 32
  %v1644 = vpop.permute.xlu0 %1643
  %1645 = vrot.lane.b32.xlu0 %v1404, 32
  %v1646 = vpop.permute.xlu0 %1645
  %1647 = vrot.lane.b32.xlu0 %v1407, 32
  %v1648 = vpop.permute.xlu0 %1647
  %1649 = vrot.lane.b32.xlu0 %v1410, 32
  %v1650 = vpop.permute.xlu0 %1649
  %v1658 = vmul.f32 %v603, %v1638
  %v1659 = vmul.f32 %v609, %v1640
  %v1660 = vmul.f32 %v615, %v1642
  %v1661 = vmul.f32 %v621, %v1644
  %v1662 = vmul.f32 %v627, %v1646
  %v1663 = vmul.f32 %v633, %v1648
  %v1664 = vmul.f32 %v639, %v1650
  %1672 = vrot.lane.b32.xlu0 %v1658, 96
  %v1673 = vpop.permute.xlu0 %1672
  %1674 = vrot.lane.b32.xlu0 %v1659, 96
  %v1675 = vpop.permute.xlu0 %1674
  %1676 = vrot.lane.b32.xlu0 %v1660, 96
  %v1677 = vpop.permute.xlu0 %1676
  %1678 = vrot.lane.b32.xlu0 %v1661, 96
  %v1679 = vpop.permute.xlu0 %1678
  %1680 = vrot.lane.b32.xlu0 %v1662, 96
  %v1681 = vpop.permute.xlu0 %1680
  %1682 = vrot.lane.b32.xlu0 %v1663, 96
  %v1683 = vpop.permute.xlu0 %1682
  %1684 = vrot.lane.b32.xlu0 %v1664, 96
  %v1685 = vpop.permute.xlu0 %1684
  %v1693 = vadd.f32 %v1658, %v1673
  %v1694 = vadd.f32 %v1659, %v1675
  %v1695 = vadd.f32 %v1660, %v1677
  %v1696 = vadd.f32 %v1661, %v1679
  %v1697 = vadd.f32 %v1662, %v1681
  %v1698 = vadd.f32 %v1663, %v1683
  %v1699 = vadd.f32 %v1664, %v1685
  %1700 = vrot.lane.b32.xlu0 %v1658, 64
  %v1701 = vpop.permute.xlu0 %1700
  %1702 = vrot.lane.b32.xlu0 %v1659, 64
  %v1703 = vpop.permute.xlu0 %1702
  %1704 = vrot.lane.b32.xlu0 %v1660, 64
  %v1705 = vpop.permute.xlu0 %1704
  %1706 = vrot.lane.b32.xlu0 %v1661, 64
  %v1707 = vpop.permute.xlu0 %1706
  %1708 = vrot.lane.b32.xlu0 %v1662, 64
  %v1709 = vpop.permute.xlu0 %1708
  %1710 = vrot.lane.b32.xlu0 %v1663, 64
  %v1711 = vpop.permute.xlu0 %1710
  %1712 = vrot.lane.b32.xlu0 %v1664, 64
  %v1713 = vpop.permute.xlu0 %1712
  %v1721 = vadd.f32 %v1693, %v1701
  %v1722 = vadd.f32 %v1694, %v1703
  %v1723 = vadd.f32 %v1695, %v1705
  %v1724 = vadd.f32 %v1696, %v1707
  %v1725 = vadd.f32 %v1697, %v1709
  %v1726 = vadd.f32 %v1698, %v1711
  %v1727 = vadd.f32 %v1699, %v1713
  %v1728 = vmul.f32 %v605, %v1638
  %v1729 = vmul.f32 %v611, %v1640
  %v1730 = vmul.f32 %v617, %v1642
  %v1731 = vmul.f32 %v623, %v1644
  %v1732 = vmul.f32 %v629, %v1646
  %v1733 = vmul.f32 %v635, %v1648
  %v1734 = vmul.f32 %v641, %v1650
  %1742 = vrot.lane.b32.xlu0 %v1728, 32
  %v1743 = vpop.permute.xlu0 %1742
  %1744 = vrot.lane.b32.xlu0 %v1729, 32
  %v1745 = vpop.permute.xlu0 %1744
  %1746 = vrot.lane.b32.xlu0 %v1730, 32
  %v1747 = vpop.permute.xlu0 %1746
  %1748 = vrot.lane.b32.xlu0 %v1731, 32
  %v1749 = vpop.permute.xlu0 %1748
  %1750 = vrot.lane.b32.xlu0 %v1732, 32
  %v1751 = vpop.permute.xlu0 %1750
  %1752 = vrot.lane.b32.xlu0 %v1733, 32
  %v1753 = vpop.permute.xlu0 %1752
  %1754 = vrot.lane.b32.xlu0 %v1734, 32
  %v1755 = vpop.permute.xlu0 %1754
  %v1763 = vadd.f32 %v1721, %v1743
  %v1764 = vadd.f32 %v1722, %v1745
  %v1765 = vadd.f32 %v1723, %v1747
  %v1766 = vadd.f32 %v1724, %v1749
  %v1767 = vadd.f32 %v1725, %v1751
  %v1768 = vadd.f32 %v1726, %v1753
  %v1769 = vadd.f32 %v1727, %v1755
  %1777 = vrot.lane.b32.xlu0 %v1393, 32
  %v1778 = vpop.permute.xlu0 %1777
  %1779 = vrot.lane.b32.xlu0 %v1396, 32
  %v1780 = vpop.permute.xlu0 %1779
  %1781 = vrot.lane.b32.xlu0 %v1399, 32
  %v1782 = vpop.permute.xlu0 %1781
  %1783 = vrot.lane.b32.xlu0 %v1402, 32
  %v1784 = vpop.permute.xlu0 %1783
  %1785 = vrot.lane.b32.xlu0 %v1405, 32
  %v1786 = vpop.permute.xlu0 %1785
  %1787 = vrot.lane.b32.xlu0 %v1408, 32
  %v1788 = vpop.permute.xlu0 %1787
  %1789 = vrot.lane.b32.xlu0 %v1411, 32
  %v1790 = vpop.permute.xlu0 %1789
  %v1798 = vmul.f32 %v605, %v1778
  %v1799 = vmul.f32 %v611, %v1780
  %v1800 = vmul.f32 %v617, %v1782
  %v1801 = vmul.f32 %v623, %v1784
  %v1802 = vmul.f32 %v629, %v1786
  %v1803 = vmul.f32 %v635, %v1788
  %v1804 = vmul.f32 %v641, %v1790
  %v1805 = vadd.f32 %v1763, %v1798
  %v1806 = vadd.f32 %v1764, %v1799
  %v1807 = vadd.f32 %v1765, %v1800
  %v1808 = vadd.f32 %v1766, %v1801
  %v1809 = vadd.f32 %v1767, %v1802
  %v1810 = vadd.f32 %v1768, %v1803
  %v1811 = vadd.f32 %v1769, %v1804
  %1819 = vrot.lane.b32.xlu0 %v1798, 96
  %v1820 = vpop.permute.xlu0 %1819
  %1821 = vrot.lane.b32.xlu0 %v1799, 96
  %v1822 = vpop.permute.xlu0 %1821
  %1823 = vrot.lane.b32.xlu0 %v1800, 96
  %v1824 = vpop.permute.xlu0 %1823
  %1825 = vrot.lane.b32.xlu0 %v1801, 96
  %v1826 = vpop.permute.xlu0 %1825
  %1827 = vrot.lane.b32.xlu0 %v1802, 96
  %v1828 = vpop.permute.xlu0 %1827
  %1829 = vrot.lane.b32.xlu0 %v1803, 96
  %v1830 = vpop.permute.xlu0 %1829
  %1831 = vrot.lane.b32.xlu0 %v1804, 96
  %v1832 = vpop.permute.xlu0 %1831
  %v1840 = vadd.f32 %v1805, %v1820
  %v1841 = vadd.f32 %v1806, %v1822
  %v1842 = vadd.f32 %v1807, %v1824
  %v1843 = vadd.f32 %v1808, %v1826
  %v1844 = vadd.f32 %v1809, %v1828
  %v1845 = vadd.f32 %v1810, %v1830
  %v1846 = vadd.f32 %v1811, %v1832
  %1847 = vrot.lane.b32.xlu0 %v1798, 64
  %v1848 = vpop.permute.xlu0 %1847
  %1849 = vrot.lane.b32.xlu0 %v1799, 64
  %v1850 = vpop.permute.xlu0 %1849
  %1851 = vrot.lane.b32.xlu0 %v1800, 64
  %v1852 = vpop.permute.xlu0 %1851
  %1853 = vrot.lane.b32.xlu0 %v1801, 64
  %v1854 = vpop.permute.xlu0 %1853
  %1855 = vrot.lane.b32.xlu0 %v1802, 64
  %v1856 = vpop.permute.xlu0 %1855
  %1857 = vrot.lane.b32.xlu0 %v1803, 64
  %v1858 = vpop.permute.xlu0 %1857
  %1859 = vrot.lane.b32.xlu0 %v1804, 64
  %v1860 = vpop.permute.xlu0 %1859
  %v1868 = vadd.f32 %v1840, %v1848
  %v1869 = vadd.f32 %v1841, %v1850
  %v1870 = vadd.f32 %v1842, %v1852
  %v1871 = vadd.f32 %v1843, %v1854
  %v1872 = vadd.f32 %v1844, %v1856
  %v1873 = vadd.f32 %v1845, %v1858
  %v1874 = vadd.f32 %v1846, %v1860
  %v1875 = vmul.f32 %v710, %v1394
  %v1876 = vmul.f32 %v716, %v1397
  %v1877 = vmul.f32 %v722, %v1400
  %v1878 = vmul.f32 %v728, %v1403
  %v1879 = vmul.f32 %v734, %v1406
  %v1880 = vmul.f32 %v740, %v1409
  %v1881 = vmul.f32 %v746, %v1412
  %1889 = vrot.lane.b32.xlu0 %v1875, 32
  %v1890 = vpop.permute.xlu0 %1889
  %1891 = vrot.lane.b32.xlu0 %v1876, 32
  %v1892 = vpop.permute.xlu0 %1891
  %1893 = vrot.lane.b32.xlu0 %v1877, 32
  %v1894 = vpop.permute.xlu0 %1893
  %1895 = vrot.lane.b32.xlu0 %v1878, 32
  %v1896 = vpop.permute.xlu0 %1895
  %1897 = vrot.lane.b32.xlu0 %v1879, 32
  %v1898 = vpop.permute.xlu0 %1897
  %1899 = vrot.lane.b32.xlu0 %v1880, 32
  %v1900 = vpop.permute.xlu0 %1899
  %1901 = vrot.lane.b32.xlu0 %v1881, 32
  %v1902 = vpop.permute.xlu0 %1901
  %v1910 = vadd.f32 %v1868, %v1890
  %v1911 = vadd.f32 %v1869, %v1892
  %v1912 = vadd.f32 %v1870, %v1894
  %v1913 = vadd.f32 %v1871, %v1896
  %v1914 = vadd.f32 %v1872, %v1898
  %v1915 = vadd.f32 %v1873, %v1900
  %v1916 = vadd.f32 %v1874, %v1902
  %v1917 = vmul.f32 %v710, %v1638
  %v1918 = vmul.f32 %v716, %v1640
  %v1919 = vmul.f32 %v722, %v1642
  %v1920 = vmul.f32 %v728, %v1644
  %v1921 = vmul.f32 %v734, %v1646
  %v1922 = vmul.f32 %v740, %v1648
  %v1923 = vmul.f32 %v746, %v1650
  %1931 = vrot.lane.b32.xlu0 %v1917, 96
  %v1932 = vpop.permute.xlu0 %1931
  %1933 = vrot.lane.b32.xlu0 %v1918, 96
  %v1934 = vpop.permute.xlu0 %1933
  %1935 = vrot.lane.b32.xlu0 %v1919, 96
  %v1936 = vpop.permute.xlu0 %1935
  %1937 = vrot.lane.b32.xlu0 %v1920, 96
  %v1938 = vpop.permute.xlu0 %1937
  %1939 = vrot.lane.b32.xlu0 %v1921, 96
  %v1940 = vpop.permute.xlu0 %1939
  %1941 = vrot.lane.b32.xlu0 %v1922, 96
  %v1942 = vpop.permute.xlu0 %1941
  %1943 = vrot.lane.b32.xlu0 %v1923, 96
  %v1944 = vpop.permute.xlu0 %1943
  %v1952 = vadd.f32 %v1917, %v1932
  %v1953 = vadd.f32 %v1918, %v1934
  %v1954 = vadd.f32 %v1919, %v1936
  %v1955 = vadd.f32 %v1920, %v1938
  %v1956 = vadd.f32 %v1921, %v1940
  %v1957 = vadd.f32 %v1922, %v1942
  %v1958 = vadd.f32 %v1923, %v1944
  %1959 = vrot.lane.b32.xlu0 %v1917, 64
  %v1960 = vpop.permute.xlu0 %1959
  %1961 = vrot.lane.b32.xlu0 %v1918, 64
  %v1962 = vpop.permute.xlu0 %1961
  %1963 = vrot.lane.b32.xlu0 %v1919, 64
  %v1964 = vpop.permute.xlu0 %1963
  %1965 = vrot.lane.b32.xlu0 %v1920, 64
  %v1966 = vpop.permute.xlu0 %1965
  %1967 = vrot.lane.b32.xlu0 %v1921, 64
  %v1968 = vpop.permute.xlu0 %1967
  %1969 = vrot.lane.b32.xlu0 %v1922, 64
  %v1970 = vpop.permute.xlu0 %1969
  %1971 = vrot.lane.b32.xlu0 %v1923, 64
  %v1972 = vpop.permute.xlu0 %1971
  %v1980 = vadd.f32 %v1952, %v1960
  %v1981 = vadd.f32 %v1953, %v1962
  %v1982 = vadd.f32 %v1954, %v1964
  %v1983 = vadd.f32 %v1955, %v1966
  %v1984 = vadd.f32 %v1956, %v1968
  %v1985 = vadd.f32 %v1957, %v1970
  %v1986 = vadd.f32 %v1958, %v1972
  %v1987 = vmul.f32 %v712, %v1638
  %v1988 = vmul.f32 %v718, %v1640
  %v1989 = vmul.f32 %v724, %v1642
  %v1990 = vmul.f32 %v730, %v1644
  %v1991 = vmul.f32 %v736, %v1646
  %v1992 = vmul.f32 %v742, %v1648
  %v1993 = vmul.f32 %v748, %v1650
  %2001 = vrot.lane.b32.xlu0 %v1987, 32
  %v2002 = vpop.permute.xlu0 %2001
  %2003 = vrot.lane.b32.xlu0 %v1988, 32
  %v2004 = vpop.permute.xlu0 %2003
  %2005 = vrot.lane.b32.xlu0 %v1989, 32
  %v2006 = vpop.permute.xlu0 %2005
  %2007 = vrot.lane.b32.xlu0 %v1990, 32
  %v2008 = vpop.permute.xlu0 %2007
  %2009 = vrot.lane.b32.xlu0 %v1991, 32
  %v2010 = vpop.permute.xlu0 %2009
  %2011 = vrot.lane.b32.xlu0 %v1992, 32
  %v2012 = vpop.permute.xlu0 %2011
  %2013 = vrot.lane.b32.xlu0 %v1993, 32
  %v2014 = vpop.permute.xlu0 %2013
  %v2022 = vadd.f32 %v1980, %v2002
  %v2023 = vadd.f32 %v1981, %v2004
  %v2024 = vadd.f32 %v1982, %v2006
  %v2025 = vadd.f32 %v1983, %v2008
  %v2026 = vadd.f32 %v1984, %v2010
  %v2027 = vadd.f32 %v1985, %v2012
  %v2028 = vadd.f32 %v1986, %v2014
  %v2029 = vmul.f32 %v712, %v1393
  %v2030 = vmul.f32 %v718, %v1396
  %v2031 = vmul.f32 %v724, %v1399
  %v2032 = vmul.f32 %v730, %v1402
  %v2033 = vmul.f32 %v736, %v1405
  %v2034 = vmul.f32 %v742, %v1408
  %v2035 = vmul.f32 %v748, %v1411
  %v2036 = vadd.f32 %v2022, %v2029
  %v2037 = vadd.f32 %v2023, %v2030
  %v2038 = vadd.f32 %v2024, %v2031
  %v2039 = vadd.f32 %v2025, %v2032
  %v2040 = vadd.f32 %v2026, %v2033
  %v2041 = vadd.f32 %v2027, %v2034
  %v2042 = vadd.f32 %v2028, %v2035
  %2050 = vrot.lane.b32.xlu0 %v2029, 96
  %v2051 = vpop.permute.xlu0 %2050
  %2052 = vrot.lane.b32.xlu0 %v2030, 96
  %v2053 = vpop.permute.xlu0 %2052
  %2054 = vrot.lane.b32.xlu0 %v2031, 96
  %v2055 = vpop.permute.xlu0 %2054
  %2056 = vrot.lane.b32.xlu0 %v2032, 96
  %v2057 = vpop.permute.xlu0 %2056
  %2058 = vrot.lane.b32.xlu0 %v2033, 96
  %v2059 = vpop.permute.xlu0 %2058
  %2060 = vrot.lane.b32.xlu0 %v2034, 96
  %v2061 = vpop.permute.xlu0 %2060
  %2062 = vrot.lane.b32.xlu0 %v2035, 96
  %v2063 = vpop.permute.xlu0 %2062
  %v2071 = vadd.f32 %v2036, %v2051
  %v2072 = vadd.f32 %v2037, %v2053
  %v2073 = vadd.f32 %v2038, %v2055
  %v2074 = vadd.f32 %v2039, %v2057
  %v2075 = vadd.f32 %v2040, %v2059
  %v2076 = vadd.f32 %v2041, %v2061
  %v2077 = vadd.f32 %v2042, %v2063
  %2078 = vrot.lane.b32.xlu0 %v2029, 64
  %v2079 = vpop.permute.xlu0 %2078
  %2080 = vrot.lane.b32.xlu0 %v2030, 64
  %v2081 = vpop.permute.xlu0 %2080
  %2082 = vrot.lane.b32.xlu0 %v2031, 64
  %v2083 = vpop.permute.xlu0 %2082
  %2084 = vrot.lane.b32.xlu0 %v2032, 64
  %v2085 = vpop.permute.xlu0 %2084
  %2086 = vrot.lane.b32.xlu0 %v2033, 64
  %v2087 = vpop.permute.xlu0 %2086
  %2088 = vrot.lane.b32.xlu0 %v2034, 64
  %v2089 = vpop.permute.xlu0 %2088
  %2090 = vrot.lane.b32.xlu0 %v2035, 64
  %v2091 = vpop.permute.xlu0 %2090
  %v2099 = vadd.f32 %v2071, %v2079
  %v2100 = vadd.f32 %v2072, %v2081
  %v2101 = vadd.f32 %v2073, %v2083
  %v2102 = vadd.f32 %v2074, %v2085
  %v2103 = vadd.f32 %v2075, %v2087
  %v2104 = vadd.f32 %v2076, %v2089
  %v2105 = vadd.f32 %v2077, %v2091
  %v2106 = vmul.f32 %v817, %v1392
  %v2107 = vmul.f32 %v823, %v1395
  %v2108 = vmul.f32 %v829, %v1398
  %v2109 = vmul.f32 %v835, %v1401
  %v2110 = vmul.f32 %v841, %v1404
  %v2111 = vmul.f32 %v847, %v1407
  %v2112 = vmul.f32 %v853, %v1410
  %2120 = vrot.lane.b32.xlu0 %v2106, 96
  %v2121 = vpop.permute.xlu0 %2120
  %2122 = vrot.lane.b32.xlu0 %v2107, 96
  %v2123 = vpop.permute.xlu0 %2122
  %2124 = vrot.lane.b32.xlu0 %v2108, 96
  %v2125 = vpop.permute.xlu0 %2124
  %2126 = vrot.lane.b32.xlu0 %v2109, 96
  %v2127 = vpop.permute.xlu0 %2126
  %2128 = vrot.lane.b32.xlu0 %v2110, 96
  %v2129 = vpop.permute.xlu0 %2128
  %2130 = vrot.lane.b32.xlu0 %v2111, 96
  %v2131 = vpop.permute.xlu0 %2130
  %2132 = vrot.lane.b32.xlu0 %v2112, 96
  %v2133 = vpop.permute.xlu0 %2132
  %v2141 = vadd.f32 %v2106, %v2121
  %v2142 = vadd.f32 %v2107, %v2123
  %v2143 = vadd.f32 %v2108, %v2125
  %v2144 = vadd.f32 %v2109, %v2127
  %v2145 = vadd.f32 %v2110, %v2129
  %v2146 = vadd.f32 %v2111, %v2131
  %v2147 = vadd.f32 %v2112, %v2133
  %2148 = vrot.lane.b32.xlu0 %v2106, 64
  %v2149 = vpop.permute.xlu0 %2148
  %2150 = vrot.lane.b32.xlu0 %v2107, 64
  %v2151 = vpop.permute.xlu0 %2150
  %2152 = vrot.lane.b32.xlu0 %v2108, 64
  %v2153 = vpop.permute.xlu0 %2152
  %2154 = vrot.lane.b32.xlu0 %v2109, 64
  %v2155 = vpop.permute.xlu0 %2154
  %2156 = vrot.lane.b32.xlu0 %v2110, 64
  %v2157 = vpop.permute.xlu0 %2156
  %2158 = vrot.lane.b32.xlu0 %v2111, 64
  %v2159 = vpop.permute.xlu0 %2158
  %2160 = vrot.lane.b32.xlu0 %v2112, 64
  %v2161 = vpop.permute.xlu0 %2160
  %v2169 = vadd.f32 %v2141, %v2149
  %v2170 = vadd.f32 %v2142, %v2151
  %v2171 = vadd.f32 %v2143, %v2153
  %v2172 = vadd.f32 %v2144, %v2155
  %v2173 = vadd.f32 %v2145, %v2157
  %v2174 = vadd.f32 %v2146, %v2159
  %v2175 = vadd.f32 %v2147, %v2161
  %2176 = vrot.lane.b32.xlu0 %v2106, 32
  %v2177 = vpop.permute.xlu0 %2176
  %2178 = vrot.lane.b32.xlu0 %v2107, 32
  %v2179 = vpop.permute.xlu0 %2178
  %2180 = vrot.lane.b32.xlu0 %v2108, 32
  %v2181 = vpop.permute.xlu0 %2180
  %2182 = vrot.lane.b32.xlu0 %v2109, 32
  %v2183 = vpop.permute.xlu0 %2182
  %2184 = vrot.lane.b32.xlu0 %v2110, 32
  %v2185 = vpop.permute.xlu0 %2184
  %2186 = vrot.lane.b32.xlu0 %v2111, 32
  %v2187 = vpop.permute.xlu0 %2186
  %2188 = vrot.lane.b32.xlu0 %v2112, 32
  %v2189 = vpop.permute.xlu0 %2188
  %v2197 = vadd.f32 %v2169, %v2177
  %v2198 = vadd.f32 %v2170, %v2179
  %v2199 = vadd.f32 %v2171, %v2181
  %v2200 = vadd.f32 %v2172, %v2183
  %v2201 = vadd.f32 %v2173, %v2185
  %v2202 = vadd.f32 %v2174, %v2187
  %v2203 = vadd.f32 %v2175, %v2189
  %v2204 = vmul.f32 %v819, %v1393
  %v2205 = vmul.f32 %v825, %v1396
  %v2206 = vmul.f32 %v831, %v1399
  %v2207 = vmul.f32 %v837, %v1402
  %v2208 = vmul.f32 %v843, %v1405
  %v2209 = vmul.f32 %v849, %v1408
  %v2210 = vmul.f32 %v855, %v1411
  %v2211 = vadd.f32 %v2197, %v2204
  %v2212 = vadd.f32 %v2198, %v2205
  %v2213 = vadd.f32 %v2199, %v2206
  %v2214 = vadd.f32 %v2200, %v2207
  %v2215 = vadd.f32 %v2201, %v2208
  %v2216 = vadd.f32 %v2202, %v2209
  %v2217 = vadd.f32 %v2203, %v2210
  %2218 = vrot.lane.b32.xlu0 %v1393, 96
  %v2219 = vpop.permute.xlu0 %2218
  %2220 = vrot.lane.b32.xlu0 %v1396, 96
  %v2221 = vpop.permute.xlu0 %2220
  %2222 = vrot.lane.b32.xlu0 %v1399, 96
  %v2223 = vpop.permute.xlu0 %2222
  %2224 = vrot.lane.b32.xlu0 %v1402, 96
  %v2225 = vpop.permute.xlu0 %2224
  %2226 = vrot.lane.b32.xlu0 %v1405, 96
  %v2227 = vpop.permute.xlu0 %2226
  %2228 = vrot.lane.b32.xlu0 %v1408, 96
  %v2229 = vpop.permute.xlu0 %2228
  %2230 = vrot.lane.b32.xlu0 %v1411, 96
  %v2231 = vpop.permute.xlu0 %2230
  %v2239 = vmul.f32 %v819, %v2219
  %v2240 = vmul.f32 %v825, %v2221
  %v2241 = vmul.f32 %v831, %v2223
  %v2242 = vmul.f32 %v837, %v2225
  %v2243 = vmul.f32 %v843, %v2227
  %v2244 = vmul.f32 %v849, %v2229
  %v2245 = vmul.f32 %v855, %v2231
  %2253 = vrot.lane.b32.xlu0 %v2239, 96
  %v2254 = vpop.permute.xlu0 %2253
  %2255 = vrot.lane.b32.xlu0 %v2240, 96
  %v2256 = vpop.permute.xlu0 %2255
  %2257 = vrot.lane.b32.xlu0 %v2241, 96
  %v2258 = vpop.permute.xlu0 %2257
  %2259 = vrot.lane.b32.xlu0 %v2242, 96
  %v2260 = vpop.permute.xlu0 %2259
  %2261 = vrot.lane.b32.xlu0 %v2243, 96
  %v2262 = vpop.permute.xlu0 %2261
  %2263 = vrot.lane.b32.xlu0 %v2244, 96
  %v2264 = vpop.permute.xlu0 %2263
  %2265 = vrot.lane.b32.xlu0 %v2245, 96
  %v2266 = vpop.permute.xlu0 %2265
  %v2274 = vadd.f32 %v2211, %v2254
  %v2275 = vadd.f32 %v2212, %v2256
  %v2276 = vadd.f32 %v2213, %v2258
  %v2277 = vadd.f32 %v2214, %v2260
  %v2278 = vadd.f32 %v2215, %v2262
  %v2279 = vadd.f32 %v2216, %v2264
  %v2280 = vadd.f32 %v2217, %v2266
  %2281 = vrot.lane.b32.xlu0 %v2239, 64
  %v2282 = vpop.permute.xlu0 %2281
  %2283 = vrot.lane.b32.xlu0 %v2240, 64
  %v2284 = vpop.permute.xlu0 %2283
  %2285 = vrot.lane.b32.xlu0 %v2241, 64
  %v2286 = vpop.permute.xlu0 %2285
  %2287 = vrot.lane.b32.xlu0 %v2242, 64
  %v2288 = vpop.permute.xlu0 %2287
  %2289 = vrot.lane.b32.xlu0 %v2243, 64
  %v2290 = vpop.permute.xlu0 %2289
  %2291 = vrot.lane.b32.xlu0 %v2244, 64
  %v2292 = vpop.permute.xlu0 %2291
  %2293 = vrot.lane.b32.xlu0 %v2245, 64
  %v2294 = vpop.permute.xlu0 %2293
  %v2302 = vadd.f32 %v2274, %v2282
  %v2303 = vadd.f32 %v2275, %v2284
  %v2304 = vadd.f32 %v2276, %v2286
  %v2305 = vadd.f32 %v2277, %v2288
  %v2306 = vadd.f32 %v2278, %v2290
  %v2307 = vadd.f32 %v2279, %v2292
  %v2308 = vadd.f32 %v2280, %v2294
  %2316 = vrot.lane.b32.xlu0 %v1394, 96
  %v2317 = vpop.permute.xlu0 %2316
  %2318 = vrot.lane.b32.xlu0 %v1397, 96
  %v2319 = vpop.permute.xlu0 %2318
  %2320 = vrot.lane.b32.xlu0 %v1400, 96
  %v2321 = vpop.permute.xlu0 %2320
  %2322 = vrot.lane.b32.xlu0 %v1403, 96
  %v2323 = vpop.permute.xlu0 %2322
  %2324 = vrot.lane.b32.xlu0 %v1406, 96
  %v2325 = vpop.permute.xlu0 %2324
  %2326 = vrot.lane.b32.xlu0 %v1409, 96
  %v2327 = vpop.permute.xlu0 %2326
  %2328 = vrot.lane.b32.xlu0 %v1412, 96
  %v2329 = vpop.permute.xlu0 %2328
  %v2337 = vmul.f32 %v819, %v2317
  %v2338 = vmul.f32 %v825, %v2319
  %v2339 = vmul.f32 %v831, %v2321
  %v2340 = vmul.f32 %v837, %v2323
  %v2341 = vmul.f32 %v843, %v2325
  %v2342 = vmul.f32 %v849, %v2327
  %v2343 = vmul.f32 %v855, %v2329
  %2351 = vrot.lane.b32.xlu0 %v2337, 32
  %v2352 = vpop.permute.xlu0 %2351
  %2353 = vrot.lane.b32.xlu0 %v2338, 32
  %v2354 = vpop.permute.xlu0 %2353
  %2355 = vrot.lane.b32.xlu0 %v2339, 32
  %v2356 = vpop.permute.xlu0 %2355
  %2357 = vrot.lane.b32.xlu0 %v2340, 32
  %v2358 = vpop.permute.xlu0 %2357
  %2359 = vrot.lane.b32.xlu0 %v2341, 32
  %v2360 = vpop.permute.xlu0 %2359
  %2361 = vrot.lane.b32.xlu0 %v2342, 32
  %v2362 = vpop.permute.xlu0 %2361
  %2363 = vrot.lane.b32.xlu0 %v2343, 32
  %v2364 = vpop.permute.xlu0 %2363
  %v2372 = vadd.f32 %v2302, %v2352
  %v2373 = vadd.f32 %v2303, %v2354
  %v2374 = vadd.f32 %v2304, %v2356
  %v2375 = vadd.f32 %v2305, %v2358
  %v2376 = vadd.f32 %v2306, %v2360
  %v2377 = vadd.f32 %v2307, %v2362
  %v2378 = vadd.f32 %v2308, %v2364
  %v2379 = vmul.f32 %v924, %v1392
  %v2380 = vmul.f32 %v930, %v1395
  %v2381 = vmul.f32 %v936, %v1398
  %v2382 = vmul.f32 %v942, %v1401
  %v2383 = vmul.f32 %v948, %v1404
  %v2384 = vmul.f32 %v954, %v1407
  %v2385 = vmul.f32 %v960, %v1410
  %2393 = vrot.lane.b32.xlu0 %v2379, 96
  %v2394 = vpop.permute.xlu0 %2393
  %2395 = vrot.lane.b32.xlu0 %v2380, 96
  %v2396 = vpop.permute.xlu0 %2395
  %2397 = vrot.lane.b32.xlu0 %v2381, 96
  %v2398 = vpop.permute.xlu0 %2397
  %2399 = vrot.lane.b32.xlu0 %v2382, 96
  %v2400 = vpop.permute.xlu0 %2399
  %2401 = vrot.lane.b32.xlu0 %v2383, 96
  %v2402 = vpop.permute.xlu0 %2401
  %2403 = vrot.lane.b32.xlu0 %v2384, 96
  %v2404 = vpop.permute.xlu0 %2403
  %2405 = vrot.lane.b32.xlu0 %v2385, 96
  %v2406 = vpop.permute.xlu0 %2405
  %v2414 = vadd.f32 %v2379, %v2394
  %v2415 = vadd.f32 %v2380, %v2396
  %v2416 = vadd.f32 %v2381, %v2398
  %v2417 = vadd.f32 %v2382, %v2400
  %v2418 = vadd.f32 %v2383, %v2402
  %v2419 = vadd.f32 %v2384, %v2404
  %v2420 = vadd.f32 %v2385, %v2406
  %2421 = vrot.lane.b32.xlu0 %v1392, 96
  %v2422 = vpop.permute.xlu0 %2421
  %2423 = vrot.lane.b32.xlu0 %v1395, 96
  %v2424 = vpop.permute.xlu0 %2423
  %2425 = vrot.lane.b32.xlu0 %v1398, 96
  %v2426 = vpop.permute.xlu0 %2425
  %2427 = vrot.lane.b32.xlu0 %v1401, 96
  %v2428 = vpop.permute.xlu0 %2427
  %2429 = vrot.lane.b32.xlu0 %v1404, 96
  %v2430 = vpop.permute.xlu0 %2429
  %2431 = vrot.lane.b32.xlu0 %v1407, 96
  %v2432 = vpop.permute.xlu0 %2431
  %2433 = vrot.lane.b32.xlu0 %v1410, 96
  %v2434 = vpop.permute.xlu0 %2433
  %v2442 = vmul.f32 %v924, %v2422
  %v2443 = vmul.f32 %v930, %v2424
  %v2444 = vmul.f32 %v936, %v2426
  %v2445 = vmul.f32 %v942, %v2428
  %v2446 = vmul.f32 %v948, %v2430
  %v2447 = vmul.f32 %v954, %v2432
  %v2448 = vmul.f32 %v960, %v2434
  %2456 = vrot.lane.b32.xlu0 %v2442, 64
  %v2457 = vpop.permute.xlu0 %2456
  %2458 = vrot.lane.b32.xlu0 %v2443, 64
  %v2459 = vpop.permute.xlu0 %2458
  %2460 = vrot.lane.b32.xlu0 %v2444, 64
  %v2461 = vpop.permute.xlu0 %2460
  %2462 = vrot.lane.b32.xlu0 %v2445, 64
  %v2463 = vpop.permute.xlu0 %2462
  %2464 = vrot.lane.b32.xlu0 %v2446, 64
  %v2465 = vpop.permute.xlu0 %2464
  %2466 = vrot.lane.b32.xlu0 %v2447, 64
  %v2467 = vpop.permute.xlu0 %2466
  %2468 = vrot.lane.b32.xlu0 %v2448, 64
  %v2469 = vpop.permute.xlu0 %2468
  %v2477 = vadd.f32 %v2414, %v2457
  %v2478 = vadd.f32 %v2415, %v2459
  %v2479 = vadd.f32 %v2416, %v2461
  %v2480 = vadd.f32 %v2417, %v2463
  %v2481 = vadd.f32 %v2418, %v2465
  %v2482 = vadd.f32 %v2419, %v2467
  %v2483 = vadd.f32 %v2420, %v2469
  %v2484 = vmul.f32 %v924, %v2219
  %v2485 = vmul.f32 %v930, %v2221
  %v2486 = vmul.f32 %v936, %v2223
  %v2487 = vmul.f32 %v942, %v2225
  %v2488 = vmul.f32 %v948, %v2227
  %v2489 = vmul.f32 %v954, %v2229
  %v2490 = vmul.f32 %v960, %v2231
  %2498 = vrot.lane.b32.xlu0 %v2484, 32
  %v2499 = vpop.permute.xlu0 %2498
  %2500 = vrot.lane.b32.xlu0 %v2485, 32
  %v2501 = vpop.permute.xlu0 %2500
  %2502 = vrot.lane.b32.xlu0 %v2486, 32
  %v2503 = vpop.permute.xlu0 %2502
  %2504 = vrot.lane.b32.xlu0 %v2487, 32
  %v2505 = vpop.permute.xlu0 %2504
  %2506 = vrot.lane.b32.xlu0 %v2488, 32
  %v2507 = vpop.permute.xlu0 %2506
  %2508 = vrot.lane.b32.xlu0 %v2489, 32
  %v2509 = vpop.permute.xlu0 %2508
  %2510 = vrot.lane.b32.xlu0 %v2490, 32
  %v2511 = vpop.permute.xlu0 %2510
  %v2519 = vadd.f32 %v2477, %v2499
  %v2520 = vadd.f32 %v2478, %v2501
  %v2521 = vadd.f32 %v2479, %v2503
  %v2522 = vadd.f32 %v2480, %v2505
  %v2523 = vadd.f32 %v2481, %v2507
  %v2524 = vadd.f32 %v2482, %v2509
  %v2525 = vadd.f32 %v2483, %v2511
  %v2526 = vmul.f32 %v926, %v2219
  %v2527 = vmul.f32 %v932, %v2221
  %v2528 = vmul.f32 %v938, %v2223
  %v2529 = vmul.f32 %v944, %v2225
  %v2530 = vmul.f32 %v950, %v2227
  %v2531 = vmul.f32 %v956, %v2229
  %v2532 = vmul.f32 %v962, %v2231
  %v2533 = vadd.f32 %v2519, %v2526
  %v2534 = vadd.f32 %v2520, %v2527
  %v2535 = vadd.f32 %v2521, %v2528
  %v2536 = vadd.f32 %v2522, %v2529
  %v2537 = vadd.f32 %v2523, %v2530
  %v2538 = vadd.f32 %v2524, %v2531
  %v2539 = vadd.f32 %v2525, %v2532
  %2547 = vrot.lane.b32.xlu0 %v2526, 96
  %v2548 = vpop.permute.xlu0 %2547
  %2549 = vrot.lane.b32.xlu0 %v2527, 96
  %v2550 = vpop.permute.xlu0 %2549
  %2551 = vrot.lane.b32.xlu0 %v2528, 96
  %v2552 = vpop.permute.xlu0 %2551
  %2553 = vrot.lane.b32.xlu0 %v2529, 96
  %v2554 = vpop.permute.xlu0 %2553
  %2555 = vrot.lane.b32.xlu0 %v2530, 96
  %v2556 = vpop.permute.xlu0 %2555
  %2557 = vrot.lane.b32.xlu0 %v2531, 96
  %v2558 = vpop.permute.xlu0 %2557
  %2559 = vrot.lane.b32.xlu0 %v2532, 96
  %v2560 = vpop.permute.xlu0 %2559
  %v2568 = vadd.f32 %v2533, %v2548
  %v2569 = vadd.f32 %v2534, %v2550
  %v2570 = vadd.f32 %v2535, %v2552
  %v2571 = vadd.f32 %v2536, %v2554
  %v2572 = vadd.f32 %v2537, %v2556
  %v2573 = vadd.f32 %v2538, %v2558
  %v2574 = vadd.f32 %v2539, %v2560
  %2575 = vrot.lane.b32.xlu0 %v2526, 64
  %v2576 = vpop.permute.xlu0 %2575
  %2577 = vrot.lane.b32.xlu0 %v2527, 64
  %v2578 = vpop.permute.xlu0 %2577
  %2579 = vrot.lane.b32.xlu0 %v2528, 64
  %v2580 = vpop.permute.xlu0 %2579
  %2581 = vrot.lane.b32.xlu0 %v2529, 64
  %v2582 = vpop.permute.xlu0 %2581
  %2583 = vrot.lane.b32.xlu0 %v2530, 64
  %v2584 = vpop.permute.xlu0 %2583
  %2585 = vrot.lane.b32.xlu0 %v2531, 64
  %v2586 = vpop.permute.xlu0 %2585
  %2587 = vrot.lane.b32.xlu0 %v2532, 64
  %v2588 = vpop.permute.xlu0 %2587
  %v2596 = vadd.f32 %v2568, %v2576
  %v2597 = vadd.f32 %v2569, %v2578
  %v2598 = vadd.f32 %v2570, %v2580
  %v2599 = vadd.f32 %v2571, %v2582
  %v2600 = vadd.f32 %v2572, %v2584
  %v2601 = vadd.f32 %v2573, %v2586
  %v2602 = vadd.f32 %v2574, %v2588
  %v2603 = vmul.f32 %v926, %v2422
  %v2604 = vmul.f32 %v932, %v2424
  %v2605 = vmul.f32 %v938, %v2426
  %v2606 = vmul.f32 %v944, %v2428
  %v2607 = vmul.f32 %v950, %v2430
  %v2608 = vmul.f32 %v956, %v2432
  %v2609 = vmul.f32 %v962, %v2434
  %v2610 = vmul.f32 %v1031, %v2422
  %v2611 = vmul.f32 %v1037, %v2424
  %v2612 = vmul.f32 %v1043, %v2426
  %v2613 = vmul.f32 %v1049, %v2428
  %v2614 = vmul.f32 %v1055, %v2430
  %v2615 = vmul.f32 %v1061, %v2432
  %v2616 = vmul.f32 %v1067, %v2434
  %2624 = vrot.lane.b32.xlu0 %v2610, 96
  %v2625 = vpop.permute.xlu0 %2624
  %2626 = vrot.lane.b32.xlu0 %v2611, 96
  %v2627 = vpop.permute.xlu0 %2626
  %2628 = vrot.lane.b32.xlu0 %v2612, 96
  %v2629 = vpop.permute.xlu0 %2628
  %2630 = vrot.lane.b32.xlu0 %v2613, 96
  %v2631 = vpop.permute.xlu0 %2630
  %2632 = vrot.lane.b32.xlu0 %v2614, 96
  %v2633 = vpop.permute.xlu0 %2632
  %2634 = vrot.lane.b32.xlu0 %v2615, 96
  %v2635 = vpop.permute.xlu0 %2634
  %2636 = vrot.lane.b32.xlu0 %v2616, 96
  %v2637 = vpop.permute.xlu0 %2636
  %v2645 = vadd.f32 %v2603, %v2625
  %v2646 = vadd.f32 %v2604, %v2627
  %v2647 = vadd.f32 %v2605, %v2629
  %v2648 = vadd.f32 %v2606, %v2631
  %v2649 = vadd.f32 %v2607, %v2633
  %v2650 = vadd.f32 %v2608, %v2635
  %v2651 = vadd.f32 %v2609, %v2637
  %2652 = vrot.lane.b32.xlu0 %v2610, 64
  %v2653 = vpop.permute.xlu0 %2652
  %2654 = vrot.lane.b32.xlu0 %v2611, 64
  %v2655 = vpop.permute.xlu0 %2654
  %2656 = vrot.lane.b32.xlu0 %v2612, 64
  %v2657 = vpop.permute.xlu0 %2656
  %2658 = vrot.lane.b32.xlu0 %v2613, 64
  %v2659 = vpop.permute.xlu0 %2658
  %2660 = vrot.lane.b32.xlu0 %v2614, 64
  %v2661 = vpop.permute.xlu0 %2660
  %2662 = vrot.lane.b32.xlu0 %v2615, 64
  %v2663 = vpop.permute.xlu0 %2662
  %2664 = vrot.lane.b32.xlu0 %v2616, 64
  %v2665 = vpop.permute.xlu0 %2664
  %v2673 = vadd.f32 %v2645, %v2653
  %v2674 = vadd.f32 %v2646, %v2655
  %v2675 = vadd.f32 %v2647, %v2657
  %v2676 = vadd.f32 %v2648, %v2659
  %v2677 = vadd.f32 %v2649, %v2661
  %v2678 = vadd.f32 %v2650, %v2663
  %v2679 = vadd.f32 %v2651, %v2665
  %2680 = vrot.lane.b32.xlu0 %v1393, 64
  %v2681 = vpop.permute.xlu0 %2680
  %2682 = vrot.lane.b32.xlu0 %v1396, 64
  %v2683 = vpop.permute.xlu0 %2682
  %2684 = vrot.lane.b32.xlu0 %v1399, 64
  %v2685 = vpop.permute.xlu0 %2684
  %2686 = vrot.lane.b32.xlu0 %v1402, 64
  %v2687 = vpop.permute.xlu0 %2686
  %2688 = vrot.lane.b32.xlu0 %v1405, 64
  %v2689 = vpop.permute.xlu0 %2688
  %2690 = vrot.lane.b32.xlu0 %v1408, 64
  %v2691 = vpop.permute.xlu0 %2690
  %2692 = vrot.lane.b32.xlu0 %v1411, 64
  %v2693 = vpop.permute.xlu0 %2692
  %v2701 = vmul.f32 %v1031, %v2681
  %v2702 = vmul.f32 %v1037, %v2683
  %v2703 = vmul.f32 %v1043, %v2685
  %v2704 = vmul.f32 %v1049, %v2687
  %v2705 = vmul.f32 %v1055, %v2689
  %v2706 = vmul.f32 %v1061, %v2691
  %v2707 = vmul.f32 %v1067, %v2693
  %2715 = vrot.lane.b32.xlu0 %v2701, 32
  %v2716 = vpop.permute.xlu0 %2715
  %2717 = vrot.lane.b32.xlu0 %v2702, 32
  %v2718 = vpop.permute.xlu0 %2717
  %2719 = vrot.lane.b32.xlu0 %v2703, 32
  %v2720 = vpop.permute.xlu0 %2719
  %2721 = vrot.lane.b32.xlu0 %v2704, 32
  %v2722 = vpop.permute.xlu0 %2721
  %2723 = vrot.lane.b32.xlu0 %v2705, 32
  %v2724 = vpop.permute.xlu0 %2723
  %2725 = vrot.lane.b32.xlu0 %v2706, 32
  %v2726 = vpop.permute.xlu0 %2725
  %2727 = vrot.lane.b32.xlu0 %v2707, 32
  %v2728 = vpop.permute.xlu0 %2727
  %v2736 = vadd.f32 %v2673, %v2716
  %v2737 = vadd.f32 %v2674, %v2718
  %v2738 = vadd.f32 %v2675, %v2720
  %v2739 = vadd.f32 %v2676, %v2722
  %v2740 = vadd.f32 %v2677, %v2724
  %v2741 = vadd.f32 %v2678, %v2726
  %v2742 = vadd.f32 %v2679, %v2728
  %v2743 = vadd.f32 %v2736, %v2701
  %v2744 = vadd.f32 %v2737, %v2702
  %v2745 = vadd.f32 %v2738, %v2703
  %v2746 = vadd.f32 %v2739, %v2704
  %v2747 = vadd.f32 %v2740, %v2705
  %v2748 = vadd.f32 %v2741, %v2706
  %v2749 = vadd.f32 %v2742, %v2707
  %v2750 = vmul.f32 %v1033, %v2681
  %v2751 = vmul.f32 %v1039, %v2683
  %v2752 = vmul.f32 %v1045, %v2685
  %v2753 = vmul.f32 %v1051, %v2687
  %v2754 = vmul.f32 %v1057, %v2689
  %v2755 = vmul.f32 %v1063, %v2691
  %v2756 = vmul.f32 %v1069, %v2693
  %2764 = vrot.lane.b32.xlu0 %v2750, 96
  %v2765 = vpop.permute.xlu0 %2764
  %2766 = vrot.lane.b32.xlu0 %v2751, 96
  %v2767 = vpop.permute.xlu0 %2766
  %2768 = vrot.lane.b32.xlu0 %v2752, 96
  %v2769 = vpop.permute.xlu0 %2768
  %2770 = vrot.lane.b32.xlu0 %v2753, 96
  %v2771 = vpop.permute.xlu0 %2770
  %2772 = vrot.lane.b32.xlu0 %v2754, 96
  %v2773 = vpop.permute.xlu0 %2772
  %2774 = vrot.lane.b32.xlu0 %v2755, 96
  %v2775 = vpop.permute.xlu0 %2774
  %2776 = vrot.lane.b32.xlu0 %v2756, 96
  %v2777 = vpop.permute.xlu0 %2776
  %v2785 = vadd.f32 %v2743, %v2765
  %v2786 = vadd.f32 %v2744, %v2767
  %v2787 = vadd.f32 %v2745, %v2769
  %v2788 = vadd.f32 %v2746, %v2771
  %v2789 = vadd.f32 %v2747, %v2773
  %v2790 = vadd.f32 %v2748, %v2775
  %v2791 = vadd.f32 %v2749, %v2777
  %2792 = vrot.lane.b32.xlu0 %v2750, 64
  %v2793 = vpop.permute.xlu0 %2792
  %2794 = vrot.lane.b32.xlu0 %v2751, 64
  %v2795 = vpop.permute.xlu0 %2794
  %2796 = vrot.lane.b32.xlu0 %v2752, 64
  %v2797 = vpop.permute.xlu0 %2796
  %2798 = vrot.lane.b32.xlu0 %v2753, 64
  %v2799 = vpop.permute.xlu0 %2798
  %2800 = vrot.lane.b32.xlu0 %v2754, 64
  %v2801 = vpop.permute.xlu0 %2800
  %2802 = vrot.lane.b32.xlu0 %v2755, 64
  %v2803 = vpop.permute.xlu0 %2802
  %2804 = vrot.lane.b32.xlu0 %v2756, 64
  %v2805 = vpop.permute.xlu0 %2804
  %v2813 = vadd.f32 %v2785, %v2793
  %v2814 = vadd.f32 %v2786, %v2795
  %v2815 = vadd.f32 %v2787, %v2797
  %v2816 = vadd.f32 %v2788, %v2799
  %v2817 = vadd.f32 %v2789, %v2801
  %v2818 = vadd.f32 %v2790, %v2803
  %v2819 = vadd.f32 %v2791, %v2805
  %2820 = vrot.lane.b32.xlu0 %v1394, 64
  %v2821 = vpop.permute.xlu0 %2820
  %2822 = vrot.lane.b32.xlu0 %v1397, 64
  %v2823 = vpop.permute.xlu0 %2822
  %2824 = vrot.lane.b32.xlu0 %v1400, 64
  %v2825 = vpop.permute.xlu0 %2824
  %2826 = vrot.lane.b32.xlu0 %v1403, 64
  %v2827 = vpop.permute.xlu0 %2826
  %2828 = vrot.lane.b32.xlu0 %v1406, 64
  %v2829 = vpop.permute.xlu0 %2828
  %2830 = vrot.lane.b32.xlu0 %v1409, 64
  %v2831 = vpop.permute.xlu0 %2830
  %2832 = vrot.lane.b32.xlu0 %v1412, 64
  %v2833 = vpop.permute.xlu0 %2832
  %v2841 = vmul.f32 %v1033, %v2821
  %v2842 = vmul.f32 %v1039, %v2823
  %v2843 = vmul.f32 %v1045, %v2825
  %v2844 = vmul.f32 %v1051, %v2827
  %v2845 = vmul.f32 %v1057, %v2829
  %v2846 = vmul.f32 %v1063, %v2831
  %v2847 = vmul.f32 %v1069, %v2833
  %2855 = vrot.lane.b32.xlu0 %v2841, 32
  %v2856 = vpop.permute.xlu0 %2855
  %2857 = vrot.lane.b32.xlu0 %v2842, 32
  %v2858 = vpop.permute.xlu0 %2857
  %2859 = vrot.lane.b32.xlu0 %v2843, 32
  %v2860 = vpop.permute.xlu0 %2859
  %2861 = vrot.lane.b32.xlu0 %v2844, 32
  %v2862 = vpop.permute.xlu0 %2861
  %2863 = vrot.lane.b32.xlu0 %v2845, 32
  %v2864 = vpop.permute.xlu0 %2863
  %2865 = vrot.lane.b32.xlu0 %v2846, 32
  %v2866 = vpop.permute.xlu0 %2865
  %2867 = vrot.lane.b32.xlu0 %v2847, 32
  %v2868 = vpop.permute.xlu0 %2867
  %v2876 = vadd.f32 %v2813, %v2856
  %v2877 = vadd.f32 %v2814, %v2858
  %v2878 = vadd.f32 %v2815, %v2860
  %v2879 = vadd.f32 %v2816, %v2862
  %v2880 = vadd.f32 %v2817, %v2864
  %v2881 = vadd.f32 %v2818, %v2866
  %v2882 = vadd.f32 %v2819, %v2868
  %v2883 = vmul.f32 %v1033, %v2422
  %v2884 = vmul.f32 %v1039, %v2424
  %v2885 = vmul.f32 %v1045, %v2426
  %v2886 = vmul.f32 %v1051, %v2428
  %v2887 = vmul.f32 %v1057, %v2430
  %v2888 = vmul.f32 %v1063, %v2432
  %v2889 = vmul.f32 %v1069, %v2434
  %v2890 = vmul.f32 %v1138, %v2422
  %v2891 = vmul.f32 %v1144, %v2424
  %v2892 = vmul.f32 %v1150, %v2426
  %v2893 = vmul.f32 %v1156, %v2428
  %v2894 = vmul.f32 %v1162, %v2430
  %v2895 = vmul.f32 %v1168, %v2432
  %v2896 = vmul.f32 %v1174, %v2434
  %2904 = vrot.lane.b32.xlu0 %v2890, 96
  %v2905 = vpop.permute.xlu0 %2904
  %2906 = vrot.lane.b32.xlu0 %v2891, 96
  %v2907 = vpop.permute.xlu0 %2906
  %2908 = vrot.lane.b32.xlu0 %v2892, 96
  %v2909 = vpop.permute.xlu0 %2908
  %2910 = vrot.lane.b32.xlu0 %v2893, 96
  %v2911 = vpop.permute.xlu0 %2910
  %2912 = vrot.lane.b32.xlu0 %v2894, 96
  %v2913 = vpop.permute.xlu0 %2912
  %2914 = vrot.lane.b32.xlu0 %v2895, 96
  %v2915 = vpop.permute.xlu0 %2914
  %2916 = vrot.lane.b32.xlu0 %v2896, 96
  %v2917 = vpop.permute.xlu0 %2916
  %v2925 = vadd.f32 %v2883, %v2905
  %v2926 = vadd.f32 %v2884, %v2907
  %v2927 = vadd.f32 %v2885, %v2909
  %v2928 = vadd.f32 %v2886, %v2911
  %v2929 = vadd.f32 %v2887, %v2913
  %v2930 = vadd.f32 %v2888, %v2915
  %v2931 = vadd.f32 %v2889, %v2917
  %2932 = vrot.lane.b32.xlu0 %v2890, 64
  %v2933 = vpop.permute.xlu0 %2932
  %2934 = vrot.lane.b32.xlu0 %v2891, 64
  %v2935 = vpop.permute.xlu0 %2934
  %2936 = vrot.lane.b32.xlu0 %v2892, 64
  %v2937 = vpop.permute.xlu0 %2936
  %2938 = vrot.lane.b32.xlu0 %v2893, 64
  %v2939 = vpop.permute.xlu0 %2938
  %2940 = vrot.lane.b32.xlu0 %v2894, 64
  %v2941 = vpop.permute.xlu0 %2940
  %2942 = vrot.lane.b32.xlu0 %v2895, 64
  %v2943 = vpop.permute.xlu0 %2942
  %2944 = vrot.lane.b32.xlu0 %v2896, 64
  %v2945 = vpop.permute.xlu0 %2944
  %v2953 = vadd.f32 %v2925, %v2933
  %v2954 = vadd.f32 %v2926, %v2935
  %v2955 = vadd.f32 %v2927, %v2937
  %v2956 = vadd.f32 %v2928, %v2939
  %v2957 = vadd.f32 %v2929, %v2941
  %v2958 = vadd.f32 %v2930, %v2943
  %v2959 = vadd.f32 %v2931, %v2945
  %2960 = vrot.lane.b32.xlu0 %v2890, 32
  %v2961 = vpop.permute.xlu0 %2960
  %2962 = vrot.lane.b32.xlu0 %v2891, 32
  %v2963 = vpop.permute.xlu0 %2962
  %2964 = vrot.lane.b32.xlu0 %v2892, 32
  %v2965 = vpop.permute.xlu0 %2964
  %2966 = vrot.lane.b32.xlu0 %v2893, 32
  %v2967 = vpop.permute.xlu0 %2966
  %2968 = vrot.lane.b32.xlu0 %v2894, 32
  %v2969 = vpop.permute.xlu0 %2968
  %2970 = vrot.lane.b32.xlu0 %v2895, 32
  %v2971 = vpop.permute.xlu0 %2970
  %2972 = vrot.lane.b32.xlu0 %v2896, 32
  %v2973 = vpop.permute.xlu0 %2972
  %v2981 = vadd.f32 %v2953, %v2961
  %v2982 = vadd.f32 %v2954, %v2963
  %v2983 = vadd.f32 %v2955, %v2965
  %v2984 = vadd.f32 %v2956, %v2967
  %v2985 = vadd.f32 %v2957, %v2969
  %v2986 = vadd.f32 %v2958, %v2971
  %v2987 = vadd.f32 %v2959, %v2973
  %v2988 = vmul.f32 %v1138, %v2219
  %v2989 = vmul.f32 %v1144, %v2221
  %v2990 = vmul.f32 %v1150, %v2223
  %v2991 = vmul.f32 %v1156, %v2225
  %v2992 = vmul.f32 %v1162, %v2227
  %v2993 = vmul.f32 %v1168, %v2229
  %v2994 = vmul.f32 %v1174, %v2231
  %v2995 = vadd.f32 %v2981, %v2988
  %v2996 = vadd.f32 %v2982, %v2989
  %v2997 = vadd.f32 %v2983, %v2990
  %v2998 = vadd.f32 %v2984, %v2991
  %v2999 = vadd.f32 %v2985, %v2992
  %v3000 = vadd.f32 %v2986, %v2993
  %v3001 = vadd.f32 %v2987, %v2994
  %v3002 = vmul.f32 %v1140, %v2219
  %v3003 = vmul.f32 %v1146, %v2221
  %v3004 = vmul.f32 %v1152, %v2223
  %v3005 = vmul.f32 %v1158, %v2225
  %v3006 = vmul.f32 %v1164, %v2227
  %v3007 = vmul.f32 %v1170, %v2229
  %v3008 = vmul.f32 %v1176, %v2231
  %3016 = vrot.lane.b32.xlu0 %v3002, 96
  %v3017 = vpop.permute.xlu0 %3016
  %3018 = vrot.lane.b32.xlu0 %v3003, 96
  %v3019 = vpop.permute.xlu0 %3018
  %3020 = vrot.lane.b32.xlu0 %v3004, 96
  %v3021 = vpop.permute.xlu0 %3020
  %3022 = vrot.lane.b32.xlu0 %v3005, 96
  %v3023 = vpop.permute.xlu0 %3022
  %3024 = vrot.lane.b32.xlu0 %v3006, 96
  %v3025 = vpop.permute.xlu0 %3024
  %3026 = vrot.lane.b32.xlu0 %v3007, 96
  %v3027 = vpop.permute.xlu0 %3026
  %3028 = vrot.lane.b32.xlu0 %v3008, 96
  %v3029 = vpop.permute.xlu0 %3028
  %v3037 = vadd.f32 %v2995, %v3017
  %v3038 = vadd.f32 %v2996, %v3019
  %v3039 = vadd.f32 %v2997, %v3021
  %v3040 = vadd.f32 %v2998, %v3023
  %v3041 = vadd.f32 %v2999, %v3025
  %v3042 = vadd.f32 %v3000, %v3027
  %v3043 = vadd.f32 %v3001, %v3029
  %3044 = vrot.lane.b32.xlu0 %v3002, 64
  %v3045 = vpop.permute.xlu0 %3044
  %3046 = vrot.lane.b32.xlu0 %v3003, 64
  %v3047 = vpop.permute.xlu0 %3046
  %3048 = vrot.lane.b32.xlu0 %v3004, 64
  %v3049 = vpop.permute.xlu0 %3048
  %3050 = vrot.lane.b32.xlu0 %v3005, 64
  %v3051 = vpop.permute.xlu0 %3050
  %3052 = vrot.lane.b32.xlu0 %v3006, 64
  %v3053 = vpop.permute.xlu0 %3052
  %3054 = vrot.lane.b32.xlu0 %v3007, 64
  %v3055 = vpop.permute.xlu0 %3054
  %3056 = vrot.lane.b32.xlu0 %v3008, 64
  %v3057 = vpop.permute.xlu0 %3056
  %v3065 = vadd.f32 %v3037, %v3045
  %v3066 = vadd.f32 %v3038, %v3047
  %v3067 = vadd.f32 %v3039, %v3049
  %v3068 = vadd.f32 %v3040, %v3051
  %v3069 = vadd.f32 %v3041, %v3053
  %v3070 = vadd.f32 %v3042, %v3055
  %v3071 = vadd.f32 %v3043, %v3057
  %3072 = vrot.lane.b32.xlu0 %v3002, 32
  %v3073 = vpop.permute.xlu0 %3072
  %3074 = vrot.lane.b32.xlu0 %v3003, 32
  %v3075 = vpop.permute.xlu0 %3074
  %3076 = vrot.lane.b32.xlu0 %v3004, 32
  %v3077 = vpop.permute.xlu0 %3076
  %3078 = vrot.lane.b32.xlu0 %v3005, 32
  %v3079 = vpop.permute.xlu0 %3078
  %3080 = vrot.lane.b32.xlu0 %v3006, 32
  %v3081 = vpop.permute.xlu0 %3080
  %3082 = vrot.lane.b32.xlu0 %v3007, 32
  %v3083 = vpop.permute.xlu0 %3082
  %3084 = vrot.lane.b32.xlu0 %v3008, 32
  %v3085 = vpop.permute.xlu0 %3084
  %v3093 = vadd.f32 %v3065, %v3073
  %v3094 = vadd.f32 %v3066, %v3075
  %v3095 = vadd.f32 %v3067, %v3077
  %v3096 = vadd.f32 %v3068, %v3079
  %v3097 = vadd.f32 %v3069, %v3081
  %v3098 = vadd.f32 %v3070, %v3083
  %v3099 = vadd.f32 %v3071, %v3085
  %v3100 = vmul.f32 %v1140, %v2317
  %v3101 = vmul.f32 %v1146, %v2319
  %v3102 = vmul.f32 %v1152, %v2321
  %v3103 = vmul.f32 %v1158, %v2323
  %v3104 = vmul.f32 %v1164, %v2325
  %v3105 = vmul.f32 %v1170, %v2327
  %v3106 = vmul.f32 %v1176, %v2329
  %v3107 = vadd.f32 %v3093, %v3100
  %v3108 = vadd.f32 %v3094, %v3101
  %v3109 = vadd.f32 %v3095, %v3102
  %v3110 = vadd.f32 %v3096, %v3103
  %v3111 = vadd.f32 %v3097, %v3104
  %v3112 = vadd.f32 %v3098, %v3105
  %v3113 = vadd.f32 %v3099, %v3106
  %v3114 = vmul.f32 %v1245, %v1392
  %v3115 = vmul.f32 %v1251, %v1395
  %v3116 = vmul.f32 %v1257, %v1398
  %v3117 = vmul.f32 %v1263, %v1401
  %v3118 = vmul.f32 %v1269, %v1404
  %v3119 = vmul.f32 %v1275, %v1407
  %v3120 = vmul.f32 %v1281, %v1410
  %v3121 = vmul.f32 %v1245, %v2422
  %v3122 = vmul.f32 %v1251, %v2424
  %v3123 = vmul.f32 %v1257, %v2426
  %v3124 = vmul.f32 %v1263, %v2428
  %v3125 = vmul.f32 %v1269, %v2430
  %v3126 = vmul.f32 %v1275, %v2432
  %v3127 = vmul.f32 %v1281, %v2434
  %3135 = vrot.lane.b32.xlu0 %v3121, 96
  %v3136 = vpop.permute.xlu0 %3135
  %3137 = vrot.lane.b32.xlu0 %v3122, 96
  %v3138 = vpop.permute.xlu0 %3137
  %3139 = vrot.lane.b32.xlu0 %v3123, 96
  %v3140 = vpop.permute.xlu0 %3139
  %3141 = vrot.lane.b32.xlu0 %v3124, 96
  %v3142 = vpop.permute.xlu0 %3141
  %3143 = vrot.lane.b32.xlu0 %v3125, 96
  %v3144 = vpop.permute.xlu0 %3143
  %3145 = vrot.lane.b32.xlu0 %v3126, 96
  %v3146 = vpop.permute.xlu0 %3145
  %3147 = vrot.lane.b32.xlu0 %v3127, 96
  %v3148 = vpop.permute.xlu0 %3147
  %v3156 = vadd.f32 %v3114, %v3136
  %v3157 = vadd.f32 %v3115, %v3138
  %v3158 = vadd.f32 %v3116, %v3140
  %v3159 = vadd.f32 %v3117, %v3142
  %v3160 = vadd.f32 %v3118, %v3144
  %v3161 = vadd.f32 %v3119, %v3146
  %v3162 = vadd.f32 %v3120, %v3148
  %3163 = vrot.lane.b32.xlu0 %v3121, 64
  %v3164 = vpop.permute.xlu0 %3163
  %3165 = vrot.lane.b32.xlu0 %v3122, 64
  %v3166 = vpop.permute.xlu0 %3165
  %3167 = vrot.lane.b32.xlu0 %v3123, 64
  %v3168 = vpop.permute.xlu0 %3167
  %3169 = vrot.lane.b32.xlu0 %v3124, 64
  %v3170 = vpop.permute.xlu0 %3169
  %3171 = vrot.lane.b32.xlu0 %v3125, 64
  %v3172 = vpop.permute.xlu0 %3171
  %3173 = vrot.lane.b32.xlu0 %v3126, 64
  %v3174 = vpop.permute.xlu0 %3173
  %3175 = vrot.lane.b32.xlu0 %v3127, 64
  %v3176 = vpop.permute.xlu0 %3175
  %v3184 = vadd.f32 %v3156, %v3164
  %v3185 = vadd.f32 %v3157, %v3166
  %v3186 = vadd.f32 %v3158, %v3168
  %v3187 = vadd.f32 %v3159, %v3170
  %v3188 = vadd.f32 %v3160, %v3172
  %v3189 = vadd.f32 %v3161, %v3174
  %v3190 = vadd.f32 %v3162, %v3176
  %v3191 = vmul.f32 %v1245, %v2219
  %v3192 = vmul.f32 %v1251, %v2221
  %v3193 = vmul.f32 %v1257, %v2223
  %v3194 = vmul.f32 %v1263, %v2225
  %v3195 = vmul.f32 %v1269, %v2227
  %v3196 = vmul.f32 %v1275, %v2229
  %v3197 = vmul.f32 %v1281, %v2231
  %3205 = vrot.lane.b32.xlu0 %v3191, 32
  %v3206 = vpop.permute.xlu0 %3205
  %3207 = vrot.lane.b32.xlu0 %v3192, 32
  %v3208 = vpop.permute.xlu0 %3207
  %3209 = vrot.lane.b32.xlu0 %v3193, 32
  %v3210 = vpop.permute.xlu0 %3209
  %3211 = vrot.lane.b32.xlu0 %v3194, 32
  %v3212 = vpop.permute.xlu0 %3211
  %3213 = vrot.lane.b32.xlu0 %v3195, 32
  %v3214 = vpop.permute.xlu0 %3213
  %3215 = vrot.lane.b32.xlu0 %v3196, 32
  %v3216 = vpop.permute.xlu0 %3215
  %3217 = vrot.lane.b32.xlu0 %v3197, 32
  %v3218 = vpop.permute.xlu0 %3217
  %v3226 = vadd.f32 %v3184, %v3206
  %v3227 = vadd.f32 %v3185, %v3208
  %v3228 = vadd.f32 %v3186, %v3210
  %v3229 = vadd.f32 %v3187, %v3212
  %v3230 = vadd.f32 %v3188, %v3214
  %v3231 = vadd.f32 %v3189, %v3216
  %v3232 = vadd.f32 %v3190, %v3218
  %v3233 = vmul.f32 %v1247, %v2219
  %v3234 = vmul.f32 %v1253, %v2221
  %v3235 = vmul.f32 %v1259, %v2223
  %v3236 = vmul.f32 %v1265, %v2225
  %v3237 = vmul.f32 %v1271, %v2227
  %v3238 = vmul.f32 %v1277, %v2229
  %v3239 = vmul.f32 %v1283, %v2231
  %v3240 = vadd.f32 %v3226, %v3233
  %v3241 = vadd.f32 %v3227, %v3234
  %v3242 = vadd.f32 %v3228, %v3235
  %v3243 = vadd.f32 %v3229, %v3236
  %v3244 = vadd.f32 %v3230, %v3237
  %v3245 = vadd.f32 %v3231, %v3238
  %v3246 = vadd.f32 %v3232, %v3239
  %3254 = vrot.lane.b32.xlu0 %v3233, 96
  %v3255 = vpop.permute.xlu0 %3254
  %3256 = vrot.lane.b32.xlu0 %v3234, 96
  %v3257 = vpop.permute.xlu0 %3256
  %3258 = vrot.lane.b32.xlu0 %v3235, 96
  %v3259 = vpop.permute.xlu0 %3258
  %3260 = vrot.lane.b32.xlu0 %v3236, 96
  %v3261 = vpop.permute.xlu0 %3260
  %3262 = vrot.lane.b32.xlu0 %v3237, 96
  %v3263 = vpop.permute.xlu0 %3262
  %3264 = vrot.lane.b32.xlu0 %v3238, 96
  %v3265 = vpop.permute.xlu0 %3264
  %3266 = vrot.lane.b32.xlu0 %v3239, 96
  %v3267 = vpop.permute.xlu0 %3266
  %v3275 = vadd.f32 %v3240, %v3255
  %v3276 = vadd.f32 %v3241, %v3257
  %v3277 = vadd.f32 %v3242, %v3259
  %v3278 = vadd.f32 %v3243, %v3261
  %v3279 = vadd.f32 %v3244, %v3263
  %v3280 = vadd.f32 %v3245, %v3265
  %v3281 = vadd.f32 %v3246, %v3267
  %3282 = vrot.lane.b32.xlu0 %v3233, 64
  %v3283 = vpop.permute.xlu0 %3282
  %3284 = vrot.lane.b32.xlu0 %v3234, 64
  %v3285 = vpop.permute.xlu0 %3284
  %3286 = vrot.lane.b32.xlu0 %v3235, 64
  %v3287 = vpop.permute.xlu0 %3286
  %3288 = vrot.lane.b32.xlu0 %v3236, 64
  %v3289 = vpop.permute.xlu0 %3288
  %3290 = vrot.lane.b32.xlu0 %v3237, 64
  %v3291 = vpop.permute.xlu0 %3290
  %3292 = vrot.lane.b32.xlu0 %v3238, 64
  %v3293 = vpop.permute.xlu0 %3292
  %3294 = vrot.lane.b32.xlu0 %v3239, 64
  %v3295 = vpop.permute.xlu0 %3294
  %v3303 = vadd.f32 %v3275, %v3283
  %v3304 = vadd.f32 %v3276, %v3285
  %v3305 = vadd.f32 %v3277, %v3287
  %v3306 = vadd.f32 %v3278, %v3289
  %v3307 = vadd.f32 %v3279, %v3291
  %v3308 = vadd.f32 %v3280, %v3293
  %v3309 = vadd.f32 %v3281, %v3295
  %v3310 = vmul.f32 %v1247, %v2317
  %v3311 = vmul.f32 %v1253, %v2319
  %v3312 = vmul.f32 %v1259, %v2321
  %v3313 = vmul.f32 %v1265, %v2323
  %v3314 = vmul.f32 %v1271, %v2325
  %v3315 = vmul.f32 %v1277, %v2327
  %v3316 = vmul.f32 %v1283, %v2329
  %3324 = vrot.lane.b32.xlu0 %v3310, 32
  %v3325 = vpop.permute.xlu0 %3324
  %3326 = vrot.lane.b32.xlu0 %v3311, 32
  %v3327 = vpop.permute.xlu0 %3326
  %3328 = vrot.lane.b32.xlu0 %v3312, 32
  %v3329 = vpop.permute.xlu0 %3328
  %3330 = vrot.lane.b32.xlu0 %v3313, 32
  %v3331 = vpop.permute.xlu0 %3330
  %3332 = vrot.lane.b32.xlu0 %v3314, 32
  %v3333 = vpop.permute.xlu0 %3332
  %3334 = vrot.lane.b32.xlu0 %v3315, 32
  %v3335 = vpop.permute.xlu0 %3334
  %3336 = vrot.lane.b32.xlu0 %v3316, 32
  %v3337 = vpop.permute.xlu0 %3336
  %v3345 = vadd.f32 %v3303, %v3325
  %v3346 = vadd.f32 %v3304, %v3327
  %v3347 = vadd.f32 %v3305, %v3329
  %v3348 = vadd.f32 %v3306, %v3331
  %v3349 = vadd.f32 %v3307, %v3333
  %v3350 = vadd.f32 %v3308, %v3335
  %v3351 = vadd.f32 %v3309, %v3337
  %v3352 = vmul.f32 %v1352, %v1392
  %v3353 = vmul.f32 %v1358, %v1395
  %v3354 = vmul.f32 %v1364, %v1398
  %v3355 = vmul.f32 %v1370, %v1401
  %v3356 = vmul.f32 %v1376, %v1404
  %v3357 = vmul.f32 %v1382, %v1407
  %v3358 = vmul.f32 %v1388, %v1410
  %3366 = vrot.lane.b32.xlu0 %v3352, 96
  %v3367 = vpop.permute.xlu0 %3366
  %3368 = vrot.lane.b32.xlu0 %v3353, 96
  %v3369 = vpop.permute.xlu0 %3368
  %3370 = vrot.lane.b32.xlu0 %v3354, 96
  %v3371 = vpop.permute.xlu0 %3370
  %3372 = vrot.lane.b32.xlu0 %v3355, 96
  %v3373 = vpop.permute.xlu0 %3372
  %3374 = vrot.lane.b32.xlu0 %v3356, 96
  %v3375 = vpop.permute.xlu0 %3374
  %3376 = vrot.lane.b32.xlu0 %v3357, 96
  %v3377 = vpop.permute.xlu0 %3376
  %3378 = vrot.lane.b32.xlu0 %v3358, 96
  %v3379 = vpop.permute.xlu0 %3378
  %v3387 = vadd.f32 %v3352, %v3367
  %v3388 = vadd.f32 %v3353, %v3369
  %v3389 = vadd.f32 %v3354, %v3371
  %v3390 = vadd.f32 %v3355, %v3373
  %v3391 = vadd.f32 %v3356, %v3375
  %v3392 = vadd.f32 %v3357, %v3377
  %v3393 = vadd.f32 %v3358, %v3379
  %v3394 = vmul.f32 %v1352, %v2422
  %v3395 = vmul.f32 %v1358, %v2424
  %v3396 = vmul.f32 %v1364, %v2426
  %v3397 = vmul.f32 %v1370, %v2428
  %v3398 = vmul.f32 %v1376, %v2430
  %v3399 = vmul.f32 %v1382, %v2432
  %v3400 = vmul.f32 %v1388, %v2434
  %3408 = vrot.lane.b32.xlu0 %v3394, 64
  %v3409 = vpop.permute.xlu0 %3408
  %3410 = vrot.lane.b32.xlu0 %v3395, 64
  %v3411 = vpop.permute.xlu0 %3410
  %3412 = vrot.lane.b32.xlu0 %v3396, 64
  %v3413 = vpop.permute.xlu0 %3412
  %3414 = vrot.lane.b32.xlu0 %v3397, 64
  %v3415 = vpop.permute.xlu0 %3414
  %3416 = vrot.lane.b32.xlu0 %v3398, 64
  %v3417 = vpop.permute.xlu0 %3416
  %3418 = vrot.lane.b32.xlu0 %v3399, 64
  %v3419 = vpop.permute.xlu0 %3418
  %3420 = vrot.lane.b32.xlu0 %v3400, 64
  %v3421 = vpop.permute.xlu0 %3420
  %v3429 = vadd.f32 %v3387, %v3409
  %v3430 = vadd.f32 %v3388, %v3411
  %v3431 = vadd.f32 %v3389, %v3413
  %v3432 = vadd.f32 %v3390, %v3415
  %v3433 = vadd.f32 %v3391, %v3417
  %v3434 = vadd.f32 %v3392, %v3419
  %v3435 = vadd.f32 %v3393, %v3421
  %v3436 = vmul.f32 %v1352, %v2681
  %v3437 = vmul.f32 %v1358, %v2683
  %v3438 = vmul.f32 %v1364, %v2685
  %v3439 = vmul.f32 %v1370, %v2687
  %v3440 = vmul.f32 %v1376, %v2689
  %v3441 = vmul.f32 %v1382, %v2691
  %v3442 = vmul.f32 %v1388, %v2693
  %3450 = vrot.lane.b32.xlu0 %v3436, 32
  %v3451 = vpop.permute.xlu0 %3450
  %3452 = vrot.lane.b32.xlu0 %v3437, 32
  %v3453 = vpop.permute.xlu0 %3452
  %3454 = vrot.lane.b32.xlu0 %v3438, 32
  %v3455 = vpop.permute.xlu0 %3454
  %3456 = vrot.lane.b32.xlu0 %v3439, 32
  %v3457 = vpop.permute.xlu0 %3456
  %3458 = vrot.lane.b32.xlu0 %v3440, 32
  %v3459 = vpop.permute.xlu0 %3458
  %3460 = vrot.lane.b32.xlu0 %v3441, 32
  %v3461 = vpop.permute.xlu0 %3460
  %3462 = vrot.lane.b32.xlu0 %v3442, 32
  %v3463 = vpop.permute.xlu0 %3462
  %v3471 = vadd.f32 %v3429, %v3451
  %v3472 = vadd.f32 %v3430, %v3453
  %v3473 = vadd.f32 %v3431, %v3455
  %v3474 = vadd.f32 %v3432, %v3457
  %v3475 = vadd.f32 %v3433, %v3459
  %v3476 = vadd.f32 %v3434, %v3461
  %v3477 = vadd.f32 %v3435, %v3463
  %v3478 = vmul.f32 %v1354, %v2681
  %v3479 = vmul.f32 %v1360, %v2683
  %v3480 = vmul.f32 %v1366, %v2685
  %v3481 = vmul.f32 %v1372, %v2687
  %v3482 = vmul.f32 %v1378, %v2689
  %v3483 = vmul.f32 %v1384, %v2691
  %v3484 = vmul.f32 %v1390, %v2693
  %v3485 = vadd.f32 %v3471, %v3478
  %v3486 = vadd.f32 %v3472, %v3479
  %v3487 = vadd.f32 %v3473, %v3480
  %v3488 = vadd.f32 %v3474, %v3481
  %v3489 = vadd.f32 %v3475, %v3482
  %v3490 = vadd.f32 %v3476, %v3483
  %v3491 = vadd.f32 %v3477, %v3484
  %3499 = vrot.lane.b32.xlu0 %v3478, 96
  %v3500 = vpop.permute.xlu0 %3499
  %3501 = vrot.lane.b32.xlu0 %v3479, 96
  %v3502 = vpop.permute.xlu0 %3501
  %3503 = vrot.lane.b32.xlu0 %v3480, 96
  %v3504 = vpop.permute.xlu0 %3503
  %3505 = vrot.lane.b32.xlu0 %v3481, 96
  %v3506 = vpop.permute.xlu0 %3505
  %3507 = vrot.lane.b32.xlu0 %v3482, 96
  %v3508 = vpop.permute.xlu0 %3507
  %3509 = vrot.lane.b32.xlu0 %v3483, 96
  %v3510 = vpop.permute.xlu0 %3509
  %3511 = vrot.lane.b32.xlu0 %v3484, 96
  %v3512 = vpop.permute.xlu0 %3511
  %v3520 = vadd.f32 %v3485, %v3500
  %v3521 = vadd.f32 %v3486, %v3502
  %v3522 = vadd.f32 %v3487, %v3504
  %v3523 = vadd.f32 %v3488, %v3506
  %v3524 = vadd.f32 %v3489, %v3508
  %v3525 = vadd.f32 %v3490, %v3510
  %v3526 = vadd.f32 %v3491, %v3512
  %v3527 = vmul.f32 %v1354, %v2821
  %v3528 = vmul.f32 %v1360, %v2823
  %v3529 = vmul.f32 %v1366, %v2825
  %v3530 = vmul.f32 %v1372, %v2827
  %v3531 = vmul.f32 %v1378, %v2829
  %v3532 = vmul.f32 %v1384, %v2831
  %v3533 = vmul.f32 %v1390, %v2833
  %3541 = vrot.lane.b32.xlu0 %v3527, 64
  %v3542 = vpop.permute.xlu0 %3541
  %3543 = vrot.lane.b32.xlu0 %v3528, 64
  %v3544 = vpop.permute.xlu0 %3543
  %3545 = vrot.lane.b32.xlu0 %v3529, 64
  %v3546 = vpop.permute.xlu0 %3545
  %3547 = vrot.lane.b32.xlu0 %v3530, 64
  %v3548 = vpop.permute.xlu0 %3547
  %3549 = vrot.lane.b32.xlu0 %v3531, 64
  %v3550 = vpop.permute.xlu0 %3549
  %3551 = vrot.lane.b32.xlu0 %v3532, 64
  %v3552 = vpop.permute.xlu0 %3551
  %3553 = vrot.lane.b32.xlu0 %v3533, 64
  %v3554 = vpop.permute.xlu0 %3553
  %v3562 = vadd.f32 %v3520, %v3542
  %v3563 = vadd.f32 %v3521, %v3544
  %v3564 = vadd.f32 %v3522, %v3546
  %v3565 = vadd.f32 %v3523, %v3548
  %v3566 = vadd.f32 %v3524, %v3550
  %v3567 = vadd.f32 %v3525, %v3552
  %v3568 = vadd.f32 %v3526, %v3554
  %3576 = vrot.lane.b32.xlu0 %v2099, 32
  %v3577 = vpop.permute.xlu0 %3576
  %3578 = vrot.lane.b32.xlu0 %v2100, 32
  %v3579 = vpop.permute.xlu0 %3578
  %3580 = vrot.lane.b32.xlu0 %v2101, 32
  %v3581 = vpop.permute.xlu0 %3580
  %3582 = vrot.lane.b32.xlu0 %v2102, 32
  %v3583 = vpop.permute.xlu0 %3582
  %3584 = vrot.lane.b32.xlu0 %v2103, 32
  %v3585 = vpop.permute.xlu0 %3584
  %3586 = vrot.lane.b32.xlu0 %v2104, 32
  %v3587 = vpop.permute.xlu0 %3586
  %3588 = vrot.lane.b32.xlu0 %v2105, 32
  %v3589 = vpop.permute.xlu0 %3588
  %3604 = vrot.lane.b32.xlu0 %v2372, 96
  %v3605 = vpop.permute.xlu0 %3604
  %3606 = vrot.lane.b32.xlu0 %v2373, 96
  %v3607 = vpop.permute.xlu0 %3606
  %3608 = vrot.lane.b32.xlu0 %v2374, 96
  %v3609 = vpop.permute.xlu0 %3608
  %3610 = vrot.lane.b32.xlu0 %v2375, 96
  %v3611 = vpop.permute.xlu0 %3610
  %3612 = vrot.lane.b32.xlu0 %v2376, 96
  %v3613 = vpop.permute.xlu0 %3612
  %3614 = vrot.lane.b32.xlu0 %v2377, 96
  %v3615 = vpop.permute.xlu0 %3614
  %3616 = vrot.lane.b32.xlu0 %v2378, 96
  %v3617 = vpop.permute.xlu0 %3616
  %3632 = vrot.lane.b32.xlu0 %v2876, 64
  %v3633 = vpop.permute.xlu0 %3632
  %3634 = vrot.lane.b32.xlu0 %v2877, 64
  %v3635 = vpop.permute.xlu0 %3634
  %3636 = vrot.lane.b32.xlu0 %v2878, 64
  %v3637 = vpop.permute.xlu0 %3636
  %3638 = vrot.lane.b32.xlu0 %v2879, 64
  %v3639 = vpop.permute.xlu0 %3638
  %3640 = vrot.lane.b32.xlu0 %v2880, 64
  %v3641 = vpop.permute.xlu0 %3640
  %3642 = vrot.lane.b32.xlu0 %v2881, 64
  %v3643 = vpop.permute.xlu0 %3642
  %3644 = vrot.lane.b32.xlu0 %v2882, 64
  %v3645 = vpop.permute.xlu0 %3644
  %3660 = vrot.lane.b32.xlu0 %v3107, 96
  %v3661 = vpop.permute.xlu0 %3660
  %3662 = vrot.lane.b32.xlu0 %v3108, 96
  %v3663 = vpop.permute.xlu0 %3662
  %3664 = vrot.lane.b32.xlu0 %v3109, 96
  %v3665 = vpop.permute.xlu0 %3664
  %3666 = vrot.lane.b32.xlu0 %v3110, 96
  %v3667 = vpop.permute.xlu0 %3666
  %3668 = vrot.lane.b32.xlu0 %v3111, 96
  %v3669 = vpop.permute.xlu0 %3668
  %3670 = vrot.lane.b32.xlu0 %v3112, 96
  %v3671 = vpop.permute.xlu0 %3670
  %3672 = vrot.lane.b32.xlu0 %v3113, 96
  %v3673 = vpop.permute.xlu0 %3672
  %3688 = vrot.lane.b32.xlu0 %v3345, 96
  %v3689 = vpop.permute.xlu0 %3688
  %3690 = vrot.lane.b32.xlu0 %v3346, 96
  %v3691 = vpop.permute.xlu0 %3690
  %3692 = vrot.lane.b32.xlu0 %v3347, 96
  %v3693 = vpop.permute.xlu0 %3692
  %3694 = vrot.lane.b32.xlu0 %v3348, 96
  %v3695 = vpop.permute.xlu0 %3694
  %3696 = vrot.lane.b32.xlu0 %v3349, 96
  %v3697 = vpop.permute.xlu0 %3696
  %3698 = vrot.lane.b32.xlu0 %v3350, 96
  %v3699 = vpop.permute.xlu0 %3698
  %3700 = vrot.lane.b32.xlu0 %v3351, 96
  %v3701 = vpop.permute.xlu0 %3700
  %v3709 = vsel %vm128, %v1623, %v1910
  %v3710 = vsel %vm128, %v1624, %v1911
  %v3711 = vsel %vm128, %v1625, %v1912
  %v3712 = vsel %vm128, %v1626, %v1913
  %v3713 = vsel %vm128, %v1627, %v1914
  %v3714 = vsel %vm128, %v1628, %v1915
  %v3715 = vsel %vm128, %v1629, %v1916
  %vm3716 = vcmask 523264
  %v3717 = vsel %vm3716, %v3709, %v3577
  %v3718 = vsel %vm3716, %v3710, %v3579
  %v3719 = vsel %vm3716, %v3711, %v3581
  %v3720 = vsel %vm3716, %v3712, %v3583
  %v3721 = vsel %vm3716, %v3713, %v3585
  %v3722 = vsel %vm3716, %v3714, %v3587
  %v3723 = vsel %vm3716, %v3715, %v3589
  %vm3724 = vcmask 785408
  %v3725 = vsel %vm3724, %v3717, %v3605
  %v3726 = vsel %vm3724, %v3718, %v3607
  %v3727 = vsel %vm3724, %v3719, %v3609
  %v3728 = vsel %vm3724, %v3720, %v3611
  %v3729 = vsel %vm3724, %v3721, %v3613
  %v3730 = vsel %vm3724, %v3722, %v3615
  %v3731 = vsel %vm3724, %v3723, %v3617
  %v3732 = vsel %vm128, %v2596, %v3633
  %v3733 = vsel %vm128, %v2597, %v3635
  %v3734 = vsel %vm128, %v2598, %v3637
  %v3735 = vsel %vm128, %v2599, %v3639
  %v3736 = vsel %vm128, %v2600, %v3641
  %v3737 = vsel %vm128, %v2601, %v3643
  %v3738 = vsel %vm128, %v2602, %v3645
  %v3739 = vsel %vm3716, %v3732, %v3661
  %v3740 = vsel %vm3716, %v3733, %v3663
  %v3741 = vsel %vm3716, %v3734, %v3665
  %v3742 = vsel %vm3716, %v3735, %v3667
  %v3743 = vsel %vm3716, %v3736, %v3669
  %v3744 = vsel %vm3716, %v3737, %v3671
  %v3745 = vsel %vm3716, %v3738, %v3673
  %v3746 = vsel %vm3724, %v3739, %v3689
  %v3747 = vsel %vm3724, %v3740, %v3691
  %v3748 = vsel %vm3724, %v3741, %v3693
  %v3749 = vsel %vm3724, %v3742, %v3695
  %v3750 = vsel %vm3724, %v3743, %v3697
  %v3751 = vsel %vm3724, %v3744, %v3699
  %v3752 = vsel %vm3724, %v3745, %v3701
  %v3753 = vsel %vm128, %v3562, 0.0
  %v3754 = vsel %vm128, %v3563, 0.0
  %v3755 = vsel %vm128, %v3564, 0.0
  %v3756 = vsel %vm128, %v3565, 0.0
  %v3757 = vsel %vm128, %v3566, 0.0
  %v3758 = vsel %vm128, %v3567, 0.0
  %v3759 = vsel %vm128, %v3568, 0.0
  %v3760 = vmul.f32 %v3725, %v217
  %v3761 = vmul.f32 %v3746, %v219
  %v3762 = vmul.f32 %v3753, %v324
  %v3763 = vmul.f32 %v3726, %v223
  %v3764 = vmul.f32 %v3747, %v225
  %v3765 = vmul.f32 %v3754, %v329
  %v3766 = vmul.f32 %v3727, %v229
  %v3767 = vmul.f32 %v3748, %v231
  %v3768 = vmul.f32 %v3755, %v334
  %v3769 = vmul.f32 %v3728, %v235
  %v3770 = vmul.f32 %v3749, %v237
  %v3771 = vmul.f32 %v3756, %v339
  %v3772 = vmul.f32 %v3729, %v241
  %v3773 = vmul.f32 %v3750, %v243
  %v3774 = vmul.f32 %v3757, %v344
  %v3775 = vmul.f32 %v3730, %v247
  %v3776 = vmul.f32 %v3751, %v249
  %v3777 = vmul.f32 %v3758, %v349
  %v3778 = vmul.f32 %v3731, %v253
  %v3779 = vmul.f32 %v3752, %v255
  %v3780 = vmul.f32 %v3759, %v354
  %v3781 = vlaneseq
  %v3782 = vshrl.u32 %v3781, 7
  %v3783 = vld [vmem:[%s82] sm:$0x1]
  %v3784 = vlaneseq
  %v3785 = vshrl.u32 %v3784, 7
  %v3786 = vsub.s32 0, %v3785
  %v3787 = vrot.slane %v3783, %v3786
  %vm3788 = vcmp.eq.s32.totalorder %v3782, %v3787
  %v3789 = vsel %vm3788, 1, 0
  %v3790 = vcvt.s32.f32 %v3789
  %v3791 = vpack.c.bf16 %v3790, %v3790
  %v3792 = vld [vmem:[%s6] sm:$0xff]
  %v3793 = vld [vmem:[%s6 + $0x8] sm:$0xff]
  %v3794 = vld [vmem:[%s6 + $0x10] sm:$0xff]
  %v3795 = vpack.c.bf16 %v3763, %v3760
  %v3796 = vpack.c.bf16 %v3764, %v3761
  %v3797 = vpack.c.bf16 %v3765, %v3762
  %v3798 = vpack.c.bf16 %v3769, %v3766
  %v3799 = vpack.c.bf16 %v3770, %v3767
  %v3800 = vpack.c.bf16 %v3771, %v3768
  %v3801 = vpack.c.bf16 %v3775, %v3772
  %v3802 = vpack.c.bf16 %v3776, %v3773
  %v3803 = vpack.c.bf16 %v3777, %v3774
  %v3804 = vpack.c.bf16 %v3778, %v3778
  %v3805 = vpack.c.bf16 %v3779, %v3779
  %v3806 = vpack.c.bf16 %v3780, %v3780
  %vm3807 = vcmask 457728
  %v3809 = vsel %vm3807, %v3791, 0
  %vm3811 = vcmask 1043456
  %v3813 = vsel %vm3811, %v3804, 0
  %v3816 = vsel %vm3811, %v3805, 0
  %v3819 = vsel %vm3811, %v3806, 0
  %3821 = vmatprep.subr.bf16.mxu0 %v3796
  %3822 = vmatpush1.bf16.msra.mxu0 %v3795
  %3823 = vmatprep.subr.bf16.mxu0 %v3799
  %3824 = vmatpush1.bf16.msra.mxu0 %v3798
  %3825 = vmatprep.subr.bf16.mxu0 %v3802
  %3826 = vmatpush1.bf16.msra.mxu0 %v3801
  %3827 = vmatprep.subr.bf16.mxu0 %v3816
  %3828 = vmatpush1.bf16.msra.mxu0 %v3813
  %3829 = vmatprep.subr.bf16.mxu0 0
  %3830 = vmatpush1.bf16.msra.mxu0 0
  %3831 = vmatprep.subr.bf16.mxu0 0
  %3832 = vmatpush1.bf16.msra.mxu0 0
  %3833 = vmatprep.subr.bf16.mxu0 0
  %3834 = vmatpush1.bf16.msra.mxu0 0
  %3835 = vmatprep.subr.bf16.mxu0 0
  %3836 = vmatpush1.bf16.msra.mxu0 0
  %3837 = vmatprep.subr.bf16.mxu0 0
  %3838 = vmatpush1.bf16.msra.mxu0 0
  %3839 = vmatprep.subr.bf16.mxu0 0
  %3840 = vmatpush1.bf16.msra.mxu0 0
  %3841 = vmatprep.subr.bf16.mxu0 0
  %3842 = vmatpush1.bf16.msra.mxu0 0
  %3843 = vmatprep.subr.bf16.mxu0 0
  %3844 = vmatpush1.bf16.msra.mxu0 0
  %3845 = vmatprep.subr.bf16.mxu0 0
  %3846 = vmatpush1.bf16.msra.mxu0 0
  %3847 = vmatprep.subr.bf16.mxu0 0
  %3848 = vmatpush1.bf16.msra.mxu0 0
  %3849 = vmatprep.subr.bf16.mxu0 0
  %3850 = vmatpush1.bf16.msra.mxu0 0
  %3851 = vmatprep.subr.bf16.mxu0 0
  %3852 = vmatpush1.bf16.msra.mxu0 0
  %3853 = vmatprep.mubr.bf16.mxu0 0
  %3854 = vmatmul.mubr.bf16.gmra.mrb[0].mxu0 %v3809
  %v3855 = vpop.f32.mrb[0].mxu0
  %v3856 = vadd.f32 0.0, %v3855
  %v3857 = vpop.f32.mrb[0].mxu0
  %v3858 = vadd.f32 0.0, %v3857
  %v3859 = vpop.f32.mrb[0].mxu0
  %v3860 = vpop.f32.mrb[0].mxu0
  %3861 = vdwg.mxu0
  %3862 = vmatprep.subr.bf16.mxu0 0
  %3863 = vmatpush1.bf16.msra.mxu0 %v3797
  %3864 = vmatprep.subr.bf16.mxu0 0
  %3865 = vmatpush1.bf16.msra.mxu0 %v3800
  %3866 = vmatprep.subr.bf16.mxu0 0
  %3867 = vmatpush1.bf16.msra.mxu0 %v3803
  %3868 = vmatprep.subr.bf16.mxu0 0
  %3869 = vmatpush1.bf16.msra.mxu0 %v3819
  %3870 = vmatprep.subr.bf16.mxu0 0
  %3871 = vmatpush1.bf16.msra.mxu0 0
  %3872 = vmatprep.subr.bf16.mxu0 0
  %3873 = vmatpush1.bf16.msra.mxu0 0
  %3874 = vmatprep.subr.bf16.mxu0 0
  %3875 = vmatpush1.bf16.msra.mxu0 0
  %3876 = vmatprep.subr.bf16.mxu0 0
  %3877 = vmatpush1.bf16.msra.mxu0 0
  %3878 = vmatprep.subr.bf16.mxu0 0
  %3879 = vmatpush1.bf16.msra.mxu0 0
  %3880 = vmatprep.subr.bf16.mxu0 0
  %3881 = vmatpush1.bf16.msra.mxu0 0
  %3882 = vmatprep.subr.bf16.mxu0 0
  %3883 = vmatpush1.bf16.msra.mxu0 0
  %3884 = vmatprep.subr.bf16.mxu0 0
  %3885 = vmatpush1.bf16.msra.mxu0 0
  %3886 = vmatprep.subr.bf16.mxu0 0
  %3887 = vmatpush1.bf16.msra.mxu0 0
  %3888 = vmatprep.subr.bf16.mxu0 0
  %3889 = vmatpush1.bf16.msra.mxu0 0
  %3890 = vmatprep.subr.bf16.mxu0 0
  %3891 = vmatpush1.bf16.msra.mxu0 0
  %3892 = vmatprep.subr.bf16.mxu0 0
  %3893 = vmatpush1.bf16.msra.mxu0 0
  %3894 = vmatprep.mubr.bf16.mxu0 0
  %3895 = vmatmul.mubr.bf16.gmra.mrb[0].mxu0 %v3809
  %v3896 = vpop.f32.mrb[0].mxu0
  %v3897 = vadd.f32 0.0, %v3896
  %v3898 = vpop.f32.mrb[0].mxu0
  %v3899 = vpop.f32.mrb[0].mxu0
  %v3900 = vpop.f32.mrb[0].mxu0
  %3901 = vdwg.mxu0
  %v3902 = vadd.f32 %v3792, %v3856
  %v3903 = vadd.f32 %v3793, %v3858
  %v3904 = vadd.f32 %v3794, %v3897
  %3905 = vst [vmem:[%s6] sm:$0xff] %v3902
  %3906 = vst [vmem:[%s6 + $0x8] sm:$0xff] %v3903
  %3907 = vst [vmem:[%s6 + $0x10] sm:$0xff] %v3904
  // Predicated region
  $region30: #{so3net_forward.6} parent=0 // pred_check
    _
  $region31: #{so3net_forward.6} parent=0 // pred_check_branch
    %3909 = sbr.rel (0) target = $region33
  $region32: #{so3net_forward.6} parent=0 // pred_region
    _
  $region33: #{so3net_forward.6} parent=0 // pred_fallthru
    _
  // Predicated region
  $region34: #{so3net_forward.6} parent=0 // pred_check
    _
  $region35: #{so3net_forward.6} parent=0 // pred_check_branch
    %3911 = sbr.rel (0) target = $region37
  $region36: #{so3net_forward.6} parent=0 // pred_region
    _
  $region37: #{so3net_forward.6} parent=0 // pred_fallthru
    _

</llo_original>
